<compile_context>
chip_gen: v7x
topology: tpu7x:2x2x1
jax: 0.10.0
libtpu: 0.0.40
codegen_flags: <defaults>
</compile_context>

<pallas_src>
import math

import jax
import jax.numpy as jnp
from jax.experimental import pallas as pl
from jax.experimental.pallas import tpu as pltpu

# ---------------------------------------------------------------------------
# Model dimensions (small, consistent with the module's forward pass)
# ---------------------------------------------------------------------------
NULL, START, END = 0, 1, 2
V_IN = 32          # encoder vocab
V_OUT = 32         # decoder vocab
D_DIM = 32         # wordvec_dim
H_DIM = 32         # hidden_dim
L_LAYERS = 2       # rnn_num_layers
N_BATCH = 2
T_IN = 8
T_OUT = 8


# ---------------------------------------------------------------------------
# Fused kernel
# ---------------------------------------------------------------------------
def _lstm_cell(gates, c_prev, H):
    # PyTorch gate order i, f, g, o ; gates already contain x-proj + h-proj + bias.
    i = jax.nn.sigmoid(gates[:, 0 * H:1 * H])
    f = jax.nn.sigmoid(gates[:, 1 * H:2 * H])
    g = jnp.tanh(gates[:, 2 * H:3 * H])
    o = jax.nn.sigmoid(gates[:, 3 * H:4 * H])
    c_new = f * c_prev + i * g
    h_new = o * jnp.tanh(c_new)
    return h_new, c_new


def seq2seq_kernel(*refs):
    (x_emb_ref, y_emb_ref, valid_ref, y_ids_ref,
     e_wih0_ref, e_whh0_ref, e_b0_ref,
     e_wih1_ref, e_whh1_ref, e_b1_ref,
     d_wih0x_ref, d_wih0c_ref, d_whh0_ref, d_b0_ref,
     d_wih1_ref, d_whh1_ref, d_b1_ref,
     lin_w_ref, lin_b_ref,
     a_wh_ref, a_we_ref, a_b_ref, a_v_ref,
     loss_ref) = refs

    f32 = jnp.float32
    NP, T_in = valid_ref.shape            # padded batch, encoder timesteps
    T_out = y_ids_ref.shape[1]
    H = e_whh0_ref.shape[0]
    V = lin_w_ref.shape[1]

    def dot(a, b):
        return jnp.dot(a, b, preferred_element_type=f32)

    # ------------------------- encoder (2-layer LSTM, length masked) --------
    valid = valid_ref[...]                                     # (NP, T_in)
    # layer-0 input projection batched over all timesteps (single MXU feed);
    # bias folded in once here.
    xp0 = dot(x_emb_ref[...], e_wih0_ref[...]) + e_b0_ref[...]  # (T_in*NP, 4H)
    e_whh0 = e_whh0_ref[...]
    e_wih1 = e_wih1_ref[...]
    e_whh1 = e_whh1_ref[...]
    e_b1 = e_b1_ref[...]
    a_we = a_we_ref[...]

    h0 = jnp.zeros((NP, H), f32)
    c0 = jnp.zeros((NP, H), f32)
    h1 = jnp.zeros((NP, H), f32)
    c1 = jnp.zeros((NP, H), f32)
    enc_outs = []    # per-timestep top-layer outputs (NP, H), zeroed past length
    enc_projs = []   # hoisted attention enc-side projection (NP, H)
    for t in range(T_in):
        v_t = valid[:, t:t + 1]                                # (NP, 1)
        # layer 0
        g0 = xp0[t * NP:(t + 1) * NP, :] + dot(h0, e_whh0)
        h0n, c0n = _lstm_cell(g0, c0, H)
        h0 = v_t * h0n + (1.0 - v_t) * h0                      # freeze past length
        c0 = v_t * c0n + (1.0 - v_t) * c0
        out0 = v_t * h0n                                       # zero past length
        # layer 1
        g1 = dot(out0, e_wih1) + dot(h1, e_whh1) + e_b1
        h1n, c1n = _lstm_cell(g1, c1, H)
        h1 = v_t * h1n + (1.0 - v_t) * h1
        c1 = v_t * c1n + (1.0 - v_t) * c1
        out1 = v_t * h1n
        enc_outs.append(out1)
        # loop-invariant (w.r.t. decoder steps) attention projection, done once
        enc_projs.append(dot(out1, a_we))

    # ------------------------- decoder (attention + 2-layer LSTM + CE) ------
    # word-embedding half of decoder layer-0 input projection, batched over time
    yp0 = dot(y_emb_ref[...], d_wih0x_ref[...]) + d_b0_ref[...]  # (T_out*NP, 4H)
    d_wih0c = d_wih0c_ref[...]
    d_whh0 = d_whh0_ref[...]
    d_wih1 = d_wih1_ref[...]
    d_whh1 = d_whh1_ref[...]
    d_b1 = d_b1_ref[...]
    lin_w = lin_w_ref[...]
    lin_b = lin_b_ref[...]
    a_wh = a_wh_ref[...]
    a_b = a_b_ref[...]
    a_v = a_v_ref[...]
    y_ids = y_ids_ref[...]                                     # (NP, T_out) int32
    vocab_iota = jax.lax.broadcasted_iota(jnp.int32, (NP, V), 1)

    dh0, dc0 = h0, c0          # decoder hidden initialized from encoder final state
    dh1, dc1 = h1, c1
    loss_sum = jnp.zeros((1, 1), f32)
    cnt = jnp.zeros((1, 1), f32)

    # The last decoder step's logits are masked out of the loss in the reference
    # (out_mask[:, -1] == 0), so only T_out - 1 steps need to run.
    for t in range(T_out - 1):
        # -- attention: energy = tanh([h, enc] @ Wa + ba); softmax over T_in; ctx --
        base = dot(dh1, a_wh) + a_b                            # (NP, H)
        s = [jnp.sum(jnp.tanh(base + enc_projs[k]) * a_v, axis=-1, keepdims=True)
             for k in range(T_in)]                             # T_in x (NP, 1)
        m = s[0]
        for k in range(1, T_in):
            m = jnp.maximum(m, s[k])
        e = [jnp.exp(s[k] - m) for k in range(T_in)]
        denom = e[0]
        for k in range(1, T_in):
            denom = denom + e[k]
        ctx = e[0] * enc_outs[0]
        for k in range(1, T_in):
            ctx = ctx + e[k] * enc_outs[k]
        ctx = ctx / denom                                      # (NP, H)

        # -- decoder LSTM layer 0 (input = [word_embed, context]) --
        g0 = yp0[t * NP:(t + 1) * NP, :] + dot(ctx, d_wih0c) + dot(dh0, d_whh0)
        dh0, dc0 = _lstm_cell(g0, dc0, H)
        # -- decoder LSTM layer 1 --
        g1 = dot(dh0, d_wih1) + dot(dh1, d_whh1) + d_b1
        dh1, dc1 = _lstm_cell(g1, dc1, H)

        # -- output projection --
        logits = dot(dh1, lin_w) + lin_b                       # (NP, V)

        # -- masked cross entropy: target y[:, t+1], positions where it != NULL --
        tgt = y_ids[:, t + 1:t + 2]                            # (NP, 1) int32
        mask = (tgt != NULL).astype(f32)                       # (NP, 1)
        mx = jnp.max(logits, axis=-1, keepdims=True)
        lse = jnp.log(jnp.sum(jnp.exp(logits - mx), axis=-1, keepdims=True)) + mx
        tgt_logit = jnp.sum(jnp.where(vocab_iota == tgt, logits, 0.0),
                            axis=-1, keepdims=True)            # (NP, 1)
        loss_sum = loss_sum + jnp.sum((lse - tgt_logit) * mask, axis=0, keepdims=True)
        cnt = cnt + jnp.sum(mask, axis=0, keepdims=True)

    loss_ref[...] = loss_sum / cnt


# ---------------------------------------------------------------------------
# pallas_call setup: single grid step, full-array VMEM blocks (tiny shapes)
# ---------------------------------------------------------------------------
def _full_spec(shape):
    nd = len(shape)
    return pl.BlockSpec(shape, lambda i, _nd=nd: (0,) * _nd)


# ---------------------------------------------------------------------------
# Parameters: PyTorch-convention init, then a one-time repack to kernel layout
# ---------------------------------------------------------------------------
def init_params(key):
    def u(k, shape, scale):
        return jax.random.uniform(k, shape, jnp.float32, -scale, scale)

    keys = iter(jax.random.split(key, 64))
    s = 1.0 / math.sqrt(H_DIM)
    p = {}
    p['enc_embed'] = jax.random.normal(next(keys), (V_IN, D_DIM), jnp.float32) * 0.1
    p['dec_embed'] = jax.random.normal(next(keys), (V_OUT, D_DIM), jnp.float32) * 0.1

    enc_layers = []
    for l in range(L_LAYERS):
        in_dim = D_DIM if l == 0 else H_DIM
        enc_layers.append(dict(
            wih=u(next(keys), (4 * H_DIM, in_dim), s),
            whh=u(next(keys), (4 * H_DIM, H_DIM), s),
            b=u(next(keys), (1, 4 * H_DIM), s),       # b_ih + b_hh combined
        ))
    p['enc_layers'] = enc_layers

    dec_layers = []
    for l in range(L_LAYERS):
        in_dim = (D_DIM + H_DIM) if l == 0 else H_DIM
        dec_layers.append(dict(
            wih=u(next(keys), (4 * H_DIM, in_dim), s),
            whh=u(next(keys), (4 * H_DIM, H_DIM), s),
            b=u(next(keys), (1, 4 * H_DIM), s),
        ))
    p['dec_layers'] = dec_layers

    p['dec_lin_w'] = u(next(keys), (V_OUT, H_DIM), s)
    p['dec_lin_b'] = u(next(keys), (1, V_OUT), s)

    # Attn: nn.Linear(2H, H) split into hidden / encoder halves; v ~ N(0, 1/sqrt(H))
    p['attn_wah'] = u(next(keys), (H_DIM, H_DIM), 1.0 / math.sqrt(2 * H_DIM))
    p['attn_wae'] = u(next(keys), (H_DIM, H_DIM), 1.0 / math.sqrt(2 * H_DIM))
    p['attn_ba'] = u(next(keys), (1, H_DIM), 1.0 / math.sqrt(2 * H_DIM))
    p['attn_v'] = jax.random.normal(next(keys), (1, H_DIM), jnp.float32) * s
    return p


def pack_params(p):
    # One-time (outside jit) repack: transpose to (in, out), split decoder layer-0
    # input weight into word-embedding / context halves (avoids in-kernel concat).
    e0, e1 = p['enc_layers']
    d0, d1 = p['dec_layers']
    return dict(
        enc_embed=p['enc_embed'], dec_embed=p['dec_embed'],
        e_wih0=e0['wih'].T, e_whh0=e0['whh'].T, e_b0=e0['b'],
        e_wih1=e1['wih'].T, e_whh1=e1['whh'].T, e_b1=e1['b'],
        d_wih0x=d0['wih'][:, :D_DIM].T,   # (D, 4H) acts on word embedding
        d_wih0c=d0['wih'][:, D_DIM:].T,   # (H, 4H) acts on attention context
        d_whh0=d0['whh'].T, d_b0=d0['b'],
        d_wih1=d1['wih'].T, d_whh1=d1['whh'].T, d_b1=d1['b'],
        lin_w=p['dec_lin_w'].T, lin_b=p['dec_lin_b'],
        a_wh=p['attn_wah'].T, a_we=p['attn_wae'].T,
        a_b=p['attn_ba'], a_v=p['attn_v'],
    )


# ---------------------------------------------------------------------------
# Forward pass (mirrors Seq2SeqAtt.forward; returns the masked CE loss)
# ---------------------------------------------------------------------------
def seq2seq_att_forward(kp, x, y):
    N, T_in = x.shape
    T_out = y.shape[1]
    NP = ((max(N, 8) + 7) // 8) * 8          # pad batch to a multiple of 8 sublanes
    pad = NP - N
    x_p = jnp.pad(x, ((0, pad), (0, 0)), constant_values=NULL)
    y_p = jnp.pad(y, ((0, pad), (0, 0)), constant_values=NULL)

    # length masking data (pack_padded_sequence semantics); padded rows: length 0
    lengths = jnp.sum(x_p != NULL, axis=1)
    valid = (jnp.arange(T_in)[None, :] < lengths[:, None]).astype(jnp.float32)

    # embedding gathers stay in plain JAX; flatten time-major so in-kernel per-step
    # slices are contiguous, sublane-aligned row blocks.
    x_emb = kp['enc_embed'][x_p.T].reshape(T_in * NP, D_DIM)     # (T_in*NP, D)
    y_emb = kp['dec_embed'][y_p.T].reshape(T_out * NP, D_DIM)    # (T_out*NP, D)

    args = (x_emb, y_emb, valid, y_p.astype(jnp.int32),
            kp['e_wih0'], kp['e_whh0'], kp['e_b0'],
            kp['e_wih1'], kp['e_whh1'], kp['e_b1'],
            kp['d_wih0x'], kp['d_wih0c'], kp['d_whh0'], kp['d_b0'],
            kp['d_wih1'], kp['d_whh1'], kp['d_b1'],
            kp['lin_w'], kp['lin_b'],
            kp['a_wh'], kp['a_we'], kp['a_b'], kp['a_v'])

    loss = pl.pallas_call(
        seq2seq_kernel,
        out_shape=jax.ShapeDtypeStruct((1, 1), jnp.float32),
        grid=(1,),
        in_specs=[_full_spec(a.shape) for a in args],
        out_specs=_full_spec((1, 1)),
        compiler_params=pltpu.CompilerParams(dimension_semantics=("arbitrary",)),
    )(*args)
    return loss[0, 0]


# ---------------------------------------------------------------------------
if __name__ == "__main__":
    key = jax.random.PRNGKey(0)
    params = init_params(key)
    kparams = pack_params(params)

    # row 0 has full length T_IN (so the padded encoder length == T_IN, matching
    # pad_packed_sequence); row 1 has trailing NULL padding.
    x = jnp.array([[5, 7, 3, 9, 4, 6, 8, 2],
                   [3, 4, 5, 6, 7, 0, 0, 0]], dtype=jnp.int32)
    y = jnp.array([[1, 4, 5, 6, 7, 8, 9, 2],
                   [1, 3, 4, 5, 2, 0, 0, 0]], dtype=jnp.int32)

    loss_fn = jax.jit(lambda xx, yy: seq2seq_att_forward(kparams, xx, yy))
    loss = loss_fn(x, y)
    jax.block_until_ready(loss)
    assert jnp.isfinite(loss), "loss is not finite"
    print("KERNEL_OK")
</pallas_src>

<mosaic_0001>
module attributes {stable_mosaic.version = 11 : i64} {
  func.func @seq2seq_kernel(%arg0: i32, %arg1: memref<64x32xf32, #tpu.memory_space<vmem>>, %arg2: memref<64x32xf32, #tpu.memory_space<vmem>>, %arg3: memref<8x8xf32, #tpu.memory_space<vmem>>, %arg4: memref<8x8xi32, #tpu.memory_space<vmem>>, %arg5: memref<32x128xf32, #tpu.memory_space<vmem>>, %arg6: memref<32x128xf32, #tpu.memory_space<vmem>>, %arg7: memref<1x128xf32, #tpu.memory_space<vmem>>, %arg8: memref<32x128xf32, #tpu.memory_space<vmem>>, %arg9: memref<32x128xf32, #tpu.memory_space<vmem>>, %arg10: memref<1x128xf32, #tpu.memory_space<vmem>>, %arg11: memref<32x128xf32, #tpu.memory_space<vmem>>, %arg12: memref<32x128xf32, #tpu.memory_space<vmem>>, %arg13: memref<32x128xf32, #tpu.memory_space<vmem>>, %arg14: memref<1x128xf32, #tpu.memory_space<vmem>>, %arg15: memref<32x128xf32, #tpu.memory_space<vmem>>, %arg16: memref<32x128xf32, #tpu.memory_space<vmem>>, %arg17: memref<1x128xf32, #tpu.memory_space<vmem>>, %arg18: memref<32x32xf32, #tpu.memory_space<vmem>>, %arg19: memref<1x32xf32, #tpu.memory_space<vmem>>, %arg20: memref<32x32xf32, #tpu.memory_space<vmem>>, %arg21: memref<32x32xf32, #tpu.memory_space<vmem>>, %arg22: memref<1x32xf32, #tpu.memory_space<vmem>>, %arg23: memref<1x32xf32, #tpu.memory_space<vmem>>, %arg24: memref<1x1xf32, #tpu.memory_space<vmem>>) attributes {dimension_semantics = [#tpu.dimension_semantics<arbitrary>], iteration_bounds = array<i64: 1>, scalar_prefetch = 0 : i64, scratch_operands = 0 : i64, tpu.core_type = #tpu.core_type<tc>, window_params = [{pipeline_mode = #tpu.pipeline_mode<synchronous>, transform_indices = @transform_0, window_bounds = array<i64: 64, 32>}, {pipeline_mode = #tpu.pipeline_mode<synchronous>, transform_indices = @transform_1, window_bounds = array<i64: 64, 32>}, {pipeline_mode = #tpu.pipeline_mode<synchronous>, transform_indices = @transform_2, window_bounds = array<i64: 8, 8>}, {pipeline_mode = #tpu.pipeline_mode<synchronous>, transform_indices = @transform_3, window_bounds = array<i64: 8, 8>}, {pipeline_mode = #tpu.pipeline_mode<synchronous>, transform_indices = @transform_4, window_bounds = array<i64: 32, 128>}, {pipeline_mode = #tpu.pipeline_mode<synchronous>, transform_indices = @transform_5, window_bounds = array<i64: 32, 128>}, {pipeline_mode = #tpu.pipeline_mode<synchronous>, transform_indices = @transform_6, window_bounds = array<i64: 1, 128>}, {pipeline_mode = #tpu.pipeline_mode<synchronous>, transform_indices = @transform_7, window_bounds = array<i64: 32, 128>}, {pipeline_mode = #tpu.pipeline_mode<synchronous>, transform_indices = @transform_8, window_bounds = array<i64: 32, 128>}, {pipeline_mode = #tpu.pipeline_mode<synchronous>, transform_indices = @transform_9, window_bounds = array<i64: 1, 128>}, {pipeline_mode = #tpu.pipeline_mode<synchronous>, transform_indices = @transform_10, window_bounds = array<i64: 32, 128>}, {pipeline_mode = #tpu.pipeline_mode<synchronous>, transform_indices = @transform_11, window_bounds = array<i64: 32, 128>}, {pipeline_mode = #tpu.pipeline_mode<synchronous>, transform_indices = @transform_12, window_bounds = array<i64: 32, 128>}, {pipeline_mode = #tpu.pipeline_mode<synchronous>, transform_indices = @transform_13, window_bounds = array<i64: 1, 128>}, {pipeline_mode = #tpu.pipeline_mode<synchronous>, transform_indices = @transform_14, window_bounds = array<i64: 32, 128>}, {pipeline_mode = #tpu.pipeline_mode<synchronous>, transform_indices = @transform_15, window_bounds = array<i64: 32, 128>}, {pipeline_mode = #tpu.pipeline_mode<synchronous>, transform_indices = @transform_16, window_bounds = array<i64: 1, 128>}, {pipeline_mode = #tpu.pipeline_mode<synchronous>, transform_indices = @transform_17, window_bounds = array<i64: 32, 32>}, {pipeline_mode = #tpu.pipeline_mode<synchronous>, transform_indices = @transform_18, window_bounds = array<i64: 1, 32>}, {pipeline_mode = #tpu.pipeline_mode<synchronous>, transform_indices = @transform_19, window_bounds = array<i64: 32, 32>}, {pipeline_mode = #tpu.pipeline_mode<synchronous>, transform_indices = @transform_20, window_bounds = array<i64: 32, 32>}, {pipeline_mode = #tpu.pipeline_mode<synchronous>, transform_indices = @transform_21, window_bounds = array<i64: 1, 32>}, {pipeline_mode = #tpu.pipeline_mode<synchronous>, transform_indices = @transform_22, window_bounds = array<i64: 1, 32>}, {pipeline_mode = #tpu.pipeline_mode<synchronous>, transform_indices = @transform_23, window_bounds = array<i64: 1, 1>}]} {
    %c0 = arith.constant 0 : index
    %c0_0 = arith.constant 0 : index
    %0 = vector.load %arg3[%c0, %c0_0] : memref<8x8xf32, #tpu.memory_space<vmem>>, vector<8x8xf32>
    %c0_1 = arith.constant 0 : index
    %c0_2 = arith.constant 0 : index
    %1 = vector.load %arg1[%c0_1, %c0_2] : memref<64x32xf32, #tpu.memory_space<vmem>>, vector<64x32xf32>
    %c0_3 = arith.constant 0 : index
    %c0_4 = arith.constant 0 : index
    %2 = vector.load %arg5[%c0_3, %c0_4] : memref<32x128xf32, #tpu.memory_space<vmem>>, vector<32x128xf32>
    %cst = arith.constant dense<0.000000e+00> : vector<64x128xf32>
    %3 = tpu.matmul %1, %2, %cst {dimension_numbers = #tpu.dot_dimension_numbers<[1], [0], [0], [1], [0, 0, 1, 1], [], []>} : vector<64x32xf32>, vector<32x128xf32>, vector<64x128xf32> -> vector<64x128xf32>
    %c0_5 = arith.constant 0 : index
    %c0_6 = arith.constant 0 : index
    %4 = vector.load %arg7[%c0_5, %c0_6] : memref<1x128xf32, #tpu.memory_space<vmem>>, vector<1x128xf32>
    %5 = vector.broadcast %4 : vector<1x128xf32> to vector<64x128xf32>
    %6 = arith.addf %3, %5 : vector<64x128xf32>
    %c0_7 = arith.constant 0 : index
    %c0_8 = arith.constant 0 : index
    %7 = vector.load %arg6[%c0_7, %c0_8] : memref<32x128xf32, #tpu.memory_space<vmem>>, vector<32x128xf32>
    %c0_9 = arith.constant 0 : index
    %c0_10 = arith.constant 0 : index
    %8 = vector.load %arg8[%c0_9, %c0_10] : memref<32x128xf32, #tpu.memory_space<vmem>>, vector<32x128xf32>
    %c0_11 = arith.constant 0 : index
    %c0_12 = arith.constant 0 : index
    %9 = vector.load %arg9[%c0_11, %c0_12] : memref<32x128xf32, #tpu.memory_space<vmem>>, vector<32x128xf32>
    %c0_13 = arith.constant 0 : index
    %c0_14 = arith.constant 0 : index
    %10 = vector.load %arg10[%c0_13, %c0_14] : memref<1x128xf32, #tpu.memory_space<vmem>>, vector<1x128xf32>
    %c0_15 = arith.constant 0 : index
    %c0_16 = arith.constant 0 : index
    %11 = vector.load %arg21[%c0_15, %c0_16] : memref<32x32xf32, #tpu.memory_space<vmem>>, vector<32x32xf32>
    %cst_17 = arith.constant 0.000000e+00 : f32
    %12 = vector.broadcast %cst_17 : f32 to vector<8x32xf32>
    %cst_18 = arith.constant 0.000000e+00 : f32
    %13 = vector.broadcast %cst_18 : f32 to vector<8x32xf32>
    %cst_19 = arith.constant 0.000000e+00 : f32
    %14 = vector.broadcast %cst_19 : f32 to vector<8x32xf32>
    %cst_20 = arith.constant 0.000000e+00 : f32
    %15 = vector.broadcast %cst_20 : f32 to vector<8x32xf32>
    %16 = vector.extract_strided_slice %0 {offsets = [0, 0], sizes = [8, 1], strides = [1, 1]} : vector<8x8xf32> to vector<8x1xf32>
    %17 = vector.extract_strided_slice %6 {offsets = [0, 0], sizes = [8, 128], strides = [1, 1]} : vector<64x128xf32> to vector<8x128xf32>
    %cst_21 = arith.constant dense<0.000000e+00> : vector<8x128xf32>
    %18 = tpu.matmul %12, %7, %cst_21 {dimension_numbers = #tpu.dot_dimension_numbers<[1], [0], [0], [1], [0, 0, 1, 1], [], []>} : vector<8x32xf32>, vector<32x128xf32>, vector<8x128xf32> -> vector<8x128xf32>
    %19 = arith.addf %17, %18 : vector<8x128xf32>
    %20 = vector.extract_strided_slice %19 {offsets = [0, 0], sizes = [8, 32], strides = [1, 1]} : vector<8x128xf32> to vector<8x32xf32>
    %21 = arith.negf %20 : vector<8x32xf32>
    %22 = math.exp %21 : vector<8x32xf32>
    %cst_22 = arith.constant 1.000000e+00 : f32
    %23 = vector.broadcast %cst_22 : f32 to vector<8x32xf32>
    %24 = arith.addf %23, %22 : vector<8x32xf32>
    %25 = arith.divf %23, %24 : vector<8x32xf32>
    %26 = vector.extract_strided_slice %19 {offsets = [0, 32], sizes = [8, 32], strides = [1, 1]} : vector<8x128xf32> to vector<8x32xf32>
    %27 = arith.negf %26 : vector<8x32xf32>
    %28 = math.exp %27 : vector<8x32xf32>
    %cst_23 = arith.constant 1.000000e+00 : f32
    %29 = vector.broadcast %cst_23 : f32 to vector<8x32xf32>
    %30 = arith.addf %29, %28 : vector<8x32xf32>
    %31 = arith.divf %29, %30 : vector<8x32xf32>
    %32 = vector.extract_strided_slice %19 {offsets = [0, 64], sizes = [8, 32], strides = [1, 1]} : vector<8x128xf32> to vector<8x32xf32>
    %33 = math.tanh %32 : vector<8x32xf32>
    %34 = vector.extract_strided_slice %19 {offsets = [0, 96], sizes = [8, 32], strides = [1, 1]} : vector<8x128xf32> to vector<8x32xf32>
    %35 = arith.negf %34 : vector<8x32xf32>
    %36 = math.exp %35 : vector<8x32xf32>
    %cst_24 = arith.constant 1.000000e+00 : f32
    %37 = vector.broadcast %cst_24 : f32 to vector<8x32xf32>
    %38 = arith.addf %37, %36 : vector<8x32xf32>
    %39 = arith.divf %37, %38 : vector<8x32xf32>
    %40 = arith.mulf %31, %13 : vector<8x32xf32>
    %41 = arith.mulf %25, %33 : vector<8x32xf32>
    %42 = arith.addf %40, %41 : vector<8x32xf32>
    %43 = math.tanh %42 : vector<8x32xf32>
    %44 = arith.mulf %39, %43 : vector<8x32xf32>
    %45 = vector.broadcast %16 : vector<8x1xf32> to vector<8x32xf32>
    %46 = arith.mulf %45, %44 : vector<8x32xf32>
    %cst_25 = arith.constant 1.000000e+00 : f32
    %47 = vector.broadcast %cst_25 : f32 to vector<8x1xf32>
    %48 = arith.subf %47, %16 : vector<8x1xf32>
    %49 = vector.broadcast %48 : vector<8x1xf32> to vector<8x32xf32>
    %50 = arith.mulf %49, %12 : vector<8x32xf32>
    %51 = arith.addf %46, %50 : vector<8x32xf32>
    %52 = vector.broadcast %16 : vector<8x1xf32> to vector<8x32xf32>
    %53 = arith.mulf %52, %42 : vector<8x32xf32>
    %cst_26 = arith.constant 1.000000e+00 : f32
    %54 = vector.broadcast %cst_26 : f32 to vector<8x1xf32>
    %55 = arith.subf %54, %16 : vector<8x1xf32>
    %56 = vector.broadcast %55 : vector<8x1xf32> to vector<8x32xf32>
    %57 = arith.mulf %56, %13 : vector<8x32xf32>
    %58 = arith.addf %53, %57 : vector<8x32xf32>
    %59 = vector.broadcast %16 : vector<8x1xf32> to vector<8x32xf32>
    %60 = arith.mulf %59, %44 : vector<8x32xf32>
    %cst_27 = arith.constant dense<0.000000e+00> : vector<8x128xf32>
    %61 = tpu.matmul %60, %8, %cst_27 {dimension_numbers = #tpu.dot_dimension_numbers<[1], [0], [0], [1], [0, 0, 1, 1], [], []>} : vector<8x32xf32>, vector<32x128xf32>, vector<8x128xf32> -> vector<8x128xf32>
    %cst_28 = arith.constant dense<0.000000e+00> : vector<8x128xf32>
    %62 = tpu.matmul %14, %9, %cst_28 {dimension_numbers = #tpu.dot_dimension_numbers<[1], [0], [0], [1], [0, 0, 1, 1], [], []>} : vector<8x32xf32>, vector<32x128xf32>, vector<8x128xf32> -> vector<8x128xf32>
    %63 = arith.addf %61, %62 : vector<8x128xf32>
    %64 = vector.broadcast %10 : vector<1x128xf32> to vector<8x128xf32>
    %65 = arith.addf %63, %64 : vector<8x128xf32>
    %66 = vector.extract_strided_slice %65 {offsets = [0, 0], sizes = [8, 32], strides = [1, 1]} : vector<8x128xf32> to vector<8x32xf32>
    %67 = arith.negf %66 : vector<8x32xf32>
    %68 = math.exp %67 : vector<8x32xf32>
    %cst_29 = arith.constant 1.000000e+00 : f32
    %69 = vector.broadcast %cst_29 : f32 to vector<8x32xf32>
    %70 = arith.addf %69, %68 : vector<8x32xf32>
    %71 = arith.divf %69, %70 : vector<8x32xf32>
    %72 = vector.extract_strided_slice %65 {offsets = [0, 32], sizes = [8, 32], strides = [1, 1]} : vector<8x128xf32> to vector<8x32xf32>
    %73 = arith.negf %72 : vector<8x32xf32>
    %74 = math.exp %73 : vector<8x32xf32>
    %cst_30 = arith.constant 1.000000e+00 : f32
    %75 = vector.broadcast %cst_30 : f32 to vector<8x32xf32>
    %76 = arith.addf %75, %74 : vector<8x32xf32>
    %77 = arith.divf %75, %76 : vector<8x32xf32>
    %78 = vector.extract_strided_slice %65 {offsets = [0, 64], sizes = [8, 32], strides = [1, 1]} : vector<8x128xf32> to vector<8x32xf32>
    %79 = math.tanh %78 : vector<8x32xf32>
    %80 = vector.extract_strided_slice %65 {offsets = [0, 96], sizes = [8, 32], strides = [1, 1]} : vector<8x128xf32> to vector<8x32xf32>
    %81 = arith.negf %80 : vector<8x32xf32>
    %82 = math.exp %81 : vector<8x32xf32>
    %cst_31 = arith.constant 1.000000e+00 : f32
    %83 = vector.broadcast %cst_31 : f32 to vector<8x32xf32>
    %84 = arith.addf %83, %82 : vector<8x32xf32>
    %85 = arith.divf %83, %84 : vector<8x32xf32>
    %86 = arith.mulf %77, %15 : vector<8x32xf32>
    %87 = arith.mulf %71, %79 : vector<8x32xf32>
    %88 = arith.addf %86, %87 : vector<8x32xf32>
    %89 = math.tanh %88 : vector<8x32xf32>
    %90 = arith.mulf %85, %89 : vector<8x32xf32>
    %91 = vector.broadcast %16 : vector<8x1xf32> to vector<8x32xf32>
    %92 = arith.mulf %91, %90 : vector<8x32xf32>
    %cst_32 = arith.constant 1.000000e+00 : f32
    %93 = vector.broadcast %cst_32 : f32 to vector<8x1xf32>
    %94 = arith.subf %93, %16 : vector<8x1xf32>
    %95 = vector.broadcast %94 : vector<8x1xf32> to vector<8x32xf32>
    %96 = arith.mulf %95, %14 : vector<8x32xf32>
    %97 = arith.addf %92, %96 : vector<8x32xf32>
    %98 = vector.broadcast %16 : vector<8x1xf32> to vector<8x32xf32>
    %99 = arith.mulf %98, %88 : vector<8x32xf32>
    %cst_33 = arith.constant 1.000000e+00 : f32
    %100 = vector.broadcast %cst_33 : f32 to vector<8x1xf32>
    %101 = arith.subf %100, %16 : vector<8x1xf32>
    %102 = vector.broadcast %101 : vector<8x1xf32> to vector<8x32xf32>
    %103 = arith.mulf %102, %15 : vector<8x32xf32>
    %104 = arith.addf %99, %103 : vector<8x32xf32>
    %105 = vector.broadcast %16 : vector<8x1xf32> to vector<8x32xf32>
    %106 = arith.mulf %105, %90 : vector<8x32xf32>
    %cst_34 = arith.constant dense<0.000000e+00> : vector<8x32xf32>
    %107 = tpu.matmul %106, %11, %cst_34 {dimension_numbers = #tpu.dot_dimension_numbers<[1], [0], [0], [1], [0, 0, 1, 1], [], []>} : vector<8x32xf32>, vector<32x32xf32>, vector<8x32xf32> -> vector<8x32xf32>
    %108 = vector.extract_strided_slice %0 {offsets = [0, 1], sizes = [8, 1], strides = [1, 1]} : vector<8x8xf32> to vector<8x1xf32>
    %109 = vector.extract_strided_slice %6 {offsets = [8, 0], sizes = [8, 128], strides = [1, 1]} : vector<64x128xf32> to vector<8x128xf32>
    %cst_35 = arith.constant dense<0.000000e+00> : vector<8x128xf32>
    %110 = tpu.matmul %51, %7, %cst_35 {dimension_numbers = #tpu.dot_dimension_numbers<[1], [0], [0], [1], [0, 0, 1, 1], [], []>} : vector<8x32xf32>, vector<32x128xf32>, vector<8x128xf32> -> vector<8x128xf32>
    %111 = arith.addf %109, %110 : vector<8x128xf32>
    %112 = vector.extract_strided_slice %111 {offsets = [0, 0], sizes = [8, 32], strides = [1, 1]} : vector<8x128xf32> to vector<8x32xf32>
    %113 = arith.negf %112 : vector<8x32xf32>
    %114 = math.exp %113 : vector<8x32xf32>
    %cst_36 = arith.constant 1.000000e+00 : f32
    %115 = vector.broadcast %cst_36 : f32 to vector<8x32xf32>
    %116 = arith.addf %115, %114 : vector<8x32xf32>
    %117 = arith.divf %115, %116 : vector<8x32xf32>
    %118 = vector.extract_strided_slice %111 {offsets = [0, 32], sizes = [8, 32], strides = [1, 1]} : vector<8x128xf32> to vector<8x32xf32>
    %119 = arith.negf %118 : vector<8x32xf32>
    %120 = math.exp %119 : vector<8x32xf32>
    %cst_37 = arith.constant 1.000000e+00 : f32
    %121 = vector.broadcast %cst_37 : f32 to vector<8x32xf32>
    %122 = arith.addf %121, %120 : vector<8x32xf32>
    %123 = arith.divf %121, %122 : vector<8x32xf32>
    %124 = vector.extract_strided_slice %111 {offsets = [0, 64], sizes = [8, 32], strides = [1, 1]} : vector<8x128xf32> to vector<8x32xf32>
    %125 = math.tanh %124 : vector<8x32xf32>
    %126 = vector.extract_strided_slice %111 {offsets = [0, 96], sizes = [8, 32], strides = [1, 1]} : vector<8x128xf32> to vector<8x32xf32>
    %127 = arith.negf %126 : vector<8x32xf32>
    %128 = math.exp %127 : vector<8x32xf32>
    %cst_38 = arith.constant 1.000000e+00 : f32
    %129 = vector.broadcast %cst_38 : f32 to vector<8x32xf32>
    %130 = arith.addf %129, %128 : vector<8x32xf32>
    %131 = arith.divf %129, %130 : vector<8x32xf32>
    %132 = arith.mulf %123, %58 : vector<8x32xf32>
    %133 = arith.mulf %117, %125 : vector<8x32xf32>
    %134 = arith.addf %132, %133 : vector<8x32xf32>
    %135 = math.tanh %134 : vector<8x32xf32>
    %136 = arith.mulf %131, %135 : vector<8x32xf32>
    %137 = vector.broadcast %108 : vector<8x1xf32> to vector<8x32xf32>
    %138 = arith.mulf %137, %136 : vector<8x32xf32>
    %cst_39 = arith.constant 1.000000e+00 : f32
    %139 = vector.broadcast %cst_39 : f32 to vector<8x1xf32>
    %140 = arith.subf %139, %108 : vector<8x1xf32>
    %141 = vector.broadcast %140 : vector<8x1xf32> to vector<8x32xf32>
    %142 = arith.mulf %141, %51 : vector<8x32xf32>
    %143 = arith.addf %138, %142 : vector<8x32xf32>
    %144 = vector.broadcast %108 : vector<8x1xf32> to vector<8x32xf32>
    %145 = arith.mulf %144, %134 : vector<8x32xf32>
    %cst_40 = arith.constant 1.000000e+00 : f32
    %146 = vector.broadcast %cst_40 : f32 to vector<8x1xf32>
    %147 = arith.subf %146, %108 : vector<8x1xf32>
    %148 = vector.broadcast %147 : vector<8x1xf32> to vector<8x32xf32>
    %149 = arith.mulf %148, %58 : vector<8x32xf32>
    %150 = arith.addf %145, %149 : vector<8x32xf32>
    %151 = vector.broadcast %108 : vector<8x1xf32> to vector<8x32xf32>
    %152 = arith.mulf %151, %136 : vector<8x32xf32>
    %cst_41 = arith.constant dense<0.000000e+00> : vector<8x128xf32>
    %153 = tpu.matmul %152, %8, %cst_41 {dimension_numbers = #tpu.dot_dimension_numbers<[1], [0], [0], [1], [0, 0, 1, 1], [], []>} : vector<8x32xf32>, vector<32x128xf32>, vector<8x128xf32> -> vector<8x128xf32>
    %cst_42 = arith.constant dense<0.000000e+00> : vector<8x128xf32>
    %154 = tpu.matmul %97, %9, %cst_42 {dimension_numbers = #tpu.dot_dimension_numbers<[1], [0], [0], [1], [0, 0, 1, 1], [], []>} : vector<8x32xf32>, vector<32x128xf32>, vector<8x128xf32> -> vector<8x128xf32>
    %155 = arith.addf %153, %154 : vector<8x128xf32>
    %156 = vector.broadcast %10 : vector<1x128xf32> to vector<8x128xf32>
    %157 = arith.addf %155, %156 : vector<8x128xf32>
    %158 = vector.extract_strided_slice %157 {offsets = [0, 0], sizes = [8, 32], strides = [1, 1]} : vector<8x128xf32> to vector<8x32xf32>
    %159 = arith.negf %158 : vector<8x32xf32>
    %160 = math.exp %159 : vector<8x32xf32>
    %cst_43 = arith.constant 1.000000e+00 : f32
    %161 = vector.broadcast %cst_43 : f32 to vector<8x32xf32>
    %162 = arith.addf %161, %160 : vector<8x32xf32>
    %163 = arith.divf %161, %162 : vector<8x32xf32>
    %164 = vector.extract_strided_slice %157 {offsets = [0, 32], sizes = [8, 32], strides = [1, 1]} : vector<8x128xf32> to vector<8x32xf32>
    %165 = arith.negf %164 : vector<8x32xf32>
    %166 = math.exp %165 : vector<8x32xf32>
    %cst_44 = arith.constant 1.000000e+00 : f32
    %167 = vector.broadcast %cst_44 : f32 to vector<8x32xf32>
    %168 = arith.addf %167, %166 : vector<8x32xf32>
    %169 = arith.divf %167, %168 : vector<8x32xf32>
    %170 = vector.extract_strided_slice %157 {offsets = [0, 64], sizes = [8, 32], strides = [1, 1]} : vector<8x128xf32> to vector<8x32xf32>
    %171 = math.tanh %170 : vector<8x32xf32>
    %172 = vector.extract_strided_slice %157 {offsets = [0, 96], sizes = [8, 32], strides = [1, 1]} : vector<8x128xf32> to vector<8x32xf32>
    %173 = arith.negf %172 : vector<8x32xf32>
    %174 = math.exp %173 : vector<8x32xf32>
    %cst_45 = arith.constant 1.000000e+00 : f32
    %175 = vector.broadcast %cst_45 : f32 to vector<8x32xf32>
    %176 = arith.addf %175, %174 : vector<8x32xf32>
    %177 = arith.divf %175, %176 : vector<8x32xf32>
    %178 = arith.mulf %169, %104 : vector<8x32xf32>
    %179 = arith.mulf %163, %171 : vector<8x32xf32>
    %180 = arith.addf %178, %179 : vector<8x32xf32>
    %181 = math.tanh %180 : vector<8x32xf32>
    %182 = arith.mulf %177, %181 : vector<8x32xf32>
    %183 = vector.broadcast %108 : vector<8x1xf32> to vector<8x32xf32>
    %184 = arith.mulf %183, %182 : vector<8x32xf32>
    %cst_46 = arith.constant 1.000000e+00 : f32
    %185 = vector.broadcast %cst_46 : f32 to vector<8x1xf32>
    %186 = arith.subf %185, %108 : vector<8x1xf32>
    %187 = vector.broadcast %186 : vector<8x1xf32> to vector<8x32xf32>
    %188 = arith.mulf %187, %97 : vector<8x32xf32>
    %189 = arith.addf %184, %188 : vector<8x32xf32>
    %190 = vector.broadcast %108 : vector<8x1xf32> to vector<8x32xf32>
    %191 = arith.mulf %190, %180 : vector<8x32xf32>
    %cst_47 = arith.constant 1.000000e+00 : f32
    %192 = vector.broadcast %cst_47 : f32 to vector<8x1xf32>
    %193 = arith.subf %192, %108 : vector<8x1xf32>
    %194 = vector.broadcast %193 : vector<8x1xf32> to vector<8x32xf32>
    %195 = arith.mulf %194, %104 : vector<8x32xf32>
    %196 = arith.addf %191, %195 : vector<8x32xf32>
    %197 = vector.broadcast %108 : vector<8x1xf32> to vector<8x32xf32>
    %198 = arith.mulf %197, %182 : vector<8x32xf32>
    %cst_48 = arith.constant dense<0.000000e+00> : vector<8x32xf32>
    %199 = tpu.matmul %198, %11, %cst_48 {dimension_numbers = #tpu.dot_dimension_numbers<[1], [0], [0], [1], [0, 0, 1, 1], [], []>} : vector<8x32xf32>, vector<32x32xf32>, vector<8x32xf32> -> vector<8x32xf32>
    %200 = vector.extract_strided_slice %0 {offsets = [0, 2], sizes = [8, 1], strides = [1, 1]} : vector<8x8xf32> to vector<8x1xf32>
    %201 = vector.extract_strided_slice %6 {offsets = [16, 0], sizes = [8, 128], strides = [1, 1]} : vector<64x128xf32> to vector<8x128xf32>
    %cst_49 = arith.constant dense<0.000000e+00> : vector<8x128xf32>
    %202 = tpu.matmul %143, %7, %cst_49 {dimension_numbers = #tpu.dot_dimension_numbers<[1], [0], [0], [1], [0, 0, 1, 1], [], []>} : vector<8x32xf32>, vector<32x128xf32>, vector<8x128xf32> -> vector<8x128xf32>
    %203 = arith.addf %201, %202 : vector<8x128xf32>
    %204 = vector.extract_strided_slice %203 {offsets = [0, 0], sizes = [8, 32], strides = [1, 1]} : vector<8x128xf32> to vector<8x32xf32>
    %205 = arith.negf %204 : vector<8x32xf32>
    %206 = math.exp %205 : vector<8x32xf32>
    %cst_50 = arith.constant 1.000000e+00 : f32
    %207 = vector.broadcast %cst_50 : f32 to vector<8x32xf32>
    %208 = arith.addf %207, %206 : vector<8x32xf32>
    %209 = arith.divf %207, %208 : vector<8x32xf32>
    %210 = vector.extract_strided_slice %203 {offsets = [0, 32], sizes = [8, 32], strides = [1, 1]} : vector<8x128xf32> to vector<8x32xf32>
    %211 = arith.negf %210 : vector<8x32xf32>
    %212 = math.exp %211 : vector<8x32xf32>
    %cst_51 = arith.constant 1.000000e+00 : f32
    %213 = vector.broadcast %cst_51 : f32 to vector<8x32xf32>
    %214 = arith.addf %213, %212 : vector<8x32xf32>
    %215 = arith.divf %213, %214 : vector<8x32xf32>
    %216 = vector.extract_strided_slice %203 {offsets = [0, 64], sizes = [8, 32], strides = [1, 1]} : vector<8x128xf32> to vector<8x32xf32>
    %217 = math.tanh %216 : vector<8x32xf32>
    %218 = vector.extract_strided_slice %203 {offsets = [0, 96], sizes = [8, 32], strides = [1, 1]} : vector<8x128xf32> to vector<8x32xf32>
    %219 = arith.negf %218 : vector<8x32xf32>
    %220 = math.exp %219 : vector<8x32xf32>
    %cst_52 = arith.constant 1.000000e+00 : f32
    %221 = vector.broadcast %cst_52 : f32 to vector<8x32xf32>
    %222 = arith.addf %221, %220 : vector<8x32xf32>
    %223 = arith.divf %221, %222 : vector<8x32xf32>
    %224 = arith.mulf %215, %150 : vector<8x32xf32>
    %225 = arith.mulf %209, %217 : vector<8x32xf32>
    %226 = arith.addf %224, %225 : vector<8x32xf32>
    %227 = math.tanh %226 : vector<8x32xf32>
    %228 = arith.mulf %223, %227 : vector<8x32xf32>
    %229 = vector.broadcast %200 : vector<8x1xf32> to vector<8x32xf32>
    %230 = arith.mulf %229, %228 : vector<8x32xf32>
    %cst_53 = arith.constant 1.000000e+00 : f32
    %231 = vector.broadcast %cst_53 : f32 to vector<8x1xf32>
    %232 = arith.subf %231, %200 : vector<8x1xf32>
    %233 = vector.broadcast %232 : vector<8x1xf32> to vector<8x32xf32>
    %234 = arith.mulf %233, %143 : vector<8x32xf32>
    %235 = arith.addf %230, %234 : vector<8x32xf32>
    %236 = vector.broadcast %200 : vector<8x1xf32> to vector<8x32xf32>
    %237 = arith.mulf %236, %226 : vector<8x32xf32>
    %cst_54 = arith.constant 1.000000e+00 : f32
    %238 = vector.broadcast %cst_54 : f32 to vector<8x1xf32>
    %239 = arith.subf %238, %200 : vector<8x1xf32>
    %240 = vector.broadcast %239 : vector<8x1xf32> to vector<8x32xf32>
    %241 = arith.mulf %240, %150 : vector<8x32xf32>
    %242 = arith.addf %237, %241 : vector<8x32xf32>
    %243 = vector.broadcast %200 : vector<8x1xf32> to vector<8x32xf32>
    %244 = arith.mulf %243, %228 : vector<8x32xf32>
    %cst_55 = arith.constant dense<0.000000e+00> : vector<8x128xf32>
    %245 = tpu.matmul %244, %8, %cst_55 {dimension_numbers = #tpu.dot_dimension_numbers<[1], [0], [0], [1], [0, 0, 1, 1], [], []>} : vector<8x32xf32>, vector<32x128xf32>, vector<8x128xf32> -> vector<8x128xf32>
    %cst_56 = arith.constant dense<0.000000e+00> : vector<8x128xf32>
    %246 = tpu.matmul %189, %9, %cst_56 {dimension_numbers = #tpu.dot_dimension_numbers<[1], [0], [0], [1], [0, 0, 1, 1], [], []>} : vector<8x32xf32>, vector<32x128xf32>, vector<8x128xf32> -> vector<8x128xf32>
    %247 = arith.addf %245, %246 : vector<8x128xf32>
    %248 = vector.broadcast %10 : vector<1x128xf32> to vector<8x128xf32>
    %249 = arith.addf %247, %248 : vector<8x128xf32>
    %250 = vector.extract_strided_slice %249 {offsets = [0, 0], sizes = [8, 32], strides = [1, 1]} : vector<8x128xf32> to vector<8x32xf32>
    %251 = arith.negf %250 : vector<8x32xf32>
    %252 = math.exp %251 : vector<8x32xf32>
    %cst_57 = arith.constant 1.000000e+00 : f32
    %253 = vector.broadcast %cst_57 : f32 to vector<8x32xf32>
    %254 = arith.addf %253, %252 : vector<8x32xf32>
    %255 = arith.divf %253, %254 : vector<8x32xf32>
    %256 = vector.extract_strided_slice %249 {offsets = [0, 32], sizes = [8, 32], strides = [1, 1]} : vector<8x128xf32> to vector<8x32xf32>
    %257 = arith.negf %256 : vector<8x32xf32>
    %258 = math.exp %257 : vector<8x32xf32>
    %cst_58 = arith.constant 1.000000e+00 : f32
    %259 = vector.broadcast %cst_58 : f32 to vector<8x32xf32>
    %260 = arith.addf %259, %258 : vector<8x32xf32>
    %261 = arith.divf %259, %260 : vector<8x32xf32>
    %262 = vector.extract_strided_slice %249 {offsets = [0, 64], sizes = [8, 32], strides = [1, 1]} : vector<8x128xf32> to vector<8x32xf32>
    %263 = math.tanh %262 : vector<8x32xf32>
    %264 = vector.extract_strided_slice %249 {offsets = [0, 96], sizes = [8, 32], strides = [1, 1]} : vector<8x128xf32> to vector<8x32xf32>
    %265 = arith.negf %264 : vector<8x32xf32>
    %266 = math.exp %265 : vector<8x32xf32>
    %cst_59 = arith.constant 1.000000e+00 : f32
    %267 = vector.broadcast %cst_59 : f32 to vector<8x32xf32>
    %268 = arith.addf %267, %266 : vector<8x32xf32>
    %269 = arith.divf %267, %268 : vector<8x32xf32>
    %270 = arith.mulf %261, %196 : vector<8x32xf32>
    %271 = arith.mulf %255, %263 : vector<8x32xf32>
    %272 = arith.addf %270, %271 : vector<8x32xf32>
    %273 = math.tanh %272 : vector<8x32xf32>
    %274 = arith.mulf %269, %273 : vector<8x32xf32>
    %275 = vector.broadcast %200 : vector<8x1xf32> to vector<8x32xf32>
    %276 = arith.mulf %275, %274 : vector<8x32xf32>
    %cst_60 = arith.constant 1.000000e+00 : f32
    %277 = vector.broadcast %cst_60 : f32 to vector<8x1xf32>
    %278 = arith.subf %277, %200 : vector<8x1xf32>
    %279 = vector.broadcast %278 : vector<8x1xf32> to vector<8x32xf32>
    %280 = arith.mulf %279, %189 : vector<8x32xf32>
    %281 = arith.addf %276, %280 : vector<8x32xf32>
    %282 = vector.broadcast %200 : vector<8x1xf32> to vector<8x32xf32>
    %283 = arith.mulf %282, %272 : vector<8x32xf32>
    %cst_61 = arith.constant 1.000000e+00 : f32
    %284 = vector.broadcast %cst_61 : f32 to vector<8x1xf32>
    %285 = arith.subf %284, %200 : vector<8x1xf32>
    %286 = vector.broadcast %285 : vector<8x1xf32> to vector<8x32xf32>
    %287 = arith.mulf %286, %196 : vector<8x32xf32>
    %288 = arith.addf %283, %287 : vector<8x32xf32>
    %289 = vector.broadcast %200 : vector<8x1xf32> to vector<8x32xf32>
    %290 = arith.mulf %289, %274 : vector<8x32xf32>
    %cst_62 = arith.constant dense<0.000000e+00> : vector<8x32xf32>
    %291 = tpu.matmul %290, %11, %cst_62 {dimension_numbers = #tpu.dot_dimension_numbers<[1], [0], [0], [1], [0, 0, 1, 1], [], []>} : vector<8x32xf32>, vector<32x32xf32>, vector<8x32xf32> -> vector<8x32xf32>
    %292 = vector.extract_strided_slice %0 {offsets = [0, 3], sizes = [8, 1], strides = [1, 1]} : vector<8x8xf32> to vector<8x1xf32>
    %293 = vector.extract_strided_slice %6 {offsets = [24, 0], sizes = [8, 128], strides = [1, 1]} : vector<64x128xf32> to vector<8x128xf32>
    %cst_63 = arith.constant dense<0.000000e+00> : vector<8x128xf32>
    %294 = tpu.matmul %235, %7, %cst_63 {dimension_numbers = #tpu.dot_dimension_numbers<[1], [0], [0], [1], [0, 0, 1, 1], [], []>} : vector<8x32xf32>, vector<32x128xf32>, vector<8x128xf32> -> vector<8x128xf32>
    %295 = arith.addf %293, %294 : vector<8x128xf32>
    %296 = vector.extract_strided_slice %295 {offsets = [0, 0], sizes = [8, 32], strides = [1, 1]} : vector<8x128xf32> to vector<8x32xf32>
    %297 = arith.negf %296 : vector<8x32xf32>
    %298 = math.exp %297 : vector<8x32xf32>
    %cst_64 = arith.constant 1.000000e+00 : f32
    %299 = vector.broadcast %cst_64 : f32 to vector<8x32xf32>
    %300 = arith.addf %299, %298 : vector<8x32xf32>
    %301 = arith.divf %299, %300 : vector<8x32xf32>
    %302 = vector.extract_strided_slice %295 {offsets = [0, 32], sizes = [8, 32], strides = [1, 1]} : vector<8x128xf32> to vector<8x32xf32>
    %303 = arith.negf %302 : vector<8x32xf32>
    %304 = math.exp %303 : vector<8x32xf32>
    %cst_65 = arith.constant 1.000000e+00 : f32
    %305 = vector.broadcast %cst_65 : f32 to vector<8x32xf32>
    %306 = arith.addf %305, %304 : vector<8x32xf32>
    %307 = arith.divf %305, %306 : vector<8x32xf32>
    %308 = vector.extract_strided_slice %295 {offsets = [0, 64], sizes = [8, 32], strides = [1, 1]} : vector<8x128xf32> to vector<8x32xf32>
    %309 = math.tanh %308 : vector<8x32xf32>
    %310 = vector.extract_strided_slice %295 {offsets = [0, 96], sizes = [8, 32], strides = [1, 1]} : vector<8x128xf32> to vector<8x32xf32>
    %311 = arith.negf %310 : vector<8x32xf32>
    %312 = math.exp %311 : vector<8x32xf32>
    %cst_66 = arith.constant 1.000000e+00 : f32
    %313 = vector.broadcast %cst_66 : f32 to vector<8x32xf32>
    %314 = arith.addf %313, %312 : vector<8x32xf32>
    %315 = arith.divf %313, %314 : vector<8x32xf32>
    %316 = arith.mulf %307, %242 : vector<8x32xf32>
    %317 = arith.mulf %301, %309 : vector<8x32xf32>
    %318 = arith.addf %316, %317 : vector<8x32xf32>
    %319 = math.tanh %318 : vector<8x32xf32>
    %320 = arith.mulf %315, %319 : vector<8x32xf32>
    %321 = vector.broadcast %292 : vector<8x1xf32> to vector<8x32xf32>
    %322 = arith.mulf %321, %320 : vector<8x32xf32>
    %cst_67 = arith.constant 1.000000e+00 : f32
    %323 = vector.broadcast %cst_67 : f32 to vector<8x1xf32>
    %324 = arith.subf %323, %292 : vector<8x1xf32>
    %325 = vector.broadcast %324 : vector<8x1xf32> to vector<8x32xf32>
    %326 = arith.mulf %325, %235 : vector<8x32xf32>
    %327 = arith.addf %322, %326 : vector<8x32xf32>
    %328 = vector.broadcast %292 : vector<8x1xf32> to vector<8x32xf32>
    %329 = arith.mulf %328, %318 : vector<8x32xf32>
    %cst_68 = arith.constant 1.000000e+00 : f32
    %330 = vector.broadcast %cst_68 : f32 to vector<8x1xf32>
    %331 = arith.subf %330, %292 : vector<8x1xf32>
    %332 = vector.broadcast %331 : vector<8x1xf32> to vector<8x32xf32>
    %333 = arith.mulf %332, %242 : vector<8x32xf32>
    %334 = arith.addf %329, %333 : vector<8x32xf32>
    %335 = vector.broadcast %292 : vector<8x1xf32> to vector<8x32xf32>
    %336 = arith.mulf %335, %320 : vector<8x32xf32>
    %cst_69 = arith.constant dense<0.000000e+00> : vector<8x128xf32>
    %337 = tpu.matmul %336, %8, %cst_69 {dimension_numbers = #tpu.dot_dimension_numbers<[1], [0], [0], [1], [0, 0, 1, 1], [], []>} : vector<8x32xf32>, vector<32x128xf32>, vector<8x128xf32> -> vector<8x128xf32>
    %cst_70 = arith.constant dense<0.000000e+00> : vector<8x128xf32>
    %338 = tpu.matmul %281, %9, %cst_70 {dimension_numbers = #tpu.dot_dimension_numbers<[1], [0], [0], [1], [0, 0, 1, 1], [], []>} : vector<8x32xf32>, vector<32x128xf32>, vector<8x128xf32> -> vector<8x128xf32>
    %339 = arith.addf %337, %338 : vector<8x128xf32>
    %340 = vector.broadcast %10 : vector<1x128xf32> to vector<8x128xf32>
    %341 = arith.addf %339, %340 : vector<8x128xf32>
    %342 = vector.extract_strided_slice %341 {offsets = [0, 0], sizes = [8, 32], strides = [1, 1]} : vector<8x128xf32> to vector<8x32xf32>
    %343 = arith.negf %342 : vector<8x32xf32>
    %344 = math.exp %343 : vector<8x32xf32>
    %cst_71 = arith.constant 1.000000e+00 : f32
    %345 = vector.broadcast %cst_71 : f32 to vector<8x32xf32>
    %346 = arith.addf %345, %344 : vector<8x32xf32>
    %347 = arith.divf %345, %346 : vector<8x32xf32>
    %348 = vector.extract_strided_slice %341 {offsets = [0, 32], sizes = [8, 32], strides = [1, 1]} : vector<8x128xf32> to vector<8x32xf32>
    %349 = arith.negf %348 : vector<8x32xf32>
    %350 = math.exp %349 : vector<8x32xf32>
    %cst_72 = arith.constant 1.000000e+00 : f32
    %351 = vector.broadcast %cst_72 : f32 to vector<8x32xf32>
    %352 = arith.addf %351, %350 : vector<8x32xf32>
    %353 = arith.divf %351, %352 : vector<8x32xf32>
    %354 = vector.extract_strided_slice %341 {offsets = [0, 64], sizes = [8, 32], strides = [1, 1]} : vector<8x128xf32> to vector<8x32xf32>
    %355 = math.tanh %354 : vector<8x32xf32>
    %356 = vector.extract_strided_slice %341 {offsets = [0, 96], sizes = [8, 32], strides = [1, 1]} : vector<8x128xf32> to vector<8x32xf32>
    %357 = arith.negf %356 : vector<8x32xf32>
    %358 = math.exp %357 : vector<8x32xf32>
    %cst_73 = arith.constant 1.000000e+00 : f32
    %359 = vector.broadcast %cst_73 : f32 to vector<8x32xf32>
    %360 = arith.addf %359, %358 : vector<8x32xf32>
    %361 = arith.divf %359, %360 : vector<8x32xf32>
    %362 = arith.mulf %353, %288 : vector<8x32xf32>
    %363 = arith.mulf %347, %355 : vector<8x32xf32>
    %364 = arith.addf %362, %363 : vector<8x32xf32>
    %365 = math.tanh %364 : vector<8x32xf32>
    %366 = arith.mulf %361, %365 : vector<8x32xf32>
    %367 = vector.broadcast %292 : vector<8x1xf32> to vector<8x32xf32>
    %368 = arith.mulf %367, %366 : vector<8x32xf32>
    %cst_74 = arith.constant 1.000000e+00 : f32
    %369 = vector.broadcast %cst_74 : f32 to vector<8x1xf32>
    %370 = arith.subf %369, %292 : vector<8x1xf32>
    %371 = vector.broadcast %370 : vector<8x1xf32> to vector<8x32xf32>
    %372 = arith.mulf %371, %281 : vector<8x32xf32>
    %373 = arith.addf %368, %372 : vector<8x32xf32>
    %374 = vector.broadcast %292 : vector<8x1xf32> to vector<8x32xf32>
    %375 = arith.mulf %374, %364 : vector<8x32xf32>
    %cst_75 = arith.constant 1.000000e+00 : f32
    %376 = vector.broadcast %cst_75 : f32 to vector<8x1xf32>
    %377 = arith.subf %376, %292 : vector<8x1xf32>
    %378 = vector.broadcast %377 : vector<8x1xf32> to vector<8x32xf32>
    %379 = arith.mulf %378, %288 : vector<8x32xf32>
    %380 = arith.addf %375, %379 : vector<8x32xf32>
    %381 = vector.broadcast %292 : vector<8x1xf32> to vector<8x32xf32>
    %382 = arith.mulf %381, %366 : vector<8x32xf32>
    %cst_76 = arith.constant dense<0.000000e+00> : vector<8x32xf32>
    %383 = tpu.matmul %382, %11, %cst_76 {dimension_numbers = #tpu.dot_dimension_numbers<[1], [0], [0], [1], [0, 0, 1, 1], [], []>} : vector<8x32xf32>, vector<32x32xf32>, vector<8x32xf32> -> vector<8x32xf32>
    %384 = vector.extract_strided_slice %0 {offsets = [0, 4], sizes = [8, 1], strides = [1, 1]} : vector<8x8xf32> to vector<8x1xf32>
    %385 = vector.extract_strided_slice %6 {offsets = [32, 0], sizes = [8, 128], strides = [1, 1]} : vector<64x128xf32> to vector<8x128xf32>
    %cst_77 = arith.constant dense<0.000000e+00> : vector<8x128xf32>
    %386 = tpu.matmul %327, %7, %cst_77 {dimension_numbers = #tpu.dot_dimension_numbers<[1], [0], [0], [1], [0, 0, 1, 1], [], []>} : vector<8x32xf32>, vector<32x128xf32>, vector<8x128xf32> -> vector<8x128xf32>
    %387 = arith.addf %385, %386 : vector<8x128xf32>
    %388 = vector.extract_strided_slice %387 {offsets = [0, 0], sizes = [8, 32], strides = [1, 1]} : vector<8x128xf32> to vector<8x32xf32>
    %389 = arith.negf %388 : vector<8x32xf32>
    %390 = math.exp %389 : vector<8x32xf32>
    %cst_78 = arith.constant 1.000000e+00 : f32
    %391 = vector.broadcast %cst_78 : f32 to vector<8x32xf32>
    %392 = arith.addf %391, %390 : vector<8x32xf32>
    %393 = arith.divf %391, %392 : vector<8x32xf32>
    %394 = vector.extract_strided_slice %387 {offsets = [0, 32], sizes = [8, 32], strides = [1, 1]} : vector<8x128xf32> to vector<8x32xf32>
    %395 = arith.negf %394 : vector<8x32xf32>
    %396 = math.exp %395 : vector<8x32xf32>
    %cst_79 = arith.constant 1.000000e+00 : f32
    %397 = vector.broadcast %cst_79 : f32 to vector<8x32xf32>
    %398 = arith.addf %397, %396 : vector<8x32xf32>
    %399 = arith.divf %397, %398 : vector<8x32xf32>
    %400 = vector.extract_strided_slice %387 {offsets = [0, 64], sizes = [8, 32], strides = [1, 1]} : vector<8x128xf32> to vector<8x32xf32>
    %401 = math.tanh %400 : vector<8x32xf32>
    %402 = vector.extract_strided_slice %387 {offsets = [0, 96], sizes = [8, 32], strides = [1, 1]} : vector<8x128xf32> to vector<8x32xf32>
    %403 = arith.negf %402 : vector<8x32xf32>
    %404 = math.exp %403 : vector<8x32xf32>
    %cst_80 = arith.constant 1.000000e+00 : f32
    %405 = vector.broadcast %cst_80 : f32 to vector<8x32xf32>
    %406 = arith.addf %405, %404 : vector<8x32xf32>
    %407 = arith.divf %405, %406 : vector<8x32xf32>
    %408 = arith.mulf %399, %334 : vector<8x32xf32>
    %409 = arith.mulf %393, %401 : vector<8x32xf32>
    %410 = arith.addf %408, %409 : vector<8x32xf32>
    %411 = math.tanh %410 : vector<8x32xf32>
    %412 = arith.mulf %407, %411 : vector<8x32xf32>
    %413 = vector.broadcast %384 : vector<8x1xf32> to vector<8x32xf32>
    %414 = arith.mulf %413, %412 : vector<8x32xf32>
    %cst_81 = arith.constant 1.000000e+00 : f32
    %415 = vector.broadcast %cst_81 : f32 to vector<8x1xf32>
    %416 = arith.subf %415, %384 : vector<8x1xf32>
    %417 = vector.broadcast %416 : vector<8x1xf32> to vector<8x32xf32>
    %418 = arith.mulf %417, %327 : vector<8x32xf32>
    %419 = arith.addf %414, %418 : vector<8x32xf32>
    %420 = vector.broadcast %384 : vector<8x1xf32> to vector<8x32xf32>
    %421 = arith.mulf %420, %410 : vector<8x32xf32>
    %cst_82 = arith.constant 1.000000e+00 : f32
    %422 = vector.broadcast %cst_82 : f32 to vector<8x1xf32>
    %423 = arith.subf %422, %384 : vector<8x1xf32>
    %424 = vector.broadcast %423 : vector<8x1xf32> to vector<8x32xf32>
    %425 = arith.mulf %424, %334 : vector<8x32xf32>
    %426 = arith.addf %421, %425 : vector<8x32xf32>
    %427 = vector.broadcast %384 : vector<8x1xf32> to vector<8x32xf32>
    %428 = arith.mulf %427, %412 : vector<8x32xf32>
    %cst_83 = arith.constant dense<0.000000e+00> : vector<8x128xf32>
    %429 = tpu.matmul %428, %8, %cst_83 {dimension_numbers = #tpu.dot_dimension_numbers<[1], [0], [0], [1], [0, 0, 1, 1], [], []>} : vector<8x32xf32>, vector<32x128xf32>, vector<8x128xf32> -> vector<8x128xf32>
    %cst_84 = arith.constant dense<0.000000e+00> : vector<8x128xf32>
    %430 = tpu.matmul %373, %9, %cst_84 {dimension_numbers = #tpu.dot_dimension_numbers<[1], [0], [0], [1], [0, 0, 1, 1], [], []>} : vector<8x32xf32>, vector<32x128xf32>, vector<8x128xf32> -> vector<8x128xf32>
    %431 = arith.addf %429, %430 : vector<8x128xf32>
    %432 = vector.broadcast %10 : vector<1x128xf32> to vector<8x128xf32>
    %433 = arith.addf %431, %432 : vector<8x128xf32>
    %434 = vector.extract_strided_slice %433 {offsets = [0, 0], sizes = [8, 32], strides = [1, 1]} : vector<8x128xf32> to vector<8x32xf32>
    %435 = arith.negf %434 : vector<8x32xf32>
    %436 = math.exp %435 : vector<8x32xf32>
    %cst_85 = arith.constant 1.000000e+00 : f32
    %437 = vector.broadcast %cst_85 : f32 to vector<8x32xf32>
    %438 = arith.addf %437, %436 : vector<8x32xf32>
    %439 = arith.divf %437, %438 : vector<8x32xf32>
    %440 = vector.extract_strided_slice %433 {offsets = [0, 32], sizes = [8, 32], strides = [1, 1]} : vector<8x128xf32> to vector<8x32xf32>
    %441 = arith.negf %440 : vector<8x32xf32>
    %442 = math.exp %441 : vector<8x32xf32>
    %cst_86 = arith.constant 1.000000e+00 : f32
    %443 = vector.broadcast %cst_86 : f32 to vector<8x32xf32>
    %444 = arith.addf %443, %442 : vector<8x32xf32>
    %445 = arith.divf %443, %444 : vector<8x32xf32>
    %446 = vector.extract_strided_slice %433 {offsets = [0, 64], sizes = [8, 32], strides = [1, 1]} : vector<8x128xf32> to vector<8x32xf32>
    %447 = math.tanh %446 : vector<8x32xf32>
    %448 = vector.extract_strided_slice %433 {offsets = [0, 96], sizes = [8, 32], strides = [1, 1]} : vector<8x128xf32> to vector<8x32xf32>
    %449 = arith.negf %448 : vector<8x32xf32>
    %450 = math.exp %449 : vector<8x32xf32>
    %cst_87 = arith.constant 1.000000e+00 : f32
    %451 = vector.broadcast %cst_87 : f32 to vector<8x32xf32>
    %452 = arith.addf %451, %450 : vector<8x32xf32>
    %453 = arith.divf %451, %452 : vector<8x32xf32>
    %454 = arith.mulf %445, %380 : vector<8x32xf32>
    %455 = arith.mulf %439, %447 : vector<8x32xf32>
    %456 = arith.addf %454, %455 : vector<8x32xf32>
    %457 = math.tanh %456 : vector<8x32xf32>
    %458 = arith.mulf %453, %457 : vector<8x32xf32>
    %459 = vector.broadcast %384 : vector<8x1xf32> to vector<8x32xf32>
    %460 = arith.mulf %459, %458 : vector<8x32xf32>
    %cst_88 = arith.constant 1.000000e+00 : f32
    %461 = vector.broadcast %cst_88 : f32 to vector<8x1xf32>
    %462 = arith.subf %461, %384 : vector<8x1xf32>
    %463 = vector.broadcast %462 : vector<8x1xf32> to vector<8x32xf32>
    %464 = arith.mulf %463, %373 : vector<8x32xf32>
    %465 = arith.addf %460, %464 : vector<8x32xf32>
    %466 = vector.broadcast %384 : vector<8x1xf32> to vector<8x32xf32>
    %467 = arith.mulf %466, %456 : vector<8x32xf32>
    %cst_89 = arith.constant 1.000000e+00 : f32
    %468 = vector.broadcast %cst_89 : f32 to vector<8x1xf32>
    %469 = arith.subf %468, %384 : vector<8x1xf32>
    %470 = vector.broadcast %469 : vector<8x1xf32> to vector<8x32xf32>
    %471 = arith.mulf %470, %380 : vector<8x32xf32>
    %472 = arith.addf %467, %471 : vector<8x32xf32>
    %473 = vector.broadcast %384 : vector<8x1xf32> to vector<8x32xf32>
    %474 = arith.mulf %473, %458 : vector<8x32xf32>
    %cst_90 = arith.constant dense<0.000000e+00> : vector<8x32xf32>
    %475 = tpu.matmul %474, %11, %cst_90 {dimension_numbers = #tpu.dot_dimension_numbers<[1], [0], [0], [1], [0, 0, 1, 1], [], []>} : vector<8x32xf32>, vector<32x32xf32>, vector<8x32xf32> -> vector<8x32xf32>
    %476 = vector.extract_strided_slice %0 {offsets = [0, 5], sizes = [8, 1], strides = [1, 1]} : vector<8x8xf32> to vector<8x1xf32>
    %477 = vector.extract_strided_slice %6 {offsets = [40, 0], sizes = [8, 128], strides = [1, 1]} : vector<64x128xf32> to vector<8x128xf32>
    %cst_91 = arith.constant dense<0.000000e+00> : vector<8x128xf32>
    %478 = tpu.matmul %419, %7, %cst_91 {dimension_numbers = #tpu.dot_dimension_numbers<[1], [0], [0], [1], [0, 0, 1, 1], [], []>} : vector<8x32xf32>, vector<32x128xf32>, vector<8x128xf32> -> vector<8x128xf32>
    %479 = arith.addf %477, %478 : vector<8x128xf32>
    %480 = vector.extract_strided_slice %479 {offsets = [0, 0], sizes = [8, 32], strides = [1, 1]} : vector<8x128xf32> to vector<8x32xf32>
    %481 = arith.negf %480 : vector<8x32xf32>
    %482 = math.exp %481 : vector<8x32xf32>
    %cst_92 = arith.constant 1.000000e+00 : f32
    %483 = vector.broadcast %cst_92 : f32 to vector<8x32xf32>
    %484 = arith.addf %483, %482 : vector<8x32xf32>
    %485 = arith.divf %483, %484 : vector<8x32xf32>
    %486 = vector.extract_strided_slice %479 {offsets = [0, 32], sizes = [8, 32], strides = [1, 1]} : vector<8x128xf32> to vector<8x32xf32>
    %487 = arith.negf %486 : vector<8x32xf32>
    %488 = math.exp %487 : vector<8x32xf32>
    %cst_93 = arith.constant 1.000000e+00 : f32
    %489 = vector.broadcast %cst_93 : f32 to vector<8x32xf32>
    %490 = arith.addf %489, %488 : vector<8x32xf32>
    %491 = arith.divf %489, %490 : vector<8x32xf32>
    %492 = vector.extract_strided_slice %479 {offsets = [0, 64], sizes = [8, 32], strides = [1, 1]} : vector<8x128xf32> to vector<8x32xf32>
    %493 = math.tanh %492 : vector<8x32xf32>
    %494 = vector.extract_strided_slice %479 {offsets = [0, 96], sizes = [8, 32], strides = [1, 1]} : vector<8x128xf32> to vector<8x32xf32>
    %495 = arith.negf %494 : vector<8x32xf32>
    %496 = math.exp %495 : vector<8x32xf32>
    %cst_94 = arith.constant 1.000000e+00 : f32
    %497 = vector.broadcast %cst_94 : f32 to vector<8x32xf32>
    %498 = arith.addf %497, %496 : vector<8x32xf32>
    %499 = arith.divf %497, %498 : vector<8x32xf32>
    %500 = arith.mulf %491, %426 : vector<8x32xf32>
    %501 = arith.mulf %485, %493 : vector<8x32xf32>
    %502 = arith.addf %500, %501 : vector<8x32xf32>
    %503 = math.tanh %502 : vector<8x32xf32>
    %504 = arith.mulf %499, %503 : vector<8x32xf32>
    %505 = vector.broadcast %476 : vector<8x1xf32> to vector<8x32xf32>
    %506 = arith.mulf %505, %504 : vector<8x32xf32>
    %cst_95 = arith.constant 1.000000e+00 : f32
    %507 = vector.broadcast %cst_95 : f32 to vector<8x1xf32>
    %508 = arith.subf %507, %476 : vector<8x1xf32>
    %509 = vector.broadcast %508 : vector<8x1xf32> to vector<8x32xf32>
    %510 = arith.mulf %509, %419 : vector<8x32xf32>
    %511 = arith.addf %506, %510 : vector<8x32xf32>
    %512 = vector.broadcast %476 : vector<8x1xf32> to vector<8x32xf32>
    %513 = arith.mulf %512, %502 : vector<8x32xf32>
    %cst_96 = arith.constant 1.000000e+00 : f32
    %514 = vector.broadcast %cst_96 : f32 to vector<8x1xf32>
    %515 = arith.subf %514, %476 : vector<8x1xf32>
    %516 = vector.broadcast %515 : vector<8x1xf32> to vector<8x32xf32>
    %517 = arith.mulf %516, %426 : vector<8x32xf32>
    %518 = arith.addf %513, %517 : vector<8x32xf32>
    %519 = vector.broadcast %476 : vector<8x1xf32> to vector<8x32xf32>
    %520 = arith.mulf %519, %504 : vector<8x32xf32>
    %cst_97 = arith.constant dense<0.000000e+00> : vector<8x128xf32>
    %521 = tpu.matmul %520, %8, %cst_97 {dimension_numbers = #tpu.dot_dimension_numbers<[1], [0], [0], [1], [0, 0, 1, 1], [], []>} : vector<8x32xf32>, vector<32x128xf32>, vector<8x128xf32> -> vector<8x128xf32>
    %cst_98 = arith.constant dense<0.000000e+00> : vector<8x128xf32>
    %522 = tpu.matmul %465, %9, %cst_98 {dimension_numbers = #tpu.dot_dimension_numbers<[1], [0], [0], [1], [0, 0, 1, 1], [], []>} : vector<8x32xf32>, vector<32x128xf32>, vector<8x128xf32> -> vector<8x128xf32>
    %523 = arith.addf %521, %522 : vector<8x128xf32>
    %524 = vector.broadcast %10 : vector<1x128xf32> to vector<8x128xf32>
    %525 = arith.addf %523, %524 : vector<8x128xf32>
    %526 = vector.extract_strided_slice %525 {offsets = [0, 0], sizes = [8, 32], strides = [1, 1]} : vector<8x128xf32> to vector<8x32xf32>
    %527 = arith.negf %526 : vector<8x32xf32>
    %528 = math.exp %527 : vector<8x32xf32>
    %cst_99 = arith.constant 1.000000e+00 : f32
    %529 = vector.broadcast %cst_99 : f32 to vector<8x32xf32>
    %530 = arith.addf %529, %528 : vector<8x32xf32>
    %531 = arith.divf %529, %530 : vector<8x32xf32>
    %532 = vector.extract_strided_slice %525 {offsets = [0, 32], sizes = [8, 32], strides = [1, 1]} : vector<8x128xf32> to vector<8x32xf32>
    %533 = arith.negf %532 : vector<8x32xf32>
    %534 = math.exp %533 : vector<8x32xf32>
    %cst_100 = arith.constant 1.000000e+00 : f32
    %535 = vector.broadcast %cst_100 : f32 to vector<8x32xf32>
    %536 = arith.addf %535, %534 : vector<8x32xf32>
    %537 = arith.divf %535, %536 : vector<8x32xf32>
    %538 = vector.extract_strided_slice %525 {offsets = [0, 64], sizes = [8, 32], strides = [1, 1]} : vector<8x128xf32> to vector<8x32xf32>
    %539 = math.tanh %538 : vector<8x32xf32>
    %540 = vector.extract_strided_slice %525 {offsets = [0, 96], sizes = [8, 32], strides = [1, 1]} : vector<8x128xf32> to vector<8x32xf32>
    %541 = arith.negf %540 : vector<8x32xf32>
    %542 = math.exp %541 : vector<8x32xf32>
    %cst_101 = arith.constant 1.000000e+00 : f32
    %543 = vector.broadcast %cst_101 : f32 to vector<8x32xf32>
    %544 = arith.addf %543, %542 : vector<8x32xf32>
    %545 = arith.divf %543, %544 : vector<8x32xf32>
    %546 = arith.mulf %537, %472 : vector<8x32xf32>
    %547 = arith.mulf %531, %539 : vector<8x32xf32>
    %548 = arith.addf %546, %547 : vector<8x32xf32>
    %549 = math.tanh %548 : vector<8x32xf32>
    %550 = arith.mulf %545, %549 : vector<8x32xf32>
    %551 = vector.broadcast %476 : vector<8x1xf32> to vector<8x32xf32>
    %552 = arith.mulf %551, %550 : vector<8x32xf32>
    %cst_102 = arith.constant 1.000000e+00 : f32
    %553 = vector.broadcast %cst_102 : f32 to vector<8x1xf32>
    %554 = arith.subf %553, %476 : vector<8x1xf32>
    %555 = vector.broadcast %554 : vector<8x1xf32> to vector<8x32xf32>
    %556 = arith.mulf %555, %465 : vector<8x32xf32>
    %557 = arith.addf %552, %556 : vector<8x32xf32>
    %558 = vector.broadcast %476 : vector<8x1xf32> to vector<8x32xf32>
    %559 = arith.mulf %558, %548 : vector<8x32xf32>
    %cst_103 = arith.constant 1.000000e+00 : f32
    %560 = vector.broadcast %cst_103 : f32 to vector<8x1xf32>
    %561 = arith.subf %560, %476 : vector<8x1xf32>
    %562 = vector.broadcast %561 : vector<8x1xf32> to vector<8x32xf32>
    %563 = arith.mulf %562, %472 : vector<8x32xf32>
    %564 = arith.addf %559, %563 : vector<8x32xf32>
    %565 = vector.broadcast %476 : vector<8x1xf32> to vector<8x32xf32>
    %566 = arith.mulf %565, %550 : vector<8x32xf32>
    %cst_104 = arith.constant dense<0.000000e+00> : vector<8x32xf32>
    %567 = tpu.matmul %566, %11, %cst_104 {dimension_numbers = #tpu.dot_dimension_numbers<[1], [0], [0], [1], [0, 0, 1, 1], [], []>} : vector<8x32xf32>, vector<32x32xf32>, vector<8x32xf32> -> vector<8x32xf32>
    %568 = vector.extract_strided_slice %0 {offsets = [0, 6], sizes = [8, 1], strides = [1, 1]} : vector<8x8xf32> to vector<8x1xf32>
    %569 = vector.extract_strided_slice %6 {offsets = [48, 0], sizes = [8, 128], strides = [1, 1]} : vector<64x128xf32> to vector<8x128xf32>
    %cst_105 = arith.constant dense<0.000000e+00> : vector<8x128xf32>
    %570 = tpu.matmul %511, %7, %cst_105 {dimension_numbers = #tpu.dot_dimension_numbers<[1], [0], [0], [1], [0, 0, 1, 1], [], []>} : vector<8x32xf32>, vector<32x128xf32>, vector<8x128xf32> -> vector<8x128xf32>
    %571 = arith.addf %569, %570 : vector<8x128xf32>
    %572 = vector.extract_strided_slice %571 {offsets = [0, 0], sizes = [8, 32], strides = [1, 1]} : vector<8x128xf32> to vector<8x32xf32>
    %573 = arith.negf %572 : vector<8x32xf32>
    %574 = math.exp %573 : vector<8x32xf32>
    %cst_106 = arith.constant 1.000000e+00 : f32
    %575 = vector.broadcast %cst_106 : f32 to vector<8x32xf32>
    %576 = arith.addf %575, %574 : vector<8x32xf32>
    %577 = arith.divf %575, %576 : vector<8x32xf32>
    %578 = vector.extract_strided_slice %571 {offsets = [0, 32], sizes = [8, 32], strides = [1, 1]} : vector<8x128xf32> to vector<8x32xf32>
    %579 = arith.negf %578 : vector<8x32xf32>
    %580 = math.exp %579 : vector<8x32xf32>
    %cst_107 = arith.constant 1.000000e+00 : f32
    %581 = vector.broadcast %cst_107 : f32 to vector<8x32xf32>
    %582 = arith.addf %581, %580 : vector<8x32xf32>
    %583 = arith.divf %581, %582 : vector<8x32xf32>
    %584 = vector.extract_strided_slice %571 {offsets = [0, 64], sizes = [8, 32], strides = [1, 1]} : vector<8x128xf32> to vector<8x32xf32>
    %585 = math.tanh %584 : vector<8x32xf32>
    %586 = vector.extract_strided_slice %571 {offsets = [0, 96], sizes = [8, 32], strides = [1, 1]} : vector<8x128xf32> to vector<8x32xf32>
    %587 = arith.negf %586 : vector<8x32xf32>
    %588 = math.exp %587 : vector<8x32xf32>
    %cst_108 = arith.constant 1.000000e+00 : f32
    %589 = vector.broadcast %cst_108 : f32 to vector<8x32xf32>
    %590 = arith.addf %589, %588 : vector<8x32xf32>
    %591 = arith.divf %589, %590 : vector<8x32xf32>
    %592 = arith.mulf %583, %518 : vector<8x32xf32>
    %593 = arith.mulf %577, %585 : vector<8x32xf32>
    %594 = arith.addf %592, %593 : vector<8x32xf32>
    %595 = math.tanh %594 : vector<8x32xf32>
    %596 = arith.mulf %591, %595 : vector<8x32xf32>
    %597 = vector.broadcast %568 : vector<8x1xf32> to vector<8x32xf32>
    %598 = arith.mulf %597, %596 : vector<8x32xf32>
    %cst_109 = arith.constant 1.000000e+00 : f32
    %599 = vector.broadcast %cst_109 : f32 to vector<8x1xf32>
    %600 = arith.subf %599, %568 : vector<8x1xf32>
    %601 = vector.broadcast %600 : vector<8x1xf32> to vector<8x32xf32>
    %602 = arith.mulf %601, %511 : vector<8x32xf32>
    %603 = arith.addf %598, %602 : vector<8x32xf32>
    %604 = vector.broadcast %568 : vector<8x1xf32> to vector<8x32xf32>
    %605 = arith.mulf %604, %594 : vector<8x32xf32>
    %cst_110 = arith.constant 1.000000e+00 : f32
    %606 = vector.broadcast %cst_110 : f32 to vector<8x1xf32>
    %607 = arith.subf %606, %568 : vector<8x1xf32>
    %608 = vector.broadcast %607 : vector<8x1xf32> to vector<8x32xf32>
    %609 = arith.mulf %608, %518 : vector<8x32xf32>
    %610 = arith.addf %605, %609 : vector<8x32xf32>
    %611 = vector.broadcast %568 : vector<8x1xf32> to vector<8x32xf32>
    %612 = arith.mulf %611, %596 : vector<8x32xf32>
    %cst_111 = arith.constant dense<0.000000e+00> : vector<8x128xf32>
    %613 = tpu.matmul %612, %8, %cst_111 {dimension_numbers = #tpu.dot_dimension_numbers<[1], [0], [0], [1], [0, 0, 1, 1], [], []>} : vector<8x32xf32>, vector<32x128xf32>, vector<8x128xf32> -> vector<8x128xf32>
    %cst_112 = arith.constant dense<0.000000e+00> : vector<8x128xf32>
    %614 = tpu.matmul %557, %9, %cst_112 {dimension_numbers = #tpu.dot_dimension_numbers<[1], [0], [0], [1], [0, 0, 1, 1], [], []>} : vector<8x32xf32>, vector<32x128xf32>, vector<8x128xf32> -> vector<8x128xf32>
    %615 = arith.addf %613, %614 : vector<8x128xf32>
    %616 = vector.broadcast %10 : vector<1x128xf32> to vector<8x128xf32>
    %617 = arith.addf %615, %616 : vector<8x128xf32>
    %618 = vector.extract_strided_slice %617 {offsets = [0, 0], sizes = [8, 32], strides = [1, 1]} : vector<8x128xf32> to vector<8x32xf32>
    %619 = arith.negf %618 : vector<8x32xf32>
    %620 = math.exp %619 : vector<8x32xf32>
    %cst_113 = arith.constant 1.000000e+00 : f32
    %621 = vector.broadcast %cst_113 : f32 to vector<8x32xf32>
    %622 = arith.addf %621, %620 : vector<8x32xf32>
    %623 = arith.divf %621, %622 : vector<8x32xf32>
    %624 = vector.extract_strided_slice %617 {offsets = [0, 32], sizes = [8, 32], strides = [1, 1]} : vector<8x128xf32> to vector<8x32xf32>
    %625 = arith.negf %624 : vector<8x32xf32>
    %626 = math.exp %625 : vector<8x32xf32>
    %cst_114 = arith.constant 1.000000e+00 : f32
    %627 = vector.broadcast %cst_114 : f32 to vector<8x32xf32>
    %628 = arith.addf %627, %626 : vector<8x32xf32>
    %629 = arith.divf %627, %628 : vector<8x32xf32>
    %630 = vector.extract_strided_slice %617 {offsets = [0, 64], sizes = [8, 32], strides = [1, 1]} : vector<8x128xf32> to vector<8x32xf32>
    %631 = math.tanh %630 : vector<8x32xf32>
    %632 = vector.extract_strided_slice %617 {offsets = [0, 96], sizes = [8, 32], strides = [1, 1]} : vector<8x128xf32> to vector<8x32xf32>
    %633 = arith.negf %632 : vector<8x32xf32>
    %634 = math.exp %633 : vector<8x32xf32>
    %cst_115 = arith.constant 1.000000e+00 : f32
    %635 = vector.broadcast %cst_115 : f32 to vector<8x32xf32>
    %636 = arith.addf %635, %634 : vector<8x32xf32>
    %637 = arith.divf %635, %636 : vector<8x32xf32>
    %638 = arith.mulf %629, %564 : vector<8x32xf32>
    %639 = arith.mulf %623, %631 : vector<8x32xf32>
    %640 = arith.addf %638, %639 : vector<8x32xf32>
    %641 = math.tanh %640 : vector<8x32xf32>
    %642 = arith.mulf %637, %641 : vector<8x32xf32>
    %643 = vector.broadcast %568 : vector<8x1xf32> to vector<8x32xf32>
    %644 = arith.mulf %643, %642 : vector<8x32xf32>
    %cst_116 = arith.constant 1.000000e+00 : f32
    %645 = vector.broadcast %cst_116 : f32 to vector<8x1xf32>
    %646 = arith.subf %645, %568 : vector<8x1xf32>
    %647 = vector.broadcast %646 : vector<8x1xf32> to vector<8x32xf32>
    %648 = arith.mulf %647, %557 : vector<8x32xf32>
    %649 = arith.addf %644, %648 : vector<8x32xf32>
    %650 = vector.broadcast %568 : vector<8x1xf32> to vector<8x32xf32>
    %651 = arith.mulf %650, %640 : vector<8x32xf32>
    %cst_117 = arith.constant 1.000000e+00 : f32
    %652 = vector.broadcast %cst_117 : f32 to vector<8x1xf32>
    %653 = arith.subf %652, %568 : vector<8x1xf32>
    %654 = vector.broadcast %653 : vector<8x1xf32> to vector<8x32xf32>
    %655 = arith.mulf %654, %564 : vector<8x32xf32>
    %656 = arith.addf %651, %655 : vector<8x32xf32>
    %657 = vector.broadcast %568 : vector<8x1xf32> to vector<8x32xf32>
    %658 = arith.mulf %657, %642 : vector<8x32xf32>
    %cst_118 = arith.constant dense<0.000000e+00> : vector<8x32xf32>
    %659 = tpu.matmul %658, %11, %cst_118 {dimension_numbers = #tpu.dot_dimension_numbers<[1], [0], [0], [1], [0, 0, 1, 1], [], []>} : vector<8x32xf32>, vector<32x32xf32>, vector<8x32xf32> -> vector<8x32xf32>
    %660 = vector.extract_strided_slice %0 {offsets = [0, 7], sizes = [8, 1], strides = [1, 1]} : vector<8x8xf32> to vector<8x1xf32>
    %661 = vector.extract_strided_slice %6 {offsets = [56, 0], sizes = [8, 128], strides = [1, 1]} : vector<64x128xf32> to vector<8x128xf32>
    %cst_119 = arith.constant dense<0.000000e+00> : vector<8x128xf32>
    %662 = tpu.matmul %603, %7, %cst_119 {dimension_numbers = #tpu.dot_dimension_numbers<[1], [0], [0], [1], [0, 0, 1, 1], [], []>} : vector<8x32xf32>, vector<32x128xf32>, vector<8x128xf32> -> vector<8x128xf32>
    %663 = arith.addf %661, %662 : vector<8x128xf32>
    %664 = vector.extract_strided_slice %663 {offsets = [0, 0], sizes = [8, 32], strides = [1, 1]} : vector<8x128xf32> to vector<8x32xf32>
    %665 = arith.negf %664 : vector<8x32xf32>
    %666 = math.exp %665 : vector<8x32xf32>
    %cst_120 = arith.constant 1.000000e+00 : f32
    %667 = vector.broadcast %cst_120 : f32 to vector<8x32xf32>
    %668 = arith.addf %667, %666 : vector<8x32xf32>
    %669 = arith.divf %667, %668 : vector<8x32xf32>
    %670 = vector.extract_strided_slice %663 {offsets = [0, 32], sizes = [8, 32], strides = [1, 1]} : vector<8x128xf32> to vector<8x32xf32>
    %671 = arith.negf %670 : vector<8x32xf32>
    %672 = math.exp %671 : vector<8x32xf32>
    %cst_121 = arith.constant 1.000000e+00 : f32
    %673 = vector.broadcast %cst_121 : f32 to vector<8x32xf32>
    %674 = arith.addf %673, %672 : vector<8x32xf32>
    %675 = arith.divf %673, %674 : vector<8x32xf32>
    %676 = vector.extract_strided_slice %663 {offsets = [0, 64], sizes = [8, 32], strides = [1, 1]} : vector<8x128xf32> to vector<8x32xf32>
    %677 = math.tanh %676 : vector<8x32xf32>
    %678 = vector.extract_strided_slice %663 {offsets = [0, 96], sizes = [8, 32], strides = [1, 1]} : vector<8x128xf32> to vector<8x32xf32>
    %679 = arith.negf %678 : vector<8x32xf32>
    %680 = math.exp %679 : vector<8x32xf32>
    %cst_122 = arith.constant 1.000000e+00 : f32
    %681 = vector.broadcast %cst_122 : f32 to vector<8x32xf32>
    %682 = arith.addf %681, %680 : vector<8x32xf32>
    %683 = arith.divf %681, %682 : vector<8x32xf32>
    %684 = arith.mulf %675, %610 : vector<8x32xf32>
    %685 = arith.mulf %669, %677 : vector<8x32xf32>
    %686 = arith.addf %684, %685 : vector<8x32xf32>
    %687 = math.tanh %686 : vector<8x32xf32>
    %688 = arith.mulf %683, %687 : vector<8x32xf32>
    %689 = vector.broadcast %660 : vector<8x1xf32> to vector<8x32xf32>
    %690 = arith.mulf %689, %688 : vector<8x32xf32>
    %cst_123 = arith.constant 1.000000e+00 : f32
    %691 = vector.broadcast %cst_123 : f32 to vector<8x1xf32>
    %692 = arith.subf %691, %660 : vector<8x1xf32>
    %693 = vector.broadcast %692 : vector<8x1xf32> to vector<8x32xf32>
    %694 = arith.mulf %693, %603 : vector<8x32xf32>
    %695 = arith.addf %690, %694 : vector<8x32xf32>
    %696 = vector.broadcast %660 : vector<8x1xf32> to vector<8x32xf32>
    %697 = arith.mulf %696, %686 : vector<8x32xf32>
    %cst_124 = arith.constant 1.000000e+00 : f32
    %698 = vector.broadcast %cst_124 : f32 to vector<8x1xf32>
    %699 = arith.subf %698, %660 : vector<8x1xf32>
    %700 = vector.broadcast %699 : vector<8x1xf32> to vector<8x32xf32>
    %701 = arith.mulf %700, %610 : vector<8x32xf32>
    %702 = arith.addf %697, %701 : vector<8x32xf32>
    %703 = vector.broadcast %660 : vector<8x1xf32> to vector<8x32xf32>
    %704 = arith.mulf %703, %688 : vector<8x32xf32>
    %cst_125 = arith.constant dense<0.000000e+00> : vector<8x128xf32>
    %705 = tpu.matmul %704, %8, %cst_125 {dimension_numbers = #tpu.dot_dimension_numbers<[1], [0], [0], [1], [0, 0, 1, 1], [], []>} : vector<8x32xf32>, vector<32x128xf32>, vector<8x128xf32> -> vector<8x128xf32>
    %cst_126 = arith.constant dense<0.000000e+00> : vector<8x128xf32>
    %706 = tpu.matmul %649, %9, %cst_126 {dimension_numbers = #tpu.dot_dimension_numbers<[1], [0], [0], [1], [0, 0, 1, 1], [], []>} : vector<8x32xf32>, vector<32x128xf32>, vector<8x128xf32> -> vector<8x128xf32>
    %707 = arith.addf %705, %706 : vector<8x128xf32>
    %708 = vector.broadcast %10 : vector<1x128xf32> to vector<8x128xf32>
    %709 = arith.addf %707, %708 : vector<8x128xf32>
    %710 = vector.extract_strided_slice %709 {offsets = [0, 0], sizes = [8, 32], strides = [1, 1]} : vector<8x128xf32> to vector<8x32xf32>
    %711 = arith.negf %710 : vector<8x32xf32>
    %712 = math.exp %711 : vector<8x32xf32>
    %cst_127 = arith.constant 1.000000e+00 : f32
    %713 = vector.broadcast %cst_127 : f32 to vector<8x32xf32>
    %714 = arith.addf %713, %712 : vector<8x32xf32>
    %715 = arith.divf %713, %714 : vector<8x32xf32>
    %716 = vector.extract_strided_slice %709 {offsets = [0, 32], sizes = [8, 32], strides = [1, 1]} : vector<8x128xf32> to vector<8x32xf32>
    %717 = arith.negf %716 : vector<8x32xf32>
    %718 = math.exp %717 : vector<8x32xf32>
    %cst_128 = arith.constant 1.000000e+00 : f32
    %719 = vector.broadcast %cst_128 : f32 to vector<8x32xf32>
    %720 = arith.addf %719, %718 : vector<8x32xf32>
    %721 = arith.divf %719, %720 : vector<8x32xf32>
    %722 = vector.extract_strided_slice %709 {offsets = [0, 64], sizes = [8, 32], strides = [1, 1]} : vector<8x128xf32> to vector<8x32xf32>
    %723 = math.tanh %722 : vector<8x32xf32>
    %724 = vector.extract_strided_slice %709 {offsets = [0, 96], sizes = [8, 32], strides = [1, 1]} : vector<8x128xf32> to vector<8x32xf32>
    %725 = arith.negf %724 : vector<8x32xf32>
    %726 = math.exp %725 : vector<8x32xf32>
    %cst_129 = arith.constant 1.000000e+00 : f32
    %727 = vector.broadcast %cst_129 : f32 to vector<8x32xf32>
    %728 = arith.addf %727, %726 : vector<8x32xf32>
    %729 = arith.divf %727, %728 : vector<8x32xf32>
    %730 = arith.mulf %721, %656 : vector<8x32xf32>
    %731 = arith.mulf %715, %723 : vector<8x32xf32>
    %732 = arith.addf %730, %731 : vector<8x32xf32>
    %733 = math.tanh %732 : vector<8x32xf32>
    %734 = arith.mulf %729, %733 : vector<8x32xf32>
    %735 = vector.broadcast %660 : vector<8x1xf32> to vector<8x32xf32>
    %736 = arith.mulf %735, %734 : vector<8x32xf32>
    %cst_130 = arith.constant 1.000000e+00 : f32
    %737 = vector.broadcast %cst_130 : f32 to vector<8x1xf32>
    %738 = arith.subf %737, %660 : vector<8x1xf32>
    %739 = vector.broadcast %738 : vector<8x1xf32> to vector<8x32xf32>
    %740 = arith.mulf %739, %649 : vector<8x32xf32>
    %741 = arith.addf %736, %740 : vector<8x32xf32>
    %742 = vector.broadcast %660 : vector<8x1xf32> to vector<8x32xf32>
    %743 = arith.mulf %742, %732 : vector<8x32xf32>
    %cst_131 = arith.constant 1.000000e+00 : f32
    %744 = vector.broadcast %cst_131 : f32 to vector<8x1xf32>
    %745 = arith.subf %744, %660 : vector<8x1xf32>
    %746 = vector.broadcast %745 : vector<8x1xf32> to vector<8x32xf32>
    %747 = arith.mulf %746, %656 : vector<8x32xf32>
    %748 = arith.addf %743, %747 : vector<8x32xf32>
    %749 = vector.broadcast %660 : vector<8x1xf32> to vector<8x32xf32>
    %750 = arith.mulf %749, %734 : vector<8x32xf32>
    %cst_132 = arith.constant dense<0.000000e+00> : vector<8x32xf32>
    %751 = tpu.matmul %750, %11, %cst_132 {dimension_numbers = #tpu.dot_dimension_numbers<[1], [0], [0], [1], [0, 0, 1, 1], [], []>} : vector<8x32xf32>, vector<32x32xf32>, vector<8x32xf32> -> vector<8x32xf32>
    %c0_133 = arith.constant 0 : index
    %c0_134 = arith.constant 0 : index
    %752 = vector.load %arg2[%c0_133, %c0_134] : memref<64x32xf32, #tpu.memory_space<vmem>>, vector<64x32xf32>
    %c0_135 = arith.constant 0 : index
    %c0_136 = arith.constant 0 : index
    %753 = vector.load %arg11[%c0_135, %c0_136] : memref<32x128xf32, #tpu.memory_space<vmem>>, vector<32x128xf32>
    %cst_137 = arith.constant dense<0.000000e+00> : vector<64x128xf32>
    %754 = tpu.matmul %752, %753, %cst_137 {dimension_numbers = #tpu.dot_dimension_numbers<[1], [0], [0], [1], [0, 0, 1, 1], [], []>} : vector<64x32xf32>, vector<32x128xf32>, vector<64x128xf32> -> vector<64x128xf32>
    %c0_138 = arith.constant 0 : index
    %c0_139 = arith.constant 0 : index
    %755 = vector.load %arg14[%c0_138, %c0_139] : memref<1x128xf32, #tpu.memory_space<vmem>>, vector<1x128xf32>
    %756 = vector.broadcast %755 : vector<1x128xf32> to vector<64x128xf32>
    %757 = arith.addf %754, %756 : vector<64x128xf32>
    %c0_140 = arith.constant 0 : index
    %c0_141 = arith.constant 0 : index
    %758 = vector.load %arg12[%c0_140, %c0_141] : memref<32x128xf32, #tpu.memory_space<vmem>>, vector<32x128xf32>
    %c0_142 = arith.constant 0 : index
    %c0_143 = arith.constant 0 : index
    %759 = vector.load %arg13[%c0_142, %c0_143] : memref<32x128xf32, #tpu.memory_space<vmem>>, vector<32x128xf32>
    %c0_144 = arith.constant 0 : index
    %c0_145 = arith.constant 0 : index
    %760 = vector.load %arg15[%c0_144, %c0_145] : memref<32x128xf32, #tpu.memory_space<vmem>>, vector<32x128xf32>
    %c0_146 = arith.constant 0 : index
    %c0_147 = arith.constant 0 : index
    %761 = vector.load %arg16[%c0_146, %c0_147] : memref<32x128xf32, #tpu.memory_space<vmem>>, vector<32x128xf32>
    %c0_148 = arith.constant 0 : index
    %c0_149 = arith.constant 0 : index
    %762 = vector.load %arg17[%c0_148, %c0_149] : memref<1x128xf32, #tpu.memory_space<vmem>>, vector<1x128xf32>
    %c0_150 = arith.constant 0 : index
    %c0_151 = arith.constant 0 : index
    %763 = vector.load %arg18[%c0_150, %c0_151] : memref<32x32xf32, #tpu.memory_space<vmem>>, vector<32x32xf32>
    %c0_152 = arith.constant 0 : index
    %c0_153 = arith.constant 0 : index
    %764 = vector.load %arg19[%c0_152, %c0_153] : memref<1x32xf32, #tpu.memory_space<vmem>>, vector<1x32xf32>
    %c0_154 = arith.constant 0 : index
    %c0_155 = arith.constant 0 : index
    %765 = vector.load %arg20[%c0_154, %c0_155] : memref<32x32xf32, #tpu.memory_space<vmem>>, vector<32x32xf32>
    %c0_156 = arith.constant 0 : index
    %c0_157 = arith.constant 0 : index
    %766 = vector.load %arg22[%c0_156, %c0_157] : memref<1x32xf32, #tpu.memory_space<vmem>>, vector<1x32xf32>
    %c0_158 = arith.constant 0 : index
    %c0_159 = arith.constant 0 : index
    %767 = vector.load %arg23[%c0_158, %c0_159] : memref<1x32xf32, #tpu.memory_space<vmem>>, vector<1x32xf32>
    %c0_160 = arith.constant 0 : index
    %c0_161 = arith.constant 0 : index
    %768 = vector.load %arg4[%c0_160, %c0_161] : memref<8x8xi32, #tpu.memory_space<vmem>>, vector<8x8xi32>
    %769 = tpu.iota {dimensions = array<i32: 1>} : vector<8x32xi32>
    %cst_162 = arith.constant 0.000000e+00 : f32
    %770 = vector.broadcast %cst_162 : f32 to vector<1x1xf32>
    %cst_163 = arith.constant 0.000000e+00 : f32
    %771 = vector.broadcast %cst_163 : f32 to vector<1x1xf32>
    %cst_164 = arith.constant dense<0.000000e+00> : vector<8x32xf32>
    %772 = tpu.matmul %741, %765, %cst_164 {dimension_numbers = #tpu.dot_dimension_numbers<[1], [0], [0], [1], [0, 0, 1, 1], [], []>} : vector<8x32xf32>, vector<32x32xf32>, vector<8x32xf32> -> vector<8x32xf32>
    %773 = vector.broadcast %766 : vector<1x32xf32> to vector<8x32xf32>
    %774 = arith.addf %772, %773 : vector<8x32xf32>
    %775 = arith.addf %774, %107 : vector<8x32xf32>
    %776 = math.tanh %775 : vector<8x32xf32>
    %777 = vector.broadcast %767 : vector<1x32xf32> to vector<8x32xf32>
    %778 = arith.mulf %776, %777 : vector<8x32xf32>
    %cst_165 = arith.constant dense<0.000000e+00> : vector<8xf32>
    %779 = vector.multi_reduction <add>, %778, %cst_165 [1] : vector<8x32xf32> to vector<8xf32>
    %780 = vector.shape_cast %779 : vector<8xf32> to vector<8x1xf32>
    %781 = arith.addf %774, %199 : vector<8x32xf32>
    %782 = math.tanh %781 : vector<8x32xf32>
    %783 = vector.broadcast %767 : vector<1x32xf32> to vector<8x32xf32>
    %784 = arith.mulf %782, %783 : vector<8x32xf32>
    %cst_166 = arith.constant dense<0.000000e+00> : vector<8xf32>
    %785 = vector.multi_reduction <add>, %784, %cst_166 [1] : vector<8x32xf32> to vector<8xf32>
    %786 = vector.shape_cast %785 : vector<8xf32> to vector<8x1xf32>
    %787 = arith.addf %774, %291 : vector<8x32xf32>
    %788 = math.tanh %787 : vector<8x32xf32>
    %789 = vector.broadcast %767 : vector<1x32xf32> to vector<8x32xf32>
    %790 = arith.mulf %788, %789 : vector<8x32xf32>
    %cst_167 = arith.constant dense<0.000000e+00> : vector<8xf32>
    %791 = vector.multi_reduction <add>, %790, %cst_167 [1] : vector<8x32xf32> to vector<8xf32>
    %792 = vector.shape_cast %791 : vector<8xf32> to vector<8x1xf32>
    %793 = arith.addf %774, %383 : vector<8x32xf32>
    %794 = math.tanh %793 : vector<8x32xf32>
    %795 = vector.broadcast %767 : vector<1x32xf32> to vector<8x32xf32>
    %796 = arith.mulf %794, %795 : vector<8x32xf32>
    %cst_168 = arith.constant dense<0.000000e+00> : vector<8xf32>
    %797 = vector.multi_reduction <add>, %796, %cst_168 [1] : vector<8x32xf32> to vector<8xf32>
    %798 = vector.shape_cast %797 : vector<8xf32> to vector<8x1xf32>
    %799 = arith.addf %774, %475 : vector<8x32xf32>
    %800 = math.tanh %799 : vector<8x32xf32>
    %801 = vector.broadcast %767 : vector<1x32xf32> to vector<8x32xf32>
    %802 = arith.mulf %800, %801 : vector<8x32xf32>
    %cst_169 = arith.constant dense<0.000000e+00> : vector<8xf32>
    %803 = vector.multi_reduction <add>, %802, %cst_169 [1] : vector<8x32xf32> to vector<8xf32>
    %804 = vector.shape_cast %803 : vector<8xf32> to vector<8x1xf32>
    %805 = arith.addf %774, %567 : vector<8x32xf32>
    %806 = math.tanh %805 : vector<8x32xf32>
    %807 = vector.broadcast %767 : vector<1x32xf32> to vector<8x32xf32>
    %808 = arith.mulf %806, %807 : vector<8x32xf32>
    %cst_170 = arith.constant dense<0.000000e+00> : vector<8xf32>
    %809 = vector.multi_reduction <add>, %808, %cst_170 [1] : vector<8x32xf32> to vector<8xf32>
    %810 = vector.shape_cast %809 : vector<8xf32> to vector<8x1xf32>
    %811 = arith.addf %774, %659 : vector<8x32xf32>
    %812 = math.tanh %811 : vector<8x32xf32>
    %813 = vector.broadcast %767 : vector<1x32xf32> to vector<8x32xf32>
    %814 = arith.mulf %812, %813 : vector<8x32xf32>
    %cst_171 = arith.constant dense<0.000000e+00> : vector<8xf32>
    %815 = vector.multi_reduction <add>, %814, %cst_171 [1] : vector<8x32xf32> to vector<8xf32>
    %816 = vector.shape_cast %815 : vector<8xf32> to vector<8x1xf32>
    %817 = arith.addf %774, %751 : vector<8x32xf32>
    %818 = math.tanh %817 : vector<8x32xf32>
    %819 = vector.broadcast %767 : vector<1x32xf32> to vector<8x32xf32>
    %820 = arith.mulf %818, %819 : vector<8x32xf32>
    %cst_172 = arith.constant dense<0.000000e+00> : vector<8xf32>
    %821 = vector.multi_reduction <add>, %820, %cst_172 [1] : vector<8x32xf32> to vector<8xf32>
    %822 = vector.shape_cast %821 : vector<8xf32> to vector<8x1xf32>
    %823 = arith.maximumf %780, %786 : vector<8x1xf32>
    %824 = arith.maximumf %823, %792 : vector<8x1xf32>
    %825 = arith.maximumf %824, %798 : vector<8x1xf32>
    %826 = arith.maximumf %825, %804 : vector<8x1xf32>
    %827 = arith.maximumf %826, %810 : vector<8x1xf32>
    %828 = arith.maximumf %827, %816 : vector<8x1xf32>
    %829 = arith.maximumf %828, %822 : vector<8x1xf32>
    %830 = arith.subf %780, %829 : vector<8x1xf32>
    %831 = math.exp %830 : vector<8x1xf32>
    %832 = arith.subf %786, %829 : vector<8x1xf32>
    %833 = math.exp %832 : vector<8x1xf32>
    %834 = arith.subf %792, %829 : vector<8x1xf32>
    %835 = math.exp %834 : vector<8x1xf32>
    %836 = arith.subf %798, %829 : vector<8x1xf32>
    %837 = math.exp %836 : vector<8x1xf32>
    %838 = arith.subf %804, %829 : vector<8x1xf32>
    %839 = math.exp %838 : vector<8x1xf32>
    %840 = arith.subf %810, %829 : vector<8x1xf32>
    %841 = math.exp %840 : vector<8x1xf32>
    %842 = arith.subf %816, %829 : vector<8x1xf32>
    %843 = math.exp %842 : vector<8x1xf32>
    %844 = arith.subf %822, %829 : vector<8x1xf32>
    %845 = math.exp %844 : vector<8x1xf32>
    %846 = arith.addf %831, %833 : vector<8x1xf32>
    %847 = arith.addf %846, %835 : vector<8x1xf32>
    %848 = arith.addf %847, %837 : vector<8x1xf32>
    %849 = arith.addf %848, %839 : vector<8x1xf32>
    %850 = arith.addf %849, %841 : vector<8x1xf32>
    %851 = arith.addf %850, %843 : vector<8x1xf32>
    %852 = arith.addf %851, %845 : vector<8x1xf32>
    %853 = vector.broadcast %831 : vector<8x1xf32> to vector<8x32xf32>
    %854 = arith.mulf %853, %106 : vector<8x32xf32>
    %855 = vector.broadcast %833 : vector<8x1xf32> to vector<8x32xf32>
    %856 = arith.mulf %855, %198 : vector<8x32xf32>
    %857 = arith.addf %854, %856 : vector<8x32xf32>
    %858 = vector.broadcast %835 : vector<8x1xf32> to vector<8x32xf32>
    %859 = arith.mulf %858, %290 : vector<8x32xf32>
    %860 = arith.addf %857, %859 : vector<8x32xf32>
    %861 = vector.broadcast %837 : vector<8x1xf32> to vector<8x32xf32>
    %862 = arith.mulf %861, %382 : vector<8x32xf32>
    %863 = arith.addf %860, %862 : vector<8x32xf32>
    %864 = vector.broadcast %839 : vector<8x1xf32> to vector<8x32xf32>
    %865 = arith.mulf %864, %474 : vector<8x32xf32>
    %866 = arith.addf %863, %865 : vector<8x32xf32>
    %867 = vector.broadcast %841 : vector<8x1xf32> to vector<8x32xf32>
    %868 = arith.mulf %867, %566 : vector<8x32xf32>
    %869 = arith.addf %866, %868 : vector<8x32xf32>
    %870 = vector.broadcast %843 : vector<8x1xf32> to vector<8x32xf32>
    %871 = arith.mulf %870, %658 : vector<8x32xf32>
    %872 = arith.addf %869, %871 : vector<8x32xf32>
    %873 = vector.broadcast %845 : vector<8x1xf32> to vector<8x32xf32>
    %874 = arith.mulf %873, %750 : vector<8x32xf32>
    %875 = arith.addf %872, %874 : vector<8x32xf32>
    %876 = vector.broadcast %852 : vector<8x1xf32> to vector<8x32xf32>
    %877 = arith.divf %875, %876 : vector<8x32xf32>
    %878 = vector.extract_strided_slice %757 {offsets = [0, 0], sizes = [8, 128], strides = [1, 1]} : vector<64x128xf32> to vector<8x128xf32>
    %cst_173 = arith.constant dense<0.000000e+00> : vector<8x128xf32>
    %879 = tpu.matmul %877, %758, %cst_173 {dimension_numbers = #tpu.dot_dimension_numbers<[1], [0], [0], [1], [0, 0, 1, 1], [], []>} : vector<8x32xf32>, vector<32x128xf32>, vector<8x128xf32> -> vector<8x128xf32>
    %880 = arith.addf %878, %879 : vector<8x128xf32>
    %cst_174 = arith.constant dense<0.000000e+00> : vector<8x128xf32>
    %881 = tpu.matmul %695, %759, %cst_174 {dimension_numbers = #tpu.dot_dimension_numbers<[1], [0], [0], [1], [0, 0, 1, 1], [], []>} : vector<8x32xf32>, vector<32x128xf32>, vector<8x128xf32> -> vector<8x128xf32>
    %882 = arith.addf %880, %881 : vector<8x128xf32>
    %883 = vector.extract_strided_slice %882 {offsets = [0, 0], sizes = [8, 32], strides = [1, 1]} : vector<8x128xf32> to vector<8x32xf32>
    %884 = arith.negf %883 : vector<8x32xf32>
    %885 = math.exp %884 : vector<8x32xf32>
    %cst_175 = arith.constant 1.000000e+00 : f32
    %886 = vector.broadcast %cst_175 : f32 to vector<8x32xf32>
    %887 = arith.addf %886, %885 : vector<8x32xf32>
    %888 = arith.divf %886, %887 : vector<8x32xf32>
    %889 = vector.extract_strided_slice %882 {offsets = [0, 32], sizes = [8, 32], strides = [1, 1]} : vector<8x128xf32> to vector<8x32xf32>
    %890 = arith.negf %889 : vector<8x32xf32>
    %891 = math.exp %890 : vector<8x32xf32>
    %cst_176 = arith.constant 1.000000e+00 : f32
    %892 = vector.broadcast %cst_176 : f32 to vector<8x32xf32>
    %893 = arith.addf %892, %891 : vector<8x32xf32>
    %894 = arith.divf %892, %893 : vector<8x32xf32>
    %895 = vector.extract_strided_slice %882 {offsets = [0, 64], sizes = [8, 32], strides = [1, 1]} : vector<8x128xf32> to vector<8x32xf32>
    %896 = math.tanh %895 : vector<8x32xf32>
    %897 = vector.extract_strided_slice %882 {offsets = [0, 96], sizes = [8, 32], strides = [1, 1]} : vector<8x128xf32> to vector<8x32xf32>
    %898 = arith.negf %897 : vector<8x32xf32>
    %899 = math.exp %898 : vector<8x32xf32>
    %cst_177 = arith.constant 1.000000e+00 : f32
    %900 = vector.broadcast %cst_177 : f32 to vector<8x32xf32>
    %901 = arith.addf %900, %899 : vector<8x32xf32>
    %902 = arith.divf %900, %901 : vector<8x32xf32>
    %903 = arith.mulf %894, %702 : vector<8x32xf32>
    %904 = arith.mulf %888, %896 : vector<8x32xf32>
    %905 = arith.addf %903, %904 : vector<8x32xf32>
    %906 = math.tanh %905 : vector<8x32xf32>
    %907 = arith.mulf %902, %906 : vector<8x32xf32>
    %cst_178 = arith.constant dense<0.000000e+00> : vector<8x128xf32>
    %908 = tpu.matmul %907, %760, %cst_178 {dimension_numbers = #tpu.dot_dimension_numbers<[1], [0], [0], [1], [0, 0, 1, 1], [], []>} : vector<8x32xf32>, vector<32x128xf32>, vector<8x128xf32> -> vector<8x128xf32>
    %cst_179 = arith.constant dense<0.000000e+00> : vector<8x128xf32>
    %909 = tpu.matmul %741, %761, %cst_179 {dimension_numbers = #tpu.dot_dimension_numbers<[1], [0], [0], [1], [0, 0, 1, 1], [], []>} : vector<8x32xf32>, vector<32x128xf32>, vector<8x128xf32> -> vector<8x128xf32>
    %910 = arith.addf %908, %909 : vector<8x128xf32>
    %911 = vector.broadcast %762 : vector<1x128xf32> to vector<8x128xf32>
    %912 = arith.addf %910, %911 : vector<8x128xf32>
    %913 = vector.extract_strided_slice %912 {offsets = [0, 0], sizes = [8, 32], strides = [1, 1]} : vector<8x128xf32> to vector<8x32xf32>
    %914 = arith.negf %913 : vector<8x32xf32>
    %915 = math.exp %914 : vector<8x32xf32>
    %cst_180 = arith.constant 1.000000e+00 : f32
    %916 = vector.broadcast %cst_180 : f32 to vector<8x32xf32>
    %917 = arith.addf %916, %915 : vector<8x32xf32>
    %918 = arith.divf %916, %917 : vector<8x32xf32>
    %919 = vector.extract_strided_slice %912 {offsets = [0, 32], sizes = [8, 32], strides = [1, 1]} : vector<8x128xf32> to vector<8x32xf32>
    %920 = arith.negf %919 : vector<8x32xf32>
    %921 = math.exp %920 : vector<8x32xf32>
    %cst_181 = arith.constant 1.000000e+00 : f32
    %922 = vector.broadcast %cst_181 : f32 to vector<8x32xf32>
    %923 = arith.addf %922, %921 : vector<8x32xf32>
    %924 = arith.divf %922, %923 : vector<8x32xf32>
    %925 = vector.extract_strided_slice %912 {offsets = [0, 64], sizes = [8, 32], strides = [1, 1]} : vector<8x128xf32> to vector<8x32xf32>
    %926 = math.tanh %925 : vector<8x32xf32>
    %927 = vector.extract_strided_slice %912 {offsets = [0, 96], sizes = [8, 32], strides = [1, 1]} : vector<8x128xf32> to vector<8x32xf32>
    %928 = arith.negf %927 : vector<8x32xf32>
    %929 = math.exp %928 : vector<8x32xf32>
    %cst_182 = arith.constant 1.000000e+00 : f32
    %930 = vector.broadcast %cst_182 : f32 to vector<8x32xf32>
    %931 = arith.addf %930, %929 : vector<8x32xf32>
    %932 = arith.divf %930, %931 : vector<8x32xf32>
    %933 = arith.mulf %924, %748 : vector<8x32xf32>
    %934 = arith.mulf %918, %926 : vector<8x32xf32>
    %935 = arith.addf %933, %934 : vector<8x32xf32>
    %936 = math.tanh %935 : vector<8x32xf32>
    %937 = arith.mulf %932, %936 : vector<8x32xf32>
    %cst_183 = arith.constant dense<0.000000e+00> : vector<8x32xf32>
    %938 = tpu.matmul %937, %763, %cst_183 {dimension_numbers = #tpu.dot_dimension_numbers<[1], [0], [0], [1], [0, 0, 1, 1], [], []>} : vector<8x32xf32>, vector<32x32xf32>, vector<8x32xf32> -> vector<8x32xf32>
    %939 = vector.broadcast %764 : vector<1x32xf32> to vector<8x32xf32>
    %940 = arith.addf %938, %939 : vector<8x32xf32>
    %941 = vector.extract_strided_slice %768 {offsets = [0, 1], sizes = [8, 1], strides = [1, 1]} : vector<8x8xi32> to vector<8x1xi32>
    %c0_i32 = arith.constant 0 : i32
    %942 = vector.broadcast %c0_i32 : i32 to vector<8x1xi32>
    %943 = arith.cmpi ne, %941, %942 : vector<8x1xi32>
    %944 = arith.extui %943 : vector<8x1xi1> to vector<8x1xi32>
    %945 = arith.sitofp %944 : vector<8x1xi32> to vector<8x1xf32>
    %cst_184 = arith.constant dense<0xFF800000> : vector<8xf32>
    %946 = vector.multi_reduction <maximumf>, %940, %cst_184 [1] : vector<8x32xf32> to vector<8xf32>
    %947 = vector.shape_cast %946 : vector<8xf32> to vector<8x1xf32>
    %948 = vector.broadcast %947 : vector<8x1xf32> to vector<8x32xf32>
    %949 = arith.subf %940, %948 : vector<8x32xf32>
    %950 = math.exp %949 : vector<8x32xf32>
    %cst_185 = arith.constant dense<0.000000e+00> : vector<8xf32>
    %951 = vector.multi_reduction <add>, %950, %cst_185 [1] : vector<8x32xf32> to vector<8xf32>
    %952 = vector.shape_cast %951 : vector<8xf32> to vector<8x1xf32>
    %953 = math.log %952 : vector<8x1xf32>
    %954 = arith.addf %953, %947 : vector<8x1xf32>
    %955 = vector.broadcast %941 : vector<8x1xi32> to vector<8x32xi32>
    %956 = arith.cmpi eq, %769, %955 : vector<8x32xi32>
    %cst_186 = arith.constant 0.000000e+00 : f32
    %957 = vector.broadcast %cst_186 : f32 to vector<8x32xf32>
    %958 = arith.select %956, %940, %957 : vector<8x32xi1>, vector<8x32xf32>
    %cst_187 = arith.constant dense<0.000000e+00> : vector<8xf32>
    %959 = vector.multi_reduction <add>, %958, %cst_187 [1] : vector<8x32xf32> to vector<8xf32>
    %960 = vector.shape_cast %959 : vector<8xf32> to vector<8x1xf32>
    %961 = arith.subf %954, %960 : vector<8x1xf32>
    %962 = arith.mulf %961, %945 : vector<8x1xf32>
    %cst_188 = arith.constant dense<0.000000e+00> : vector<1xf32>
    %963 = vector.multi_reduction <add>, %962, %cst_188 [0] : vector<8x1xf32> to vector<1xf32>
    %964 = vector.shape_cast %963 : vector<1xf32> to vector<1x1xf32>
    %965 = arith.addf %770, %964 : vector<1x1xf32>
    %cst_189 = arith.constant dense<0.000000e+00> : vector<1xf32>
    %966 = vector.multi_reduction <add>, %945, %cst_189 [0] : vector<8x1xf32> to vector<1xf32>
    %967 = vector.shape_cast %966 : vector<1xf32> to vector<1x1xf32>
    %968 = arith.addf %771, %967 : vector<1x1xf32>
    %cst_190 = arith.constant dense<0.000000e+00> : vector<8x32xf32>
    %969 = tpu.matmul %937, %765, %cst_190 {dimension_numbers = #tpu.dot_dimension_numbers<[1], [0], [0], [1], [0, 0, 1, 1], [], []>} : vector<8x32xf32>, vector<32x32xf32>, vector<8x32xf32> -> vector<8x32xf32>
    %970 = vector.broadcast %766 : vector<1x32xf32> to vector<8x32xf32>
    %971 = arith.addf %969, %970 : vector<8x32xf32>
    %972 = arith.addf %971, %107 : vector<8x32xf32>
    %973 = math.tanh %972 : vector<8x32xf32>
    %974 = vector.broadcast %767 : vector<1x32xf32> to vector<8x32xf32>
    %975 = arith.mulf %973, %974 : vector<8x32xf32>
    %cst_191 = arith.constant dense<0.000000e+00> : vector<8xf32>
    %976 = vector.multi_reduction <add>, %975, %cst_191 [1] : vector<8x32xf32> to vector<8xf32>
    %977 = vector.shape_cast %976 : vector<8xf32> to vector<8x1xf32>
    %978 = arith.addf %971, %199 : vector<8x32xf32>
    %979 = math.tanh %978 : vector<8x32xf32>
    %980 = vector.broadcast %767 : vector<1x32xf32> to vector<8x32xf32>
    %981 = arith.mulf %979, %980 : vector<8x32xf32>
    %cst_192 = arith.constant dense<0.000000e+00> : vector<8xf32>
    %982 = vector.multi_reduction <add>, %981, %cst_192 [1] : vector<8x32xf32> to vector<8xf32>
    %983 = vector.shape_cast %982 : vector<8xf32> to vector<8x1xf32>
    %984 = arith.addf %971, %291 : vector<8x32xf32>
    %985 = math.tanh %984 : vector<8x32xf32>
    %986 = vector.broadcast %767 : vector<1x32xf32> to vector<8x32xf32>
    %987 = arith.mulf %985, %986 : vector<8x32xf32>
    %cst_193 = arith.constant dense<0.000000e+00> : vector<8xf32>
    %988 = vector.multi_reduction <add>, %987, %cst_193 [1] : vector<8x32xf32> to vector<8xf32>
    %989 = vector.shape_cast %988 : vector<8xf32> to vector<8x1xf32>
    %990 = arith.addf %971, %383 : vector<8x32xf32>
    %991 = math.tanh %990 : vector<8x32xf32>
    %992 = vector.broadcast %767 : vector<1x32xf32> to vector<8x32xf32>
    %993 = arith.mulf %991, %992 : vector<8x32xf32>
    %cst_194 = arith.constant dense<0.000000e+00> : vector<8xf32>
    %994 = vector.multi_reduction <add>, %993, %cst_194 [1] : vector<8x32xf32> to vector<8xf32>
    %995 = vector.shape_cast %994 : vector<8xf32> to vector<8x1xf32>
    %996 = arith.addf %971, %475 : vector<8x32xf32>
    %997 = math.tanh %996 : vector<8x32xf32>
    %998 = vector.broadcast %767 : vector<1x32xf32> to vector<8x32xf32>
    %999 = arith.mulf %997, %998 : vector<8x32xf32>
    %cst_195 = arith.constant dense<0.000000e+00> : vector<8xf32>
    %1000 = vector.multi_reduction <add>, %999, %cst_195 [1] : vector<8x32xf32> to vector<8xf32>
    %1001 = vector.shape_cast %1000 : vector<8xf32> to vector<8x1xf32>
    %1002 = arith.addf %971, %567 : vector<8x32xf32>
    %1003 = math.tanh %1002 : vector<8x32xf32>
    %1004 = vector.broadcast %767 : vector<1x32xf32> to vector<8x32xf32>
    %1005 = arith.mulf %1003, %1004 : vector<8x32xf32>
    %cst_196 = arith.constant dense<0.000000e+00> : vector<8xf32>
    %1006 = vector.multi_reduction <add>, %1005, %cst_196 [1] : vector<8x32xf32> to vector<8xf32>
    %1007 = vector.shape_cast %1006 : vector<8xf32> to vector<8x1xf32>
    %1008 = arith.addf %971, %659 : vector<8x32xf32>
    %1009 = math.tanh %1008 : vector<8x32xf32>
    %1010 = vector.broadcast %767 : vector<1x32xf32> to vector<8x32xf32>
    %1011 = arith.mulf %1009, %1010 : vector<8x32xf32>
    %cst_197 = arith.constant dense<0.000000e+00> : vector<8xf32>
    %1012 = vector.multi_reduction <add>, %1011, %cst_197 [1] : vector<8x32xf32> to vector<8xf32>
    %1013 = vector.shape_cast %1012 : vector<8xf32> to vector<8x1xf32>
    %1014 = arith.addf %971, %751 : vector<8x32xf32>
    %1015 = math.tanh %1014 : vector<8x32xf32>
    %1016 = vector.broadcast %767 : vector<1x32xf32> to vector<8x32xf32>
    %1017 = arith.mulf %1015, %1016 : vector<8x32xf32>
    %cst_198 = arith.constant dense<0.000000e+00> : vector<8xf32>
    %1018 = vector.multi_reduction <add>, %1017, %cst_198 [1] : vector<8x32xf32> to vector<8xf32>
    %1019 = vector.shape_cast %1018 : vector<8xf32> to vector<8x1xf32>
    %1020 = arith.maximumf %977, %983 : vector<8x1xf32>
    %1021 = arith.maximumf %1020, %989 : vector<8x1xf32>
    %1022 = arith.maximumf %1021, %995 : vector<8x1xf32>
    %1023 = arith.maximumf %1022, %1001 : vector<8x1xf32>
    %1024 = arith.maximumf %1023, %1007 : vector<8x1xf32>
    %1025 = arith.maximumf %1024, %1013 : vector<8x1xf32>
    %1026 = arith.maximumf %1025, %1019 : vector<8x1xf32>
    %1027 = arith.subf %977, %1026 : vector<8x1xf32>
    %1028 = math.exp %1027 : vector<8x1xf32>
    %1029 = arith.subf %983, %1026 : vector<8x1xf32>
    %1030 = math.exp %1029 : vector<8x1xf32>
    %1031 = arith.subf %989, %1026 : vector<8x1xf32>
    %1032 = math.exp %1031 : vector<8x1xf32>
    %1033 = arith.subf %995, %1026 : vector<8x1xf32>
    %1034 = math.exp %1033 : vector<8x1xf32>
    %1035 = arith.subf %1001, %1026 : vector<8x1xf32>
    %1036 = math.exp %1035 : vector<8x1xf32>
    %1037 = arith.subf %1007, %1026 : vector<8x1xf32>
    %1038 = math.exp %1037 : vector<8x1xf32>
    %1039 = arith.subf %1013, %1026 : vector<8x1xf32>
    %1040 = math.exp %1039 : vector<8x1xf32>
    %1041 = arith.subf %1019, %1026 : vector<8x1xf32>
    %1042 = math.exp %1041 : vector<8x1xf32>
    %1043 = arith.addf %1028, %1030 : vector<8x1xf32>
    %1044 = arith.addf %1043, %1032 : vector<8x1xf32>
    %1045 = arith.addf %1044, %1034 : vector<8x1xf32>
    %1046 = arith.addf %1045, %1036 : vector<8x1xf32>
    %1047 = arith.addf %1046, %1038 : vector<8x1xf32>
    %1048 = arith.addf %1047, %1040 : vector<8x1xf32>
    %1049 = arith.addf %1048, %1042 : vector<8x1xf32>
    %1050 = vector.broadcast %1028 : vector<8x1xf32> to vector<8x32xf32>
    %1051 = arith.mulf %1050, %106 : vector<8x32xf32>
    %1052 = vector.broadcast %1030 : vector<8x1xf32> to vector<8x32xf32>
    %1053 = arith.mulf %1052, %198 : vector<8x32xf32>
    %1054 = arith.addf %1051, %1053 : vector<8x32xf32>
    %1055 = vector.broadcast %1032 : vector<8x1xf32> to vector<8x32xf32>
    %1056 = arith.mulf %1055, %290 : vector<8x32xf32>
    %1057 = arith.addf %1054, %1056 : vector<8x32xf32>
    %1058 = vector.broadcast %1034 : vector<8x1xf32> to vector<8x32xf32>
    %1059 = arith.mulf %1058, %382 : vector<8x32xf32>
    %1060 = arith.addf %1057, %1059 : vector<8x32xf32>
    %1061 = vector.broadcast %1036 : vector<8x1xf32> to vector<8x32xf32>
    %1062 = arith.mulf %1061, %474 : vector<8x32xf32>
    %1063 = arith.addf %1060, %1062 : vector<8x32xf32>
    %1064 = vector.broadcast %1038 : vector<8x1xf32> to vector<8x32xf32>
    %1065 = arith.mulf %1064, %566 : vector<8x32xf32>
    %1066 = arith.addf %1063, %1065 : vector<8x32xf32>
    %1067 = vector.broadcast %1040 : vector<8x1xf32> to vector<8x32xf32>
    %1068 = arith.mulf %1067, %658 : vector<8x32xf32>
    %1069 = arith.addf %1066, %1068 : vector<8x32xf32>
    %1070 = vector.broadcast %1042 : vector<8x1xf32> to vector<8x32xf32>
    %1071 = arith.mulf %1070, %750 : vector<8x32xf32>
    %1072 = arith.addf %1069, %1071 : vector<8x32xf32>
    %1073 = vector.broadcast %1049 : vector<8x1xf32> to vector<8x32xf32>
    %1074 = arith.divf %1072, %1073 : vector<8x32xf32>
    %1075 = vector.extract_strided_slice %757 {offsets = [8, 0], sizes = [8, 128], strides = [1, 1]} : vector<64x128xf32> to vector<8x128xf32>
    %cst_199 = arith.constant dense<0.000000e+00> : vector<8x128xf32>
    %1076 = tpu.matmul %1074, %758, %cst_199 {dimension_numbers = #tpu.dot_dimension_numbers<[1], [0], [0], [1], [0, 0, 1, 1], [], []>} : vector<8x32xf32>, vector<32x128xf32>, vector<8x128xf32> -> vector<8x128xf32>
    %1077 = arith.addf %1075, %1076 : vector<8x128xf32>
    %cst_200 = arith.constant dense<0.000000e+00> : vector<8x128xf32>
    %1078 = tpu.matmul %907, %759, %cst_200 {dimension_numbers = #tpu.dot_dimension_numbers<[1], [0], [0], [1], [0, 0, 1, 1], [], []>} : vector<8x32xf32>, vector<32x128xf32>, vector<8x128xf32> -> vector<8x128xf32>
    %1079 = arith.addf %1077, %1078 : vector<8x128xf32>
    %1080 = vector.extract_strided_slice %1079 {offsets = [0, 0], sizes = [8, 32], strides = [1, 1]} : vector<8x128xf32> to vector<8x32xf32>
    %1081 = arith.negf %1080 : vector<8x32xf32>
    %1082 = math.exp %1081 : vector<8x32xf32>
    %cst_201 = arith.constant 1.000000e+00 : f32
    %1083 = vector.broadcast %cst_201 : f32 to vector<8x32xf32>
    %1084 = arith.addf %1083, %1082 : vector<8x32xf32>
    %1085 = arith.divf %1083, %1084 : vector<8x32xf32>
    %1086 = vector.extract_strided_slice %1079 {offsets = [0, 32], sizes = [8, 32], strides = [1, 1]} : vector<8x128xf32> to vector<8x32xf32>
    %1087 = arith.negf %1086 : vector<8x32xf32>
    %1088 = math.exp %1087 : vector<8x32xf32>
    %cst_202 = arith.constant 1.000000e+00 : f32
    %1089 = vector.broadcast %cst_202 : f32 to vector<8x32xf32>
    %1090 = arith.addf %1089, %1088 : vector<8x32xf32>
    %1091 = arith.divf %1089, %1090 : vector<8x32xf32>
    %1092 = vector.extract_strided_slice %1079 {offsets = [0, 64], sizes = [8, 32], strides = [1, 1]} : vector<8x128xf32> to vector<8x32xf32>
    %1093 = math.tanh %1092 : vector<8x32xf32>
    %1094 = vector.extract_strided_slice %1079 {offsets = [0, 96], sizes = [8, 32], strides = [1, 1]} : vector<8x128xf32> to vector<8x32xf32>
    %1095 = arith.negf %1094 : vector<8x32xf32>
    %1096 = math.exp %1095 : vector<8x32xf32>
    %cst_203 = arith.constant 1.000000e+00 : f32
    %1097 = vector.broadcast %cst_203 : f32 to vector<8x32xf32>
    %1098 = arith.addf %1097, %1096 : vector<8x32xf32>
    %1099 = arith.divf %1097, %1098 : vector<8x32xf32>
    %1100 = arith.mulf %1091, %905 : vector<8x32xf32>
    %1101 = arith.mulf %1085, %1093 : vector<8x32xf32>
    %1102 = arith.addf %1100, %1101 : vector<8x32xf32>
    %1103 = math.tanh %1102 : vector<8x32xf32>
    %1104 = arith.mulf %1099, %1103 : vector<8x32xf32>
    %cst_204 = arith.constant dense<0.000000e+00> : vector<8x128xf32>
    %1105 = tpu.matmul %1104, %760, %cst_204 {dimension_numbers = #tpu.dot_dimension_numbers<[1], [0], [0], [1], [0, 0, 1, 1], [], []>} : vector<8x32xf32>, vector<32x128xf32>, vector<8x128xf32> -> vector<8x128xf32>
    %cst_205 = arith.constant dense<0.000000e+00> : vector<8x128xf32>
    %1106 = tpu.matmul %937, %761, %cst_205 {dimension_numbers = #tpu.dot_dimension_numbers<[1], [0], [0], [1], [0, 0, 1, 1], [], []>} : vector<8x32xf32>, vector<32x128xf32>, vector<8x128xf32> -> vector<8x128xf32>
    %1107 = arith.addf %1105, %1106 : vector<8x128xf32>
    %1108 = vector.broadcast %762 : vector<1x128xf32> to vector<8x128xf32>
    %1109 = arith.addf %1107, %1108 : vector<8x128xf32>
    %1110 = vector.extract_strided_slice %1109 {offsets = [0, 0], sizes = [8, 32], strides = [1, 1]} : vector<8x128xf32> to vector<8x32xf32>
    %1111 = arith.negf %1110 : vector<8x32xf32>
    %1112 = math.exp %1111 : vector<8x32xf32>
    %cst_206 = arith.constant 1.000000e+00 : f32
    %1113 = vector.broadcast %cst_206 : f32 to vector<8x32xf32>
    %1114 = arith.addf %1113, %1112 : vector<8x32xf32>
    %1115 = arith.divf %1113, %1114 : vector<8x32xf32>
    %1116 = vector.extract_strided_slice %1109 {offsets = [0, 32], sizes = [8, 32], strides = [1, 1]} : vector<8x128xf32> to vector<8x32xf32>
    %1117 = arith.negf %1116 : vector<8x32xf32>
    %1118 = math.exp %1117 : vector<8x32xf32>
    %cst_207 = arith.constant 1.000000e+00 : f32
    %1119 = vector.broadcast %cst_207 : f32 to vector<8x32xf32>
    %1120 = arith.addf %1119, %1118 : vector<8x32xf32>
    %1121 = arith.divf %1119, %1120 : vector<8x32xf32>
    %1122 = vector.extract_strided_slice %1109 {offsets = [0, 64], sizes = [8, 32], strides = [1, 1]} : vector<8x128xf32> to vector<8x32xf32>
    %1123 = math.tanh %1122 : vector<8x32xf32>
    %1124 = vector.extract_strided_slice %1109 {offsets = [0, 96], sizes = [8, 32], strides = [1, 1]} : vector<8x128xf32> to vector<8x32xf32>
    %1125 = arith.negf %1124 : vector<8x32xf32>
    %1126 = math.exp %1125 : vector<8x32xf32>
    %cst_208 = arith.constant 1.000000e+00 : f32
    %1127 = vector.broadcast %cst_208 : f32 to vector<8x32xf32>
    %1128 = arith.addf %1127, %1126 : vector<8x32xf32>
    %1129 = arith.divf %1127, %1128 : vector<8x32xf32>
    %1130 = arith.mulf %1121, %935 : vector<8x32xf32>
    %1131 = arith.mulf %1115, %1123 : vector<8x32xf32>
    %1132 = arith.addf %1130, %1131 : vector<8x32xf32>
    %1133 = math.tanh %1132 : vector<8x32xf32>
    %1134 = arith.mulf %1129, %1133 : vector<8x32xf32>
    %cst_209 = arith.constant dense<0.000000e+00> : vector<8x32xf32>
    %1135 = tpu.matmul %1134, %763, %cst_209 {dimension_numbers = #tpu.dot_dimension_numbers<[1], [0], [0], [1], [0, 0, 1, 1], [], []>} : vector<8x32xf32>, vector<32x32xf32>, vector<8x32xf32> -> vector<8x32xf32>
    %1136 = vector.broadcast %764 : vector<1x32xf32> to vector<8x32xf32>
    %1137 = arith.addf %1135, %1136 : vector<8x32xf32>
    %1138 = vector.extract_strided_slice %768 {offsets = [0, 2], sizes = [8, 1], strides = [1, 1]} : vector<8x8xi32> to vector<8x1xi32>
    %c0_i32_210 = arith.constant 0 : i32
    %1139 = vector.broadcast %c0_i32_210 : i32 to vector<8x1xi32>
    %1140 = arith.cmpi ne, %1138, %1139 : vector<8x1xi32>
    %1141 = arith.extui %1140 : vector<8x1xi1> to vector<8x1xi32>
    %1142 = arith.sitofp %1141 : vector<8x1xi32> to vector<8x1xf32>
    %cst_211 = arith.constant dense<0xFF800000> : vector<8xf32>
    %1143 = vector.multi_reduction <maximumf>, %1137, %cst_211 [1] : vector<8x32xf32> to vector<8xf32>
    %1144 = vector.shape_cast %1143 : vector<8xf32> to vector<8x1xf32>
    %1145 = vector.broadcast %1144 : vector<8x1xf32> to vector<8x32xf32>
    %1146 = arith.subf %1137, %1145 : vector<8x32xf32>
    %1147 = math.exp %1146 : vector<8x32xf32>
    %cst_212 = arith.constant dense<0.000000e+00> : vector<8xf32>
    %1148 = vector.multi_reduction <add>, %1147, %cst_212 [1] : vector<8x32xf32> to vector<8xf32>
    %1149 = vector.shape_cast %1148 : vector<8xf32> to vector<8x1xf32>
    %1150 = math.log %1149 : vector<8x1xf32>
    %1151 = arith.addf %1150, %1144 : vector<8x1xf32>
    %1152 = vector.broadcast %1138 : vector<8x1xi32> to vector<8x32xi32>
    %1153 = arith.cmpi eq, %769, %1152 : vector<8x32xi32>
    %cst_213 = arith.constant 0.000000e+00 : f32
    %1154 = vector.broadcast %cst_213 : f32 to vector<8x32xf32>
    %1155 = arith.select %1153, %1137, %1154 : vector<8x32xi1>, vector<8x32xf32>
    %cst_214 = arith.constant dense<0.000000e+00> : vector<8xf32>
    %1156 = vector.multi_reduction <add>, %1155, %cst_214 [1] : vector<8x32xf32> to vector<8xf32>
    %1157 = vector.shape_cast %1156 : vector<8xf32> to vector<8x1xf32>
    %1158 = arith.subf %1151, %1157 : vector<8x1xf32>
    %1159 = arith.mulf %1158, %1142 : vector<8x1xf32>
    %cst_215 = arith.constant dense<0.000000e+00> : vector<1xf32>
    %1160 = vector.multi_reduction <add>, %1159, %cst_215 [0] : vector<8x1xf32> to vector<1xf32>
    %1161 = vector.shape_cast %1160 : vector<1xf32> to vector<1x1xf32>
    %1162 = arith.addf %965, %1161 : vector<1x1xf32>
    %cst_216 = arith.constant dense<0.000000e+00> : vector<1xf32>
    %1163 = vector.multi_reduction <add>, %1142, %cst_216 [0] : vector<8x1xf32> to vector<1xf32>
    %1164 = vector.shape_cast %1163 : vector<1xf32> to vector<1x1xf32>
    %1165 = arith.addf %968, %1164 : vector<1x1xf32>
    %cst_217 = arith.constant dense<0.000000e+00> : vector<8x32xf32>
    %1166 = tpu.matmul %1134, %765, %cst_217 {dimension_numbers = #tpu.dot_dimension_numbers<[1], [0], [0], [1], [0, 0, 1, 1], [], []>} : vector<8x32xf32>, vector<32x32xf32>, vector<8x32xf32> -> vector<8x32xf32>
    %1167 = vector.broadcast %766 : vector<1x32xf32> to vector<8x32xf32>
    %1168 = arith.addf %1166, %1167 : vector<8x32xf32>
    %1169 = arith.addf %1168, %107 : vector<8x32xf32>
    %1170 = math.tanh %1169 : vector<8x32xf32>
    %1171 = vector.broadcast %767 : vector<1x32xf32> to vector<8x32xf32>
    %1172 = arith.mulf %1170, %1171 : vector<8x32xf32>
    %cst_218 = arith.constant dense<0.000000e+00> : vector<8xf32>
    %1173 = vector.multi_reduction <add>, %1172, %cst_218 [1] : vector<8x32xf32> to vector<8xf32>
    %1174 = vector.shape_cast %1173 : vector<8xf32> to vector<8x1xf32>
    %1175 = arith.addf %1168, %199 : vector<8x32xf32>
    %1176 = math.tanh %1175 : vector<8x32xf32>
    %1177 = vector.broadcast %767 : vector<1x32xf32> to vector<8x32xf32>
    %1178 = arith.mulf %1176, %1177 : vector<8x32xf32>
    %cst_219 = arith.constant dense<0.000000e+00> : vector<8xf32>
    %1179 = vector.multi_reduction <add>, %1178, %cst_219 [1] : vector<8x32xf32> to vector<8xf32>
    %1180 = vector.shape_cast %1179 : vector<8xf32> to vector<8x1xf32>
    %1181 = arith.addf %1168, %291 : vector<8x32xf32>
    %1182 = math.tanh %1181 : vector<8x32xf32>
    %1183 = vector.broadcast %767 : vector<1x32xf32> to vector<8x32xf32>
    %1184 = arith.mulf %1182, %1183 : vector<8x32xf32>
    %cst_220 = arith.constant dense<0.000000e+00> : vector<8xf32>
    %1185 = vector.multi_reduction <add>, %1184, %cst_220 [1] : vector<8x32xf32> to vector<8xf32>
    %1186 = vector.shape_cast %1185 : vector<8xf32> to vector<8x1xf32>
    %1187 = arith.addf %1168, %383 : vector<8x32xf32>
    %1188 = math.tanh %1187 : vector<8x32xf32>
    %1189 = vector.broadcast %767 : vector<1x32xf32> to vector<8x32xf32>
    %1190 = arith.mulf %1188, %1189 : vector<8x32xf32>
    %cst_221 = arith.constant dense<0.000000e+00> : vector<8xf32>
    %1191 = vector.multi_reduction <add>, %1190, %cst_221 [1] : vector<8x32xf32> to vector<8xf32>
    %1192 = vector.shape_cast %1191 : vector<8xf32> to vector<8x1xf32>
    %1193 = arith.addf %1168, %475 : vector<8x32xf32>
    %1194 = math.tanh %1193 : vector<8x32xf32>
    %1195 = vector.broadcast %767 : vector<1x32xf32> to vector<8x32xf32>
    %1196 = arith.mulf %1194, %1195 : vector<8x32xf32>
    %cst_222 = arith.constant dense<0.000000e+00> : vector<8xf32>
    %1197 = vector.multi_reduction <add>, %1196, %cst_222 [1] : vector<8x32xf32> to vector<8xf32>
    %1198 = vector.shape_cast %1197 : vector<8xf32> to vector<8x1xf32>
    %1199 = arith.addf %1168, %567 : vector<8x32xf32>
    %1200 = math.tanh %1199 : vector<8x32xf32>
    %1201 = vector.broadcast %767 : vector<1x32xf32> to vector<8x32xf32>
    %1202 = arith.mulf %1200, %1201 : vector<8x32xf32>
    %cst_223 = arith.constant dense<0.000000e+00> : vector<8xf32>
    %1203 = vector.multi_reduction <add>, %1202, %cst_223 [1] : vector<8x32xf32> to vector<8xf32>
    %1204 = vector.shape_cast %1203 : vector<8xf32> to vector<8x1xf32>
    %1205 = arith.addf %1168, %659 : vector<8x32xf32>
    %1206 = math.tanh %1205 : vector<8x32xf32>
    %1207 = vector.broadcast %767 : vector<1x32xf32> to vector<8x32xf32>
    %1208 = arith.mulf %1206, %1207 : vector<8x32xf32>
    %cst_224 = arith.constant dense<0.000000e+00> : vector<8xf32>
    %1209 = vector.multi_reduction <add>, %1208, %cst_224 [1] : vector<8x32xf32> to vector<8xf32>
    %1210 = vector.shape_cast %1209 : vector<8xf32> to vector<8x1xf32>
    %1211 = arith.addf %1168, %751 : vector<8x32xf32>
    %1212 = math.tanh %1211 : vector<8x32xf32>
    %1213 = vector.broadcast %767 : vector<1x32xf32> to vector<8x32xf32>
    %1214 = arith.mulf %1212, %1213 : vector<8x32xf32>
    %cst_225 = arith.constant dense<0.000000e+00> : vector<8xf32>
    %1215 = vector.multi_reduction <add>, %1214, %cst_225 [1] : vector<8x32xf32> to vector<8xf32>
    %1216 = vector.shape_cast %1215 : vector<8xf32> to vector<8x1xf32>
    %1217 = arith.maximumf %1174, %1180 : vector<8x1xf32>
    %1218 = arith.maximumf %1217, %1186 : vector<8x1xf32>
    %1219 = arith.maximumf %1218, %1192 : vector<8x1xf32>
    %1220 = arith.maximumf %1219, %1198 : vector<8x1xf32>
    %1221 = arith.maximumf %1220, %1204 : vector<8x1xf32>
    %1222 = arith.maximumf %1221, %1210 : vector<8x1xf32>
    %1223 = arith.maximumf %1222, %1216 : vector<8x1xf32>
    %1224 = arith.subf %1174, %1223 : vector<8x1xf32>
    %1225 = math.exp %1224 : vector<8x1xf32>
    %1226 = arith.subf %1180, %1223 : vector<8x1xf32>
    %1227 = math.exp %1226 : vector<8x1xf32>
    %1228 = arith.subf %1186, %1223 : vector<8x1xf32>
    %1229 = math.exp %1228 : vector<8x1xf32>
    %1230 = arith.subf %1192, %1223 : vector<8x1xf32>
    %1231 = math.exp %1230 : vector<8x1xf32>
    %1232 = arith.subf %1198, %1223 : vector<8x1xf32>
    %1233 = math.exp %1232 : vector<8x1xf32>
    %1234 = arith.subf %1204, %1223 : vector<8x1xf32>
    %1235 = math.exp %1234 : vector<8x1xf32>
    %1236 = arith.subf %1210, %1223 : vector<8x1xf32>
    %1237 = math.exp %1236 : vector<8x1xf32>
    %1238 = arith.subf %1216, %1223 : vector<8x1xf32>
    %1239 = math.exp %1238 : vector<8x1xf32>
    %1240 = arith.addf %1225, %1227 : vector<8x1xf32>
    %1241 = arith.addf %1240, %1229 : vector<8x1xf32>
    %1242 = arith.addf %1241, %1231 : vector<8x1xf32>
    %1243 = arith.addf %1242, %1233 : vector<8x1xf32>
    %1244 = arith.addf %1243, %1235 : vector<8x1xf32>
    %1245 = arith.addf %1244, %1237 : vector<8x1xf32>
    %1246 = arith.addf %1245, %1239 : vector<8x1xf32>
    %1247 = vector.broadcast %1225 : vector<8x1xf32> to vector<8x32xf32>
    %1248 = arith.mulf %1247, %106 : vector<8x32xf32>
    %1249 = vector.broadcast %1227 : vector<8x1xf32> to vector<8x32xf32>
    %1250 = arith.mulf %1249, %198 : vector<8x32xf32>
    %1251 = arith.addf %1248, %1250 : vector<8x32xf32>
    %1252 = vector.broadcast %1229 : vector<8x1xf32> to vector<8x32xf32>
    %1253 = arith.mulf %1252, %290 : vector<8x32xf32>
    %1254 = arith.addf %1251, %1253 : vector<8x32xf32>
    %1255 = vector.broadcast %1231 : vector<8x1xf32> to vector<8x32xf32>
    %1256 = arith.mulf %1255, %382 : vector<8x32xf32>
    %1257 = arith.addf %1254, %1256 : vector<8x32xf32>
    %1258 = vector.broadcast %1233 : vector<8x1xf32> to vector<8x32xf32>
    %1259 = arith.mulf %1258, %474 : vector<8x32xf32>
    %1260 = arith.addf %1257, %1259 : vector<8x32xf32>
    %1261 = vector.broadcast %1235 : vector<8x1xf32> to vector<8x32xf32>
    %1262 = arith.mulf %1261, %566 : vector<8x32xf32>
    %1263 = arith.addf %1260, %1262 : vector<8x32xf32>
    %1264 = vector.broadcast %1237 : vector<8x1xf32> to vector<8x32xf32>
    %1265 = arith.mulf %1264, %658 : vector<8x32xf32>
    %1266 = arith.addf %1263, %1265 : vector<8x32xf32>
    %1267 = vector.broadcast %1239 : vector<8x1xf32> to vector<8x32xf32>
    %1268 = arith.mulf %1267, %750 : vector<8x32xf32>
    %1269 = arith.addf %1266, %1268 : vector<8x32xf32>
    %1270 = vector.broadcast %1246 : vector<8x1xf32> to vector<8x32xf32>
    %1271 = arith.divf %1269, %1270 : vector<8x32xf32>
    %1272 = vector.extract_strided_slice %757 {offsets = [16, 0], sizes = [8, 128], strides = [1, 1]} : vector<64x128xf32> to vector<8x128xf32>
    %cst_226 = arith.constant dense<0.000000e+00> : vector<8x128xf32>
    %1273 = tpu.matmul %1271, %758, %cst_226 {dimension_numbers = #tpu.dot_dimension_numbers<[1], [0], [0], [1], [0, 0, 1, 1], [], []>} : vector<8x32xf32>, vector<32x128xf32>, vector<8x128xf32> -> vector<8x128xf32>
    %1274 = arith.addf %1272, %1273 : vector<8x128xf32>
    %cst_227 = arith.constant dense<0.000000e+00> : vector<8x128xf32>
    %1275 = tpu.matmul %1104, %759, %cst_227 {dimension_numbers = #tpu.dot_dimension_numbers<[1], [0], [0], [1], [0, 0, 1, 1], [], []>} : vector<8x32xf32>, vector<32x128xf32>, vector<8x128xf32> -> vector<8x128xf32>
    %1276 = arith.addf %1274, %1275 : vector<8x128xf32>
    %1277 = vector.extract_strided_slice %1276 {offsets = [0, 0], sizes = [8, 32], strides = [1, 1]} : vector<8x128xf32> to vector<8x32xf32>
    %1278 = arith.negf %1277 : vector<8x32xf32>
    %1279 = math.exp %1278 : vector<8x32xf32>
    %cst_228 = arith.constant 1.000000e+00 : f32
    %1280 = vector.broadcast %cst_228 : f32 to vector<8x32xf32>
    %1281 = arith.addf %1280, %1279 : vector<8x32xf32>
    %1282 = arith.divf %1280, %1281 : vector<8x32xf32>
    %1283 = vector.extract_strided_slice %1276 {offsets = [0, 32], sizes = [8, 32], strides = [1, 1]} : vector<8x128xf32> to vector<8x32xf32>
    %1284 = arith.negf %1283 : vector<8x32xf32>
    %1285 = math.exp %1284 : vector<8x32xf32>
    %cst_229 = arith.constant 1.000000e+00 : f32
    %1286 = vector.broadcast %cst_229 : f32 to vector<8x32xf32>
    %1287 = arith.addf %1286, %1285 : vector<8x32xf32>
    %1288 = arith.divf %1286, %1287 : vector<8x32xf32>
    %1289 = vector.extract_strided_slice %1276 {offsets = [0, 64], sizes = [8, 32], strides = [1, 1]} : vector<8x128xf32> to vector<8x32xf32>
    %1290 = math.tanh %1289 : vector<8x32xf32>
    %1291 = vector.extract_strided_slice %1276 {offsets = [0, 96], sizes = [8, 32], strides = [1, 1]} : vector<8x128xf32> to vector<8x32xf32>
    %1292 = arith.negf %1291 : vector<8x32xf32>
    %1293 = math.exp %1292 : vector<8x32xf32>
    %cst_230 = arith.constant 1.000000e+00 : f32
    %1294 = vector.broadcast %cst_230 : f32 to vector<8x32xf32>
    %1295 = arith.addf %1294, %1293 : vector<8x32xf32>
    %1296 = arith.divf %1294, %1295 : vector<8x32xf32>
    %1297 = arith.mulf %1288, %1102 : vector<8x32xf32>
    %1298 = arith.mulf %1282, %1290 : vector<8x32xf32>
    %1299 = arith.addf %1297, %1298 : vector<8x32xf32>
    %1300 = math.tanh %1299 : vector<8x32xf32>
    %1301 = arith.mulf %1296, %1300 : vector<8x32xf32>
    %cst_231 = arith.constant dense<0.000000e+00> : vector<8x128xf32>
    %1302 = tpu.matmul %1301, %760, %cst_231 {dimension_numbers = #tpu.dot_dimension_numbers<[1], [0], [0], [1], [0, 0, 1, 1], [], []>} : vector<8x32xf32>, vector<32x128xf32>, vector<8x128xf32> -> vector<8x128xf32>
    %cst_232 = arith.constant dense<0.000000e+00> : vector<8x128xf32>
    %1303 = tpu.matmul %1134, %761, %cst_232 {dimension_numbers = #tpu.dot_dimension_numbers<[1], [0], [0], [1], [0, 0, 1, 1], [], []>} : vector<8x32xf32>, vector<32x128xf32>, vector<8x128xf32> -> vector<8x128xf32>
    %1304 = arith.addf %1302, %1303 : vector<8x128xf32>
    %1305 = vector.broadcast %762 : vector<1x128xf32> to vector<8x128xf32>
    %1306 = arith.addf %1304, %1305 : vector<8x128xf32>
    %1307 = vector.extract_strided_slice %1306 {offsets = [0, 0], sizes = [8, 32], strides = [1, 1]} : vector<8x128xf32> to vector<8x32xf32>
    %1308 = arith.negf %1307 : vector<8x32xf32>
    %1309 = math.exp %1308 : vector<8x32xf32>
    %cst_233 = arith.constant 1.000000e+00 : f32
    %1310 = vector.broadcast %cst_233 : f32 to vector<8x32xf32>
    %1311 = arith.addf %1310, %1309 : vector<8x32xf32>
    %1312 = arith.divf %1310, %1311 : vector<8x32xf32>
    %1313 = vector.extract_strided_slice %1306 {offsets = [0, 32], sizes = [8, 32], strides = [1, 1]} : vector<8x128xf32> to vector<8x32xf32>
    %1314 = arith.negf %1313 : vector<8x32xf32>
    %1315 = math.exp %1314 : vector<8x32xf32>
    %cst_234 = arith.constant 1.000000e+00 : f32
    %1316 = vector.broadcast %cst_234 : f32 to vector<8x32xf32>
    %1317 = arith.addf %1316, %1315 : vector<8x32xf32>
    %1318 = arith.divf %1316, %1317 : vector<8x32xf32>
    %1319 = vector.extract_strided_slice %1306 {offsets = [0, 64], sizes = [8, 32], strides = [1, 1]} : vector<8x128xf32> to vector<8x32xf32>
    %1320 = math.tanh %1319 : vector<8x32xf32>
    %1321 = vector.extract_strided_slice %1306 {offsets = [0, 96], sizes = [8, 32], strides = [1, 1]} : vector<8x128xf32> to vector<8x32xf32>
    %1322 = arith.negf %1321 : vector<8x32xf32>
    %1323 = math.exp %1322 : vector<8x32xf32>
    %cst_235 = arith.constant 1.000000e+00 : f32
    %1324 = vector.broadcast %cst_235 : f32 to vector<8x32xf32>
    %1325 = arith.addf %1324, %1323 : vector<8x32xf32>
    %1326 = arith.divf %1324, %1325 : vector<8x32xf32>
    %1327 = arith.mulf %1318, %1132 : vector<8x32xf32>
    %1328 = arith.mulf %1312, %1320 : vector<8x32xf32>
    %1329 = arith.addf %1327, %1328 : vector<8x32xf32>
    %1330 = math.tanh %1329 : vector<8x32xf32>
    %1331 = arith.mulf %1326, %1330 : vector<8x32xf32>
    %cst_236 = arith.constant dense<0.000000e+00> : vector<8x32xf32>
    %1332 = tpu.matmul %1331, %763, %cst_236 {dimension_numbers = #tpu.dot_dimension_numbers<[1], [0], [0], [1], [0, 0, 1, 1], [], []>} : vector<8x32xf32>, vector<32x32xf32>, vector<8x32xf32> -> vector<8x32xf32>
    %1333 = vector.broadcast %764 : vector<1x32xf32> to vector<8x32xf32>
    %1334 = arith.addf %1332, %1333 : vector<8x32xf32>
    %1335 = vector.extract_strided_slice %768 {offsets = [0, 3], sizes = [8, 1], strides = [1, 1]} : vector<8x8xi32> to vector<8x1xi32>
    %c0_i32_237 = arith.constant 0 : i32
    %1336 = vector.broadcast %c0_i32_237 : i32 to vector<8x1xi32>
    %1337 = arith.cmpi ne, %1335, %1336 : vector<8x1xi32>
    %1338 = arith.extui %1337 : vector<8x1xi1> to vector<8x1xi32>
    %1339 = arith.sitofp %1338 : vector<8x1xi32> to vector<8x1xf32>
    %cst_238 = arith.constant dense<0xFF800000> : vector<8xf32>
    %1340 = vector.multi_reduction <maximumf>, %1334, %cst_238 [1] : vector<8x32xf32> to vector<8xf32>
    %1341 = vector.shape_cast %1340 : vector<8xf32> to vector<8x1xf32>
    %1342 = vector.broadcast %1341 : vector<8x1xf32> to vector<8x32xf32>
    %1343 = arith.subf %1334, %1342 : vector<8x32xf32>
    %1344 = math.exp %1343 : vector<8x32xf32>
    %cst_239 = arith.constant dense<0.000000e+00> : vector<8xf32>
    %1345 = vector.multi_reduction <add>, %1344, %cst_239 [1] : vector<8x32xf32> to vector<8xf32>
    %1346 = vector.shape_cast %1345 : vector<8xf32> to vector<8x1xf32>
    %1347 = math.log %1346 : vector<8x1xf32>
    %1348 = arith.addf %1347, %1341 : vector<8x1xf32>
    %1349 = vector.broadcast %1335 : vector<8x1xi32> to vector<8x32xi32>
    %1350 = arith.cmpi eq, %769, %1349 : vector<8x32xi32>
    %cst_240 = arith.constant 0.000000e+00 : f32
    %1351 = vector.broadcast %cst_240 : f32 to vector<8x32xf32>
    %1352 = arith.select %1350, %1334, %1351 : vector<8x32xi1>, vector<8x32xf32>
    %cst_241 = arith.constant dense<0.000000e+00> : vector<8xf32>
    %1353 = vector.multi_reduction <add>, %1352, %cst_241 [1] : vector<8x32xf32> to vector<8xf32>
    %1354 = vector.shape_cast %1353 : vector<8xf32> to vector<8x1xf32>
    %1355 = arith.subf %1348, %1354 : vector<8x1xf32>
    %1356 = arith.mulf %1355, %1339 : vector<8x1xf32>
    %cst_242 = arith.constant dense<0.000000e+00> : vector<1xf32>
    %1357 = vector.multi_reduction <add>, %1356, %cst_242 [0] : vector<8x1xf32> to vector<1xf32>
    %1358 = vector.shape_cast %1357 : vector<1xf32> to vector<1x1xf32>
    %1359 = arith.addf %1162, %1358 : vector<1x1xf32>
    %cst_243 = arith.constant dense<0.000000e+00> : vector<1xf32>
    %1360 = vector.multi_reduction <add>, %1339, %cst_243 [0] : vector<8x1xf32> to vector<1xf32>
    %1361 = vector.shape_cast %1360 : vector<1xf32> to vector<1x1xf32>
    %1362 = arith.addf %1165, %1361 : vector<1x1xf32>
    %cst_244 = arith.constant dense<0.000000e+00> : vector<8x32xf32>
    %1363 = tpu.matmul %1331, %765, %cst_244 {dimension_numbers = #tpu.dot_dimension_numbers<[1], [0], [0], [1], [0, 0, 1, 1], [], []>} : vector<8x32xf32>, vector<32x32xf32>, vector<8x32xf32> -> vector<8x32xf32>
    %1364 = vector.broadcast %766 : vector<1x32xf32> to vector<8x32xf32>
    %1365 = arith.addf %1363, %1364 : vector<8x32xf32>
    %1366 = arith.addf %1365, %107 : vector<8x32xf32>
    %1367 = math.tanh %1366 : vector<8x32xf32>
    %1368 = vector.broadcast %767 : vector<1x32xf32> to vector<8x32xf32>
    %1369 = arith.mulf %1367, %1368 : vector<8x32xf32>
    %cst_245 = arith.constant dense<0.000000e+00> : vector<8xf32>
    %1370 = vector.multi_reduction <add>, %1369, %cst_245 [1] : vector<8x32xf32> to vector<8xf32>
    %1371 = vector.shape_cast %1370 : vector<8xf32> to vector<8x1xf32>
    %1372 = arith.addf %1365, %199 : vector<8x32xf32>
    %1373 = math.tanh %1372 : vector<8x32xf32>
    %1374 = vector.broadcast %767 : vector<1x32xf32> to vector<8x32xf32>
    %1375 = arith.mulf %1373, %1374 : vector<8x32xf32>
    %cst_246 = arith.constant dense<0.000000e+00> : vector<8xf32>
    %1376 = vector.multi_reduction <add>, %1375, %cst_246 [1] : vector<8x32xf32> to vector<8xf32>
    %1377 = vector.shape_cast %1376 : vector<8xf32> to vector<8x1xf32>
    %1378 = arith.addf %1365, %291 : vector<8x32xf32>
    %1379 = math.tanh %1378 : vector<8x32xf32>
    %1380 = vector.broadcast %767 : vector<1x32xf32> to vector<8x32xf32>
    %1381 = arith.mulf %1379, %1380 : vector<8x32xf32>
    %cst_247 = arith.constant dense<0.000000e+00> : vector<8xf32>
    %1382 = vector.multi_reduction <add>, %1381, %cst_247 [1] : vector<8x32xf32> to vector<8xf32>
    %1383 = vector.shape_cast %1382 : vector<8xf32> to vector<8x1xf32>
    %1384 = arith.addf %1365, %383 : vector<8x32xf32>
    %1385 = math.tanh %1384 : vector<8x32xf32>
    %1386 = vector.broadcast %767 : vector<1x32xf32> to vector<8x32xf32>
    %1387 = arith.mulf %1385, %1386 : vector<8x32xf32>
    %cst_248 = arith.constant dense<0.000000e+00> : vector<8xf32>
    %1388 = vector.multi_reduction <add>, %1387, %cst_248 [1] : vector<8x32xf32> to vector<8xf32>
    %1389 = vector.shape_cast %1388 : vector<8xf32> to vector<8x1xf32>
    %1390 = arith.addf %1365, %475 : vector<8x32xf32>
    %1391 = math.tanh %1390 : vector<8x32xf32>
    %1392 = vector.broadcast %767 : vector<1x32xf32> to vector<8x32xf32>
    %1393 = arith.mulf %1391, %1392 : vector<8x32xf32>
    %cst_249 = arith.constant dense<0.000000e+00> : vector<8xf32>
    %1394 = vector.multi_reduction <add>, %1393, %cst_249 [1] : vector<8x32xf32> to vector<8xf32>
    %1395 = vector.shape_cast %1394 : vector<8xf32> to vector<8x1xf32>
    %1396 = arith.addf %1365, %567 : vector<8x32xf32>
    %1397 = math.tanh %1396 : vector<8x32xf32>
    %1398 = vector.broadcast %767 : vector<1x32xf32> to vector<8x32xf32>
    %1399 = arith.mulf %1397, %1398 : vector<8x32xf32>
    %cst_250 = arith.constant dense<0.000000e+00> : vector<8xf32>
    %1400 = vector.multi_reduction <add>, %1399, %cst_250 [1] : vector<8x32xf32> to vector<8xf32>
    %1401 = vector.shape_cast %1400 : vector<8xf32> to vector<8x1xf32>
    %1402 = arith.addf %1365, %659 : vector<8x32xf32>
    %1403 = math.tanh %1402 : vector<8x32xf32>
    %1404 = vector.broadcast %767 : vector<1x32xf32> to vector<8x32xf32>
    %1405 = arith.mulf %1403, %1404 : vector<8x32xf32>
    %cst_251 = arith.constant dense<0.000000e+00> : vector<8xf32>
    %1406 = vector.multi_reduction <add>, %1405, %cst_251 [1] : vector<8x32xf32> to vector<8xf32>
    %1407 = vector.shape_cast %1406 : vector<8xf32> to vector<8x1xf32>
    %1408 = arith.addf %1365, %751 : vector<8x32xf32>
    %1409 = math.tanh %1408 : vector<8x32xf32>
    %1410 = vector.broadcast %767 : vector<1x32xf32> to vector<8x32xf32>
    %1411 = arith.mulf %1409, %1410 : vector<8x32xf32>
    %cst_252 = arith.constant dense<0.000000e+00> : vector<8xf32>
    %1412 = vector.multi_reduction <add>, %1411, %cst_252 [1] : vector<8x32xf32> to vector<8xf32>
    %1413 = vector.shape_cast %1412 : vector<8xf32> to vector<8x1xf32>
    %1414 = arith.maximumf %1371, %1377 : vector<8x1xf32>
    %1415 = arith.maximumf %1414, %1383 : vector<8x1xf32>
    %1416 = arith.maximumf %1415, %1389 : vector<8x1xf32>
    %1417 = arith.maximumf %1416, %1395 : vector<8x1xf32>
    %1418 = arith.maximumf %1417, %1401 : vector<8x1xf32>
    %1419 = arith.maximumf %1418, %1407 : vector<8x1xf32>
    %1420 = arith.maximumf %1419, %1413 : vector<8x1xf32>
    %1421 = arith.subf %1371, %1420 : vector<8x1xf32>
    %1422 = math.exp %1421 : vector<8x1xf32>
    %1423 = arith.subf %1377, %1420 : vector<8x1xf32>
    %1424 = math.exp %1423 : vector<8x1xf32>
    %1425 = arith.subf %1383, %1420 : vector<8x1xf32>
    %1426 = math.exp %1425 : vector<8x1xf32>
    %1427 = arith.subf %1389, %1420 : vector<8x1xf32>
    %1428 = math.exp %1427 : vector<8x1xf32>
    %1429 = arith.subf %1395, %1420 : vector<8x1xf32>
    %1430 = math.exp %1429 : vector<8x1xf32>
    %1431 = arith.subf %1401, %1420 : vector<8x1xf32>
    %1432 = math.exp %1431 : vector<8x1xf32>
    %1433 = arith.subf %1407, %1420 : vector<8x1xf32>
    %1434 = math.exp %1433 : vector<8x1xf32>
    %1435 = arith.subf %1413, %1420 : vector<8x1xf32>
    %1436 = math.exp %1435 : vector<8x1xf32>
    %1437 = arith.addf %1422, %1424 : vector<8x1xf32>
    %1438 = arith.addf %1437, %1426 : vector<8x1xf32>
    %1439 = arith.addf %1438, %1428 : vector<8x1xf32>
    %1440 = arith.addf %1439, %1430 : vector<8x1xf32>
    %1441 = arith.addf %1440, %1432 : vector<8x1xf32>
    %1442 = arith.addf %1441, %1434 : vector<8x1xf32>
    %1443 = arith.addf %1442, %1436 : vector<8x1xf32>
    %1444 = vector.broadcast %1422 : vector<8x1xf32> to vector<8x32xf32>
    %1445 = arith.mulf %1444, %106 : vector<8x32xf32>
    %1446 = vector.broadcast %1424 : vector<8x1xf32> to vector<8x32xf32>
    %1447 = arith.mulf %1446, %198 : vector<8x32xf32>
    %1448 = arith.addf %1445, %1447 : vector<8x32xf32>
    %1449 = vector.broadcast %1426 : vector<8x1xf32> to vector<8x32xf32>
    %1450 = arith.mulf %1449, %290 : vector<8x32xf32>
    %1451 = arith.addf %1448, %1450 : vector<8x32xf32>
    %1452 = vector.broadcast %1428 : vector<8x1xf32> to vector<8x32xf32>
    %1453 = arith.mulf %1452, %382 : vector<8x32xf32>
    %1454 = arith.addf %1451, %1453 : vector<8x32xf32>
    %1455 = vector.broadcast %1430 : vector<8x1xf32> to vector<8x32xf32>
    %1456 = arith.mulf %1455, %474 : vector<8x32xf32>
    %1457 = arith.addf %1454, %1456 : vector<8x32xf32>
    %1458 = vector.broadcast %1432 : vector<8x1xf32> to vector<8x32xf32>
    %1459 = arith.mulf %1458, %566 : vector<8x32xf32>
    %1460 = arith.addf %1457, %1459 : vector<8x32xf32>
    %1461 = vector.broadcast %1434 : vector<8x1xf32> to vector<8x32xf32>
    %1462 = arith.mulf %1461, %658 : vector<8x32xf32>
    %1463 = arith.addf %1460, %1462 : vector<8x32xf32>
    %1464 = vector.broadcast %1436 : vector<8x1xf32> to vector<8x32xf32>
    %1465 = arith.mulf %1464, %750 : vector<8x32xf32>
    %1466 = arith.addf %1463, %1465 : vector<8x32xf32>
    %1467 = vector.broadcast %1443 : vector<8x1xf32> to vector<8x32xf32>
    %1468 = arith.divf %1466, %1467 : vector<8x32xf32>
    %1469 = vector.extract_strided_slice %757 {offsets = [24, 0], sizes = [8, 128], strides = [1, 1]} : vector<64x128xf32> to vector<8x128xf32>
    %cst_253 = arith.constant dense<0.000000e+00> : vector<8x128xf32>
    %1470 = tpu.matmul %1468, %758, %cst_253 {dimension_numbers = #tpu.dot_dimension_numbers<[1], [0], [0], [1], [0, 0, 1, 1], [], []>} : vector<8x32xf32>, vector<32x128xf32>, vector<8x128xf32> -> vector<8x128xf32>
    %1471 = arith.addf %1469, %1470 : vector<8x128xf32>
    %cst_254 = arith.constant dense<0.000000e+00> : vector<8x128xf32>
    %1472 = tpu.matmul %1301, %759, %cst_254 {dimension_numbers = #tpu.dot_dimension_numbers<[1], [0], [0], [1], [0, 0, 1, 1], [], []>} : vector<8x32xf32>, vector<32x128xf32>, vector<8x128xf32> -> vector<8x128xf32>
    %1473 = arith.addf %1471, %1472 : vector<8x128xf32>
    %1474 = vector.extract_strided_slice %1473 {offsets = [0, 0], sizes = [8, 32], strides = [1, 1]} : vector<8x128xf32> to vector<8x32xf32>
    %1475 = arith.negf %1474 : vector<8x32xf32>
    %1476 = math.exp %1475 : vector<8x32xf32>
    %cst_255 = arith.constant 1.000000e+00 : f32
    %1477 = vector.broadcast %cst_255 : f32 to vector<8x32xf32>
    %1478 = arith.addf %1477, %1476 : vector<8x32xf32>
    %1479 = arith.divf %1477, %1478 : vector<8x32xf32>
    %1480 = vector.extract_strided_slice %1473 {offsets = [0, 32], sizes = [8, 32], strides = [1, 1]} : vector<8x128xf32> to vector<8x32xf32>
    %1481 = arith.negf %1480 : vector<8x32xf32>
    %1482 = math.exp %1481 : vector<8x32xf32>
    %cst_256 = arith.constant 1.000000e+00 : f32
    %1483 = vector.broadcast %cst_256 : f32 to vector<8x32xf32>
    %1484 = arith.addf %1483, %1482 : vector<8x32xf32>
    %1485 = arith.divf %1483, %1484 : vector<8x32xf32>
    %1486 = vector.extract_strided_slice %1473 {offsets = [0, 64], sizes = [8, 32], strides = [1, 1]} : vector<8x128xf32> to vector<8x32xf32>
    %1487 = math.tanh %1486 : vector<8x32xf32>
    %1488 = vector.extract_strided_slice %1473 {offsets = [0, 96], sizes = [8, 32], strides = [1, 1]} : vector<8x128xf32> to vector<8x32xf32>
    %1489 = arith.negf %1488 : vector<8x32xf32>
    %1490 = math.exp %1489 : vector<8x32xf32>
    %cst_257 = arith.constant 1.000000e+00 : f32
    %1491 = vector.broadcast %cst_257 : f32 to vector<8x32xf32>
    %1492 = arith.addf %1491, %1490 : vector<8x32xf32>
    %1493 = arith.divf %1491, %1492 : vector<8x32xf32>
    %1494 = arith.mulf %1485, %1299 : vector<8x32xf32>
    %1495 = arith.mulf %1479, %1487 : vector<8x32xf32>
    %1496 = arith.addf %1494, %1495 : vector<8x32xf32>
    %1497 = math.tanh %1496 : vector<8x32xf32>
    %1498 = arith.mulf %1493, %1497 : vector<8x32xf32>
    %cst_258 = arith.constant dense<0.000000e+00> : vector<8x128xf32>
    %1499 = tpu.matmul %1498, %760, %cst_258 {dimension_numbers = #tpu.dot_dimension_numbers<[1], [0], [0], [1], [0, 0, 1, 1], [], []>} : vector<8x32xf32>, vector<32x128xf32>, vector<8x128xf32> -> vector<8x128xf32>
    %cst_259 = arith.constant dense<0.000000e+00> : vector<8x128xf32>
    %1500 = tpu.matmul %1331, %761, %cst_259 {dimension_numbers = #tpu.dot_dimension_numbers<[1], [0], [0], [1], [0, 0, 1, 1], [], []>} : vector<8x32xf32>, vector<32x128xf32>, vector<8x128xf32> -> vector<8x128xf32>
    %1501 = arith.addf %1499, %1500 : vector<8x128xf32>
    %1502 = vector.broadcast %762 : vector<1x128xf32> to vector<8x128xf32>
    %1503 = arith.addf %1501, %1502 : vector<8x128xf32>
    %1504 = vector.extract_strided_slice %1503 {offsets = [0, 0], sizes = [8, 32], strides = [1, 1]} : vector<8x128xf32> to vector<8x32xf32>
    %1505 = arith.negf %1504 : vector<8x32xf32>
    %1506 = math.exp %1505 : vector<8x32xf32>
    %cst_260 = arith.constant 1.000000e+00 : f32
    %1507 = vector.broadcast %cst_260 : f32 to vector<8x32xf32>
    %1508 = arith.addf %1507, %1506 : vector<8x32xf32>
    %1509 = arith.divf %1507, %1508 : vector<8x32xf32>
    %1510 = vector.extract_strided_slice %1503 {offsets = [0, 32], sizes = [8, 32], strides = [1, 1]} : vector<8x128xf32> to vector<8x32xf32>
    %1511 = arith.negf %1510 : vector<8x32xf32>
    %1512 = math.exp %1511 : vector<8x32xf32>
    %cst_261 = arith.constant 1.000000e+00 : f32
    %1513 = vector.broadcast %cst_261 : f32 to vector<8x32xf32>
    %1514 = arith.addf %1513, %1512 : vector<8x32xf32>
    %1515 = arith.divf %1513, %1514 : vector<8x32xf32>
    %1516 = vector.extract_strided_slice %1503 {offsets = [0, 64], sizes = [8, 32], strides = [1, 1]} : vector<8x128xf32> to vector<8x32xf32>
    %1517 = math.tanh %1516 : vector<8x32xf32>
    %1518 = vector.extract_strided_slice %1503 {offsets = [0, 96], sizes = [8, 32], strides = [1, 1]} : vector<8x128xf32> to vector<8x32xf32>
    %1519 = arith.negf %1518 : vector<8x32xf32>
    %1520 = math.exp %1519 : vector<8x32xf32>
    %cst_262 = arith.constant 1.000000e+00 : f32
    %1521 = vector.broadcast %cst_262 : f32 to vector<8x32xf32>
    %1522 = arith.addf %1521, %1520 : vector<8x32xf32>
    %1523 = arith.divf %1521, %1522 : vector<8x32xf32>
    %1524 = arith.mulf %1515, %1329 : vector<8x32xf32>
    %1525 = arith.mulf %1509, %1517 : vector<8x32xf32>
    %1526 = arith.addf %1524, %1525 : vector<8x32xf32>
    %1527 = math.tanh %1526 : vector<8x32xf32>
    %1528 = arith.mulf %1523, %1527 : vector<8x32xf32>
    %cst_263 = arith.constant dense<0.000000e+00> : vector<8x32xf32>
    %1529 = tpu.matmul %1528, %763, %cst_263 {dimension_numbers = #tpu.dot_dimension_numbers<[1], [0], [0], [1], [0, 0, 1, 1], [], []>} : vector<8x32xf32>, vector<32x32xf32>, vector<8x32xf32> -> vector<8x32xf32>
    %1530 = vector.broadcast %764 : vector<1x32xf32> to vector<8x32xf32>
    %1531 = arith.addf %1529, %1530 : vector<8x32xf32>
    %1532 = vector.extract_strided_slice %768 {offsets = [0, 4], sizes = [8, 1], strides = [1, 1]} : vector<8x8xi32> to vector<8x1xi32>
    %c0_i32_264 = arith.constant 0 : i32
    %1533 = vector.broadcast %c0_i32_264 : i32 to vector<8x1xi32>
    %1534 = arith.cmpi ne, %1532, %1533 : vector<8x1xi32>
    %1535 = arith.extui %1534 : vector<8x1xi1> to vector<8x1xi32>
    %1536 = arith.sitofp %1535 : vector<8x1xi32> to vector<8x1xf32>
    %cst_265 = arith.constant dense<0xFF800000> : vector<8xf32>
    %1537 = vector.multi_reduction <maximumf>, %1531, %cst_265 [1] : vector<8x32xf32> to vector<8xf32>
    %1538 = vector.shape_cast %1537 : vector<8xf32> to vector<8x1xf32>
    %1539 = vector.broadcast %1538 : vector<8x1xf32> to vector<8x32xf32>
    %1540 = arith.subf %1531, %1539 : vector<8x32xf32>
    %1541 = math.exp %1540 : vector<8x32xf32>
    %cst_266 = arith.constant dense<0.000000e+00> : vector<8xf32>
    %1542 = vector.multi_reduction <add>, %1541, %cst_266 [1] : vector<8x32xf32> to vector<8xf32>
    %1543 = vector.shape_cast %1542 : vector<8xf32> to vector<8x1xf32>
    %1544 = math.log %1543 : vector<8x1xf32>
    %1545 = arith.addf %1544, %1538 : vector<8x1xf32>
    %1546 = vector.broadcast %1532 : vector<8x1xi32> to vector<8x32xi32>
    %1547 = arith.cmpi eq, %769, %1546 : vector<8x32xi32>
    %cst_267 = arith.constant 0.000000e+00 : f32
    %1548 = vector.broadcast %cst_267 : f32 to vector<8x32xf32>
    %1549 = arith.select %1547, %1531, %1548 : vector<8x32xi1>, vector<8x32xf32>
    %cst_268 = arith.constant dense<0.000000e+00> : vector<8xf32>
    %1550 = vector.multi_reduction <add>, %1549, %cst_268 [1] : vector<8x32xf32> to vector<8xf32>
    %1551 = vector.shape_cast %1550 : vector<8xf32> to vector<8x1xf32>
    %1552 = arith.subf %1545, %1551 : vector<8x1xf32>
    %1553 = arith.mulf %1552, %1536 : vector<8x1xf32>
    %cst_269 = arith.constant dense<0.000000e+00> : vector<1xf32>
    %1554 = vector.multi_reduction <add>, %1553, %cst_269 [0] : vector<8x1xf32> to vector<1xf32>
    %1555 = vector.shape_cast %1554 : vector<1xf32> to vector<1x1xf32>
    %1556 = arith.addf %1359, %1555 : vector<1x1xf32>
    %cst_270 = arith.constant dense<0.000000e+00> : vector<1xf32>
    %1557 = vector.multi_reduction <add>, %1536, %cst_270 [0] : vector<8x1xf32> to vector<1xf32>
    %1558 = vector.shape_cast %1557 : vector<1xf32> to vector<1x1xf32>
    %1559 = arith.addf %1362, %1558 : vector<1x1xf32>
    %cst_271 = arith.constant dense<0.000000e+00> : vector<8x32xf32>
    %1560 = tpu.matmul %1528, %765, %cst_271 {dimension_numbers = #tpu.dot_dimension_numbers<[1], [0], [0], [1], [0, 0, 1, 1], [], []>} : vector<8x32xf32>, vector<32x32xf32>, vector<8x32xf32> -> vector<8x32xf32>
    %1561 = vector.broadcast %766 : vector<1x32xf32> to vector<8x32xf32>
    %1562 = arith.addf %1560, %1561 : vector<8x32xf32>
    %1563 = arith.addf %1562, %107 : vector<8x32xf32>
    %1564 = math.tanh %1563 : vector<8x32xf32>
    %1565 = vector.broadcast %767 : vector<1x32xf32> to vector<8x32xf32>
    %1566 = arith.mulf %1564, %1565 : vector<8x32xf32>
    %cst_272 = arith.constant dense<0.000000e+00> : vector<8xf32>
    %1567 = vector.multi_reduction <add>, %1566, %cst_272 [1] : vector<8x32xf32> to vector<8xf32>
    %1568 = vector.shape_cast %1567 : vector<8xf32> to vector<8x1xf32>
    %1569 = arith.addf %1562, %199 : vector<8x32xf32>
    %1570 = math.tanh %1569 : vector<8x32xf32>
    %1571 = vector.broadcast %767 : vector<1x32xf32> to vector<8x32xf32>
    %1572 = arith.mulf %1570, %1571 : vector<8x32xf32>
    %cst_273 = arith.constant dense<0.000000e+00> : vector<8xf32>
    %1573 = vector.multi_reduction <add>, %1572, %cst_273 [1] : vector<8x32xf32> to vector<8xf32>
    %1574 = vector.shape_cast %1573 : vector<8xf32> to vector<8x1xf32>
    %1575 = arith.addf %1562, %291 : vector<8x32xf32>
    %1576 = math.tanh %1575 : vector<8x32xf32>
    %1577 = vector.broadcast %767 : vector<1x32xf32> to vector<8x32xf32>
    %1578 = arith.mulf %1576, %1577 : vector<8x32xf32>
    %cst_274 = arith.constant dense<0.000000e+00> : vector<8xf32>
    %1579 = vector.multi_reduction <add>, %1578, %cst_274 [1] : vector<8x32xf32> to vector<8xf32>
    %1580 = vector.shape_cast %1579 : vector<8xf32> to vector<8x1xf32>
    %1581 = arith.addf %1562, %383 : vector<8x32xf32>
    %1582 = math.tanh %1581 : vector<8x32xf32>
    %1583 = vector.broadcast %767 : vector<1x32xf32> to vector<8x32xf32>
    %1584 = arith.mulf %1582, %1583 : vector<8x32xf32>
    %cst_275 = arith.constant dense<0.000000e+00> : vector<8xf32>
    %1585 = vector.multi_reduction <add>, %1584, %cst_275 [1] : vector<8x32xf32> to vector<8xf32>
    %1586 = vector.shape_cast %1585 : vector<8xf32> to vector<8x1xf32>
    %1587 = arith.addf %1562, %475 : vector<8x32xf32>
    %1588 = math.tanh %1587 : vector<8x32xf32>
    %1589 = vector.broadcast %767 : vector<1x32xf32> to vector<8x32xf32>
    %1590 = arith.mulf %1588, %1589 : vector<8x32xf32>
    %cst_276 = arith.constant dense<0.000000e+00> : vector<8xf32>
    %1591 = vector.multi_reduction <add>, %1590, %cst_276 [1] : vector<8x32xf32> to vector<8xf32>
    %1592 = vector.shape_cast %1591 : vector<8xf32> to vector<8x1xf32>
    %1593 = arith.addf %1562, %567 : vector<8x32xf32>
    %1594 = math.tanh %1593 : vector<8x32xf32>
    %1595 = vector.broadcast %767 : vector<1x32xf32> to vector<8x32xf32>
    %1596 = arith.mulf %1594, %1595 : vector<8x32xf32>
    %cst_277 = arith.constant dense<0.000000e+00> : vector<8xf32>
    %1597 = vector.multi_reduction <add>, %1596, %cst_277 [1] : vector<8x32xf32> to vector<8xf32>
    %1598 = vector.shape_cast %1597 : vector<8xf32> to vector<8x1xf32>
    %1599 = arith.addf %1562, %659 : vector<8x32xf32>
    %1600 = math.tanh %1599 : vector<8x32xf32>
    %1601 = vector.broadcast %767 : vector<1x32xf32> to vector<8x32xf32>
    %1602 = arith.mulf %1600, %1601 : vector<8x32xf32>
    %cst_278 = arith.constant dense<0.000000e+00> : vector<8xf32>
    %1603 = vector.multi_reduction <add>, %1602, %cst_278 [1] : vector<8x32xf32> to vector<8xf32>
    %1604 = vector.shape_cast %1603 : vector<8xf32> to vector<8x1xf32>
    %1605 = arith.addf %1562, %751 : vector<8x32xf32>
    %1606 = math.tanh %1605 : vector<8x32xf32>
    %1607 = vector.broadcast %767 : vector<1x32xf32> to vector<8x32xf32>
    %1608 = arith.mulf %1606, %1607 : vector<8x32xf32>
    %cst_279 = arith.constant dense<0.000000e+00> : vector<8xf32>
    %1609 = vector.multi_reduction <add>, %1608, %cst_279 [1] : vector<8x32xf32> to vector<8xf32>
    %1610 = vector.shape_cast %1609 : vector<8xf32> to vector<8x1xf32>
    %1611 = arith.maximumf %1568, %1574 : vector<8x1xf32>
    %1612 = arith.maximumf %1611, %1580 : vector<8x1xf32>
    %1613 = arith.maximumf %1612, %1586 : vector<8x1xf32>
    %1614 = arith.maximumf %1613, %1592 : vector<8x1xf32>
    %1615 = arith.maximumf %1614, %1598 : vector<8x1xf32>
    %1616 = arith.maximumf %1615, %1604 : vector<8x1xf32>
    %1617 = arith.maximumf %1616, %1610 : vector<8x1xf32>
    %1618 = arith.subf %1568, %1617 : vector<8x1xf32>
    %1619 = math.exp %1618 : vector<8x1xf32>
    %1620 = arith.subf %1574, %1617 : vector<8x1xf32>
    %1621 = math.exp %1620 : vector<8x1xf32>
    %1622 = arith.subf %1580, %1617 : vector<8x1xf32>
    %1623 = math.exp %1622 : vector<8x1xf32>
    %1624 = arith.subf %1586, %1617 : vector<8x1xf32>
    %1625 = math.exp %1624 : vector<8x1xf32>
    %1626 = arith.subf %1592, %1617 : vector<8x1xf32>
    %1627 = math.exp %1626 : vector<8x1xf32>
    %1628 = arith.subf %1598, %1617 : vector<8x1xf32>
    %1629 = math.exp %1628 : vector<8x1xf32>
    %1630 = arith.subf %1604, %1617 : vector<8x1xf32>
    %1631 = math.exp %1630 : vector<8x1xf32>
    %1632 = arith.subf %1610, %1617 : vector<8x1xf32>
    %1633 = math.exp %1632 : vector<8x1xf32>
    %1634 = arith.addf %1619, %1621 : vector<8x1xf32>
    %1635 = arith.addf %1634, %1623 : vector<8x1xf32>
    %1636 = arith.addf %1635, %1625 : vector<8x1xf32>
    %1637 = arith.addf %1636, %1627 : vector<8x1xf32>
    %1638 = arith.addf %1637, %1629 : vector<8x1xf32>
    %1639 = arith.addf %1638, %1631 : vector<8x1xf32>
    %1640 = arith.addf %1639, %1633 : vector<8x1xf32>
    %1641 = vector.broadcast %1619 : vector<8x1xf32> to vector<8x32xf32>
    %1642 = arith.mulf %1641, %106 : vector<8x32xf32>
    %1643 = vector.broadcast %1621 : vector<8x1xf32> to vector<8x32xf32>
    %1644 = arith.mulf %1643, %198 : vector<8x32xf32>
    %1645 = arith.addf %1642, %1644 : vector<8x32xf32>
    %1646 = vector.broadcast %1623 : vector<8x1xf32> to vector<8x32xf32>
    %1647 = arith.mulf %1646, %290 : vector<8x32xf32>
    %1648 = arith.addf %1645, %1647 : vector<8x32xf32>
    %1649 = vector.broadcast %1625 : vector<8x1xf32> to vector<8x32xf32>
    %1650 = arith.mulf %1649, %382 : vector<8x32xf32>
    %1651 = arith.addf %1648, %1650 : vector<8x32xf32>
    %1652 = vector.broadcast %1627 : vector<8x1xf32> to vector<8x32xf32>
    %1653 = arith.mulf %1652, %474 : vector<8x32xf32>
    %1654 = arith.addf %1651, %1653 : vector<8x32xf32>
    %1655 = vector.broadcast %1629 : vector<8x1xf32> to vector<8x32xf32>
    %1656 = arith.mulf %1655, %566 : vector<8x32xf32>
    %1657 = arith.addf %1654, %1656 : vector<8x32xf32>
    %1658 = vector.broadcast %1631 : vector<8x1xf32> to vector<8x32xf32>
    %1659 = arith.mulf %1658, %658 : vector<8x32xf32>
    %1660 = arith.addf %1657, %1659 : vector<8x32xf32>
    %1661 = vector.broadcast %1633 : vector<8x1xf32> to vector<8x32xf32>
    %1662 = arith.mulf %1661, %750 : vector<8x32xf32>
    %1663 = arith.addf %1660, %1662 : vector<8x32xf32>
    %1664 = vector.broadcast %1640 : vector<8x1xf32> to vector<8x32xf32>
    %1665 = arith.divf %1663, %1664 : vector<8x32xf32>
    %1666 = vector.extract_strided_slice %757 {offsets = [32, 0], sizes = [8, 128], strides = [1, 1]} : vector<64x128xf32> to vector<8x128xf32>
    %cst_280 = arith.constant dense<0.000000e+00> : vector<8x128xf32>
    %1667 = tpu.matmul %1665, %758, %cst_280 {dimension_numbers = #tpu.dot_dimension_numbers<[1], [0], [0], [1], [0, 0, 1, 1], [], []>} : vector<8x32xf32>, vector<32x128xf32>, vector<8x128xf32> -> vector<8x128xf32>
    %1668 = arith.addf %1666, %1667 : vector<8x128xf32>
    %cst_281 = arith.constant dense<0.000000e+00> : vector<8x128xf32>
    %1669 = tpu.matmul %1498, %759, %cst_281 {dimension_numbers = #tpu.dot_dimension_numbers<[1], [0], [0], [1], [0, 0, 1, 1], [], []>} : vector<8x32xf32>, vector<32x128xf32>, vector<8x128xf32> -> vector<8x128xf32>
    %1670 = arith.addf %1668, %1669 : vector<8x128xf32>
    %1671 = vector.extract_strided_slice %1670 {offsets = [0, 0], sizes = [8, 32], strides = [1, 1]} : vector<8x128xf32> to vector<8x32xf32>
    %1672 = arith.negf %1671 : vector<8x32xf32>
    %1673 = math.exp %1672 : vector<8x32xf32>
    %cst_282 = arith.constant 1.000000e+00 : f32
    %1674 = vector.broadcast %cst_282 : f32 to vector<8x32xf32>
    %1675 = arith.addf %1674, %1673 : vector<8x32xf32>
    %1676 = arith.divf %1674, %1675 : vector<8x32xf32>
    %1677 = vector.extract_strided_slice %1670 {offsets = [0, 32], sizes = [8, 32], strides = [1, 1]} : vector<8x128xf32> to vector<8x32xf32>
    %1678 = arith.negf %1677 : vector<8x32xf32>
    %1679 = math.exp %1678 : vector<8x32xf32>
    %cst_283 = arith.constant 1.000000e+00 : f32
    %1680 = vector.broadcast %cst_283 : f32 to vector<8x32xf32>
    %1681 = arith.addf %1680, %1679 : vector<8x32xf32>
    %1682 = arith.divf %1680, %1681 : vector<8x32xf32>
    %1683 = vector.extract_strided_slice %1670 {offsets = [0, 64], sizes = [8, 32], strides = [1, 1]} : vector<8x128xf32> to vector<8x32xf32>
    %1684 = math.tanh %1683 : vector<8x32xf32>
    %1685 = vector.extract_strided_slice %1670 {offsets = [0, 96], sizes = [8, 32], strides = [1, 1]} : vector<8x128xf32> to vector<8x32xf32>
    %1686 = arith.negf %1685 : vector<8x32xf32>
    %1687 = math.exp %1686 : vector<8x32xf32>
    %cst_284 = arith.constant 1.000000e+00 : f32
    %1688 = vector.broadcast %cst_284 : f32 to vector<8x32xf32>
    %1689 = arith.addf %1688, %1687 : vector<8x32xf32>
    %1690 = arith.divf %1688, %1689 : vector<8x32xf32>
    %1691 = arith.mulf %1682, %1496 : vector<8x32xf32>
    %1692 = arith.mulf %1676, %1684 : vector<8x32xf32>
    %1693 = arith.addf %1691, %1692 : vector<8x32xf32>
    %1694 = math.tanh %1693 : vector<8x32xf32>
    %1695 = arith.mulf %1690, %1694 : vector<8x32xf32>
    %cst_285 = arith.constant dense<0.000000e+00> : vector<8x128xf32>
    %1696 = tpu.matmul %1695, %760, %cst_285 {dimension_numbers = #tpu.dot_dimension_numbers<[1], [0], [0], [1], [0, 0, 1, 1], [], []>} : vector<8x32xf32>, vector<32x128xf32>, vector<8x128xf32> -> vector<8x128xf32>
    %cst_286 = arith.constant dense<0.000000e+00> : vector<8x128xf32>
    %1697 = tpu.matmul %1528, %761, %cst_286 {dimension_numbers = #tpu.dot_dimension_numbers<[1], [0], [0], [1], [0, 0, 1, 1], [], []>} : vector<8x32xf32>, vector<32x128xf32>, vector<8x128xf32> -> vector<8x128xf32>
    %1698 = arith.addf %1696, %1697 : vector<8x128xf32>
    %1699 = vector.broadcast %762 : vector<1x128xf32> to vector<8x128xf32>
    %1700 = arith.addf %1698, %1699 : vector<8x128xf32>
    %1701 = vector.extract_strided_slice %1700 {offsets = [0, 0], sizes = [8, 32], strides = [1, 1]} : vector<8x128xf32> to vector<8x32xf32>
    %1702 = arith.negf %1701 : vector<8x32xf32>
    %1703 = math.exp %1702 : vector<8x32xf32>
    %cst_287 = arith.constant 1.000000e+00 : f32
    %1704 = vector.broadcast %cst_287 : f32 to vector<8x32xf32>
    %1705 = arith.addf %1704, %1703 : vector<8x32xf32>
    %1706 = arith.divf %1704, %1705 : vector<8x32xf32>
    %1707 = vector.extract_strided_slice %1700 {offsets = [0, 32], sizes = [8, 32], strides = [1, 1]} : vector<8x128xf32> to vector<8x32xf32>
    %1708 = arith.negf %1707 : vector<8x32xf32>
    %1709 = math.exp %1708 : vector<8x32xf32>
    %cst_288 = arith.constant 1.000000e+00 : f32
    %1710 = vector.broadcast %cst_288 : f32 to vector<8x32xf32>
    %1711 = arith.addf %1710, %1709 : vector<8x32xf32>
    %1712 = arith.divf %1710, %1711 : vector<8x32xf32>
    %1713 = vector.extract_strided_slice %1700 {offsets = [0, 64], sizes = [8, 32], strides = [1, 1]} : vector<8x128xf32> to vector<8x32xf32>
    %1714 = math.tanh %1713 : vector<8x32xf32>
    %1715 = vector.extract_strided_slice %1700 {offsets = [0, 96], sizes = [8, 32], strides = [1, 1]} : vector<8x128xf32> to vector<8x32xf32>
    %1716 = arith.negf %1715 : vector<8x32xf32>
    %1717 = math.exp %1716 : vector<8x32xf32>
    %cst_289 = arith.constant 1.000000e+00 : f32
    %1718 = vector.broadcast %cst_289 : f32 to vector<8x32xf32>
    %1719 = arith.addf %1718, %1717 : vector<8x32xf32>
    %1720 = arith.divf %1718, %1719 : vector<8x32xf32>
    %1721 = arith.mulf %1712, %1526 : vector<8x32xf32>
    %1722 = arith.mulf %1706, %1714 : vector<8x32xf32>
    %1723 = arith.addf %1721, %1722 : vector<8x32xf32>
    %1724 = math.tanh %1723 : vector<8x32xf32>
    %1725 = arith.mulf %1720, %1724 : vector<8x32xf32>
    %cst_290 = arith.constant dense<0.000000e+00> : vector<8x32xf32>
    %1726 = tpu.matmul %1725, %763, %cst_290 {dimension_numbers = #tpu.dot_dimension_numbers<[1], [0], [0], [1], [0, 0, 1, 1], [], []>} : vector<8x32xf32>, vector<32x32xf32>, vector<8x32xf32> -> vector<8x32xf32>
    %1727 = vector.broadcast %764 : vector<1x32xf32> to vector<8x32xf32>
    %1728 = arith.addf %1726, %1727 : vector<8x32xf32>
    %1729 = vector.extract_strided_slice %768 {offsets = [0, 5], sizes = [8, 1], strides = [1, 1]} : vector<8x8xi32> to vector<8x1xi32>
    %c0_i32_291 = arith.constant 0 : i32
    %1730 = vector.broadcast %c0_i32_291 : i32 to vector<8x1xi32>
    %1731 = arith.cmpi ne, %1729, %1730 : vector<8x1xi32>
    %1732 = arith.extui %1731 : vector<8x1xi1> to vector<8x1xi32>
    %1733 = arith.sitofp %1732 : vector<8x1xi32> to vector<8x1xf32>
    %cst_292 = arith.constant dense<0xFF800000> : vector<8xf32>
    %1734 = vector.multi_reduction <maximumf>, %1728, %cst_292 [1] : vector<8x32xf32> to vector<8xf32>
    %1735 = vector.shape_cast %1734 : vector<8xf32> to vector<8x1xf32>
    %1736 = vector.broadcast %1735 : vector<8x1xf32> to vector<8x32xf32>
    %1737 = arith.subf %1728, %1736 : vector<8x32xf32>
    %1738 = math.exp %1737 : vector<8x32xf32>
    %cst_293 = arith.constant dense<0.000000e+00> : vector<8xf32>
    %1739 = vector.multi_reduction <add>, %1738, %cst_293 [1] : vector<8x32xf32> to vector<8xf32>
    %1740 = vector.shape_cast %1739 : vector<8xf32> to vector<8x1xf32>
    %1741 = math.log %1740 : vector<8x1xf32>
    %1742 = arith.addf %1741, %1735 : vector<8x1xf32>
    %1743 = vector.broadcast %1729 : vector<8x1xi32> to vector<8x32xi32>
    %1744 = arith.cmpi eq, %769, %1743 : vector<8x32xi32>
    %cst_294 = arith.constant 0.000000e+00 : f32
    %1745 = vector.broadcast %cst_294 : f32 to vector<8x32xf32>
    %1746 = arith.select %1744, %1728, %1745 : vector<8x32xi1>, vector<8x32xf32>
    %cst_295 = arith.constant dense<0.000000e+00> : vector<8xf32>
    %1747 = vector.multi_reduction <add>, %1746, %cst_295 [1] : vector<8x32xf32> to vector<8xf32>
    %1748 = vector.shape_cast %1747 : vector<8xf32> to vector<8x1xf32>
    %1749 = arith.subf %1742, %1748 : vector<8x1xf32>
    %1750 = arith.mulf %1749, %1733 : vector<8x1xf32>
    %cst_296 = arith.constant dense<0.000000e+00> : vector<1xf32>
    %1751 = vector.multi_reduction <add>, %1750, %cst_296 [0] : vector<8x1xf32> to vector<1xf32>
    %1752 = vector.shape_cast %1751 : vector<1xf32> to vector<1x1xf32>
    %1753 = arith.addf %1556, %1752 : vector<1x1xf32>
    %cst_297 = arith.constant dense<0.000000e+00> : vector<1xf32>
    %1754 = vector.multi_reduction <add>, %1733, %cst_297 [0] : vector<8x1xf32> to vector<1xf32>
    %1755 = vector.shape_cast %1754 : vector<1xf32> to vector<1x1xf32>
    %1756 = arith.addf %1559, %1755 : vector<1x1xf32>
    %cst_298 = arith.constant dense<0.000000e+00> : vector<8x32xf32>
    %1757 = tpu.matmul %1725, %765, %cst_298 {dimension_numbers = #tpu.dot_dimension_numbers<[1], [0], [0], [1], [0, 0, 1, 1], [], []>} : vector<8x32xf32>, vector<32x32xf32>, vector<8x32xf32> -> vector<8x32xf32>
    %1758 = vector.broadcast %766 : vector<1x32xf32> to vector<8x32xf32>
    %1759 = arith.addf %1757, %1758 : vector<8x32xf32>
    %1760 = arith.addf %1759, %107 : vector<8x32xf32>
    %1761 = math.tanh %1760 : vector<8x32xf32>
    %1762 = vector.broadcast %767 : vector<1x32xf32> to vector<8x32xf32>
    %1763 = arith.mulf %1761, %1762 : vector<8x32xf32>
    %cst_299 = arith.constant dense<0.000000e+00> : vector<8xf32>
    %1764 = vector.multi_reduction <add>, %1763, %cst_299 [1] : vector<8x32xf32> to vector<8xf32>
    %1765 = vector.shape_cast %1764 : vector<8xf32> to vector<8x1xf32>
    %1766 = arith.addf %1759, %199 : vector<8x32xf32>
    %1767 = math.tanh %1766 : vector<8x32xf32>
    %1768 = vector.broadcast %767 : vector<1x32xf32> to vector<8x32xf32>
    %1769 = arith.mulf %1767, %1768 : vector<8x32xf32>
    %cst_300 = arith.constant dense<0.000000e+00> : vector<8xf32>
    %1770 = vector.multi_reduction <add>, %1769, %cst_300 [1] : vector<8x32xf32> to vector<8xf32>
    %1771 = vector.shape_cast %1770 : vector<8xf32> to vector<8x1xf32>
    %1772 = arith.addf %1759, %291 : vector<8x32xf32>
    %1773 = math.tanh %1772 : vector<8x32xf32>
    %1774 = vector.broadcast %767 : vector<1x32xf32> to vector<8x32xf32>
    %1775 = arith.mulf %1773, %1774 : vector<8x32xf32>
    %cst_301 = arith.constant dense<0.000000e+00> : vector<8xf32>
    %1776 = vector.multi_reduction <add>, %1775, %cst_301 [1] : vector<8x32xf32> to vector<8xf32>
    %1777 = vector.shape_cast %1776 : vector<8xf32> to vector<8x1xf32>
    %1778 = arith.addf %1759, %383 : vector<8x32xf32>
    %1779 = math.tanh %1778 : vector<8x32xf32>
    %1780 = vector.broadcast %767 : vector<1x32xf32> to vector<8x32xf32>
    %1781 = arith.mulf %1779, %1780 : vector<8x32xf32>
    %cst_302 = arith.constant dense<0.000000e+00> : vector<8xf32>
    %1782 = vector.multi_reduction <add>, %1781, %cst_302 [1] : vector<8x32xf32> to vector<8xf32>
    %1783 = vector.shape_cast %1782 : vector<8xf32> to vector<8x1xf32>
    %1784 = arith.addf %1759, %475 : vector<8x32xf32>
    %1785 = math.tanh %1784 : vector<8x32xf32>
    %1786 = vector.broadcast %767 : vector<1x32xf32> to vector<8x32xf32>
    %1787 = arith.mulf %1785, %1786 : vector<8x32xf32>
    %cst_303 = arith.constant dense<0.000000e+00> : vector<8xf32>
    %1788 = vector.multi_reduction <add>, %1787, %cst_303 [1] : vector<8x32xf32> to vector<8xf32>
    %1789 = vector.shape_cast %1788 : vector<8xf32> to vector<8x1xf32>
    %1790 = arith.addf %1759, %567 : vector<8x32xf32>
    %1791 = math.tanh %1790 : vector<8x32xf32>
    %1792 = vector.broadcast %767 : vector<1x32xf32> to vector<8x32xf32>
    %1793 = arith.mulf %1791, %1792 : vector<8x32xf32>
    %cst_304 = arith.constant dense<0.000000e+00> : vector<8xf32>
    %1794 = vector.multi_reduction <add>, %1793, %cst_304 [1] : vector<8x32xf32> to vector<8xf32>
    %1795 = vector.shape_cast %1794 : vector<8xf32> to vector<8x1xf32>
    %1796 = arith.addf %1759, %659 : vector<8x32xf32>
    %1797 = math.tanh %1796 : vector<8x32xf32>
    %1798 = vector.broadcast %767 : vector<1x32xf32> to vector<8x32xf32>
    %1799 = arith.mulf %1797, %1798 : vector<8x32xf32>
    %cst_305 = arith.constant dense<0.000000e+00> : vector<8xf32>
    %1800 = vector.multi_reduction <add>, %1799, %cst_305 [1] : vector<8x32xf32> to vector<8xf32>
    %1801 = vector.shape_cast %1800 : vector<8xf32> to vector<8x1xf32>
    %1802 = arith.addf %1759, %751 : vector<8x32xf32>
    %1803 = math.tanh %1802 : vector<8x32xf32>
    %1804 = vector.broadcast %767 : vector<1x32xf32> to vector<8x32xf32>
    %1805 = arith.mulf %1803, %1804 : vector<8x32xf32>
    %cst_306 = arith.constant dense<0.000000e+00> : vector<8xf32>
    %1806 = vector.multi_reduction <add>, %1805, %cst_306 [1] : vector<8x32xf32> to vector<8xf32>
    %1807 = vector.shape_cast %1806 : vector<8xf32> to vector<8x1xf32>
    %1808 = arith.maximumf %1765, %1771 : vector<8x1xf32>
    %1809 = arith.maximumf %1808, %1777 : vector<8x1xf32>
    %1810 = arith.maximumf %1809, %1783 : vector<8x1xf32>
    %1811 = arith.maximumf %1810, %1789 : vector<8x1xf32>
    %1812 = arith.maximumf %1811, %1795 : vector<8x1xf32>
    %1813 = arith.maximumf %1812, %1801 : vector<8x1xf32>
    %1814 = arith.maximumf %1813, %1807 : vector<8x1xf32>
    %1815 = arith.subf %1765, %1814 : vector<8x1xf32>
    %1816 = math.exp %1815 : vector<8x1xf32>
    %1817 = arith.subf %1771, %1814 : vector<8x1xf32>
    %1818 = math.exp %1817 : vector<8x1xf32>
    %1819 = arith.subf %1777, %1814 : vector<8x1xf32>
    %1820 = math.exp %1819 : vector<8x1xf32>
    %1821 = arith.subf %1783, %1814 : vector<8x1xf32>
    %1822 = math.exp %1821 : vector<8x1xf32>
    %1823 = arith.subf %1789, %1814 : vector<8x1xf32>
    %1824 = math.exp %1823 : vector<8x1xf32>
    %1825 = arith.subf %1795, %1814 : vector<8x1xf32>
    %1826 = math.exp %1825 : vector<8x1xf32>
    %1827 = arith.subf %1801, %1814 : vector<8x1xf32>
    %1828 = math.exp %1827 : vector<8x1xf32>
    %1829 = arith.subf %1807, %1814 : vector<8x1xf32>
    %1830 = math.exp %1829 : vector<8x1xf32>
    %1831 = arith.addf %1816, %1818 : vector<8x1xf32>
    %1832 = arith.addf %1831, %1820 : vector<8x1xf32>
    %1833 = arith.addf %1832, %1822 : vector<8x1xf32>
    %1834 = arith.addf %1833, %1824 : vector<8x1xf32>
    %1835 = arith.addf %1834, %1826 : vector<8x1xf32>
    %1836 = arith.addf %1835, %1828 : vector<8x1xf32>
    %1837 = arith.addf %1836, %1830 : vector<8x1xf32>
    %1838 = vector.broadcast %1816 : vector<8x1xf32> to vector<8x32xf32>
    %1839 = arith.mulf %1838, %106 : vector<8x32xf32>
    %1840 = vector.broadcast %1818 : vector<8x1xf32> to vector<8x32xf32>
    %1841 = arith.mulf %1840, %198 : vector<8x32xf32>
    %1842 = arith.addf %1839, %1841 : vector<8x32xf32>
    %1843 = vector.broadcast %1820 : vector<8x1xf32> to vector<8x32xf32>
    %1844 = arith.mulf %1843, %290 : vector<8x32xf32>
    %1845 = arith.addf %1842, %1844 : vector<8x32xf32>
    %1846 = vector.broadcast %1822 : vector<8x1xf32> to vector<8x32xf32>
    %1847 = arith.mulf %1846, %382 : vector<8x32xf32>
    %1848 = arith.addf %1845, %1847 : vector<8x32xf32>
    %1849 = vector.broadcast %1824 : vector<8x1xf32> to vector<8x32xf32>
    %1850 = arith.mulf %1849, %474 : vector<8x32xf32>
    %1851 = arith.addf %1848, %1850 : vector<8x32xf32>
    %1852 = vector.broadcast %1826 : vector<8x1xf32> to vector<8x32xf32>
    %1853 = arith.mulf %1852, %566 : vector<8x32xf32>
    %1854 = arith.addf %1851, %1853 : vector<8x32xf32>
    %1855 = vector.broadcast %1828 : vector<8x1xf32> to vector<8x32xf32>
    %1856 = arith.mulf %1855, %658 : vector<8x32xf32>
    %1857 = arith.addf %1854, %1856 : vector<8x32xf32>
    %1858 = vector.broadcast %1830 : vector<8x1xf32> to vector<8x32xf32>
    %1859 = arith.mulf %1858, %750 : vector<8x32xf32>
    %1860 = arith.addf %1857, %1859 : vector<8x32xf32>
    %1861 = vector.broadcast %1837 : vector<8x1xf32> to vector<8x32xf32>
    %1862 = arith.divf %1860, %1861 : vector<8x32xf32>
    %1863 = vector.extract_strided_slice %757 {offsets = [40, 0], sizes = [8, 128], strides = [1, 1]} : vector<64x128xf32> to vector<8x128xf32>
    %cst_307 = arith.constant dense<0.000000e+00> : vector<8x128xf32>
    %1864 = tpu.matmul %1862, %758, %cst_307 {dimension_numbers = #tpu.dot_dimension_numbers<[1], [0], [0], [1], [0, 0, 1, 1], [], []>} : vector<8x32xf32>, vector<32x128xf32>, vector<8x128xf32> -> vector<8x128xf32>
    %1865 = arith.addf %1863, %1864 : vector<8x128xf32>
    %cst_308 = arith.constant dense<0.000000e+00> : vector<8x128xf32>
    %1866 = tpu.matmul %1695, %759, %cst_308 {dimension_numbers = #tpu.dot_dimension_numbers<[1], [0], [0], [1], [0, 0, 1, 1], [], []>} : vector<8x32xf32>, vector<32x128xf32>, vector<8x128xf32> -> vector<8x128xf32>
    %1867 = arith.addf %1865, %1866 : vector<8x128xf32>
    %1868 = vector.extract_strided_slice %1867 {offsets = [0, 0], sizes = [8, 32], strides = [1, 1]} : vector<8x128xf32> to vector<8x32xf32>
    %1869 = arith.negf %1868 : vector<8x32xf32>
    %1870 = math.exp %1869 : vector<8x32xf32>
    %cst_309 = arith.constant 1.000000e+00 : f32
    %1871 = vector.broadcast %cst_309 : f32 to vector<8x32xf32>
    %1872 = arith.addf %1871, %1870 : vector<8x32xf32>
    %1873 = arith.divf %1871, %1872 : vector<8x32xf32>
    %1874 = vector.extract_strided_slice %1867 {offsets = [0, 32], sizes = [8, 32], strides = [1, 1]} : vector<8x128xf32> to vector<8x32xf32>
    %1875 = arith.negf %1874 : vector<8x32xf32>
    %1876 = math.exp %1875 : vector<8x32xf32>
    %cst_310 = arith.constant 1.000000e+00 : f32
    %1877 = vector.broadcast %cst_310 : f32 to vector<8x32xf32>
    %1878 = arith.addf %1877, %1876 : vector<8x32xf32>
    %1879 = arith.divf %1877, %1878 : vector<8x32xf32>
    %1880 = vector.extract_strided_slice %1867 {offsets = [0, 64], sizes = [8, 32], strides = [1, 1]} : vector<8x128xf32> to vector<8x32xf32>
    %1881 = math.tanh %1880 : vector<8x32xf32>
    %1882 = vector.extract_strided_slice %1867 {offsets = [0, 96], sizes = [8, 32], strides = [1, 1]} : vector<8x128xf32> to vector<8x32xf32>
    %1883 = arith.negf %1882 : vector<8x32xf32>
    %1884 = math.exp %1883 : vector<8x32xf32>
    %cst_311 = arith.constant 1.000000e+00 : f32
    %1885 = vector.broadcast %cst_311 : f32 to vector<8x32xf32>
    %1886 = arith.addf %1885, %1884 : vector<8x32xf32>
    %1887 = arith.divf %1885, %1886 : vector<8x32xf32>
    %1888 = arith.mulf %1879, %1693 : vector<8x32xf32>
    %1889 = arith.mulf %1873, %1881 : vector<8x32xf32>
    %1890 = arith.addf %1888, %1889 : vector<8x32xf32>
    %1891 = math.tanh %1890 : vector<8x32xf32>
    %1892 = arith.mulf %1887, %1891 : vector<8x32xf32>
    %cst_312 = arith.constant dense<0.000000e+00> : vector<8x128xf32>
    %1893 = tpu.matmul %1892, %760, %cst_312 {dimension_numbers = #tpu.dot_dimension_numbers<[1], [0], [0], [1], [0, 0, 1, 1], [], []>} : vector<8x32xf32>, vector<32x128xf32>, vector<8x128xf32> -> vector<8x128xf32>
    %cst_313 = arith.constant dense<0.000000e+00> : vector<8x128xf32>
    %1894 = tpu.matmul %1725, %761, %cst_313 {dimension_numbers = #tpu.dot_dimension_numbers<[1], [0], [0], [1], [0, 0, 1, 1], [], []>} : vector<8x32xf32>, vector<32x128xf32>, vector<8x128xf32> -> vector<8x128xf32>
    %1895 = arith.addf %1893, %1894 : vector<8x128xf32>
    %1896 = vector.broadcast %762 : vector<1x128xf32> to vector<8x128xf32>
    %1897 = arith.addf %1895, %1896 : vector<8x128xf32>
    %1898 = vector.extract_strided_slice %1897 {offsets = [0, 0], sizes = [8, 32], strides = [1, 1]} : vector<8x128xf32> to vector<8x32xf32>
    %1899 = arith.negf %1898 : vector<8x32xf32>
    %1900 = math.exp %1899 : vector<8x32xf32>
    %cst_314 = arith.constant 1.000000e+00 : f32
    %1901 = vector.broadcast %cst_314 : f32 to vector<8x32xf32>
    %1902 = arith.addf %1901, %1900 : vector<8x32xf32>
    %1903 = arith.divf %1901, %1902 : vector<8x32xf32>
    %1904 = vector.extract_strided_slice %1897 {offsets = [0, 32], sizes = [8, 32], strides = [1, 1]} : vector<8x128xf32> to vector<8x32xf32>
    %1905 = arith.negf %1904 : vector<8x32xf32>
    %1906 = math.exp %1905 : vector<8x32xf32>
    %cst_315 = arith.constant 1.000000e+00 : f32
    %1907 = vector.broadcast %cst_315 : f32 to vector<8x32xf32>
    %1908 = arith.addf %1907, %1906 : vector<8x32xf32>
    %1909 = arith.divf %1907, %1908 : vector<8x32xf32>
    %1910 = vector.extract_strided_slice %1897 {offsets = [0, 64], sizes = [8, 32], strides = [1, 1]} : vector<8x128xf32> to vector<8x32xf32>
    %1911 = math.tanh %1910 : vector<8x32xf32>
    %1912 = vector.extract_strided_slice %1897 {offsets = [0, 96], sizes = [8, 32], strides = [1, 1]} : vector<8x128xf32> to vector<8x32xf32>
    %1913 = arith.negf %1912 : vector<8x32xf32>
    %1914 = math.exp %1913 : vector<8x32xf32>
    %cst_316 = arith.constant 1.000000e+00 : f32
    %1915 = vector.broadcast %cst_316 : f32 to vector<8x32xf32>
    %1916 = arith.addf %1915, %1914 : vector<8x32xf32>
    %1917 = arith.divf %1915, %1916 : vector<8x32xf32>
    %1918 = arith.mulf %1909, %1723 : vector<8x32xf32>
    %1919 = arith.mulf %1903, %1911 : vector<8x32xf32>
    %1920 = arith.addf %1918, %1919 : vector<8x32xf32>
    %1921 = math.tanh %1920 : vector<8x32xf32>
    %1922 = arith.mulf %1917, %1921 : vector<8x32xf32>
    %cst_317 = arith.constant dense<0.000000e+00> : vector<8x32xf32>
    %1923 = tpu.matmul %1922, %763, %cst_317 {dimension_numbers = #tpu.dot_dimension_numbers<[1], [0], [0], [1], [0, 0, 1, 1], [], []>} : vector<8x32xf32>, vector<32x32xf32>, vector<8x32xf32> -> vector<8x32xf32>
    %1924 = vector.broadcast %764 : vector<1x32xf32> to vector<8x32xf32>
    %1925 = arith.addf %1923, %1924 : vector<8x32xf32>
    %1926 = vector.extract_strided_slice %768 {offsets = [0, 6], sizes = [8, 1], strides = [1, 1]} : vector<8x8xi32> to vector<8x1xi32>
    %c0_i32_318 = arith.constant 0 : i32
    %1927 = vector.broadcast %c0_i32_318 : i32 to vector<8x1xi32>
    %1928 = arith.cmpi ne, %1926, %1927 : vector<8x1xi32>
    %1929 = arith.extui %1928 : vector<8x1xi1> to vector<8x1xi32>
    %1930 = arith.sitofp %1929 : vector<8x1xi32> to vector<8x1xf32>
    %cst_319 = arith.constant dense<0xFF800000> : vector<8xf32>
    %1931 = vector.multi_reduction <maximumf>, %1925, %cst_319 [1] : vector<8x32xf32> to vector<8xf32>
    %1932 = vector.shape_cast %1931 : vector<8xf32> to vector<8x1xf32>
    %1933 = vector.broadcast %1932 : vector<8x1xf32> to vector<8x32xf32>
    %1934 = arith.subf %1925, %1933 : vector<8x32xf32>
    %1935 = math.exp %1934 : vector<8x32xf32>
    %cst_320 = arith.constant dense<0.000000e+00> : vector<8xf32>
    %1936 = vector.multi_reduction <add>, %1935, %cst_320 [1] : vector<8x32xf32> to vector<8xf32>
    %1937 = vector.shape_cast %1936 : vector<8xf32> to vector<8x1xf32>
    %1938 = math.log %1937 : vector<8x1xf32>
    %1939 = arith.addf %1938, %1932 : vector<8x1xf32>
    %1940 = vector.broadcast %1926 : vector<8x1xi32> to vector<8x32xi32>
    %1941 = arith.cmpi eq, %769, %1940 : vector<8x32xi32>
    %cst_321 = arith.constant 0.000000e+00 : f32
    %1942 = vector.broadcast %cst_321 : f32 to vector<8x32xf32>
    %1943 = arith.select %1941, %1925, %1942 : vector<8x32xi1>, vector<8x32xf32>
    %cst_322 = arith.constant dense<0.000000e+00> : vector<8xf32>
    %1944 = vector.multi_reduction <add>, %1943, %cst_322 [1] : vector<8x32xf32> to vector<8xf32>
    %1945 = vector.shape_cast %1944 : vector<8xf32> to vector<8x1xf32>
    %1946 = arith.subf %1939, %1945 : vector<8x1xf32>
    %1947 = arith.mulf %1946, %1930 : vector<8x1xf32>
    %cst_323 = arith.constant dense<0.000000e+00> : vector<1xf32>
    %1948 = vector.multi_reduction <add>, %1947, %cst_323 [0] : vector<8x1xf32> to vector<1xf32>
    %1949 = vector.shape_cast %1948 : vector<1xf32> to vector<1x1xf32>
    %1950 = arith.addf %1753, %1949 : vector<1x1xf32>
    %cst_324 = arith.constant dense<0.000000e+00> : vector<1xf32>
    %1951 = vector.multi_reduction <add>, %1930, %cst_324 [0] : vector<8x1xf32> to vector<1xf32>
    %1952 = vector.shape_cast %1951 : vector<1xf32> to vector<1x1xf32>
    %1953 = arith.addf %1756, %1952 : vector<1x1xf32>
    %cst_325 = arith.constant dense<0.000000e+00> : vector<8x32xf32>
    %1954 = tpu.matmul %1922, %765, %cst_325 {dimension_numbers = #tpu.dot_dimension_numbers<[1], [0], [0], [1], [0, 0, 1, 1], [], []>} : vector<8x32xf32>, vector<32x32xf32>, vector<8x32xf32> -> vector<8x32xf32>
    %1955 = vector.broadcast %766 : vector<1x32xf32> to vector<8x32xf32>
    %1956 = arith.addf %1954, %1955 : vector<8x32xf32>
    %1957 = arith.addf %1956, %107 : vector<8x32xf32>
    %1958 = math.tanh %1957 : vector<8x32xf32>
    %1959 = vector.broadcast %767 : vector<1x32xf32> to vector<8x32xf32>
    %1960 = arith.mulf %1958, %1959 : vector<8x32xf32>
    %cst_326 = arith.constant dense<0.000000e+00> : vector<8xf32>
    %1961 = vector.multi_reduction <add>, %1960, %cst_326 [1] : vector<8x32xf32> to vector<8xf32>
    %1962 = vector.shape_cast %1961 : vector<8xf32> to vector<8x1xf32>
    %1963 = arith.addf %1956, %199 : vector<8x32xf32>
    %1964 = math.tanh %1963 : vector<8x32xf32>
    %1965 = vector.broadcast %767 : vector<1x32xf32> to vector<8x32xf32>
    %1966 = arith.mulf %1964, %1965 : vector<8x32xf32>
    %cst_327 = arith.constant dense<0.000000e+00> : vector<8xf32>
    %1967 = vector.multi_reduction <add>, %1966, %cst_327 [1] : vector<8x32xf32> to vector<8xf32>
    %1968 = vector.shape_cast %1967 : vector<8xf32> to vector<8x1xf32>
    %1969 = arith.addf %1956, %291 : vector<8x32xf32>
    %1970 = math.tanh %1969 : vector<8x32xf32>
    %1971 = vector.broadcast %767 : vector<1x32xf32> to vector<8x32xf32>
    %1972 = arith.mulf %1970, %1971 : vector<8x32xf32>
    %cst_328 = arith.constant dense<0.000000e+00> : vector<8xf32>
    %1973 = vector.multi_reduction <add>, %1972, %cst_328 [1] : vector<8x32xf32> to vector<8xf32>
    %1974 = vector.shape_cast %1973 : vector<8xf32> to vector<8x1xf32>
    %1975 = arith.addf %1956, %383 : vector<8x32xf32>
    %1976 = math.tanh %1975 : vector<8x32xf32>
    %1977 = vector.broadcast %767 : vector<1x32xf32> to vector<8x32xf32>
    %1978 = arith.mulf %1976, %1977 : vector<8x32xf32>
    %cst_329 = arith.constant dense<0.000000e+00> : vector<8xf32>
    %1979 = vector.multi_reduction <add>, %1978, %cst_329 [1] : vector<8x32xf32> to vector<8xf32>
    %1980 = vector.shape_cast %1979 : vector<8xf32> to vector<8x1xf32>
    %1981 = arith.addf %1956, %475 : vector<8x32xf32>
    %1982 = math.tanh %1981 : vector<8x32xf32>
    %1983 = vector.broadcast %767 : vector<1x32xf32> to vector<8x32xf32>
    %1984 = arith.mulf %1982, %1983 : vector<8x32xf32>
    %cst_330 = arith.constant dense<0.000000e+00> : vector<8xf32>
    %1985 = vector.multi_reduction <add>, %1984, %cst_330 [1] : vector<8x32xf32> to vector<8xf32>
    %1986 = vector.shape_cast %1985 : vector<8xf32> to vector<8x1xf32>
    %1987 = arith.addf %1956, %567 : vector<8x32xf32>
    %1988 = math.tanh %1987 : vector<8x32xf32>
    %1989 = vector.broadcast %767 : vector<1x32xf32> to vector<8x32xf32>
    %1990 = arith.mulf %1988, %1989 : vector<8x32xf32>
    %cst_331 = arith.constant dense<0.000000e+00> : vector<8xf32>
    %1991 = vector.multi_reduction <add>, %1990, %cst_331 [1] : vector<8x32xf32> to vector<8xf32>
    %1992 = vector.shape_cast %1991 : vector<8xf32> to vector<8x1xf32>
    %1993 = arith.addf %1956, %659 : vector<8x32xf32>
    %1994 = math.tanh %1993 : vector<8x32xf32>
    %1995 = vector.broadcast %767 : vector<1x32xf32> to vector<8x32xf32>
    %1996 = arith.mulf %1994, %1995 : vector<8x32xf32>
    %cst_332 = arith.constant dense<0.000000e+00> : vector<8xf32>
    %1997 = vector.multi_reduction <add>, %1996, %cst_332 [1] : vector<8x32xf32> to vector<8xf32>
    %1998 = vector.shape_cast %1997 : vector<8xf32> to vector<8x1xf32>
    %1999 = arith.addf %1956, %751 : vector<8x32xf32>
    %2000 = math.tanh %1999 : vector<8x32xf32>
    %2001 = vector.broadcast %767 : vector<1x32xf32> to vector<8x32xf32>
    %2002 = arith.mulf %2000, %2001 : vector<8x32xf32>
    %cst_333 = arith.constant dense<0.000000e+00> : vector<8xf32>
    %2003 = vector.multi_reduction <add>, %2002, %cst_333 [1] : vector<8x32xf32> to vector<8xf32>
    %2004 = vector.shape_cast %2003 : vector<8xf32> to vector<8x1xf32>
    %2005 = arith.maximumf %1962, %1968 : vector<8x1xf32>
    %2006 = arith.maximumf %2005, %1974 : vector<8x1xf32>
    %2007 = arith.maximumf %2006, %1980 : vector<8x1xf32>
    %2008 = arith.maximumf %2007, %1986 : vector<8x1xf32>
    %2009 = arith.maximumf %2008, %1992 : vector<8x1xf32>
    %2010 = arith.maximumf %2009, %1998 : vector<8x1xf32>
    %2011 = arith.maximumf %2010, %2004 : vector<8x1xf32>
    %2012 = arith.subf %1962, %2011 : vector<8x1xf32>
    %2013 = math.exp %2012 : vector<8x1xf32>
    %2014 = arith.subf %1968, %2011 : vector<8x1xf32>
    %2015 = math.exp %2014 : vector<8x1xf32>
    %2016 = arith.subf %1974, %2011 : vector<8x1xf32>
    %2017 = math.exp %2016 : vector<8x1xf32>
    %2018 = arith.subf %1980, %2011 : vector<8x1xf32>
    %2019 = math.exp %2018 : vector<8x1xf32>
    %2020 = arith.subf %1986, %2011 : vector<8x1xf32>
    %2021 = math.exp %2020 : vector<8x1xf32>
    %2022 = arith.subf %1992, %2011 : vector<8x1xf32>
    %2023 = math.exp %2022 : vector<8x1xf32>
    %2024 = arith.subf %1998, %2011 : vector<8x1xf32>
    %2025 = math.exp %2024 : vector<8x1xf32>
    %2026 = arith.subf %2004, %2011 : vector<8x1xf32>
    %2027 = math.exp %2026 : vector<8x1xf32>
    %2028 = arith.addf %2013, %2015 : vector<8x1xf32>
    %2029 = arith.addf %2028, %2017 : vector<8x1xf32>
    %2030 = arith.addf %2029, %2019 : vector<8x1xf32>
    %2031 = arith.addf %2030, %2021 : vector<8x1xf32>
    %2032 = arith.addf %2031, %2023 : vector<8x1xf32>
    %2033 = arith.addf %2032, %2025 : vector<8x1xf32>
    %2034 = arith.addf %2033, %2027 : vector<8x1xf32>
    %2035 = vector.broadcast %2013 : vector<8x1xf32> to vector<8x32xf32>
    %2036 = arith.mulf %2035, %106 : vector<8x32xf32>
    %2037 = vector.broadcast %2015 : vector<8x1xf32> to vector<8x32xf32>
    %2038 = arith.mulf %2037, %198 : vector<8x32xf32>
    %2039 = arith.addf %2036, %2038 : vector<8x32xf32>
    %2040 = vector.broadcast %2017 : vector<8x1xf32> to vector<8x32xf32>
    %2041 = arith.mulf %2040, %290 : vector<8x32xf32>
    %2042 = arith.addf %2039, %2041 : vector<8x32xf32>
    %2043 = vector.broadcast %2019 : vector<8x1xf32> to vector<8x32xf32>
    %2044 = arith.mulf %2043, %382 : vector<8x32xf32>
    %2045 = arith.addf %2042, %2044 : vector<8x32xf32>
    %2046 = vector.broadcast %2021 : vector<8x1xf32> to vector<8x32xf32>
    %2047 = arith.mulf %2046, %474 : vector<8x32xf32>
    %2048 = arith.addf %2045, %2047 : vector<8x32xf32>
    %2049 = vector.broadcast %2023 : vector<8x1xf32> to vector<8x32xf32>
    %2050 = arith.mulf %2049, %566 : vector<8x32xf32>
    %2051 = arith.addf %2048, %2050 : vector<8x32xf32>
    %2052 = vector.broadcast %2025 : vector<8x1xf32> to vector<8x32xf32>
    %2053 = arith.mulf %2052, %658 : vector<8x32xf32>
    %2054 = arith.addf %2051, %2053 : vector<8x32xf32>
    %2055 = vector.broadcast %2027 : vector<8x1xf32> to vector<8x32xf32>
    %2056 = arith.mulf %2055, %750 : vector<8x32xf32>
    %2057 = arith.addf %2054, %2056 : vector<8x32xf32>
    %2058 = vector.broadcast %2034 : vector<8x1xf32> to vector<8x32xf32>
    %2059 = arith.divf %2057, %2058 : vector<8x32xf32>
    %2060 = vector.extract_strided_slice %757 {offsets = [48, 0], sizes = [8, 128], strides = [1, 1]} : vector<64x128xf32> to vector<8x128xf32>
    %cst_334 = arith.constant dense<0.000000e+00> : vector<8x128xf32>
    %2061 = tpu.matmul %2059, %758, %cst_334 {dimension_numbers = #tpu.dot_dimension_numbers<[1], [0], [0], [1], [0, 0, 1, 1], [], []>} : vector<8x32xf32>, vector<32x128xf32>, vector<8x128xf32> -> vector<8x128xf32>
    %2062 = arith.addf %2060, %2061 : vector<8x128xf32>
    %cst_335 = arith.constant dense<0.000000e+00> : vector<8x128xf32>
    %2063 = tpu.matmul %1892, %759, %cst_335 {dimension_numbers = #tpu.dot_dimension_numbers<[1], [0], [0], [1], [0, 0, 1, 1], [], []>} : vector<8x32xf32>, vector<32x128xf32>, vector<8x128xf32> -> vector<8x128xf32>
    %2064 = arith.addf %2062, %2063 : vector<8x128xf32>
    %2065 = vector.extract_strided_slice %2064 {offsets = [0, 0], sizes = [8, 32], strides = [1, 1]} : vector<8x128xf32> to vector<8x32xf32>
    %2066 = arith.negf %2065 : vector<8x32xf32>
    %2067 = math.exp %2066 : vector<8x32xf32>
    %cst_336 = arith.constant 1.000000e+00 : f32
    %2068 = vector.broadcast %cst_336 : f32 to vector<8x32xf32>
    %2069 = arith.addf %2068, %2067 : vector<8x32xf32>
    %2070 = arith.divf %2068, %2069 : vector<8x32xf32>
    %2071 = vector.extract_strided_slice %2064 {offsets = [0, 32], sizes = [8, 32], strides = [1, 1]} : vector<8x128xf32> to vector<8x32xf32>
    %2072 = arith.negf %2071 : vector<8x32xf32>
    %2073 = math.exp %2072 : vector<8x32xf32>
    %cst_337 = arith.constant 1.000000e+00 : f32
    %2074 = vector.broadcast %cst_337 : f32 to vector<8x32xf32>
    %2075 = arith.addf %2074, %2073 : vector<8x32xf32>
    %2076 = arith.divf %2074, %2075 : vector<8x32xf32>
    %2077 = vector.extract_strided_slice %2064 {offsets = [0, 64], sizes = [8, 32], strides = [1, 1]} : vector<8x128xf32> to vector<8x32xf32>
    %2078 = math.tanh %2077 : vector<8x32xf32>
    %2079 = vector.extract_strided_slice %2064 {offsets = [0, 96], sizes = [8, 32], strides = [1, 1]} : vector<8x128xf32> to vector<8x32xf32>
    %2080 = arith.negf %2079 : vector<8x32xf32>
    %2081 = math.exp %2080 : vector<8x32xf32>
    %cst_338 = arith.constant 1.000000e+00 : f32
    %2082 = vector.broadcast %cst_338 : f32 to vector<8x32xf32>
    %2083 = arith.addf %2082, %2081 : vector<8x32xf32>
    %2084 = arith.divf %2082, %2083 : vector<8x32xf32>
    %2085 = arith.mulf %2076, %1890 : vector<8x32xf32>
    %2086 = arith.mulf %2070, %2078 : vector<8x32xf32>
    %2087 = arith.addf %2085, %2086 : vector<8x32xf32>
    %2088 = math.tanh %2087 : vector<8x32xf32>
    %2089 = arith.mulf %2084, %2088 : vector<8x32xf32>
    %cst_339 = arith.constant dense<0.000000e+00> : vector<8x128xf32>
    %2090 = tpu.matmul %2089, %760, %cst_339 {dimension_numbers = #tpu.dot_dimension_numbers<[1], [0], [0], [1], [0, 0, 1, 1], [], []>} : vector<8x32xf32>, vector<32x128xf32>, vector<8x128xf32> -> vector<8x128xf32>
    %cst_340 = arith.constant dense<0.000000e+00> : vector<8x128xf32>
    %2091 = tpu.matmul %1922, %761, %cst_340 {dimension_numbers = #tpu.dot_dimension_numbers<[1], [0], [0], [1], [0, 0, 1, 1], [], []>} : vector<8x32xf32>, vector<32x128xf32>, vector<8x128xf32> -> vector<8x128xf32>
    %2092 = arith.addf %2090, %2091 : vector<8x128xf32>
    %2093 = vector.broadcast %762 : vector<1x128xf32> to vector<8x128xf32>
    %2094 = arith.addf %2092, %2093 : vector<8x128xf32>
    %2095 = vector.extract_strided_slice %2094 {offsets = [0, 0], sizes = [8, 32], strides = [1, 1]} : vector<8x128xf32> to vector<8x32xf32>
    %2096 = arith.negf %2095 : vector<8x32xf32>
    %2097 = math.exp %2096 : vector<8x32xf32>
    %cst_341 = arith.constant 1.000000e+00 : f32
    %2098 = vector.broadcast %cst_341 : f32 to vector<8x32xf32>
    %2099 = arith.addf %2098, %2097 : vector<8x32xf32>
    %2100 = arith.divf %2098, %2099 : vector<8x32xf32>
    %2101 = vector.extract_strided_slice %2094 {offsets = [0, 32], sizes = [8, 32], strides = [1, 1]} : vector<8x128xf32> to vector<8x32xf32>
    %2102 = arith.negf %2101 : vector<8x32xf32>
    %2103 = math.exp %2102 : vector<8x32xf32>
    %cst_342 = arith.constant 1.000000e+00 : f32
    %2104 = vector.broadcast %cst_342 : f32 to vector<8x32xf32>
    %2105 = arith.addf %2104, %2103 : vector<8x32xf32>
    %2106 = arith.divf %2104, %2105 : vector<8x32xf32>
    %2107 = vector.extract_strided_slice %2094 {offsets = [0, 64], sizes = [8, 32], strides = [1, 1]} : vector<8x128xf32> to vector<8x32xf32>
    %2108 = math.tanh %2107 : vector<8x32xf32>
    %2109 = vector.extract_strided_slice %2094 {offsets = [0, 96], sizes = [8, 32], strides = [1, 1]} : vector<8x128xf32> to vector<8x32xf32>
    %2110 = arith.negf %2109 : vector<8x32xf32>
    %2111 = math.exp %2110 : vector<8x32xf32>
    %cst_343 = arith.constant 1.000000e+00 : f32
    %2112 = vector.broadcast %cst_343 : f32 to vector<8x32xf32>
    %2113 = arith.addf %2112, %2111 : vector<8x32xf32>
    %2114 = arith.divf %2112, %2113 : vector<8x32xf32>
    %2115 = arith.mulf %2106, %1920 : vector<8x32xf32>
    %2116 = arith.mulf %2100, %2108 : vector<8x32xf32>
    %2117 = arith.addf %2115, %2116 : vector<8x32xf32>
    %2118 = math.tanh %2117 : vector<8x32xf32>
    %2119 = arith.mulf %2114, %2118 : vector<8x32xf32>
    %cst_344 = arith.constant dense<0.000000e+00> : vector<8x32xf32>
    %2120 = tpu.matmul %2119, %763, %cst_344 {dimension_numbers = #tpu.dot_dimension_numbers<[1], [0], [0], [1], [0, 0, 1, 1], [], []>} : vector<8x32xf32>, vector<32x32xf32>, vector<8x32xf32> -> vector<8x32xf32>
    %2121 = vector.broadcast %764 : vector<1x32xf32> to vector<8x32xf32>
    %2122 = arith.addf %2120, %2121 : vector<8x32xf32>
    %2123 = vector.extract_strided_slice %768 {offsets = [0, 7], sizes = [8, 1], strides = [1, 1]} : vector<8x8xi32> to vector<8x1xi32>
    %c0_i32_345 = arith.constant 0 : i32
    %2124 = vector.broadcast %c0_i32_345 : i32 to vector<8x1xi32>
    %2125 = arith.cmpi ne, %2123, %2124 : vector<8x1xi32>
    %2126 = arith.extui %2125 : vector<8x1xi1> to vector<8x1xi32>
    %2127 = arith.sitofp %2126 : vector<8x1xi32> to vector<8x1xf32>
    %cst_346 = arith.constant dense<0xFF800000> : vector<8xf32>
    %2128 = vector.multi_reduction <maximumf>, %2122, %cst_346 [1] : vector<8x32xf32> to vector<8xf32>
    %2129 = vector.shape_cast %2128 : vector<8xf32> to vector<8x1xf32>
    %2130 = vector.broadcast %2129 : vector<8x1xf32> to vector<8x32xf32>
    %2131 = arith.subf %2122, %2130 : vector<8x32xf32>
    %2132 = math.exp %2131 : vector<8x32xf32>
    %cst_347 = arith.constant dense<0.000000e+00> : vector<8xf32>
    %2133 = vector.multi_reduction <add>, %2132, %cst_347 [1] : vector<8x32xf32> to vector<8xf32>
    %2134 = vector.shape_cast %2133 : vector<8xf32> to vector<8x1xf32>
    %2135 = math.log %2134 : vector<8x1xf32>
    %2136 = arith.addf %2135, %2129 : vector<8x1xf32>
    %2137 = vector.broadcast %2123 : vector<8x1xi32> to vector<8x32xi32>
    %2138 = arith.cmpi eq, %769, %2137 : vector<8x32xi32>
    %cst_348 = arith.constant 0.000000e+00 : f32
    %2139 = vector.broadcast %cst_348 : f32 to vector<8x32xf32>
    %2140 = arith.select %2138, %2122, %2139 : vector<8x32xi1>, vector<8x32xf32>
    %cst_349 = arith.constant dense<0.000000e+00> : vector<8xf32>
    %2141 = vector.multi_reduction <add>, %2140, %cst_349 [1] : vector<8x32xf32> to vector<8xf32>
    %2142 = vector.shape_cast %2141 : vector<8xf32> to vector<8x1xf32>
    %2143 = arith.subf %2136, %2142 : vector<8x1xf32>
    %2144 = arith.mulf %2143, %2127 : vector<8x1xf32>
    %cst_350 = arith.constant dense<0.000000e+00> : vector<1xf32>
    %2145 = vector.multi_reduction <add>, %2144, %cst_350 [0] : vector<8x1xf32> to vector<1xf32>
    %2146 = vector.shape_cast %2145 : vector<1xf32> to vector<1x1xf32>
    %2147 = arith.addf %1950, %2146 : vector<1x1xf32>
    %cst_351 = arith.constant dense<0.000000e+00> : vector<1xf32>
    %2148 = vector.multi_reduction <add>, %2127, %cst_351 [0] : vector<8x1xf32> to vector<1xf32>
    %2149 = vector.shape_cast %2148 : vector<1xf32> to vector<1x1xf32>
    %2150 = arith.addf %1953, %2149 : vector<1x1xf32>
    %2151 = arith.divf %2147, %2150 : vector<1x1xf32>
    %c0_352 = arith.constant 0 : index
    %c0_353 = arith.constant 0 : index
    %2152 = vector.load %arg24[%c0_352, %c0_353] : memref<1x1xf32, #tpu.memory_space<vmem>>, vector<1x1xf32>
    tpu.vector_store %arg24[%c0_352, %c0_353], %2151 {strides = array<i32>} : memref<1x1xf32, #tpu.memory_space<vmem>>, vector<1x1xf32>,
    return
  }
  func.func @transform_0(%arg0: i32) -> (i32, i32) {
    %c0_i32 = arith.constant 0 : i32
    %c0_i32_0 = arith.constant 0 : i32
    %c0_i32_1 = arith.constant 0 : i32
    return %c0_i32, %c0_i32_0 : i32, i32
  }
  func.func @transform_1(%arg0: i32) -> (i32, i32) {
    %c0_i32 = arith.constant 0 : i32
    %c0_i32_0 = arith.constant 0 : i32
    %c0_i32_1 = arith.constant 0 : i32
    return %c0_i32, %c0_i32_0 : i32, i32
  }
  func.func @transform_2(%arg0: i32) -> (i32, i32) {
    %c0_i32 = arith.constant 0 : i32
    %c0_i32_0 = arith.constant 0 : i32
    %c0_i32_1 = arith.constant 0 : i32
    return %c0_i32, %c0_i32_0 : i32, i32
  }
  func.func @transform_3(%arg0: i32) -> (i32, i32) {
    %c0_i32 = arith.constant 0 : i32
    %c0_i32_0 = arith.constant 0 : i32
    %c0_i32_1 = arith.constant 0 : i32
    return %c0_i32, %c0_i32_0 : i32, i32
  }
  func.func @transform_4(%arg0: i32) -> (i32, i32) {
    %c0_i32 = arith.constant 0 : i32
    %c0_i32_0 = arith.constant 0 : i32
    %c0_i32_1 = arith.constant 0 : i32
    return %c0_i32, %c0_i32_0 : i32, i32
  }
  func.func @transform_5(%arg0: i32) -> (i32, i32) {
    %c0_i32 = arith.constant 0 : i32
    %c0_i32_0 = arith.constant 0 : i32
    %c0_i32_1 = arith.constant 0 : i32
    return %c0_i32, %c0_i32_0 : i32, i32
  }
  func.func @transform_6(%arg0: i32) -> (i32, i32) {
    %c0_i32 = arith.constant 0 : i32
    %c0_i32_0 = arith.constant 0 : i32
    %c0_i32_1 = arith.constant 0 : i32
    return %c0_i32, %c0_i32_0 : i32, i32
  }
  func.func @transform_7(%arg0: i32) -> (i32, i32) {
    %c0_i32 = arith.constant 0 : i32
    %c0_i32_0 = arith.constant 0 : i32
    %c0_i32_1 = arith.constant 0 : i32
    return %c0_i32, %c0_i32_0 : i32, i32
  }
  func.func @transform_8(%arg0: i32) -> (i32, i32) {
    %c0_i32 = arith.constant 0 : i32
    %c0_i32_0 = arith.constant 0 : i32
    %c0_i32_1 = arith.constant 0 : i32
    return %c0_i32, %c0_i32_0 : i32, i32
  }
  func.func @transform_9(%arg0: i32) -> (i32, i32) {
    %c0_i32 = arith.constant 0 : i32
    %c0_i32_0 = arith.constant 0 : i32
    %c0_i32_1 = arith.constant 0 : i32
    return %c0_i32, %c0_i32_0 : i32, i32
  }
  func.func @transform_10(%arg0: i32) -> (i32, i32) {
    %c0_i32 = arith.constant 0 : i32
    %c0_i32_0 = arith.constant 0 : i32
    %c0_i32_1 = arith.constant 0 : i32
    return %c0_i32, %c0_i32_0 : i32, i32
  }
  func.func @transform_11(%arg0: i32) -> (i32, i32) {
    %c0_i32 = arith.constant 0 : i32
    %c0_i32_0 = arith.constant 0 : i32
    %c0_i32_1 = arith.constant 0 : i32
    return %c0_i32, %c0_i32_0 : i32, i32
  }
  func.func @transform_12(%arg0: i32) -> (i32, i32) {
    %c0_i32 = arith.constant 0 : i32
    %c0_i32_0 = arith.constant 0 : i32
    %c0_i32_1 = arith.constant 0 : i32
    return %c0_i32, %c0_i32_0 : i32, i32
  }
  func.func @transform_13(%arg0: i32) -> (i32, i32) {
    %c0_i32 = arith.constant 0 : i32
    %c0_i32_0 = arith.constant 0 : i32
    %c0_i32_1 = arith.constant 0 : i32
    return %c0_i32, %c0_i32_0 : i32, i32
  }
  func.func @transform_14(%arg0: i32) -> (i32, i32) {
    %c0_i32 = arith.constant 0 : i32
    %c0_i32_0 = arith.constant 0 : i32
    %c0_i32_1 = arith.constant 0 : i32
    return %c0_i32, %c0_i32_0 : i32, i32
  }
  func.func @transform_15(%arg0: i32) -> (i32, i32) {
    %c0_i32 = arith.constant 0 : i32
    %c0_i32_0 = arith.constant 0 : i32
    %c0_i32_1 = arith.constant 0 : i32
    return %c0_i32, %c0_i32_0 : i32, i32
  }
  func.func @transform_16(%arg0: i32) -> (i32, i32) {
    %c0_i32 = arith.constant 0 : i32
    %c0_i32_0 = arith.constant 0 : i32
    %c0_i32_1 = arith.constant 0 : i32
    return %c0_i32, %c0_i32_0 : i32, i32
  }
  func.func @transform_17(%arg0: i32) -> (i32, i32) {
    %c0_i32 = arith.constant 0 : i32
    %c0_i32_0 = arith.constant 0 : i32
    %c0_i32_1 = arith.constant 0 : i32
    return %c0_i32, %c0_i32_0 : i32, i32
  }
  func.func @transform_18(%arg0: i32) -> (i32, i32) {
    %c0_i32 = arith.constant 0 : i32
    %c0_i32_0 = arith.constant 0 : i32
    %c0_i32_1 = arith.constant 0 : i32
    return %c0_i32, %c0_i32_0 : i32, i32
  }
  func.func @transform_19(%arg0: i32) -> (i32, i32) {
    %c0_i32 = arith.constant 0 : i32
    %c0_i32_0 = arith.constant 0 : i32
    %c0_i32_1 = arith.constant 0 : i32
    return %c0_i32, %c0_i32_0 : i32, i32
  }
  func.func @transform_20(%arg0: i32) -> (i32, i32) {
    %c0_i32 = arith.constant 0 : i32
    %c0_i32_0 = arith.constant 0 : i32
    %c0_i32_1 = arith.constant 0 : i32
    return %c0_i32, %c0_i32_0 : i32, i32
  }
  func.func @transform_21(%arg0: i32) -> (i32, i32) {
    %c0_i32 = arith.constant 0 : i32
    %c0_i32_0 = arith.constant 0 : i32
    %c0_i32_1 = arith.constant 0 : i32
    return %c0_i32, %c0_i32_0 : i32, i32
  }
  func.func @transform_22(%arg0: i32) -> (i32, i32) {
    %c0_i32 = arith.constant 0 : i32
    %c0_i32_0 = arith.constant 0 : i32
    %c0_i32_1 = arith.constant 0 : i32
    return %c0_i32, %c0_i32_0 : i32, i32
  }
  func.func @transform_23(%arg0: i32) -> (i32, i32) {
    %c0_i32 = arith.constant 0 : i32
    %c0_i32_0 = arith.constant 0 : i32
    %c0_i32_1 = arith.constant 0 : i32
    return %c0_i32, %c0_i32_0 : i32, i32
  }
}

</mosaic_0001>

<llo_original>
// kernel: _lambda_.1
$region0: #{_lambda_.1}
  #allocation0 [shape = 'u32[]', space=smem, size = 0x4, offset = 0x4, fixed_abs, tag = 'smem constant byte address 0x4 - core index']
  #allocation1 [shape = 'u32[144,128]{1,0:T(1,128)}', space=vmem, size = 0x12000, scoped, tag = 'internal scratch']
  %s0 = inlined_call_operand.vmem [shape: f32[64,32], index: 0, kind: input, shape index: {}]
  %s1 = inlined_call_operand.vmem [shape: f32[64,32], index: 1, kind: input, shape index: {}]
  %s2 = inlined_call_operand.vmem [shape: f32[8,8], index: 2, kind: input, shape index: {}]
  %s3 = inlined_call_operand.vmem [shape: s32[8,8], index: 3, kind: input, shape index: {}]
  %s4 = inlined_call_operand.vmem [shape: f32[32,128], index: 4, kind: input, shape index: {}]
  %s5 = inlined_call_operand.vmem [shape: f32[32,128], index: 5, kind: input, shape index: {}]
  %s6 = inlined_call_operand.vmem [shape: f32[1,128], index: 6, kind: input, shape index: {}]
  %s7 = inlined_call_operand.vmem [shape: f32[32,128], index: 7, kind: input, shape index: {}]
  %s8 = inlined_call_operand.vmem [shape: f32[32,128], index: 8, kind: input, shape index: {}]
  %s9 = inlined_call_operand.vmem [shape: f32[1,128], index: 9, kind: input, shape index: {}]
  %s10 = inlined_call_operand.vmem [shape: f32[32,128], index: 10, kind: input, shape index: {}]
  %s11 = inlined_call_operand.vmem [shape: f32[32,128], index: 11, kind: input, shape index: {}]
  %s12 = inlined_call_operand.vmem [shape: f32[32,128], index: 12, kind: input, shape index: {}]
  %s13 = inlined_call_operand.vmem [shape: f32[1,128], index: 13, kind: input, shape index: {}]
  %s14 = inlined_call_operand.vmem [shape: f32[32,128], index: 14, kind: input, shape index: {}]
  %s15 = inlined_call_operand.vmem [shape: f32[32,128], index: 15, kind: input, shape index: {}]
  %s16 = inlined_call_operand.vmem [shape: f32[1,128], index: 16, kind: input, shape index: {}]
  %s17 = inlined_call_operand.vmem [shape: f32[32,32], index: 17, kind: input, shape index: {}]
  %s18 = inlined_call_operand.vmem [shape: f32[1,32], index: 18, kind: input, shape index: {}]
  %s19 = inlined_call_operand.vmem [shape: f32[32,32], index: 19, kind: input, shape index: {}]
  %s20 = inlined_call_operand.vmem [shape: f32[32,32], index: 20, kind: input, shape index: {}]
  %s21 = inlined_call_operand.vmem [shape: f32[1,32], index: 21, kind: input, shape index: {}]
  %s22 = inlined_call_operand.vmem [shape: f32[1,32], index: 22, kind: input, shape index: {}]
  %s23 = inlined_call_operand.hbm [shape: f32[1,1], index: 23, kind: output, shape index: {}]
  %s24 = sld [smem:[#allocation0]]
  $region102: #{_lambda_.1} parent=0
    _
  %s26 = ssub.s32 1, %s24
  %s27 = scalar_select 0, %s26, %s24
  $region1: #{_lambda_.1} parent=0
    #allocation2 [shape = 'u8[512]{0}', space=vmem, size = 0x400, scoped, tag = 'output window, operand 0, single buffered']
    #allocation3 [shape = 's32[1]{0}', space=sflag, size = 0x4, scoped, tag = 'scoped memory for _lambda_.1']
    %28 = vsyncpa [#allocation3], 0
    // Predicated region
    $region2: #{_lambda_.1} parent=1 // pred_check
      _
    $region3: #{_lambda_.1} parent=1 // pred_check_branch
      %30 = sbr.rel (0) target = $region5
    $region4: #{_lambda_.1} parent=1 // pred_region
      _
    $region5: #{_lambda_.1} parent=1 // pred_fallthru
      _
    // Predicated region
    $region6: #{_lambda_.1} parent=1 // pred_check
      _
    $region7: #{_lambda_.1} parent=1 // pred_check_branch
      %32 = sbr.rel (0) target = $region9
    $region8: #{_lambda_.1} parent=1 // pred_region
      _
    $region9: #{_lambda_.1} parent=1 // pred_fallthru
      _
    // Predicated region
    $region10: #{_lambda_.1} parent=1 // pred_check
      _
    $region11: #{_lambda_.1} parent=1 // pred_check_branch
      %34 = sbr.rel (0) target = $region13
    $region12: #{_lambda_.1} parent=1 // pred_region
      _
    $region13: #{_lambda_.1} parent=1 // pred_fallthru
      _
    // Predicated region
    $region14: #{_lambda_.1} parent=1 // pred_check
      _
    $region15: #{_lambda_.1} parent=1 // pred_check_branch
      %36 = sbr.rel (0) target = $region17
    $region16: #{_lambda_.1} parent=1 // pred_region
      _
    $region17: #{_lambda_.1} parent=1 // pred_fallthru
      _
    // Predicated region
    $region18: #{_lambda_.1} parent=1 // pred_check
      _
    $region19: #{_lambda_.1} parent=1 // pred_check_branch
      %38 = sbr.rel (0) target = $region21
    $region20: #{_lambda_.1} parent=1 // pred_region
      _
    $region21: #{_lambda_.1} parent=1 // pred_fallthru
      _
    // Predicated region
    $region22: #{_lambda_.1} parent=1 // pred_check
      _
    $region23: #{_lambda_.1} parent=1 // pred_check_branch
      %40 = sbr.rel (0) target = $region25
    $region24: #{_lambda_.1} parent=1 // pred_region
      _
    $region25: #{_lambda_.1} parent=1 // pred_fallthru
      _
    // Predicated region
    $region26: #{_lambda_.1} parent=1 // pred_check
      _
    $region27: #{_lambda_.1} parent=1 // pred_check_branch
      %42 = sbr.rel (0) target = $region29
    $region28: #{_lambda_.1} parent=1 // pred_region
      _
    $region29: #{_lambda_.1} parent=1 // pred_fallthru
      _
    // Predicated region
    $region30: #{_lambda_.1} parent=1 // pred_check
      _
    $region31: #{_lambda_.1} parent=1 // pred_check_branch
      %44 = sbr.rel (0) target = $region33
    $region32: #{_lambda_.1} parent=1 // pred_region
      _
    $region33: #{_lambda_.1} parent=1 // pred_fallthru
      _
    // Predicated region
    $region34: #{_lambda_.1} parent=1 // pred_check
      _
    $region35: #{_lambda_.1} parent=1 // pred_check_branch
      %46 = sbr.rel (0) target = $region37
    $region36: #{_lambda_.1} parent=1 // pred_region
      _
    $region37: #{_lambda_.1} parent=1 // pred_fallthru
      _
    // Predicated region
    $region38: #{_lambda_.1} parent=1 // pred_check
      _
    $region39: #{_lambda_.1} parent=1 // pred_check_branch
      %48 = sbr.rel (0) target = $region41
    $region40: #{_lambda_.1} parent=1 // pred_region
      _
    $region41: #{_lambda_.1} parent=1 // pred_fallthru
      _
    // Predicated region
    $region42: #{_lambda_.1} parent=1 // pred_check
      _
    $region43: #{_lambda_.1} parent=1 // pred_check_branch
      %50 = sbr.rel (0) target = $region45
    $region44: #{_lambda_.1} parent=1 // pred_region
      _
    $region45: #{_lambda_.1} parent=1 // pred_fallthru
      _
    // Predicated region
    $region46: #{_lambda_.1} parent=1 // pred_check
      _
    $region47: #{_lambda_.1} parent=1 // pred_check_branch
      %52 = sbr.rel (0) target = $region49
    $region48: #{_lambda_.1} parent=1 // pred_region
      _
    $region49: #{_lambda_.1} parent=1 // pred_fallthru
      _
    // Predicated region
    $region50: #{_lambda_.1} parent=1 // pred_check
      _
    $region51: #{_lambda_.1} parent=1 // pred_check_branch
      %54 = sbr.rel (0) target = $region53
    $region52: #{_lambda_.1} parent=1 // pred_region
      _
    $region53: #{_lambda_.1} parent=1 // pred_fallthru
      _
    // Predicated region
    $region54: #{_lambda_.1} parent=1 // pred_check
      _
    $region55: #{_lambda_.1} parent=1 // pred_check_branch
      %56 = sbr.rel (0) target = $region57
    $region56: #{_lambda_.1} parent=1 // pred_region
      _
    $region57: #{_lambda_.1} parent=1 // pred_fallthru
      _
    // Predicated region
    $region58: #{_lambda_.1} parent=1 // pred_check
      _
    $region59: #{_lambda_.1} parent=1 // pred_check_branch
      %58 = sbr.rel (0) target = $region61
    $region60: #{_lambda_.1} parent=1 // pred_region
      _
    $region61: #{_lambda_.1} parent=1 // pred_fallthru
      _
    // Predicated region
    $region62: #{_lambda_.1} parent=1 // pred_check
      _
    $region63: #{_lambda_.1} parent=1 // pred_check_branch
      %60 = sbr.rel (0) target = $region65
    $region64: #{_lambda_.1} parent=1 // pred_region
      _
    $region65: #{_lambda_.1} parent=1 // pred_fallthru
      _
    // Predicated region
    $region66: #{_lambda_.1} parent=1 // pred_check
      _
    $region67: #{_lambda_.1} parent=1 // pred_check_branch
      %62 = sbr.rel (0) target = $region69
    $region68: #{_lambda_.1} parent=1 // pred_region
      _
    $region69: #{_lambda_.1} parent=1 // pred_fallthru
      _
    // Predicated region
    $region70: #{_lambda_.1} parent=1 // pred_check
      _
    $region71: #{_lambda_.1} parent=1 // pred_check_branch
      %64 = sbr.rel (0) target = $region73
    $region72: #{_lambda_.1} parent=1 // pred_region
      _
    $region73: #{_lambda_.1} parent=1 // pred_fallthru
      _
    // Predicated region
    $region74: #{_lambda_.1} parent=1 // pred_check
      _
    $region75: #{_lambda_.1} parent=1 // pred_check_branch
      %66 = sbr.rel (0) target = $region77
    $region76: #{_lambda_.1} parent=1 // pred_region
      _
    $region77: #{_lambda_.1} parent=1 // pred_fallthru
      _
    // Predicated region
    $region78: #{_lambda_.1} parent=1 // pred_check
      _
    $region79: #{_lambda_.1} parent=1 // pred_check_branch
      %68 = sbr.rel (0) target = $region81
    $region80: #{_lambda_.1} parent=1 // pred_region
      _
    $region81: #{_lambda_.1} parent=1 // pred_fallthru
      _
    // Predicated region
    $region82: #{_lambda_.1} parent=1 // pred_check
      _
    $region83: #{_lambda_.1} parent=1 // pred_check_branch
      %70 = sbr.rel (0) target = $region85
    $region84: #{_lambda_.1} parent=1 // pred_region
      _
    $region85: #{_lambda_.1} parent=1 // pred_fallthru
      _
    // Predicated region
    $region86: #{_lambda_.1} parent=1 // pred_check
      _
    $region87: #{_lambda_.1} parent=1 // pred_check_branch
      %72 = sbr.rel (0) target = $region89
    $region88: #{_lambda_.1} parent=1 // pred_region
      _
    $region89: #{_lambda_.1} parent=1 // pred_fallthru
      _
    // Predicated region
    $region90: #{_lambda_.1} parent=1 // pred_check
      _
    $region91: #{_lambda_.1} parent=1 // pred_check_branch
      %74 = sbr.rel (0) target = $region93
    $region92: #{_lambda_.1} parent=1 // pred_region
      _
    $region93: #{_lambda_.1} parent=1 // pred_fallthru
      _
    %v75 = vld [vmem:[%s2] sm:$0xff]
    %v76 = vld [vmem:[%s0] sm:$0xff]
    %v77 = vld [vmem:[%s0 + $0x8] sm:$0xff]
    %v78 = vld [vmem:[%s0 + $0x10] sm:$0xff]
    %v79 = vld [vmem:[%s0 + $0x18] sm:$0xff]
    %v80 = vld [vmem:[%s0 + $0x20] sm:$0xff]
    %v81 = vld [vmem:[%s0 + $0x28] sm:$0xff]
    %v82 = vld [vmem:[%s0 + $0x30] sm:$0xff]
    %v83 = vld [vmem:[%s0 + $0x38] sm:$0xff]
    %v84 = vld [vmem:[%s4] sm:$0xff]
    %v85 = vld [vmem:[%s4 + $0x8] sm:$0xff]
    %v86 = vld [vmem:[%s4 + $0x10] sm:$0xff]
    %v87 = vld [vmem:[%s4 + $0x18] sm:$0xff]
    %v88 = vld [vmem:[%s6] sm:$0x1]
    %v90 = vlaneseq
    %v91 = vshrl.u32 %v90, 7
    %v92 = vsub.s32 0, %v91
    %v93 = vrot.slane %v88, %v92
    %vm95 = vcmask 261120
    %v97 = vsel %vm95, %v76, 0
    %v100 = vsel %vm95, %v77, 0
    %v103 = vsel %vm95, %v78, 0
    %v106 = vsel %vm95, %v79, 0
    %v109 = vsel %vm95, %v80, 0
    %v112 = vsel %vm95, %v81, 0
    %v115 = vsel %vm95, %v82, 0
    %v118 = vsel %vm95, %v83, 0
    %120 = vmatprep.subr.mxu0 0.0
    %121 = vmatpush1.msra.mxu0 %v84
    %122 = vmatprep.subr.mxu0 0.0
    %123 = vmatpush1.msra.mxu0 %v85
    %124 = vmatprep.subr.mxu0 0.0
    %125 = vmatpush1.msra.mxu0 %v86
    %126 = vmatprep.subr.mxu0 0.0
    %127 = vmatpush1.msra.mxu0 %v87
    %128 = vmatprep.subr.mxu0 0.0
    %129 = vmatpush1.msra.mxu0 0.0
    %130 = vmatprep.subr.mxu0 0.0
    %131 = vmatpush1.msra.mxu0 0.0
    %132 = vmatprep.subr.mxu0 0.0
    %133 = vmatpush1.msra.mxu0 0.0
    %134 = vmatprep.subr.mxu0 0.0
    %135 = vmatpush1.msra.mxu0 0.0
    %136 = vmatprep.subr.mxu0 0.0
    %137 = vmatpush1.msra.mxu0 0.0
    %138 = vmatprep.subr.mxu0 0.0
    %139 = vmatpush1.msra.mxu0 0.0
    %140 = vmatprep.subr.mxu0 0.0
    %141 = vmatpush1.msra.mxu0 0.0
    %142 = vmatprep.subr.mxu0 0.0
    %143 = vmatpush1.msra.mxu0 0.0
    %144 = vmatprep.subr.mxu0 0.0
    %145 = vmatpush1.msra.mxu0 0.0
    %146 = vmatprep.subr.mxu0 0.0
    %147 = vmatpush1.msra.mxu0 0.0
    %148 = vmatprep.subr.mxu0 0.0
    %149 = vmatpush1.msra.mxu0 0.0
    %150 = vmatprep.subr.mxu0 0.0
    %151 = vmatpush1.msra.mxu0 0.0
    %152 = vmatprep.subr.mxu0 0.0
    %153 = vmatpush1.msra.mxu0 0.0
    %154 = vmatprep.subr.mxu0 0.0
    %155 = vmatpush1.msra.mxu0 0.0
    %156 = vmatprep.subr.mxu0 0.0
    %157 = vmatpush1.msra.mxu0 0.0
    %158 = vmatprep.subr.mxu0 0.0
    %159 = vmatpush1.msra.mxu0 0.0
    %160 = vmatprep.subr.mxu0 0.0
    %161 = vmatpush1.msra.mxu0 0.0
    %162 = vmatprep.subr.mxu0 0.0
    %163 = vmatpush1.msra.mxu0 0.0
    %164 = vmatprep.subr.mxu0 0.0
    %165 = vmatpush1.msra.mxu0 0.0
    %166 = vmatprep.subr.mxu0 0.0
    %167 = vmatpush1.msra.mxu0 0.0
    %168 = vmatprep.subr.mxu0 0.0
    %169 = vmatpush1.msra.mxu0 0.0
    %170 = vmatprep.subr.mxu0 0.0
    %171 = vmatpush1.msra.mxu0 0.0
    %172 = vmatprep.subr.mxu0 0.0
    %173 = vmatpush1.msra.mxu0 0.0
    %174 = vmatprep.subr.mxu0 0.0
    %175 = vmatpush1.msra.mxu0 0.0
    %176 = vmatprep.subr.mxu0 0.0
    %177 = vmatpush1.msra.mxu0 0.0
    %178 = vmatprep.subr.mxu0 0.0
    %179 = vmatpush1.msra.mxu0 0.0
    %180 = vmatprep.subr.mxu0 0.0
    %181 = vmatpush1.msra.mxu0 0.0
    %182 = vmatprep.subr.mxu0 0.0
    %183 = vmatpush1.msra.mxu0 0.0
    %184 = vmatprep.mubr.f32.mxu0 0.0
    %185 = vmatmul.mubr.f32.gmra.mrb[0].mxu0 %v97
    %v186 = vpop.f32.mrb[0].mxu0
    %v187 = vadd.f32 %v93, %v186
    %v188 = vpop.f32.mrb[0].mxu0
    %189 = vmatprep.mubr.f32.mxu0 0.0
    %190 = vmatmul.mubr.f32.gmra.mrb[0].mxu0 %v100
    %v191 = vpop.f32.mrb[0].mxu0
    %v192 = vadd.f32 %v93, %v191
    %v193 = vpop.f32.mrb[0].mxu0
    %194 = vmatprep.mubr.f32.mxu0 0.0
    %195 = vmatmul.mubr.f32.gmra.mrb[0].mxu0 %v103
    %v196 = vpop.f32.mrb[0].mxu0
    %v197 = vadd.f32 %v93, %v196
    %v198 = vpop.f32.mrb[0].mxu0
    %199 = vmatprep.mubr.f32.mxu0 0.0
    %200 = vmatmul.mubr.f32.gmra.mrb[0].mxu0 %v106
    %v201 = vpop.f32.mrb[0].mxu0
    %v202 = vadd.f32 %v93, %v201
    %v203 = vpop.f32.mrb[0].mxu0
    %204 = vmatprep.mubr.f32.mxu0 0.0
    %205 = vmatmul.mubr.f32.gmra.mrb[0].mxu0 %v109
    %v206 = vpop.f32.mrb[0].mxu0
    %v207 = vadd.f32 %v93, %v206
    %v208 = vpop.f32.mrb[0].mxu0
    %209 = vmatprep.mubr.f32.mxu0 0.0
    %210 = vmatmul.mubr.f32.gmra.mrb[0].mxu0 %v112
    %v211 = vpop.f32.mrb[0].mxu0
    %v212 = vadd.f32 %v93, %v211
    %v213 = vpop.f32.mrb[0].mxu0
    %214 = vmatprep.mubr.f32.mxu0 0.0
    %215 = vmatmul.mubr.f32.gmra.mrb[0].mxu0 %v115
    %v216 = vpop.f32.mrb[0].mxu0
    %v217 = vadd.f32 %v93, %v216
    %v218 = vpop.f32.mrb[0].mxu0
    %219 = vmatprep.mubr.f32.mxu0 0.0
    %220 = vmatmul.mubr.f32.gmra.mrb[0].mxu0 %v118
    %v221 = vpop.f32.mrb[0].mxu0
    %v222 = vadd.f32 %v93, %v221
    %v223 = vpop.f32.mrb[0].mxu0
    %224 = vdwg.mxu0
    %v225 = vld [vmem:[%s5] sm:$0xff]
    %v226 = vld [vmem:[%s5 + $0x8] sm:$0xff]
    %v227 = vld [vmem:[%s5 + $0x10] sm:$0xff]
    %v228 = vld [vmem:[%s5 + $0x18] sm:$0xff]
    %v229 = vld [vmem:[%s7] sm:$0xff]
    %v230 = vld [vmem:[%s7 + $0x8] sm:$0xff]
    %v231 = vld [vmem:[%s7 + $0x10] sm:$0xff]
    %v232 = vld [vmem:[%s7 + $0x18] sm:$0xff]
    %v233 = vld [vmem:[%s8] sm:$0xff]
    %v234 = vld [vmem:[%s8 + $0x8] sm:$0xff]
    %v235 = vld [vmem:[%s8 + $0x10] sm:$0xff]
    %v236 = vld [vmem:[%s8 + $0x18] sm:$0xff]
    %v237 = vld [vmem:[%s9] sm:$0x1]
    %v238 = vld [vmem:[%s20] sm:$0xff]
    %v239 = vld [vmem:[%s20 + $0x8] sm:$0xff]
    %v240 = vld [vmem:[%s20 + $0x10] sm:$0xff]
    %v241 = vld [vmem:[%s20 + $0x18] sm:$0xff]
    %v243 = vsel %vm95, 0.0, 0
    %245 = vmatprep.subr.mxu0 0.0
    %246 = vmatpush1.msra.mxu0 %v225
    %247 = vmatprep.subr.mxu0 0.0
    %248 = vmatpush1.msra.mxu0 %v226
    %249 = vmatprep.subr.mxu0 0.0
    %250 = vmatpush1.msra.mxu0 %v227
    %251 = vmatprep.subr.mxu0 0.0
    %252 = vmatpush1.msra.mxu0 %v228
    %253 = vmatprep.subr.mxu0 0.0
    %254 = vmatpush1.msra.mxu0 0.0
    %255 = vmatprep.subr.mxu0 0.0
    %256 = vmatpush1.msra.mxu0 0.0
    %257 = vmatprep.subr.mxu0 0.0
    %258 = vmatpush1.msra.mxu0 0.0
    %259 = vmatprep.subr.mxu0 0.0
    %260 = vmatpush1.msra.mxu0 0.0
    %261 = vmatprep.subr.mxu0 0.0
    %262 = vmatpush1.msra.mxu0 0.0
    %263 = vmatprep.subr.mxu0 0.0
    %264 = vmatpush1.msra.mxu0 0.0
    %265 = vmatprep.subr.mxu0 0.0
    %266 = vmatpush1.msra.mxu0 0.0
    %267 = vmatprep.subr.mxu0 0.0
    %268 = vmatpush1.msra.mxu0 0.0
    %269 = vmatprep.subr.mxu0 0.0
    %270 = vmatpush1.msra.mxu0 0.0
    %271 = vmatprep.subr.mxu0 0.0
    %272 = vmatpush1.msra.mxu0 0.0
    %273 = vmatprep.subr.mxu0 0.0
    %274 = vmatpush1.msra.mxu0 0.0
    %275 = vmatprep.subr.mxu0 0.0
    %276 = vmatpush1.msra.mxu0 0.0
    %277 = vmatprep.subr.mxu0 0.0
    %278 = vmatpush1.msra.mxu0 0.0
    %279 = vmatprep.subr.mxu0 0.0
    %280 = vmatpush1.msra.mxu0 0.0
    %281 = vmatprep.subr.mxu0 0.0
    %282 = vmatpush1.msra.mxu0 0.0
    %283 = vmatprep.subr.mxu0 0.0
    %284 = vmatpush1.msra.mxu0 0.0
    %285 = vmatprep.subr.mxu0 0.0
    %286 = vmatpush1.msra.mxu0 0.0
    %287 = vmatprep.subr.mxu0 0.0
    %288 = vmatpush1.msra.mxu0 0.0
    %289 = vmatprep.subr.mxu0 0.0
    %290 = vmatpush1.msra.mxu0 0.0
    %291 = vmatprep.subr.mxu0 0.0
    %292 = vmatpush1.msra.mxu0 0.0
    %293 = vmatprep.subr.mxu0 0.0
    %294 = vmatpush1.msra.mxu0 0.0
    %295 = vmatprep.subr.mxu0 0.0
    %296 = vmatpush1.msra.mxu0 0.0
    %297 = vmatprep.subr.mxu0 0.0
    %298 = vmatpush1.msra.mxu0 0.0
    %299 = vmatprep.subr.mxu0 0.0
    %300 = vmatpush1.msra.mxu0 0.0
    %301 = vmatprep.subr.mxu0 0.0
    %302 = vmatpush1.msra.mxu0 0.0
    %303 = vmatprep.subr.mxu0 0.0
    %304 = vmatpush1.msra.mxu0 0.0
    %305 = vmatprep.subr.mxu0 0.0
    %306 = vmatpush1.msra.mxu0 0.0
    %307 = vmatprep.subr.mxu0 0.0
    %308 = vmatpush1.msra.mxu0 0.0
    %309 = vmatprep.mubr.f32.mxu0 0.0
    %310 = vmatmul.mubr.f32.gmra.mrb[0].mxu0 %v243
    %v311 = vpop.f32.mrb[0].mxu0
    %v312 = vadd.f32 0.0, %v311
    %v313 = vpop.f32.mrb[0].mxu0
    %314 = vdwg.mxu0
    %v315 = vadd.f32 %v187, %v312
    %v316 = vxor.u32 %v315, 2147483648
    %v317 = vmul.f32 %v316, 1.442695
    %v318 = vpow.pop %v317
    %v319 = vadd.f32 %v318, 1.0
    %v320 = vrcp.pop %v319
    %v321 = vmul.f32 1.0, %v320
    %v322 = vtanh.pop %v315
    %v323 = vmul.f32 %v321, 0.0
    %325 = vrot.lane.b32.xlu0 %v322, 64
    %v326 = vpop.permute.xlu0 %325
    %v328 = vmul.f32 %v321, %v326
    %330 = vrot.lane.b32.xlu0 %v328, 32
    %v331 = vpop.permute.xlu0 %330
    %v333 = vadd.f32 %v323, %v331
    %v334 = vtanh.pop %v333
    %336 = vrot.lane.b32.xlu0 %v334, 64
    %v337 = vpop.permute.xlu0 %336
    %v339 = vmul.f32 %v321, %v337
    %341 = vset.pattern.permute.xlu0 0
    %342 = vperm.xlu0 %341, %v75
    %v343 = vpop.permute.xlu0 %342
    %v345 = vmul.f32 %v343, %v339
    %v346 = vsub.f32 1.0, %v75
    %348 = vset.pattern.permute.xlu0 0
    %349 = vperm.xlu0 %348, %v346
    %v350 = vpop.permute.xlu0 %349
    %v352 = vmul.f32 %v350, 0.0
    %v353 = vadd.f32 %v345, %v352
    %v354 = vmul.f32 %v343, %v333
    %v355 = vadd.f32 %v354, %v352
    %356 = vmatprep.subr.mxu0 0.0
    %357 = vmatpush1.msra.mxu0 %v233
    %358 = vmatprep.subr.mxu0 0.0
    %359 = vmatpush1.msra.mxu0 %v234
    %360 = vmatprep.subr.mxu0 0.0
    %361 = vmatpush1.msra.mxu0 %v235
    %362 = vmatprep.subr.mxu0 0.0
    %363 = vmatpush1.msra.mxu0 %v236
    %364 = vmatprep.subr.mxu0 0.0
    %365 = vmatpush1.msra.mxu0 0.0
    %366 = vmatprep.subr.mxu0 0.0
    %367 = vmatpush1.msra.mxu0 0.0
    %368 = vmatprep.subr.mxu0 0.0
    %369 = vmatpush1.msra.mxu0 0.0
    %370 = vmatprep.subr.mxu0 0.0
    %371 = vmatpush1.msra.mxu0 0.0
    %372 = vmatprep.subr.mxu0 0.0
    %373 = vmatpush1.msra.mxu0 0.0
    %374 = vmatprep.subr.mxu0 0.0
    %375 = vmatpush1.msra.mxu0 0.0
    %376 = vmatprep.subr.mxu0 0.0
    %377 = vmatpush1.msra.mxu0 0.0
    %378 = vmatprep.subr.mxu0 0.0
    %379 = vmatpush1.msra.mxu0 0.0
    %380 = vmatprep.subr.mxu0 0.0
    %381 = vmatpush1.msra.mxu0 0.0
    %382 = vmatprep.subr.mxu0 0.0
    %383 = vmatpush1.msra.mxu0 0.0
    %384 = vmatprep.subr.mxu0 0.0
    %385 = vmatpush1.msra.mxu0 0.0
    %386 = vmatprep.subr.mxu0 0.0
    %387 = vmatpush1.msra.mxu0 0.0
    %388 = vmatprep.subr.mxu0 0.0
    %389 = vmatpush1.msra.mxu0 0.0
    %390 = vmatprep.subr.mxu0 0.0
    %391 = vmatpush1.msra.mxu0 0.0
    %392 = vmatprep.subr.mxu0 0.0
    %393 = vmatpush1.msra.mxu0 0.0
    %394 = vmatprep.subr.mxu0 0.0
    %395 = vmatpush1.msra.mxu0 0.0
    %396 = vmatprep.subr.mxu0 0.0
    %397 = vmatpush1.msra.mxu0 0.0
    %398 = vmatprep.subr.mxu0 0.0
    %399 = vmatpush1.msra.mxu0 0.0
    %400 = vmatprep.subr.mxu0 0.0
    %401 = vmatpush1.msra.mxu0 0.0
    %402 = vmatprep.subr.mxu0 0.0
    %403 = vmatpush1.msra.mxu0 0.0
    %404 = vmatprep.subr.mxu0 0.0
    %405 = vmatpush1.msra.mxu0 0.0
    %406 = vmatprep.subr.mxu0 0.0
    %407 = vmatpush1.msra.mxu0 0.0
    %408 = vmatprep.subr.mxu0 0.0
    %409 = vmatpush1.msra.mxu0 0.0
    %410 = vmatprep.subr.mxu0 0.0
    %411 = vmatpush1.msra.mxu0 0.0
    %412 = vmatprep.subr.mxu0 0.0
    %413 = vmatpush1.msra.mxu0 0.0
    %414 = vmatprep.subr.mxu0 0.0
    %415 = vmatpush1.msra.mxu0 0.0
    %416 = vmatprep.subr.mxu0 0.0
    %417 = vmatpush1.msra.mxu0 0.0
    %418 = vmatprep.subr.mxu0 0.0
    %419 = vmatpush1.msra.mxu0 0.0
    %420 = vmatprep.mubr.f32.mxu0 0.0
    %421 = vmatmul.mubr.f32.gmra.mrb[0].mxu0 %v243
    %v422 = vpop.f32.mrb[0].mxu0
    %v423 = vadd.f32 0.0, %v422
    %v424 = vpop.f32.mrb[0].mxu0
    %425 = vdwg.mxu0
    %427 = vrot.lane.b32.xlu0 %v345, 32
    %v428 = vpop.permute.xlu0 %427
    %v429 = vsel %vm95, %v428, 0
    %431 = vmatprep.subr.mxu0 0.0
    %432 = vmatpush1.msra.mxu0 %v229
    %433 = vmatprep.subr.mxu0 0.0
    %434 = vmatpush1.msra.mxu0 %v230
    %435 = vmatprep.subr.mxu0 0.0
    %436 = vmatpush1.msra.mxu0 %v231
    %437 = vmatprep.subr.mxu0 0.0
    %438 = vmatpush1.msra.mxu0 %v232
    %439 = vmatprep.subr.mxu0 0.0
    %440 = vmatpush1.msra.mxu0 0.0
    %441 = vmatprep.subr.mxu0 0.0
    %442 = vmatpush1.msra.mxu0 0.0
    %443 = vmatprep.subr.mxu0 0.0
    %444 = vmatpush1.msra.mxu0 0.0
    %445 = vmatprep.subr.mxu0 0.0
    %446 = vmatpush1.msra.mxu0 0.0
    %447 = vmatprep.subr.mxu0 0.0
    %448 = vmatpush1.msra.mxu0 0.0
    %449 = vmatprep.subr.mxu0 0.0
    %450 = vmatpush1.msra.mxu0 0.0
    %451 = vmatprep.subr.mxu0 0.0
    %452 = vmatpush1.msra.mxu0 0.0
    %453 = vmatprep.subr.mxu0 0.0
    %454 = vmatpush1.msra.mxu0 0.0
    %455 = vmatprep.subr.mxu0 0.0
    %456 = vmatpush1.msra.mxu0 0.0
    %457 = vmatprep.subr.mxu0 0.0
    %458 = vmatpush1.msra.mxu0 0.0
    %459 = vmatprep.subr.mxu0 0.0
    %460 = vmatpush1.msra.mxu0 0.0
    %461 = vmatprep.subr.mxu0 0.0
    %462 = vmatpush1.msra.mxu0 0.0
    %463 = vmatprep.subr.mxu0 0.0
    %464 = vmatpush1.msra.mxu0 0.0
    %465 = vmatprep.subr.mxu0 0.0
    %466 = vmatpush1.msra.mxu0 0.0
    %467 = vmatprep.subr.mxu0 0.0
    %468 = vmatpush1.msra.mxu0 0.0
    %469 = vmatprep.subr.mxu0 0.0
    %470 = vmatpush1.msra.mxu0 0.0
    %471 = vmatprep.subr.mxu0 0.0
    %472 = vmatpush1.msra.mxu0 0.0
    %473 = vmatprep.subr.mxu0 0.0
    %474 = vmatpush1.msra.mxu0 0.0
    %475 = vmatprep.subr.mxu0 0.0
    %476 = vmatpush1.msra.mxu0 0.0
    %477 = vmatprep.subr.mxu0 0.0
    %478 = vmatpush1.msra.mxu0 0.0
    %479 = vmatprep.subr.mxu0 0.0
    %480 = vmatpush1.msra.mxu0 0.0
    %481 = vmatprep.subr.mxu0 0.0
    %482 = vmatpush1.msra.mxu0 0.0
    %483 = vmatprep.subr.mxu0 0.0
    %484 = vmatpush1.msra.mxu0 0.0
    %485 = vmatprep.subr.mxu0 0.0
    %486 = vmatpush1.msra.mxu0 0.0
    %487 = vmatprep.subr.mxu0 0.0
    %488 = vmatpush1.msra.mxu0 0.0
    %489 = vmatprep.subr.mxu0 0.0
    %490 = vmatpush1.msra.mxu0 0.0
    %491 = vmatprep.subr.mxu0 0.0
    %492 = vmatpush1.msra.mxu0 0.0
    %493 = vmatprep.subr.mxu0 0.0
    %494 = vmatpush1.msra.mxu0 0.0
    %495 = vmatprep.mubr.f32.mxu0 0.0
    %496 = vmatmul.mubr.f32.gmra.mrb[0].mxu0 %v429
    %v497 = vpop.f32.mrb[0].mxu0
    %v498 = vadd.f32 %v423, %v497
    %v499 = vpop.f32.mrb[0].mxu0
    %500 = vdwg.mxu0
    %v502 = vlaneseq
    %v503 = vshrl.u32 %v502, 7
    %v504 = vsub.s32 0, %v503
    %v505 = vrot.slane %v237, %v504
    %v507 = vadd.f32 %v498, %v505
    %v508 = vxor.u32 %v507, 2147483648
    %v509 = vmul.f32 %v508, 1.442695
    %v510 = vpow.pop %v509
    %v511 = vadd.f32 %v510, 1.0
    %v512 = vrcp.pop %v511
    %v513 = vmul.f32 1.0, %v512
    %v514 = vtanh.pop %v507
    %v515 = vmul.f32 %v513, 0.0
    %517 = vrot.lane.b32.xlu0 %v514, 64
    %v518 = vpop.permute.xlu0 %517
    %v520 = vmul.f32 %v513, %v518
    %522 = vrot.lane.b32.xlu0 %v520, 32
    %v523 = vpop.permute.xlu0 %522
    %v525 = vadd.f32 %v515, %v523
    %v526 = vtanh.pop %v525
    %528 = vrot.lane.b32.xlu0 %v526, 64
    %v529 = vpop.permute.xlu0 %528
    %v531 = vmul.f32 %v513, %v529
    %v532 = vmul.f32 %v343, %v531
    %v533 = vadd.f32 %v532, %v352
    %v534 = vmul.f32 %v343, %v525
    %v535 = vadd.f32 %v534, %v352
    %537 = vrot.lane.b32.xlu0 %v532, 32
    %v538 = vpop.permute.xlu0 %537
    %v539 = vsel %vm95, %v538, 0
    %541 = vmatprep.subr.mxu0 0.0
    %542 = vmatpush1.msra.mxu0 %v238
    %543 = vmatprep.subr.mxu0 0.0
    %544 = vmatpush1.msra.mxu0 %v239
    %545 = vmatprep.subr.mxu0 0.0
    %546 = vmatpush1.msra.mxu0 %v240
    %547 = vmatprep.subr.mxu0 0.0
    %548 = vmatpush1.msra.mxu0 %v241
    %549 = vmatprep.subr.mxu0 0.0
    %550 = vmatpush1.msra.mxu0 0.0
    %551 = vmatprep.subr.mxu0 0.0
    %552 = vmatpush1.msra.mxu0 0.0
    %553 = vmatprep.subr.mxu0 0.0
    %554 = vmatpush1.msra.mxu0 0.0
    %555 = vmatprep.subr.mxu0 0.0
    %556 = vmatpush1.msra.mxu0 0.0
    %557 = vmatprep.subr.mxu0 0.0
    %558 = vmatpush1.msra.mxu0 0.0
    %559 = vmatprep.subr.mxu0 0.0
    %560 = vmatpush1.msra.mxu0 0.0
    %561 = vmatprep.subr.mxu0 0.0
    %562 = vmatpush1.msra.mxu0 0.0
    %563 = vmatprep.subr.mxu0 0.0
    %564 = vmatpush1.msra.mxu0 0.0
    %565 = vmatprep.subr.mxu0 0.0
    %566 = vmatpush1.msra.mxu0 0.0
    %567 = vmatprep.subr.mxu0 0.0
    %568 = vmatpush1.msra.mxu0 0.0
    %569 = vmatprep.subr.mxu0 0.0
    %570 = vmatpush1.msra.mxu0 0.0
    %571 = vmatprep.subr.mxu0 0.0
    %572 = vmatpush1.msra.mxu0 0.0
    %573 = vmatprep.subr.mxu0 0.0
    %574 = vmatpush1.msra.mxu0 0.0
    %575 = vmatprep.subr.mxu0 0.0
    %576 = vmatpush1.msra.mxu0 0.0
    %577 = vmatprep.subr.mxu0 0.0
    %578 = vmatpush1.msra.mxu0 0.0
    %579 = vmatprep.subr.mxu0 0.0
    %580 = vmatpush1.msra.mxu0 0.0
    %581 = vmatprep.subr.mxu0 0.0
    %582 = vmatpush1.msra.mxu0 0.0
    %583 = vmatprep.subr.mxu0 0.0
    %584 = vmatpush1.msra.mxu0 0.0
    %585 = vmatprep.subr.mxu0 0.0
    %586 = vmatpush1.msra.mxu0 0.0
    %587 = vmatprep.subr.mxu0 0.0
    %588 = vmatpush1.msra.mxu0 0.0
    %589 = vmatprep.subr.mxu0 0.0
    %590 = vmatpush1.msra.mxu0 0.0
    %591 = vmatprep.subr.mxu0 0.0
    %592 = vmatpush1.msra.mxu0 0.0
    %593 = vmatprep.subr.mxu0 0.0
    %594 = vmatpush1.msra.mxu0 0.0
    %595 = vmatprep.subr.mxu0 0.0
    %596 = vmatpush1.msra.mxu0 0.0
    %597 = vmatprep.subr.mxu0 0.0
    %598 = vmatpush1.msra.mxu0 0.0
    %599 = vmatprep.subr.mxu0 0.0
    %600 = vmatpush1.msra.mxu0 0.0
    %601 = vmatprep.subr.mxu0 0.0
    %602 = vmatpush1.msra.mxu0 0.0
    %603 = vmatprep.subr.mxu0 0.0
    %604 = vmatpush1.msra.mxu0 0.0
    %605 = vmatprep.mubr.f32.mxu0 0.0
    %606 = vmatmul.mubr.f32.gmra.mrb[0].mxu0 %v539
    %v607 = vpop.f32.mrb[0].mxu0
    %v608 = vadd.f32 0.0, %v607
    %v609 = vpop.f32.mrb[0].mxu0
    %610 = vdwg.mxu0
    %612 = vrot.lane.b32.xlu0 %v353, 32
    %v613 = vpop.permute.xlu0 %612
    %v614 = vsel %vm95, %v613, 0
    %616 = vmatprep.subr.mxu0 0.0
    %617 = vmatpush1.msra.mxu0 %v225
    %618 = vmatprep.subr.mxu0 0.0
    %619 = vmatpush1.msra.mxu0 %v226
    %620 = vmatprep.subr.mxu0 0.0
    %621 = vmatpush1.msra.mxu0 %v227
    %622 = vmatprep.subr.mxu0 0.0
    %623 = vmatpush1.msra.mxu0 %v228
    %624 = vmatprep.subr.mxu0 0.0
    %625 = vmatpush1.msra.mxu0 0.0
    %626 = vmatprep.subr.mxu0 0.0
    %627 = vmatpush1.msra.mxu0 0.0
    %628 = vmatprep.subr.mxu0 0.0
    %629 = vmatpush1.msra.mxu0 0.0
    %630 = vmatprep.subr.mxu0 0.0
    %631 = vmatpush1.msra.mxu0 0.0
    %632 = vmatprep.subr.mxu0 0.0
    %633 = vmatpush1.msra.mxu0 0.0
    %634 = vmatprep.subr.mxu0 0.0
    %635 = vmatpush1.msra.mxu0 0.0
    %636 = vmatprep.subr.mxu0 0.0
    %637 = vmatpush1.msra.mxu0 0.0
    %638 = vmatprep.subr.mxu0 0.0
    %639 = vmatpush1.msra.mxu0 0.0
    %640 = vmatprep.subr.mxu0 0.0
    %641 = vmatpush1.msra.mxu0 0.0
    %642 = vmatprep.subr.mxu0 0.0
    %643 = vmatpush1.msra.mxu0 0.0
    %644 = vmatprep.subr.mxu0 0.0
    %645 = vmatpush1.msra.mxu0 0.0
    %646 = vmatprep.subr.mxu0 0.0
    %647 = vmatpush1.msra.mxu0 0.0
    %648 = vmatprep.subr.mxu0 0.0
    %649 = vmatpush1.msra.mxu0 0.0
    %650 = vmatprep.subr.mxu0 0.0
    %651 = vmatpush1.msra.mxu0 0.0
    %652 = vmatprep.subr.mxu0 0.0
    %653 = vmatpush1.msra.mxu0 0.0
    %654 = vmatprep.subr.mxu0 0.0
    %655 = vmatpush1.msra.mxu0 0.0
    %656 = vmatprep.subr.mxu0 0.0
    %657 = vmatpush1.msra.mxu0 0.0
    %658 = vmatprep.subr.mxu0 0.0
    %659 = vmatpush1.msra.mxu0 0.0
    %660 = vmatprep.subr.mxu0 0.0
    %661 = vmatpush1.msra.mxu0 0.0
    %662 = vmatprep.subr.mxu0 0.0
    %663 = vmatpush1.msra.mxu0 0.0
    %664 = vmatprep.subr.mxu0 0.0
    %665 = vmatpush1.msra.mxu0 0.0
    %666 = vmatprep.subr.mxu0 0.0
    %667 = vmatpush1.msra.mxu0 0.0
    %668 = vmatprep.subr.mxu0 0.0
    %669 = vmatpush1.msra.mxu0 0.0
    %670 = vmatprep.subr.mxu0 0.0
    %671 = vmatpush1.msra.mxu0 0.0
    %672 = vmatprep.subr.mxu0 0.0
    %673 = vmatpush1.msra.mxu0 0.0
    %674 = vmatprep.subr.mxu0 0.0
    %675 = vmatpush1.msra.mxu0 0.0
    %676 = vmatprep.subr.mxu0 0.0
    %677 = vmatpush1.msra.mxu0 0.0
    %678 = vmatprep.subr.mxu0 0.0
    %679 = vmatpush1.msra.mxu0 0.0
    %680 = vmatprep.mubr.f32.mxu0 0.0
    %681 = vmatmul.mubr.f32.gmra.mrb[0].mxu0 %v614
    %v682 = vpop.f32.mrb[0].mxu0
    %v683 = vadd.f32 0.0, %v682
    %v684 = vpop.f32.mrb[0].mxu0
    %685 = vdwg.mxu0
    %v686 = vadd.f32 %v192, %v683
    %v687 = vxor.u32 %v686, 2147483648
    %v688 = vmul.f32 %v687, 1.442695
    %v689 = vpow.pop %v688
    %v690 = vadd.f32 %v689, 1.0
    %v691 = vrcp.pop %v690
    %v692 = vmul.f32 1.0, %v691
    %v693 = vtanh.pop %v686
    %v694 = vmul.f32 %v692, %v355
    %696 = vrot.lane.b32.xlu0 %v693, 64
    %v697 = vpop.permute.xlu0 %696
    %v699 = vmul.f32 %v692, %v697
    %701 = vrot.lane.b32.xlu0 %v699, 32
    %v702 = vpop.permute.xlu0 %701
    %v704 = vadd.f32 %v694, %v702
    %v705 = vtanh.pop %v704
    %707 = vrot.lane.b32.xlu0 %v705, 64
    %v708 = vpop.permute.xlu0 %707
    %v710 = vmul.f32 %v692, %v708
    %711 = vset.pattern.permute.xlu0 1
    %712 = vperm.xlu0 %711, %v75
    %v713 = vpop.permute.xlu0 %712
    %v715 = vmul.f32 %v713, %v710
    %716 = vset.pattern.permute.xlu0 1
    %717 = vperm.xlu0 %716, %v346
    %v718 = vpop.permute.xlu0 %717
    %v720 = vmul.f32 %v718, %v353
    %v721 = vadd.f32 %v715, %v720
    %v722 = vmul.f32 %v713, %v704
    %v723 = vmul.f32 %v718, %v355
    %v724 = vadd.f32 %v722, %v723
    %726 = vrot.lane.b32.xlu0 %v533, 32
    %v727 = vpop.permute.xlu0 %726
    %v728 = vsel %vm95, %v727, 0
    %730 = vmatprep.subr.mxu0 0.0
    %731 = vmatpush1.msra.mxu0 %v233
    %732 = vmatprep.subr.mxu0 0.0
    %733 = vmatpush1.msra.mxu0 %v234
    %734 = vmatprep.subr.mxu0 0.0
    %735 = vmatpush1.msra.mxu0 %v235
    %736 = vmatprep.subr.mxu0 0.0
    %737 = vmatpush1.msra.mxu0 %v236
    %738 = vmatprep.subr.mxu0 0.0
    %739 = vmatpush1.msra.mxu0 0.0
    %740 = vmatprep.subr.mxu0 0.0
    %741 = vmatpush1.msra.mxu0 0.0
    %742 = vmatprep.subr.mxu0 0.0
    %743 = vmatpush1.msra.mxu0 0.0
    %744 = vmatprep.subr.mxu0 0.0
    %745 = vmatpush1.msra.mxu0 0.0
    %746 = vmatprep.subr.mxu0 0.0
    %747 = vmatpush1.msra.mxu0 0.0
    %748 = vmatprep.subr.mxu0 0.0
    %749 = vmatpush1.msra.mxu0 0.0
    %750 = vmatprep.subr.mxu0 0.0
    %751 = vmatpush1.msra.mxu0 0.0
    %752 = vmatprep.subr.mxu0 0.0
    %753 = vmatpush1.msra.mxu0 0.0
    %754 = vmatprep.subr.mxu0 0.0
    %755 = vmatpush1.msra.mxu0 0.0
    %756 = vmatprep.subr.mxu0 0.0
    %757 = vmatpush1.msra.mxu0 0.0
    %758 = vmatprep.subr.mxu0 0.0
    %759 = vmatpush1.msra.mxu0 0.0
    %760 = vmatprep.subr.mxu0 0.0
    %761 = vmatpush1.msra.mxu0 0.0
    %762 = vmatprep.subr.mxu0 0.0
    %763 = vmatpush1.msra.mxu0 0.0
    %764 = vmatprep.subr.mxu0 0.0
    %765 = vmatpush1.msra.mxu0 0.0
    %766 = vmatprep.subr.mxu0 0.0
    %767 = vmatpush1.msra.mxu0 0.0
    %768 = vmatprep.subr.mxu0 0.0
    %769 = vmatpush1.msra.mxu0 0.0
    %770 = vmatprep.subr.mxu0 0.0
    %771 = vmatpush1.msra.mxu0 0.0
    %772 = vmatprep.subr.mxu0 0.0
    %773 = vmatpush1.msra.mxu0 0.0
    %774 = vmatprep.subr.mxu0 0.0
    %775 = vmatpush1.msra.mxu0 0.0
    %776 = vmatprep.subr.mxu0 0.0
    %777 = vmatpush1.msra.mxu0 0.0
    %778 = vmatprep.subr.mxu0 0.0
    %779 = vmatpush1.msra.mxu0 0.0
    %780 = vmatprep.subr.mxu0 0.0
    %781 = vmatpush1.msra.mxu0 0.0
    %782 = vmatprep.subr.mxu0 0.0
    %783 = vmatpush1.msra.mxu0 0.0
    %784 = vmatprep.subr.mxu0 0.0
    %785 = vmatpush1.msra.mxu0 0.0
    %786 = vmatprep.subr.mxu0 0.0
    %787 = vmatpush1.msra.mxu0 0.0
    %788 = vmatprep.subr.mxu0 0.0
    %789 = vmatpush1.msra.mxu0 0.0
    %790 = vmatprep.subr.mxu0 0.0
    %791 = vmatpush1.msra.mxu0 0.0
    %792 = vmatprep.subr.mxu0 0.0
    %793 = vmatpush1.msra.mxu0 0.0
    %794 = vmatprep.mubr.f32.mxu0 0.0
    %795 = vmatmul.mubr.f32.gmra.mrb[0].mxu0 %v728
    %v796 = vpop.f32.mrb[0].mxu0
    %v797 = vadd.f32 0.0, %v796
    %v798 = vpop.f32.mrb[0].mxu0
    %799 = vdwg.mxu0
    %801 = vrot.lane.b32.xlu0 %v715, 32
    %v802 = vpop.permute.xlu0 %801
    %v803 = vsel %vm95, %v802, 0
    %805 = vmatprep.subr.mxu0 0.0
    %806 = vmatpush1.msra.mxu0 %v229
    %807 = vmatprep.subr.mxu0 0.0
    %808 = vmatpush1.msra.mxu0 %v230
    %809 = vmatprep.subr.mxu0 0.0
    %810 = vmatpush1.msra.mxu0 %v231
    %811 = vmatprep.subr.mxu0 0.0
    %812 = vmatpush1.msra.mxu0 %v232
    %813 = vmatprep.subr.mxu0 0.0
    %814 = vmatpush1.msra.mxu0 0.0
    %815 = vmatprep.subr.mxu0 0.0
    %816 = vmatpush1.msra.mxu0 0.0
    %817 = vmatprep.subr.mxu0 0.0
    %818 = vmatpush1.msra.mxu0 0.0
    %819 = vmatprep.subr.mxu0 0.0
    %820 = vmatpush1.msra.mxu0 0.0
    %821 = vmatprep.subr.mxu0 0.0
    %822 = vmatpush1.msra.mxu0 0.0
    %823 = vmatprep.subr.mxu0 0.0
    %824 = vmatpush1.msra.mxu0 0.0
    %825 = vmatprep.subr.mxu0 0.0
    %826 = vmatpush1.msra.mxu0 0.0
    %827 = vmatprep.subr.mxu0 0.0
    %828 = vmatpush1.msra.mxu0 0.0
    %829 = vmatprep.subr.mxu0 0.0
    %830 = vmatpush1.msra.mxu0 0.0
    %831 = vmatprep.subr.mxu0 0.0
    %832 = vmatpush1.msra.mxu0 0.0
    %833 = vmatprep.subr.mxu0 0.0
    %834 = vmatpush1.msra.mxu0 0.0
    %835 = vmatprep.subr.mxu0 0.0
    %836 = vmatpush1.msra.mxu0 0.0
    %837 = vmatprep.subr.mxu0 0.0
    %838 = vmatpush1.msra.mxu0 0.0
    %839 = vmatprep.subr.mxu0 0.0
    %840 = vmatpush1.msra.mxu0 0.0
    %841 = vmatprep.subr.mxu0 0.0
    %842 = vmatpush1.msra.mxu0 0.0
    %843 = vmatprep.subr.mxu0 0.0
    %844 = vmatpush1.msra.mxu0 0.0
    %845 = vmatprep.subr.mxu0 0.0
    %846 = vmatpush1.msra.mxu0 0.0
    %847 = vmatprep.subr.mxu0 0.0
    %848 = vmatpush1.msra.mxu0 0.0
    %849 = vmatprep.subr.mxu0 0.0
    %850 = vmatpush1.msra.mxu0 0.0
    %851 = vmatprep.subr.mxu0 0.0
    %852 = vmatpush1.msra.mxu0 0.0
    %853 = vmatprep.subr.mxu0 0.0
    %854 = vmatpush1.msra.mxu0 0.0
    %855 = vmatprep.subr.mxu0 0.0
    %856 = vmatpush1.msra.mxu0 0.0
    %857 = vmatprep.subr.mxu0 0.0
    %858 = vmatpush1.msra.mxu0 0.0
    %859 = vmatprep.subr.mxu0 0.0
    %860 = vmatpush1.msra.mxu0 0.0
    %861 = vmatprep.subr.mxu0 0.0
    %862 = vmatpush1.msra.mxu0 0.0
    %863 = vmatprep.subr.mxu0 0.0
    %864 = vmatpush1.msra.mxu0 0.0
    %865 = vmatprep.subr.mxu0 0.0
    %866 = vmatpush1.msra.mxu0 0.0
    %867 = vmatprep.subr.mxu0 0.0
    %868 = vmatpush1.msra.mxu0 0.0
    %869 = vmatprep.mubr.f32.mxu0 0.0
    %870 = vmatmul.mubr.f32.gmra.mrb[0].mxu0 %v803
    %v871 = vpop.f32.mrb[0].mxu0
    %v872 = vadd.f32 %v797, %v871
    %v873 = vpop.f32.mrb[0].mxu0
    %874 = vdwg.mxu0
    %v875 = vadd.f32 %v872, %v505
    %v876 = vxor.u32 %v875, 2147483648
    %v877 = vmul.f32 %v876, 1.442695
    %v878 = vpow.pop %v877
    %v879 = vadd.f32 %v878, 1.0
    %v880 = vrcp.pop %v879
    %v881 = vmul.f32 1.0, %v880
    %v882 = vtanh.pop %v875
    %v883 = vmul.f32 %v881, %v535
    %885 = vrot.lane.b32.xlu0 %v882, 64
    %v886 = vpop.permute.xlu0 %885
    %v888 = vmul.f32 %v881, %v886
    %890 = vrot.lane.b32.xlu0 %v888, 32
    %v891 = vpop.permute.xlu0 %890
    %v893 = vadd.f32 %v883, %v891
    %v894 = vtanh.pop %v893
    %896 = vrot.lane.b32.xlu0 %v894, 64
    %v897 = vpop.permute.xlu0 %896
    %v899 = vmul.f32 %v881, %v897
    %v900 = vmul.f32 %v713, %v899
    %v901 = vmul.f32 %v718, %v533
    %v902 = vadd.f32 %v900, %v901
    %v903 = vmul.f32 %v713, %v893
    %v904 = vmul.f32 %v718, %v535
    %v905 = vadd.f32 %v903, %v904
    %907 = vrot.lane.b32.xlu0 %v900, 32
    %v908 = vpop.permute.xlu0 %907
    %v909 = vsel %vm95, %v908, 0
    %911 = vmatprep.subr.mxu0 0.0
    %912 = vmatpush1.msra.mxu0 %v238
    %913 = vmatprep.subr.mxu0 0.0
    %914 = vmatpush1.msra.mxu0 %v239
    %915 = vmatprep.subr.mxu0 0.0
    %916 = vmatpush1.msra.mxu0 %v240
    %917 = vmatprep.subr.mxu0 0.0
    %918 = vmatpush1.msra.mxu0 %v241
    %919 = vmatprep.subr.mxu0 0.0
    %920 = vmatpush1.msra.mxu0 0.0
    %921 = vmatprep.subr.mxu0 0.0
    %922 = vmatpush1.msra.mxu0 0.0
    %923 = vmatprep.subr.mxu0 0.0
    %924 = vmatpush1.msra.mxu0 0.0
    %925 = vmatprep.subr.mxu0 0.0
    %926 = vmatpush1.msra.mxu0 0.0
    %927 = vmatprep.subr.mxu0 0.0
    %928 = vmatpush1.msra.mxu0 0.0
    %929 = vmatprep.subr.mxu0 0.0
    %930 = vmatpush1.msra.mxu0 0.0
    %931 = vmatprep.subr.mxu0 0.0
    %932 = vmatpush1.msra.mxu0 0.0
    %933 = vmatprep.subr.mxu0 0.0
    %934 = vmatpush1.msra.mxu0 0.0
    %935 = vmatprep.subr.mxu0 0.0
    %936 = vmatpush1.msra.mxu0 0.0
    %937 = vmatprep.subr.mxu0 0.0
    %938 = vmatpush1.msra.mxu0 0.0
    %939 = vmatprep.subr.mxu0 0.0
    %940 = vmatpush1.msra.mxu0 0.0
    %941 = vmatprep.subr.mxu0 0.0
    %942 = vmatpush1.msra.mxu0 0.0
    %943 = vmatprep.subr.mxu0 0.0
    %944 = vmatpush1.msra.mxu0 0.0
    %945 = vmatprep.subr.mxu0 0.0
    %946 = vmatpush1.msra.mxu0 0.0
    %947 = vmatprep.subr.mxu0 0.0
    %948 = vmatpush1.msra.mxu0 0.0
    %949 = vmatprep.subr.mxu0 0.0
    %950 = vmatpush1.msra.mxu0 0.0
    %951 = vmatprep.subr.mxu0 0.0
    %952 = vmatpush1.msra.mxu0 0.0
    %953 = vmatprep.subr.mxu0 0.0
    %954 = vmatpush1.msra.mxu0 0.0
    %955 = vmatprep.subr.mxu0 0.0
    %956 = vmatpush1.msra.mxu0 0.0
    %957 = vmatprep.subr.mxu0 0.0
    %958 = vmatpush1.msra.mxu0 0.0
    %959 = vmatprep.subr.mxu0 0.0
    %960 = vmatpush1.msra.mxu0 0.0
    %961 = vmatprep.subr.mxu0 0.0
    %962 = vmatpush1.msra.mxu0 0.0
    %963 = vmatprep.subr.mxu0 0.0
    %964 = vmatpush1.msra.mxu0 0.0
    %965 = vmatprep.subr.mxu0 0.0
    %966 = vmatpush1.msra.mxu0 0.0
    %967 = vmatprep.subr.mxu0 0.0
    %968 = vmatpush1.msra.mxu0 0.0
    %969 = vmatprep.subr.mxu0 0.0
    %970 = vmatpush1.msra.mxu0 0.0
    %971 = vmatprep.subr.mxu0 0.0
    %972 = vmatpush1.msra.mxu0 0.0
    %973 = vmatprep.subr.mxu0 0.0
    %974 = vmatpush1.msra.mxu0 0.0
    %975 = vmatprep.mubr.f32.mxu0 0.0
    %976 = vmatmul.mubr.f32.gmra.mrb[0].mxu0 %v909
    %v977 = vpop.f32.mrb[0].mxu0
    %v978 = vadd.f32 0.0, %v977
    %v979 = vpop.f32.mrb[0].mxu0
    %980 = vdwg.mxu0
    %982 = vrot.lane.b32.xlu0 %v721, 32
    %v983 = vpop.permute.xlu0 %982
    %v984 = vsel %vm95, %v983, 0
    %986 = vmatprep.subr.mxu0 0.0
    %987 = vmatpush1.msra.mxu0 %v225
    %988 = vmatprep.subr.mxu0 0.0
    %989 = vmatpush1.msra.mxu0 %v226
    %990 = vmatprep.subr.mxu0 0.0
    %991 = vmatpush1.msra.mxu0 %v227
    %992 = vmatprep.subr.mxu0 0.0
    %993 = vmatpush1.msra.mxu0 %v228
    %994 = vmatprep.subr.mxu0 0.0
    %995 = vmatpush1.msra.mxu0 0.0
    %996 = vmatprep.subr.mxu0 0.0
    %997 = vmatpush1.msra.mxu0 0.0
    %998 = vmatprep.subr.mxu0 0.0
    %999 = vmatpush1.msra.mxu0 0.0
    %1000 = vmatprep.subr.mxu0 0.0
    %1001 = vmatpush1.msra.mxu0 0.0
    %1002 = vmatprep.subr.mxu0 0.0
    %1003 = vmatpush1.msra.mxu0 0.0
    %1004 = vmatprep.subr.mxu0 0.0
    %1005 = vmatpush1.msra.mxu0 0.0
    %1006 = vmatprep.subr.mxu0 0.0
    %1007 = vmatpush1.msra.mxu0 0.0
    %1008 = vmatprep.subr.mxu0 0.0
    %1009 = vmatpush1.msra.mxu0 0.0
    %1010 = vmatprep.subr.mxu0 0.0
    %1011 = vmatpush1.msra.mxu0 0.0
    %1012 = vmatprep.subr.mxu0 0.0
    %1013 = vmatpush1.msra.mxu0 0.0
    %1014 = vmatprep.subr.mxu0 0.0
    %1015 = vmatpush1.msra.mxu0 0.0
    %1016 = vmatprep.subr.mxu0 0.0
    %1017 = vmatpush1.msra.mxu0 0.0
    %1018 = vmatprep.subr.mxu0 0.0
    %1019 = vmatpush1.msra.mxu0 0.0
    %1020 = vmatprep.subr.mxu0 0.0
    %1021 = vmatpush1.msra.mxu0 0.0
    %1022 = vmatprep.subr.mxu0 0.0
    %1023 = vmatpush1.msra.mxu0 0.0
    %1024 = vmatprep.subr.mxu0 0.0
    %1025 = vmatpush1.msra.mxu0 0.0
    %1026 = vmatprep.subr.mxu0 0.0
    %1027 = vmatpush1.msra.mxu0 0.0
    %1028 = vmatprep.subr.mxu0 0.0
    %1029 = vmatpush1.msra.mxu0 0.0
    %1030 = vmatprep.subr.mxu0 0.0
    %1031 = vmatpush1.msra.mxu0 0.0
    %1032 = vmatprep.subr.mxu0 0.0
    %1033 = vmatpush1.msra.mxu0 0.0
    %1034 = vmatprep.subr.mxu0 0.0
    %1035 = vmatpush1.msra.mxu0 0.0
    %1036 = vmatprep.subr.mxu0 0.0
    %1037 = vmatpush1.msra.mxu0 0.0
    %1038 = vmatprep.subr.mxu0 0.0
    %1039 = vmatpush1.msra.mxu0 0.0
    %1040 = vmatprep.subr.mxu0 0.0
    %1041 = vmatpush1.msra.mxu0 0.0
    %1042 = vmatprep.subr.mxu0 0.0
    %1043 = vmatpush1.msra.mxu0 0.0
    %1044 = vmatprep.subr.mxu0 0.0
    %1045 = vmatpush1.msra.mxu0 0.0
    %1046 = vmatprep.subr.mxu0 0.0
    %1047 = vmatpush1.msra.mxu0 0.0
    %1048 = vmatprep.subr.mxu0 0.0
    %1049 = vmatpush1.msra.mxu0 0.0
    %1050 = vmatprep.mubr.f32.mxu0 0.0
    %1051 = vmatmul.mubr.f32.gmra.mrb[0].mxu0 %v984
    %v1052 = vpop.f32.mrb[0].mxu0
    %v1053 = vadd.f32 0.0, %v1052
    %v1054 = vpop.f32.mrb[0].mxu0
    %1055 = vdwg.mxu0
    %v1056 = vadd.f32 %v197, %v1053
    %v1057 = vxor.u32 %v1056, 2147483648
    %v1058 = vmul.f32 %v1057, 1.442695
    %v1059 = vpow.pop %v1058
    %v1060 = vadd.f32 %v1059, 1.0
    %v1061 = vrcp.pop %v1060
    %v1062 = vmul.f32 1.0, %v1061
    %v1063 = vtanh.pop %v1056
    %v1064 = vmul.f32 %v1062, %v724
    %1066 = vrot.lane.b32.xlu0 %v1063, 64
    %v1067 = vpop.permute.xlu0 %1066
    %v1069 = vmul.f32 %v1062, %v1067
    %1071 = vrot.lane.b32.xlu0 %v1069, 32
    %v1072 = vpop.permute.xlu0 %1071
    %v1074 = vadd.f32 %v1064, %v1072
    %v1075 = vtanh.pop %v1074
    %1077 = vrot.lane.b32.xlu0 %v1075, 64
    %v1078 = vpop.permute.xlu0 %1077
    %v1080 = vmul.f32 %v1062, %v1078
    %1081 = vset.pattern.permute.xlu0 2
    %1082 = vperm.xlu0 %1081, %v75
    %v1083 = vpop.permute.xlu0 %1082
    %v1085 = vmul.f32 %v1083, %v1080
    %1086 = vset.pattern.permute.xlu0 2
    %1087 = vperm.xlu0 %1086, %v346
    %v1088 = vpop.permute.xlu0 %1087
    %v1090 = vmul.f32 %v1088, %v721
    %v1091 = vadd.f32 %v1085, %v1090
    %v1092 = vmul.f32 %v1083, %v1074
    %v1093 = vmul.f32 %v1088, %v724
    %v1094 = vadd.f32 %v1092, %v1093
    %1096 = vrot.lane.b32.xlu0 %v902, 32
    %v1097 = vpop.permute.xlu0 %1096
    %v1098 = vsel %vm95, %v1097, 0
    %1100 = vmatprep.subr.mxu0 0.0
    %1101 = vmatpush1.msra.mxu0 %v233
    %1102 = vmatprep.subr.mxu0 0.0
    %1103 = vmatpush1.msra.mxu0 %v234
    %1104 = vmatprep.subr.mxu0 0.0
    %1105 = vmatpush1.msra.mxu0 %v235
    %1106 = vmatprep.subr.mxu0 0.0
    %1107 = vmatpush1.msra.mxu0 %v236
    %1108 = vmatprep.subr.mxu0 0.0
    %1109 = vmatpush1.msra.mxu0 0.0
    %1110 = vmatprep.subr.mxu0 0.0
    %1111 = vmatpush1.msra.mxu0 0.0
    %1112 = vmatprep.subr.mxu0 0.0
    %1113 = vmatpush1.msra.mxu0 0.0
    %1114 = vmatprep.subr.mxu0 0.0
    %1115 = vmatpush1.msra.mxu0 0.0
    %1116 = vmatprep.subr.mxu0 0.0
    %1117 = vmatpush1.msra.mxu0 0.0
    %1118 = vmatprep.subr.mxu0 0.0
    %1119 = vmatpush1.msra.mxu0 0.0
    %1120 = vmatprep.subr.mxu0 0.0
    %1121 = vmatpush1.msra.mxu0 0.0
    %1122 = vmatprep.subr.mxu0 0.0
    %1123 = vmatpush1.msra.mxu0 0.0
    %1124 = vmatprep.subr.mxu0 0.0
    %1125 = vmatpush1.msra.mxu0 0.0
    %1126 = vmatprep.subr.mxu0 0.0
    %1127 = vmatpush1.msra.mxu0 0.0
    %1128 = vmatprep.subr.mxu0 0.0
    %1129 = vmatpush1.msra.mxu0 0.0
    %1130 = vmatprep.subr.mxu0 0.0
    %1131 = vmatpush1.msra.mxu0 0.0
    %1132 = vmatprep.subr.mxu0 0.0
    %1133 = vmatpush1.msra.mxu0 0.0
    %1134 = vmatprep.subr.mxu0 0.0
    %1135 = vmatpush1.msra.mxu0 0.0
    %1136 = vmatprep.subr.mxu0 0.0
    %1137 = vmatpush1.msra.mxu0 0.0
    %1138 = vmatprep.subr.mxu0 0.0
    %1139 = vmatpush1.msra.mxu0 0.0
    %1140 = vmatprep.subr.mxu0 0.0
    %1141 = vmatpush1.msra.mxu0 0.0
    %1142 = vmatprep.subr.mxu0 0.0
    %1143 = vmatpush1.msra.mxu0 0.0
    %1144 = vmatprep.subr.mxu0 0.0
    %1145 = vmatpush1.msra.mxu0 0.0
    %1146 = vmatprep.subr.mxu0 0.0
    %1147 = vmatpush1.msra.mxu0 0.0
    %1148 = vmatprep.subr.mxu0 0.0
    %1149 = vmatpush1.msra.mxu0 0.0
    %1150 = vmatprep.subr.mxu0 0.0
    %1151 = vmatpush1.msra.mxu0 0.0
    %1152 = vmatprep.subr.mxu0 0.0
    %1153 = vmatpush1.msra.mxu0 0.0
    %1154 = vmatprep.subr.mxu0 0.0
    %1155 = vmatpush1.msra.mxu0 0.0
    %1156 = vmatprep.subr.mxu0 0.0
    %1157 = vmatpush1.msra.mxu0 0.0
    %1158 = vmatprep.subr.mxu0 0.0
    %1159 = vmatpush1.msra.mxu0 0.0
    %1160 = vmatprep.subr.mxu0 0.0
    %1161 = vmatpush1.msra.mxu0 0.0
    %1162 = vmatprep.subr.mxu0 0.0
    %1163 = vmatpush1.msra.mxu0 0.0
    %1164 = vmatprep.mubr.f32.mxu0 0.0
    %1165 = vmatmul.mubr.f32.gmra.mrb[0].mxu0 %v1098
    %v1166 = vpop.f32.mrb[0].mxu0
    %v1167 = vadd.f32 0.0, %v1166
    %v1168 = vpop.f32.mrb[0].mxu0
    %1169 = vdwg.mxu0
    %1171 = vrot.lane.b32.xlu0 %v1085, 32
    %v1172 = vpop.permute.xlu0 %1171
    %v1173 = vsel %vm95, %v1172, 0
    %1175 = vmatprep.subr.mxu0 0.0
    %1176 = vmatpush1.msra.mxu0 %v229
    %1177 = vmatprep.subr.mxu0 0.0
    %1178 = vmatpush1.msra.mxu0 %v230
    %1179 = vmatprep.subr.mxu0 0.0
    %1180 = vmatpush1.msra.mxu0 %v231
    %1181 = vmatprep.subr.mxu0 0.0
    %1182 = vmatpush1.msra.mxu0 %v232
    %1183 = vmatprep.subr.mxu0 0.0
    %1184 = vmatpush1.msra.mxu0 0.0
    %1185 = vmatprep.subr.mxu0 0.0
    %1186 = vmatpush1.msra.mxu0 0.0
    %1187 = vmatprep.subr.mxu0 0.0
    %1188 = vmatpush1.msra.mxu0 0.0
    %1189 = vmatprep.subr.mxu0 0.0
    %1190 = vmatpush1.msra.mxu0 0.0
    %1191 = vmatprep.subr.mxu0 0.0
    %1192 = vmatpush1.msra.mxu0 0.0
    %1193 = vmatprep.subr.mxu0 0.0
    %1194 = vmatpush1.msra.mxu0 0.0
    %1195 = vmatprep.subr.mxu0 0.0
    %1196 = vmatpush1.msra.mxu0 0.0
    %1197 = vmatprep.subr.mxu0 0.0
    %1198 = vmatpush1.msra.mxu0 0.0
    %1199 = vmatprep.subr.mxu0 0.0
    %1200 = vmatpush1.msra.mxu0 0.0
    %1201 = vmatprep.subr.mxu0 0.0
    %1202 = vmatpush1.msra.mxu0 0.0
    %1203 = vmatprep.subr.mxu0 0.0
    %1204 = vmatpush1.msra.mxu0 0.0
    %1205 = vmatprep.subr.mxu0 0.0
    %1206 = vmatpush1.msra.mxu0 0.0
    %1207 = vmatprep.subr.mxu0 0.0
    %1208 = vmatpush1.msra.mxu0 0.0
    %1209 = vmatprep.subr.mxu0 0.0
    %1210 = vmatpush1.msra.mxu0 0.0
    %1211 = vmatprep.subr.mxu0 0.0
    %1212 = vmatpush1.msra.mxu0 0.0
    %1213 = vmatprep.subr.mxu0 0.0
    %1214 = vmatpush1.msra.mxu0 0.0
    %1215 = vmatprep.subr.mxu0 0.0
    %1216 = vmatpush1.msra.mxu0 0.0
    %1217 = vmatprep.subr.mxu0 0.0
    %1218 = vmatpush1.msra.mxu0 0.0
    %1219 = vmatprep.subr.mxu0 0.0
    %1220 = vmatpush1.msra.mxu0 0.0
    %1221 = vmatprep.subr.mxu0 0.0
    %1222 = vmatpush1.msra.mxu0 0.0
    %1223 = vmatprep.subr.mxu0 0.0
    %1224 = vmatpush1.msra.mxu0 0.0
    %1225 = vmatprep.subr.mxu0 0.0
    %1226 = vmatpush1.msra.mxu0 0.0
    %1227 = vmatprep.subr.mxu0 0.0
    %1228 = vmatpush1.msra.mxu0 0.0
    %1229 = vmatprep.subr.mxu0 0.0
    %1230 = vmatpush1.msra.mxu0 0.0
    %1231 = vmatprep.subr.mxu0 0.0
    %1232 = vmatpush1.msra.mxu0 0.0
    %1233 = vmatprep.subr.mxu0 0.0
    %1234 = vmatpush1.msra.mxu0 0.0
    %1235 = vmatprep.subr.mxu0 0.0
    %1236 = vmatpush1.msra.mxu0 0.0
    %1237 = vmatprep.subr.mxu0 0.0
    %1238 = vmatpush1.msra.mxu0 0.0
    %1239 = vmatprep.mubr.f32.mxu0 0.0
    %1240 = vmatmul.mubr.f32.gmra.mrb[0].mxu0 %v1173
    %v1241 = vpop.f32.mrb[0].mxu0
    %v1242 = vadd.f32 %v1167, %v1241
    %v1243 = vpop.f32.mrb[0].mxu0
    %1244 = vdwg.mxu0
    %v1245 = vadd.f32 %v1242, %v505
    %v1246 = vxor.u32 %v1245, 2147483648
    %v1247 = vmul.f32 %v1246, 1.442695
    %v1248 = vpow.pop %v1247
    %v1249 = vadd.f32 %v1248, 1.0
    %v1250 = vrcp.pop %v1249
    %v1251 = vmul.f32 1.0, %v1250
    %v1252 = vtanh.pop %v1245
    %v1253 = vmul.f32 %v1251, %v905
    %1255 = vrot.lane.b32.xlu0 %v1252, 64
    %v1256 = vpop.permute.xlu0 %1255
    %v1258 = vmul.f32 %v1251, %v1256
    %1260 = vrot.lane.b32.xlu0 %v1258, 32
    %v1261 = vpop.permute.xlu0 %1260
    %v1263 = vadd.f32 %v1253, %v1261
    %v1264 = vtanh.pop %v1263
    %1266 = vrot.lane.b32.xlu0 %v1264, 64
    %v1267 = vpop.permute.xlu0 %1266
    %v1269 = vmul.f32 %v1251, %v1267
    %v1270 = vmul.f32 %v1083, %v1269
    %v1271 = vmul.f32 %v1088, %v902
    %v1272 = vadd.f32 %v1270, %v1271
    %v1273 = vmul.f32 %v1083, %v1263
    %v1274 = vmul.f32 %v1088, %v905
    %v1275 = vadd.f32 %v1273, %v1274
    %1277 = vrot.lane.b32.xlu0 %v1270, 32
    %v1278 = vpop.permute.xlu0 %1277
    %v1279 = vsel %vm95, %v1278, 0
    %1281 = vmatprep.subr.mxu0 0.0
    %1282 = vmatpush1.msra.mxu0 %v238
    %1283 = vmatprep.subr.mxu0 0.0
    %1284 = vmatpush1.msra.mxu0 %v239
    %1285 = vmatprep.subr.mxu0 0.0
    %1286 = vmatpush1.msra.mxu0 %v240
    %1287 = vmatprep.subr.mxu0 0.0
    %1288 = vmatpush1.msra.mxu0 %v241
    %1289 = vmatprep.subr.mxu0 0.0
    %1290 = vmatpush1.msra.mxu0 0.0
    %1291 = vmatprep.subr.mxu0 0.0
    %1292 = vmatpush1.msra.mxu0 0.0
    %1293 = vmatprep.subr.mxu0 0.0
    %1294 = vmatpush1.msra.mxu0 0.0
    %1295 = vmatprep.subr.mxu0 0.0
    %1296 = vmatpush1.msra.mxu0 0.0
    %1297 = vmatprep.subr.mxu0 0.0
    %1298 = vmatpush1.msra.mxu0 0.0
    %1299 = vmatprep.subr.mxu0 0.0
    %1300 = vmatpush1.msra.mxu0 0.0
    %1301 = vmatprep.subr.mxu0 0.0
    %1302 = vmatpush1.msra.mxu0 0.0
    %1303 = vmatprep.subr.mxu0 0.0
    %1304 = vmatpush1.msra.mxu0 0.0
    %1305 = vmatprep.subr.mxu0 0.0
    %1306 = vmatpush1.msra.mxu0 0.0
    %1307 = vmatprep.subr.mxu0 0.0
    %1308 = vmatpush1.msra.mxu0 0.0
    %1309 = vmatprep.subr.mxu0 0.0
    %1310 = vmatpush1.msra.mxu0 0.0
    %1311 = vmatprep.subr.mxu0 0.0
    %1312 = vmatpush1.msra.mxu0 0.0
    %1313 = vmatprep.subr.mxu0 0.0
    %1314 = vmatpush1.msra.mxu0 0.0
    %1315 = vmatprep.subr.mxu0 0.0
    %1316 = vmatpush1.msra.mxu0 0.0
    %1317 = vmatprep.subr.mxu0 0.0
    %1318 = vmatpush1.msra.mxu0 0.0
    %1319 = vmatprep.subr.mxu0 0.0
    %1320 = vmatpush1.msra.mxu0 0.0
    %1321 = vmatprep.subr.mxu0 0.0
    %1322 = vmatpush1.msra.mxu0 0.0
    %1323 = vmatprep.subr.mxu0 0.0
    %1324 = vmatpush1.msra.mxu0 0.0
    %1325 = vmatprep.subr.mxu0 0.0
    %1326 = vmatpush1.msra.mxu0 0.0
    %1327 = vmatprep.subr.mxu0 0.0
    %1328 = vmatpush1.msra.mxu0 0.0
    %1329 = vmatprep.subr.mxu0 0.0
    %1330 = vmatpush1.msra.mxu0 0.0
    %1331 = vmatprep.subr.mxu0 0.0
    %1332 = vmatpush1.msra.mxu0 0.0
    %1333 = vmatprep.subr.mxu0 0.0
    %1334 = vmatpush1.msra.mxu0 0.0
    %1335 = vmatprep.subr.mxu0 0.0
    %1336 = vmatpush1.msra.mxu0 0.0
    %1337 = vmatprep.subr.mxu0 0.0
    %1338 = vmatpush1.msra.mxu0 0.0
    %1339 = vmatprep.subr.mxu0 0.0
    %1340 = vmatpush1.msra.mxu0 0.0
    %1341 = vmatprep.subr.mxu0 0.0
    %1342 = vmatpush1.msra.mxu0 0.0
    %1343 = vmatprep.subr.mxu0 0.0
    %1344 = vmatpush1.msra.mxu0 0.0
    %1345 = vmatprep.mubr.f32.mxu0 0.0
    %1346 = vmatmul.mubr.f32.gmra.mrb[0].mxu0 %v1279
    %v1347 = vpop.f32.mrb[0].mxu0
    %v1348 = vadd.f32 0.0, %v1347
    %v1349 = vpop.f32.mrb[0].mxu0
    %1350 = vdwg.mxu0
    %1352 = vrot.lane.b32.xlu0 %v1091, 32
    %v1353 = vpop.permute.xlu0 %1352
    %v1354 = vsel %vm95, %v1353, 0
    %1356 = vmatprep.subr.mxu0 0.0
    %1357 = vmatpush1.msra.mxu0 %v225
    %1358 = vmatprep.subr.mxu0 0.0
    %1359 = vmatpush1.msra.mxu0 %v226
    %1360 = vmatprep.subr.mxu0 0.0
    %1361 = vmatpush1.msra.mxu0 %v227
    %1362 = vmatprep.subr.mxu0 0.0
    %1363 = vmatpush1.msra.mxu0 %v228
    %1364 = vmatprep.subr.mxu0 0.0
    %1365 = vmatpush1.msra.mxu0 0.0
    %1366 = vmatprep.subr.mxu0 0.0
    %1367 = vmatpush1.msra.mxu0 0.0
    %1368 = vmatprep.subr.mxu0 0.0
    %1369 = vmatpush1.msra.mxu0 0.0
    %1370 = vmatprep.subr.mxu0 0.0
    %1371 = vmatpush1.msra.mxu0 0.0
    %1372 = vmatprep.subr.mxu0 0.0
    %1373 = vmatpush1.msra.mxu0 0.0
    %1374 = vmatprep.subr.mxu0 0.0
    %1375 = vmatpush1.msra.mxu0 0.0
    %1376 = vmatprep.subr.mxu0 0.0
    %1377 = vmatpush1.msra.mxu0 0.0
    %1378 = vmatprep.subr.mxu0 0.0
    %1379 = vmatpush1.msra.mxu0 0.0
    %1380 = vmatprep.subr.mxu0 0.0
    %1381 = vmatpush1.msra.mxu0 0.0
    %1382 = vmatprep.subr.mxu0 0.0
    %1383 = vmatpush1.msra.mxu0 0.0
    %1384 = vmatprep.subr.mxu0 0.0
    %1385 = vmatpush1.msra.mxu0 0.0
    %1386 = vmatprep.subr.mxu0 0.0
    %1387 = vmatpush1.msra.mxu0 0.0
    %1388 = vmatprep.subr.mxu0 0.0
    %1389 = vmatpush1.msra.mxu0 0.0
    %1390 = vmatprep.subr.mxu0 0.0
    %1391 = vmatpush1.msra.mxu0 0.0
    %1392 = vmatprep.subr.mxu0 0.0
    %1393 = vmatpush1.msra.mxu0 0.0
    %1394 = vmatprep.subr.mxu0 0.0
    %1395 = vmatpush1.msra.mxu0 0.0
    %1396 = vmatprep.subr.mxu0 0.0
    %1397 = vmatpush1.msra.mxu0 0.0
    %1398 = vmatprep.subr.mxu0 0.0
    %1399 = vmatpush1.msra.mxu0 0.0
    %1400 = vmatprep.subr.mxu0 0.0
    %1401 = vmatpush1.msra.mxu0 0.0
    %1402 = vmatprep.subr.mxu0 0.0
    %1403 = vmatpush1.msra.mxu0 0.0
    %1404 = vmatprep.subr.mxu0 0.0
    %1405 = vmatpush1.msra.mxu0 0.0
    %1406 = vmatprep.subr.mxu0 0.0
    %1407 = vmatpush1.msra.mxu0 0.0
    %1408 = vmatprep.subr.mxu0 0.0
    %1409 = vmatpush1.msra.mxu0 0.0
    %1410 = vmatprep.subr.mxu0 0.0
    %1411 = vmatpush1.msra.mxu0 0.0
    %1412 = vmatprep.subr.mxu0 0.0
    %1413 = vmatpush1.msra.mxu0 0.0
    %1414 = vmatprep.subr.mxu0 0.0
    %1415 = vmatpush1.msra.mxu0 0.0
    %1416 = vmatprep.subr.mxu0 0.0
    %1417 = vmatpush1.msra.mxu0 0.0
    %1418 = vmatprep.subr.mxu0 0.0
    %1419 = vmatpush1.msra.mxu0 0.0
    %1420 = vmatprep.mubr.f32.mxu0 0.0
    %1421 = vmatmul.mubr.f32.gmra.mrb[0].mxu0 %v1354
    %v1422 = vpop.f32.mrb[0].mxu0
    %v1423 = vadd.f32 0.0, %v1422
    %v1424 = vpop.f32.mrb[0].mxu0
    %1425 = vdwg.mxu0
    %v1426 = vadd.f32 %v202, %v1423
    %v1427 = vxor.u32 %v1426, 2147483648
    %v1428 = vmul.f32 %v1427, 1.442695
    %v1429 = vpow.pop %v1428
    %v1430 = vadd.f32 %v1429, 1.0
    %v1431 = vrcp.pop %v1430
    %v1432 = vmul.f32 1.0, %v1431
    %v1433 = vtanh.pop %v1426
    %v1434 = vmul.f32 %v1432, %v1094
    %1436 = vrot.lane.b32.xlu0 %v1433, 64
    %v1437 = vpop.permute.xlu0 %1436
    %v1439 = vmul.f32 %v1432, %v1437
    %1441 = vrot.lane.b32.xlu0 %v1439, 32
    %v1442 = vpop.permute.xlu0 %1441
    %v1444 = vadd.f32 %v1434, %v1442
    %v1445 = vtanh.pop %v1444
    %1447 = vrot.lane.b32.xlu0 %v1445, 64
    %v1448 = vpop.permute.xlu0 %1447
    %v1450 = vmul.f32 %v1432, %v1448
    %1451 = vset.pattern.permute.xlu0 3
    %1452 = vperm.xlu0 %1451, %v75
    %v1453 = vpop.permute.xlu0 %1452
    %v1455 = vmul.f32 %v1453, %v1450
    %1456 = vset.pattern.permute.xlu0 3
    %1457 = vperm.xlu0 %1456, %v346
    %v1458 = vpop.permute.xlu0 %1457
    %v1460 = vmul.f32 %v1458, %v1091
    %v1461 = vadd.f32 %v1455, %v1460
    %v1462 = vmul.f32 %v1453, %v1444
    %v1463 = vmul.f32 %v1458, %v1094
    %v1464 = vadd.f32 %v1462, %v1463
    %1466 = vrot.lane.b32.xlu0 %v1272, 32
    %v1467 = vpop.permute.xlu0 %1466
    %v1468 = vsel %vm95, %v1467, 0
    %1470 = vmatprep.subr.mxu0 0.0
    %1471 = vmatpush1.msra.mxu0 %v233
    %1472 = vmatprep.subr.mxu0 0.0
    %1473 = vmatpush1.msra.mxu0 %v234
    %1474 = vmatprep.subr.mxu0 0.0
    %1475 = vmatpush1.msra.mxu0 %v235
    %1476 = vmatprep.subr.mxu0 0.0
    %1477 = vmatpush1.msra.mxu0 %v236
    %1478 = vmatprep.subr.mxu0 0.0
    %1479 = vmatpush1.msra.mxu0 0.0
    %1480 = vmatprep.subr.mxu0 0.0
    %1481 = vmatpush1.msra.mxu0 0.0
    %1482 = vmatprep.subr.mxu0 0.0
    %1483 = vmatpush1.msra.mxu0 0.0
    %1484 = vmatprep.subr.mxu0 0.0
    %1485 = vmatpush1.msra.mxu0 0.0
    %1486 = vmatprep.subr.mxu0 0.0
    %1487 = vmatpush1.msra.mxu0 0.0
    %1488 = vmatprep.subr.mxu0 0.0
    %1489 = vmatpush1.msra.mxu0 0.0
    %1490 = vmatprep.subr.mxu0 0.0
    %1491 = vmatpush1.msra.mxu0 0.0
    %1492 = vmatprep.subr.mxu0 0.0
    %1493 = vmatpush1.msra.mxu0 0.0
    %1494 = vmatprep.subr.mxu0 0.0
    %1495 = vmatpush1.msra.mxu0 0.0
    %1496 = vmatprep.subr.mxu0 0.0
    %1497 = vmatpush1.msra.mxu0 0.0
    %1498 = vmatprep.subr.mxu0 0.0
    %1499 = vmatpush1.msra.mxu0 0.0
    %1500 = vmatprep.subr.mxu0 0.0
    %1501 = vmatpush1.msra.mxu0 0.0
    %1502 = vmatprep.subr.mxu0 0.0
    %1503 = vmatpush1.msra.mxu0 0.0
    %1504 = vmatprep.subr.mxu0 0.0
    %1505 = vmatpush1.msra.mxu0 0.0
    %1506 = vmatprep.subr.mxu0 0.0
    %1507 = vmatpush1.msra.mxu0 0.0
    %1508 = vmatprep.subr.mxu0 0.0
    %1509 = vmatpush1.msra.mxu0 0.0
    %1510 = vmatprep.subr.mxu0 0.0
    %1511 = vmatpush1.msra.mxu0 0.0
    %1512 = vmatprep.subr.mxu0 0.0
    %1513 = vmatpush1.msra.mxu0 0.0
    %1514 = vmatprep.subr.mxu0 0.0
    %1515 = vmatpush1.msra.mxu0 0.0
    %1516 = vmatprep.subr.mxu0 0.0
    %1517 = vmatpush1.msra.mxu0 0.0
    %1518 = vmatprep.subr.mxu0 0.0
    %1519 = vmatpush1.msra.mxu0 0.0
    %1520 = vmatprep.subr.mxu0 0.0
    %1521 = vmatpush1.msra.mxu0 0.0
    %1522 = vmatprep.subr.mxu0 0.0
    %1523 = vmatpush1.msra.mxu0 0.0
    %1524 = vmatprep.subr.mxu0 0.0
    %1525 = vmatpush1.msra.mxu0 0.0
    %1526 = vmatprep.subr.mxu0 0.0
    %1527 = vmatpush1.msra.mxu0 0.0
    %1528 = vmatprep.subr.mxu0 0.0
    %1529 = vmatpush1.msra.mxu0 0.0
    %1530 = vmatprep.subr.mxu0 0.0
    %1531 = vmatpush1.msra.mxu0 0.0
    %1532 = vmatprep.subr.mxu0 0.0
    %1533 = vmatpush1.msra.mxu0 0.0
    %1534 = vmatprep.mubr.f32.mxu0 0.0
    %1535 = vmatmul.mubr.f32.gmra.mrb[0].mxu0 %v1468
    %v1536 = vpop.f32.mrb[0].mxu0
    %v1537 = vadd.f32 0.0, %v1536
    %v1538 = vpop.f32.mrb[0].mxu0
    %1539 = vdwg.mxu0
    %1541 = vrot.lane.b32.xlu0 %v1455, 32
    %v1542 = vpop.permute.xlu0 %1541
    %v1543 = vsel %vm95, %v1542, 0
    %1545 = vmatprep.subr.mxu0 0.0
    %1546 = vmatpush1.msra.mxu0 %v229
    %1547 = vmatprep.subr.mxu0 0.0
    %1548 = vmatpush1.msra.mxu0 %v230
    %1549 = vmatprep.subr.mxu0 0.0
    %1550 = vmatpush1.msra.mxu0 %v231
    %1551 = vmatprep.subr.mxu0 0.0
    %1552 = vmatpush1.msra.mxu0 %v232
    %1553 = vmatprep.subr.mxu0 0.0
    %1554 = vmatpush1.msra.mxu0 0.0
    %1555 = vmatprep.subr.mxu0 0.0
    %1556 = vmatpush1.msra.mxu0 0.0
    %1557 = vmatprep.subr.mxu0 0.0
    %1558 = vmatpush1.msra.mxu0 0.0
    %1559 = vmatprep.subr.mxu0 0.0
    %1560 = vmatpush1.msra.mxu0 0.0
    %1561 = vmatprep.subr.mxu0 0.0
    %1562 = vmatpush1.msra.mxu0 0.0
    %1563 = vmatprep.subr.mxu0 0.0
    %1564 = vmatpush1.msra.mxu0 0.0
    %1565 = vmatprep.subr.mxu0 0.0
    %1566 = vmatpush1.msra.mxu0 0.0
    %1567 = vmatprep.subr.mxu0 0.0
    %1568 = vmatpush1.msra.mxu0 0.0
    %1569 = vmatprep.subr.mxu0 0.0
    %1570 = vmatpush1.msra.mxu0 0.0
    %1571 = vmatprep.subr.mxu0 0.0
    %1572 = vmatpush1.msra.mxu0 0.0
    %1573 = vmatprep.subr.mxu0 0.0
    %1574 = vmatpush1.msra.mxu0 0.0
    %1575 = vmatprep.subr.mxu0 0.0
    %1576 = vmatpush1.msra.mxu0 0.0
    %1577 = vmatprep.subr.mxu0 0.0
    %1578 = vmatpush1.msra.mxu0 0.0
    %1579 = vmatprep.subr.mxu0 0.0
    %1580 = vmatpush1.msra.mxu0 0.0
    %1581 = vmatprep.subr.mxu0 0.0
    %1582 = vmatpush1.msra.mxu0 0.0
    %1583 = vmatprep.subr.mxu0 0.0
    %1584 = vmatpush1.msra.mxu0 0.0
    %1585 = vmatprep.subr.mxu0 0.0
    %1586 = vmatpush1.msra.mxu0 0.0
    %1587 = vmatprep.subr.mxu0 0.0
    %1588 = vmatpush1.msra.mxu0 0.0
    %1589 = vmatprep.subr.mxu0 0.0
    %1590 = vmatpush1.msra.mxu0 0.0
    %1591 = vmatprep.subr.mxu0 0.0
    %1592 = vmatpush1.msra.mxu0 0.0
    %1593 = vmatprep.subr.mxu0 0.0
    %1594 = vmatpush1.msra.mxu0 0.0
    %1595 = vmatprep.subr.mxu0 0.0
    %1596 = vmatpush1.msra.mxu0 0.0
    %1597 = vmatprep.subr.mxu0 0.0
    %1598 = vmatpush1.msra.mxu0 0.0
    %1599 = vmatprep.subr.mxu0 0.0
    %1600 = vmatpush1.msra.mxu0 0.0
    %1601 = vmatprep.subr.mxu0 0.0
    %1602 = vmatpush1.msra.mxu0 0.0
    %1603 = vmatprep.subr.mxu0 0.0
    %1604 = vmatpush1.msra.mxu0 0.0
    %1605 = vmatprep.subr.mxu0 0.0
    %1606 = vmatpush1.msra.mxu0 0.0
    %1607 = vmatprep.subr.mxu0 0.0
    %1608 = vmatpush1.msra.mxu0 0.0
    %1609 = vmatprep.mubr.f32.mxu0 0.0
    %1610 = vmatmul.mubr.f32.gmra.mrb[0].mxu0 %v1543
    %v1611 = vpop.f32.mrb[0].mxu0
    %v1612 = vadd.f32 %v1537, %v1611
    %v1613 = vpop.f32.mrb[0].mxu0
    %1614 = vdwg.mxu0
    %v1615 = vadd.f32 %v1612, %v505
    %v1616 = vxor.u32 %v1615, 2147483648
    %v1617 = vmul.f32 %v1616, 1.442695
    %v1618 = vpow.pop %v1617
    %v1619 = vadd.f32 %v1618, 1.0
    %v1620 = vrcp.pop %v1619
    %v1621 = vmul.f32 1.0, %v1620
    %v1622 = vtanh.pop %v1615
    %v1623 = vmul.f32 %v1621, %v1275
    %1625 = vrot.lane.b32.xlu0 %v1622, 64
    %v1626 = vpop.permute.xlu0 %1625
    %v1628 = vmul.f32 %v1621, %v1626
    %1630 = vrot.lane.b32.xlu0 %v1628, 32
    %v1631 = vpop.permute.xlu0 %1630
    %v1633 = vadd.f32 %v1623, %v1631
    %v1634 = vtanh.pop %v1633
    %1636 = vrot.lane.b32.xlu0 %v1634, 64
    %v1637 = vpop.permute.xlu0 %1636
    %v1639 = vmul.f32 %v1621, %v1637
    %v1640 = vmul.f32 %v1453, %v1639
    %v1641 = vmul.f32 %v1458, %v1272
    %v1642 = vadd.f32 %v1640, %v1641
    %v1643 = vmul.f32 %v1453, %v1633
    %v1644 = vmul.f32 %v1458, %v1275
    %v1645 = vadd.f32 %v1643, %v1644
    %1647 = vrot.lane.b32.xlu0 %v1640, 32
    %v1648 = vpop.permute.xlu0 %1647
    %v1649 = vsel %vm95, %v1648, 0
    %1651 = vmatprep.subr.mxu0 0.0
    %1652 = vmatpush1.msra.mxu0 %v238
    %1653 = vmatprep.subr.mxu0 0.0
    %1654 = vmatpush1.msra.mxu0 %v239
    %1655 = vmatprep.subr.mxu0 0.0
    %1656 = vmatpush1.msra.mxu0 %v240
    %1657 = vmatprep.subr.mxu0 0.0
    %1658 = vmatpush1.msra.mxu0 %v241
    %1659 = vmatprep.subr.mxu0 0.0
    %1660 = vmatpush1.msra.mxu0 0.0
    %1661 = vmatprep.subr.mxu0 0.0
    %1662 = vmatpush1.msra.mxu0 0.0
    %1663 = vmatprep.subr.mxu0 0.0
    %1664 = vmatpush1.msra.mxu0 0.0
    %1665 = vmatprep.subr.mxu0 0.0
    %1666 = vmatpush1.msra.mxu0 0.0
    %1667 = vmatprep.subr.mxu0 0.0
    %1668 = vmatpush1.msra.mxu0 0.0
    %1669 = vmatprep.subr.mxu0 0.0
    %1670 = vmatpush1.msra.mxu0 0.0
    %1671 = vmatprep.subr.mxu0 0.0
    %1672 = vmatpush1.msra.mxu0 0.0
    %1673 = vmatprep.subr.mxu0 0.0
    %1674 = vmatpush1.msra.mxu0 0.0
    %1675 = vmatprep.subr.mxu0 0.0
    %1676 = vmatpush1.msra.mxu0 0.0
    %1677 = vmatprep.subr.mxu0 0.0
    %1678 = vmatpush1.msra.mxu0 0.0
    %1679 = vmatprep.subr.mxu0 0.0
    %1680 = vmatpush1.msra.mxu0 0.0
    %1681 = vmatprep.subr.mxu0 0.0
    %1682 = vmatpush1.msra.mxu0 0.0
    %1683 = vmatprep.subr.mxu0 0.0
    %1684 = vmatpush1.msra.mxu0 0.0
    %1685 = vmatprep.subr.mxu0 0.0
    %1686 = vmatpush1.msra.mxu0 0.0
    %1687 = vmatprep.subr.mxu0 0.0
    %1688 = vmatpush1.msra.mxu0 0.0
    %1689 = vmatprep.subr.mxu0 0.0
    %1690 = vmatpush1.msra.mxu0 0.0
    %1691 = vmatprep.subr.mxu0 0.0
    %1692 = vmatpush1.msra.mxu0 0.0
    %1693 = vmatprep.subr.mxu0 0.0
    %1694 = vmatpush1.msra.mxu0 0.0
    %1695 = vmatprep.subr.mxu0 0.0
    %1696 = vmatpush1.msra.mxu0 0.0
    %1697 = vmatprep.subr.mxu0 0.0
    %1698 = vmatpush1.msra.mxu0 0.0
    %1699 = vmatprep.subr.mxu0 0.0
    %1700 = vmatpush1.msra.mxu0 0.0
    %1701 = vmatprep.subr.mxu0 0.0
    %1702 = vmatpush1.msra.mxu0 0.0
    %1703 = vmatprep.subr.mxu0 0.0
    %1704 = vmatpush1.msra.mxu0 0.0
    %1705 = vmatprep.subr.mxu0 0.0
    %1706 = vmatpush1.msra.mxu0 0.0
    %1707 = vmatprep.subr.mxu0 0.0
    %1708 = vmatpush1.msra.mxu0 0.0
    %1709 = vmatprep.subr.mxu0 0.0
    %1710 = vmatpush1.msra.mxu0 0.0
    %1711 = vmatprep.subr.mxu0 0.0
    %1712 = vmatpush1.msra.mxu0 0.0
    %1713 = vmatprep.subr.mxu0 0.0
    %1714 = vmatpush1.msra.mxu0 0.0
    %1715 = vmatprep.mubr.f32.mxu0 0.0
    %1716 = vmatmul.mubr.f32.gmra.mrb[0].mxu0 %v1649
    %v1717 = vpop.f32.mrb[0].mxu0
    %v1718 = vadd.f32 0.0, %v1717
    %v1719 = vpop.f32.mrb[0].mxu0
    %1720 = vdwg.mxu0
    %1722 = vrot.lane.b32.xlu0 %v1461, 32
    %v1723 = vpop.permute.xlu0 %1722
    %v1724 = vsel %vm95, %v1723, 0
    %1726 = vmatprep.subr.mxu0 0.0
    %1727 = vmatpush1.msra.mxu0 %v225
    %1728 = vmatprep.subr.mxu0 0.0
    %1729 = vmatpush1.msra.mxu0 %v226
    %1730 = vmatprep.subr.mxu0 0.0
    %1731 = vmatpush1.msra.mxu0 %v227
    %1732 = vmatprep.subr.mxu0 0.0
    %1733 = vmatpush1.msra.mxu0 %v228
    %1734 = vmatprep.subr.mxu0 0.0
    %1735 = vmatpush1.msra.mxu0 0.0
    %1736 = vmatprep.subr.mxu0 0.0
    %1737 = vmatpush1.msra.mxu0 0.0
    %1738 = vmatprep.subr.mxu0 0.0
    %1739 = vmatpush1.msra.mxu0 0.0
    %1740 = vmatprep.subr.mxu0 0.0
    %1741 = vmatpush1.msra.mxu0 0.0
    %1742 = vmatprep.subr.mxu0 0.0
    %1743 = vmatpush1.msra.mxu0 0.0
    %1744 = vmatprep.subr.mxu0 0.0
    %1745 = vmatpush1.msra.mxu0 0.0
    %1746 = vmatprep.subr.mxu0 0.0
    %1747 = vmatpush1.msra.mxu0 0.0
    %1748 = vmatprep.subr.mxu0 0.0
    %1749 = vmatpush1.msra.mxu0 0.0
    %1750 = vmatprep.subr.mxu0 0.0
    %1751 = vmatpush1.msra.mxu0 0.0
    %1752 = vmatprep.subr.mxu0 0.0
    %1753 = vmatpush1.msra.mxu0 0.0
    %1754 = vmatprep.subr.mxu0 0.0
    %1755 = vmatpush1.msra.mxu0 0.0
    %1756 = vmatprep.subr.mxu0 0.0
    %1757 = vmatpush1.msra.mxu0 0.0
    %1758 = vmatprep.subr.mxu0 0.0
    %1759 = vmatpush1.msra.mxu0 0.0
    %1760 = vmatprep.subr.mxu0 0.0
    %1761 = vmatpush1.msra.mxu0 0.0
    %1762 = vmatprep.subr.mxu0 0.0
    %1763 = vmatpush1.msra.mxu0 0.0
    %1764 = vmatprep.subr.mxu0 0.0
    %1765 = vmatpush1.msra.mxu0 0.0
    %1766 = vmatprep.subr.mxu0 0.0
    %1767 = vmatpush1.msra.mxu0 0.0
    %1768 = vmatprep.subr.mxu0 0.0
    %1769 = vmatpush1.msra.mxu0 0.0
    %1770 = vmatprep.subr.mxu0 0.0
    %1771 = vmatpush1.msra.mxu0 0.0
    %1772 = vmatprep.subr.mxu0 0.0
    %1773 = vmatpush1.msra.mxu0 0.0
    %1774 = vmatprep.subr.mxu0 0.0
    %1775 = vmatpush1.msra.mxu0 0.0
    %1776 = vmatprep.subr.mxu0 0.0
    %1777 = vmatpush1.msra.mxu0 0.0
    %1778 = vmatprep.subr.mxu0 0.0
    %1779 = vmatpush1.msra.mxu0 0.0
    %1780 = vmatprep.subr.mxu0 0.0
    %1781 = vmatpush1.msra.mxu0 0.0
    %1782 = vmatprep.subr.mxu0 0.0
    %1783 = vmatpush1.msra.mxu0 0.0
    %1784 = vmatprep.subr.mxu0 0.0
    %1785 = vmatpush1.msra.mxu0 0.0
    %1786 = vmatprep.subr.mxu0 0.0
    %1787 = vmatpush1.msra.mxu0 0.0
    %1788 = vmatprep.subr.mxu0 0.0
    %1789 = vmatpush1.msra.mxu0 0.0
    %1790 = vmatprep.mubr.f32.mxu0 0.0
    %1791 = vmatmul.mubr.f32.gmra.mrb[0].mxu0 %v1724
    %v1792 = vpop.f32.mrb[0].mxu0
    %v1793 = vadd.f32 0.0, %v1792
    %v1794 = vpop.f32.mrb[0].mxu0
    %1795 = vdwg.mxu0
    %v1796 = vadd.f32 %v207, %v1793
    %v1797 = vxor.u32 %v1796, 2147483648
    %v1798 = vmul.f32 %v1797, 1.442695
    %v1799 = vpow.pop %v1798
    %v1800 = vadd.f32 %v1799, 1.0
    %v1801 = vrcp.pop %v1800
    %v1802 = vmul.f32 1.0, %v1801
    %v1803 = vtanh.pop %v1796
    %v1804 = vmul.f32 %v1802, %v1464
    %1806 = vrot.lane.b32.xlu0 %v1803, 64
    %v1807 = vpop.permute.xlu0 %1806
    %v1809 = vmul.f32 %v1802, %v1807
    %1811 = vrot.lane.b32.xlu0 %v1809, 32
    %v1812 = vpop.permute.xlu0 %1811
    %v1814 = vadd.f32 %v1804, %v1812
    %v1815 = vtanh.pop %v1814
    %1817 = vrot.lane.b32.xlu0 %v1815, 64
    %v1818 = vpop.permute.xlu0 %1817
    %v1820 = vmul.f32 %v1802, %v1818
    %1821 = vset.pattern.permute.xlu0 4
    %1822 = vperm.xlu0 %1821, %v75
    %v1823 = vpop.permute.xlu0 %1822
    %v1825 = vmul.f32 %v1823, %v1820
    %1826 = vset.pattern.permute.xlu0 4
    %1827 = vperm.xlu0 %1826, %v346
    %v1828 = vpop.permute.xlu0 %1827
    %v1830 = vmul.f32 %v1828, %v1461
    %v1831 = vadd.f32 %v1825, %v1830
    %v1832 = vmul.f32 %v1823, %v1814
    %v1833 = vmul.f32 %v1828, %v1464
    %v1834 = vadd.f32 %v1832, %v1833
    %1836 = vrot.lane.b32.xlu0 %v1642, 32
    %v1837 = vpop.permute.xlu0 %1836
    %v1838 = vsel %vm95, %v1837, 0
    %1840 = vmatprep.subr.mxu0 0.0
    %1841 = vmatpush1.msra.mxu0 %v233
    %1842 = vmatprep.subr.mxu0 0.0
    %1843 = vmatpush1.msra.mxu0 %v234
    %1844 = vmatprep.subr.mxu0 0.0
    %1845 = vmatpush1.msra.mxu0 %v235
    %1846 = vmatprep.subr.mxu0 0.0
    %1847 = vmatpush1.msra.mxu0 %v236
    %1848 = vmatprep.subr.mxu0 0.0
    %1849 = vmatpush1.msra.mxu0 0.0
    %1850 = vmatprep.subr.mxu0 0.0
    %1851 = vmatpush1.msra.mxu0 0.0
    %1852 = vmatprep.subr.mxu0 0.0
    %1853 = vmatpush1.msra.mxu0 0.0
    %1854 = vmatprep.subr.mxu0 0.0
    %1855 = vmatpush1.msra.mxu0 0.0
    %1856 = vmatprep.subr.mxu0 0.0
    %1857 = vmatpush1.msra.mxu0 0.0
    %1858 = vmatprep.subr.mxu0 0.0
    %1859 = vmatpush1.msra.mxu0 0.0
    %1860 = vmatprep.subr.mxu0 0.0
    %1861 = vmatpush1.msra.mxu0 0.0
    %1862 = vmatprep.subr.mxu0 0.0
    %1863 = vmatpush1.msra.mxu0 0.0
    %1864 = vmatprep.subr.mxu0 0.0
    %1865 = vmatpush1.msra.mxu0 0.0
    %1866 = vmatprep.subr.mxu0 0.0
    %1867 = vmatpush1.msra.mxu0 0.0
    %1868 = vmatprep.subr.mxu0 0.0
    %1869 = vmatpush1.msra.mxu0 0.0
    %1870 = vmatprep.subr.mxu0 0.0
    %1871 = vmatpush1.msra.mxu0 0.0
    %1872 = vmatprep.subr.mxu0 0.0
    %1873 = vmatpush1.msra.mxu0 0.0
    %1874 = vmatprep.subr.mxu0 0.0
    %1875 = vmatpush1.msra.mxu0 0.0
    %1876 = vmatprep.subr.mxu0 0.0
    %1877 = vmatpush1.msra.mxu0 0.0
    %1878 = vmatprep.subr.mxu0 0.0
    %1879 = vmatpush1.msra.mxu0 0.0
    %1880 = vmatprep.subr.mxu0 0.0
    %1881 = vmatpush1.msra.mxu0 0.0
    %1882 = vmatprep.subr.mxu0 0.0
    %1883 = vmatpush1.msra.mxu0 0.0
    %1884 = vmatprep.subr.mxu0 0.0
    %1885 = vmatpush1.msra.mxu0 0.0
    %1886 = vmatprep.subr.mxu0 0.0
    %1887 = vmatpush1.msra.mxu0 0.0
    %1888 = vmatprep.subr.mxu0 0.0
    %1889 = vmatpush1.msra.mxu0 0.0
    %1890 = vmatprep.subr.mxu0 0.0
    %1891 = vmatpush1.msra.mxu0 0.0
    %1892 = vmatprep.subr.mxu0 0.0
    %1893 = vmatpush1.msra.mxu0 0.0
    %1894 = vmatprep.subr.mxu0 0.0
    %1895 = vmatpush1.msra.mxu0 0.0
    %1896 = vmatprep.subr.mxu0 0.0
    %1897 = vmatpush1.msra.mxu0 0.0
    %1898 = vmatprep.subr.mxu0 0.0
    %1899 = vmatpush1.msra.mxu0 0.0
    %1900 = vmatprep.subr.mxu0 0.0
    %1901 = vmatpush1.msra.mxu0 0.0
    %1902 = vmatprep.subr.mxu0 0.0
    %1903 = vmatpush1.msra.mxu0 0.0
    %1904 = vmatprep.mubr.f32.mxu0 0.0
    %1905 = vmatmul.mubr.f32.gmra.mrb[0].mxu0 %v1838
    %v1906 = vpop.f32.mrb[0].mxu0
    %v1907 = vadd.f32 0.0, %v1906
    %v1908 = vpop.f32.mrb[0].mxu0
    %1909 = vdwg.mxu0
    %1911 = vrot.lane.b32.xlu0 %v1825, 32
    %v1912 = vpop.permute.xlu0 %1911
    %v1913 = vsel %vm95, %v1912, 0
    %1915 = vmatprep.subr.mxu0 0.0
    %1916 = vmatpush1.msra.mxu0 %v229
    %1917 = vmatprep.subr.mxu0 0.0
    %1918 = vmatpush1.msra.mxu0 %v230
    %1919 = vmatprep.subr.mxu0 0.0
    %1920 = vmatpush1.msra.mxu0 %v231
    %1921 = vmatprep.subr.mxu0 0.0
    %1922 = vmatpush1.msra.mxu0 %v232
    %1923 = vmatprep.subr.mxu0 0.0
    %1924 = vmatpush1.msra.mxu0 0.0
    %1925 = vmatprep.subr.mxu0 0.0
    %1926 = vmatpush1.msra.mxu0 0.0
    %1927 = vmatprep.subr.mxu0 0.0
    %1928 = vmatpush1.msra.mxu0 0.0
    %1929 = vmatprep.subr.mxu0 0.0
    %1930 = vmatpush1.msra.mxu0 0.0
    %1931 = vmatprep.subr.mxu0 0.0
    %1932 = vmatpush1.msra.mxu0 0.0
    %1933 = vmatprep.subr.mxu0 0.0
    %1934 = vmatpush1.msra.mxu0 0.0
    %1935 = vmatprep.subr.mxu0 0.0
    %1936 = vmatpush1.msra.mxu0 0.0
    %1937 = vmatprep.subr.mxu0 0.0
    %1938 = vmatpush1.msra.mxu0 0.0
    %1939 = vmatprep.subr.mxu0 0.0
    %1940 = vmatpush1.msra.mxu0 0.0
    %1941 = vmatprep.subr.mxu0 0.0
    %1942 = vmatpush1.msra.mxu0 0.0
    %1943 = vmatprep.subr.mxu0 0.0
    %1944 = vmatpush1.msra.mxu0 0.0
    %1945 = vmatprep.subr.mxu0 0.0
    %1946 = vmatpush1.msra.mxu0 0.0
    %1947 = vmatprep.subr.mxu0 0.0
    %1948 = vmatpush1.msra.mxu0 0.0
    %1949 = vmatprep.subr.mxu0 0.0
    %1950 = vmatpush1.msra.mxu0 0.0
    %1951 = vmatprep.subr.mxu0 0.0
    %1952 = vmatpush1.msra.mxu0 0.0
    %1953 = vmatprep.subr.mxu0 0.0
    %1954 = vmatpush1.msra.mxu0 0.0
    %1955 = vmatprep.subr.mxu0 0.0
    %1956 = vmatpush1.msra.mxu0 0.0
    %1957 = vmatprep.subr.mxu0 0.0
    %1958 = vmatpush1.msra.mxu0 0.0
    %1959 = vmatprep.subr.mxu0 0.0
    %1960 = vmatpush1.msra.mxu0 0.0
    %1961 = vmatprep.subr.mxu0 0.0
    %1962 = vmatpush1.msra.mxu0 0.0
    %1963 = vmatprep.subr.mxu0 0.0
    %1964 = vmatpush1.msra.mxu0 0.0
    %1965 = vmatprep.subr.mxu0 0.0
    %1966 = vmatpush1.msra.mxu0 0.0
    %1967 = vmatprep.subr.mxu0 0.0
    %1968 = vmatpush1.msra.mxu0 0.0
    %1969 = vmatprep.subr.mxu0 0.0
    %1970 = vmatpush1.msra.mxu0 0.0
    %1971 = vmatprep.subr.mxu0 0.0
    %1972 = vmatpush1.msra.mxu0 0.0
    %1973 = vmatprep.subr.mxu0 0.0
    %1974 = vmatpush1.msra.mxu0 0.0
    %1975 = vmatprep.subr.mxu0 0.0
    %1976 = vmatpush1.msra.mxu0 0.0
    %1977 = vmatprep.subr.mxu0 0.0
    %1978 = vmatpush1.msra.mxu0 0.0
    %1979 = vmatprep.mubr.f32.mxu0 0.0
    %1980 = vmatmul.mubr.f32.gmra.mrb[0].mxu0 %v1913
    %v1981 = vpop.f32.mrb[0].mxu0
    %v1982 = vadd.f32 %v1907, %v1981
    %v1983 = vpop.f32.mrb[0].mxu0
    %1984 = vdwg.mxu0
    %v1985 = vadd.f32 %v1982, %v505
    %v1986 = vxor.u32 %v1985, 2147483648
    %v1987 = vmul.f32 %v1986, 1.442695
    %v1988 = vpow.pop %v1987
    %v1989 = vadd.f32 %v1988, 1.0
    %v1990 = vrcp.pop %v1989
    %v1991 = vmul.f32 1.0, %v1990
    %v1992 = vtanh.pop %v1985
    %v1993 = vmul.f32 %v1991, %v1645
    %1995 = vrot.lane.b32.xlu0 %v1992, 64
    %v1996 = vpop.permute.xlu0 %1995
    %v1998 = vmul.f32 %v1991, %v1996
    %2000 = vrot.lane.b32.xlu0 %v1998, 32
    %v2001 = vpop.permute.xlu0 %2000
    %v2003 = vadd.f32 %v1993, %v2001
    %v2004 = vtanh.pop %v2003
    %2006 = vrot.lane.b32.xlu0 %v2004, 64
    %v2007 = vpop.permute.xlu0 %2006
    %v2009 = vmul.f32 %v1991, %v2007
    %v2010 = vmul.f32 %v1823, %v2009
    %v2011 = vmul.f32 %v1828, %v1642
    %v2012 = vadd.f32 %v2010, %v2011
    %v2013 = vmul.f32 %v1823, %v2003
    %v2014 = vmul.f32 %v1828, %v1645
    %v2015 = vadd.f32 %v2013, %v2014
    %2017 = vrot.lane.b32.xlu0 %v2010, 32
    %v2018 = vpop.permute.xlu0 %2017
    %v2019 = vsel %vm95, %v2018, 0
    %2021 = vmatprep.subr.mxu0 0.0
    %2022 = vmatpush1.msra.mxu0 %v238
    %2023 = vmatprep.subr.mxu0 0.0
    %2024 = vmatpush1.msra.mxu0 %v239
    %2025 = vmatprep.subr.mxu0 0.0
    %2026 = vmatpush1.msra.mxu0 %v240
    %2027 = vmatprep.subr.mxu0 0.0
    %2028 = vmatpush1.msra.mxu0 %v241
    %2029 = vmatprep.subr.mxu0 0.0
    %2030 = vmatpush1.msra.mxu0 0.0
    %2031 = vmatprep.subr.mxu0 0.0
    %2032 = vmatpush1.msra.mxu0 0.0
    %2033 = vmatprep.subr.mxu0 0.0
    %2034 = vmatpush1.msra.mxu0 0.0
    %2035 = vmatprep.subr.mxu0 0.0
    %2036 = vmatpush1.msra.mxu0 0.0
    %2037 = vmatprep.subr.mxu0 0.0
    %2038 = vmatpush1.msra.mxu0 0.0
    %2039 = vmatprep.subr.mxu0 0.0
    %2040 = vmatpush1.msra.mxu0 0.0
    %2041 = vmatprep.subr.mxu0 0.0
    %2042 = vmatpush1.msra.mxu0 0.0
    %2043 = vmatprep.subr.mxu0 0.0
    %2044 = vmatpush1.msra.mxu0 0.0
    %2045 = vmatprep.subr.mxu0 0.0
    %2046 = vmatpush1.msra.mxu0 0.0
    %2047 = vmatprep.subr.mxu0 0.0
    %2048 = vmatpush1.msra.mxu0 0.0
    %2049 = vmatprep.subr.mxu0 0.0
    %2050 = vmatpush1.msra.mxu0 0.0
    %2051 = vmatprep.subr.mxu0 0.0
    %2052 = vmatpush1.msra.mxu0 0.0
    %2053 = vmatprep.subr.mxu0 0.0
    %2054 = vmatpush1.msra.mxu0 0.0
    %2055 = vmatprep.subr.mxu0 0.0
    %2056 = vmatpush1.msra.mxu0 0.0
    %2057 = vmatprep.subr.mxu0 0.0
    %2058 = vmatpush1.msra.mxu0 0.0
    %2059 = vmatprep.subr.mxu0 0.0
    %2060 = vmatpush1.msra.mxu0 0.0
    %2061 = vmatprep.subr.mxu0 0.0
    %2062 = vmatpush1.msra.mxu0 0.0
    %2063 = vmatprep.subr.mxu0 0.0
    %2064 = vmatpush1.msra.mxu0 0.0
    %2065 = vmatprep.subr.mxu0 0.0
    %2066 = vmatpush1.msra.mxu0 0.0
    %2067 = vmatprep.subr.mxu0 0.0
    %2068 = vmatpush1.msra.mxu0 0.0
    %2069 = vmatprep.subr.mxu0 0.0
    %2070 = vmatpush1.msra.mxu0 0.0
    %2071 = vmatprep.subr.mxu0 0.0
    %2072 = vmatpush1.msra.mxu0 0.0
    %2073 = vmatprep.subr.mxu0 0.0
    %2074 = vmatpush1.msra.mxu0 0.0
    %2075 = vmatprep.subr.mxu0 0.0
    %2076 = vmatpush1.msra.mxu0 0.0
    %2077 = vmatprep.subr.mxu0 0.0
    %2078 = vmatpush1.msra.mxu0 0.0
    %2079 = vmatprep.subr.mxu0 0.0
    %2080 = vmatpush1.msra.mxu0 0.0
    %2081 = vmatprep.subr.mxu0 0.0
    %2082 = vmatpush1.msra.mxu0 0.0
    %2083 = vmatprep.subr.mxu0 0.0
    %2084 = vmatpush1.msra.mxu0 0.0
    %2085 = vmatprep.mubr.f32.mxu0 0.0
    %2086 = vmatmul.mubr.f32.gmra.mrb[0].mxu0 %v2019
    %v2087 = vpop.f32.mrb[0].mxu0
    %v2088 = vadd.f32 0.0, %v2087
    %v2089 = vpop.f32.mrb[0].mxu0
    %2090 = vdwg.mxu0
    %2092 = vrot.lane.b32.xlu0 %v1831, 32
    %v2093 = vpop.permute.xlu0 %2092
    %v2094 = vsel %vm95, %v2093, 0
    %2096 = vmatprep.subr.mxu0 0.0
    %2097 = vmatpush1.msra.mxu0 %v225
    %2098 = vmatprep.subr.mxu0 0.0
    %2099 = vmatpush1.msra.mxu0 %v226
    %2100 = vmatprep.subr.mxu0 0.0
    %2101 = vmatpush1.msra.mxu0 %v227
    %2102 = vmatprep.subr.mxu0 0.0
    %2103 = vmatpush1.msra.mxu0 %v228
    %2104 = vmatprep.subr.mxu0 0.0
    %2105 = vmatpush1.msra.mxu0 0.0
    %2106 = vmatprep.subr.mxu0 0.0
    %2107 = vmatpush1.msra.mxu0 0.0
    %2108 = vmatprep.subr.mxu0 0.0
    %2109 = vmatpush1.msra.mxu0 0.0
    %2110 = vmatprep.subr.mxu0 0.0
    %2111 = vmatpush1.msra.mxu0 0.0
    %2112 = vmatprep.subr.mxu0 0.0
    %2113 = vmatpush1.msra.mxu0 0.0
    %2114 = vmatprep.subr.mxu0 0.0
    %2115 = vmatpush1.msra.mxu0 0.0
    %2116 = vmatprep.subr.mxu0 0.0
    %2117 = vmatpush1.msra.mxu0 0.0
    %2118 = vmatprep.subr.mxu0 0.0
    %2119 = vmatpush1.msra.mxu0 0.0
    %2120 = vmatprep.subr.mxu0 0.0
    %2121 = vmatpush1.msra.mxu0 0.0
    %2122 = vmatprep.subr.mxu0 0.0
    %2123 = vmatpush1.msra.mxu0 0.0
    %2124 = vmatprep.subr.mxu0 0.0
    %2125 = vmatpush1.msra.mxu0 0.0
    %2126 = vmatprep.subr.mxu0 0.0
    %2127 = vmatpush1.msra.mxu0 0.0
    %2128 = vmatprep.subr.mxu0 0.0
    %2129 = vmatpush1.msra.mxu0 0.0
    %2130 = vmatprep.subr.mxu0 0.0
    %2131 = vmatpush1.msra.mxu0 0.0
    %2132 = vmatprep.subr.mxu0 0.0
    %2133 = vmatpush1.msra.mxu0 0.0
    %2134 = vmatprep.subr.mxu0 0.0
    %2135 = vmatpush1.msra.mxu0 0.0
    %2136 = vmatprep.subr.mxu0 0.0
    %2137 = vmatpush1.msra.mxu0 0.0
    %2138 = vmatprep.subr.mxu0 0.0
    %2139 = vmatpush1.msra.mxu0 0.0
    %2140 = vmatprep.subr.mxu0 0.0
    %2141 = vmatpush1.msra.mxu0 0.0
    %2142 = vmatprep.subr.mxu0 0.0
    %2143 = vmatpush1.msra.mxu0 0.0
    %2144 = vmatprep.subr.mxu0 0.0
    %2145 = vmatpush1.msra.mxu0 0.0
    %2146 = vmatprep.subr.mxu0 0.0
    %2147 = vmatpush1.msra.mxu0 0.0
    %2148 = vmatprep.subr.mxu0 0.0
    %2149 = vmatpush1.msra.mxu0 0.0
    %2150 = vmatprep.subr.mxu0 0.0
    %2151 = vmatpush1.msra.mxu0 0.0
    %2152 = vmatprep.subr.mxu0 0.0
    %2153 = vmatpush1.msra.mxu0 0.0
    %2154 = vmatprep.subr.mxu0 0.0
    %2155 = vmatpush1.msra.mxu0 0.0
    %2156 = vmatprep.subr.mxu0 0.0
    %2157 = vmatpush1.msra.mxu0 0.0
    %2158 = vmatprep.subr.mxu0 0.0
    %2159 = vmatpush1.msra.mxu0 0.0
    %2160 = vmatprep.mubr.f32.mxu0 0.0
    %2161 = vmatmul.mubr.f32.gmra.mrb[0].mxu0 %v2094
    %v2162 = vpop.f32.mrb[0].mxu0
    %v2163 = vadd.f32 0.0, %v2162
    %v2164 = vpop.f32.mrb[0].mxu0
    %2165 = vdwg.mxu0
    %v2166 = vadd.f32 %v212, %v2163
    %v2167 = vxor.u32 %v2166, 2147483648
    %v2168 = vmul.f32 %v2167, 1.442695
    %v2169 = vpow.pop %v2168
    %v2170 = vadd.f32 %v2169, 1.0
    %v2171 = vrcp.pop %v2170
    %v2172 = vmul.f32 1.0, %v2171
    %v2173 = vtanh.pop %v2166
    %v2174 = vmul.f32 %v2172, %v1834
    %2176 = vrot.lane.b32.xlu0 %v2173, 64
    %v2177 = vpop.permute.xlu0 %2176
    %v2179 = vmul.f32 %v2172, %v2177
    %2181 = vrot.lane.b32.xlu0 %v2179, 32
    %v2182 = vpop.permute.xlu0 %2181
    %v2184 = vadd.f32 %v2174, %v2182
    %v2185 = vtanh.pop %v2184
    %2187 = vrot.lane.b32.xlu0 %v2185, 64
    %v2188 = vpop.permute.xlu0 %2187
    %v2190 = vmul.f32 %v2172, %v2188
    %2191 = vset.pattern.permute.xlu0 5
    %2192 = vperm.xlu0 %2191, %v75
    %v2193 = vpop.permute.xlu0 %2192
    %v2195 = vmul.f32 %v2193, %v2190
    %2196 = vset.pattern.permute.xlu0 5
    %2197 = vperm.xlu0 %2196, %v346
    %v2198 = vpop.permute.xlu0 %2197
    %v2200 = vmul.f32 %v2198, %v1831
    %v2201 = vadd.f32 %v2195, %v2200
    %v2202 = vmul.f32 %v2193, %v2184
    %v2203 = vmul.f32 %v2198, %v1834
    %v2204 = vadd.f32 %v2202, %v2203
    %2206 = vrot.lane.b32.xlu0 %v2012, 32
    %v2207 = vpop.permute.xlu0 %2206
    %v2208 = vsel %vm95, %v2207, 0
    %2210 = vmatprep.subr.mxu0 0.0
    %2211 = vmatpush1.msra.mxu0 %v233
    %2212 = vmatprep.subr.mxu0 0.0
    %2213 = vmatpush1.msra.mxu0 %v234
    %2214 = vmatprep.subr.mxu0 0.0
    %2215 = vmatpush1.msra.mxu0 %v235
    %2216 = vmatprep.subr.mxu0 0.0
    %2217 = vmatpush1.msra.mxu0 %v236
    %2218 = vmatprep.subr.mxu0 0.0
    %2219 = vmatpush1.msra.mxu0 0.0
    %2220 = vmatprep.subr.mxu0 0.0
    %2221 = vmatpush1.msra.mxu0 0.0
    %2222 = vmatprep.subr.mxu0 0.0
    %2223 = vmatpush1.msra.mxu0 0.0
    %2224 = vmatprep.subr.mxu0 0.0
    %2225 = vmatpush1.msra.mxu0 0.0
    %2226 = vmatprep.subr.mxu0 0.0
    %2227 = vmatpush1.msra.mxu0 0.0
    %2228 = vmatprep.subr.mxu0 0.0
    %2229 = vmatpush1.msra.mxu0 0.0
    %2230 = vmatprep.subr.mxu0 0.0
    %2231 = vmatpush1.msra.mxu0 0.0
    %2232 = vmatprep.subr.mxu0 0.0
    %2233 = vmatpush1.msra.mxu0 0.0
    %2234 = vmatprep.subr.mxu0 0.0
    %2235 = vmatpush1.msra.mxu0 0.0
    %2236 = vmatprep.subr.mxu0 0.0
    %2237 = vmatpush1.msra.mxu0 0.0
    %2238 = vmatprep.subr.mxu0 0.0
    %2239 = vmatpush1.msra.mxu0 0.0
    %2240 = vmatprep.subr.mxu0 0.0
    %2241 = vmatpush1.msra.mxu0 0.0
    %2242 = vmatprep.subr.mxu0 0.0
    %2243 = vmatpush1.msra.mxu0 0.0
    %2244 = vmatprep.subr.mxu0 0.0
    %2245 = vmatpush1.msra.mxu0 0.0
    %2246 = vmatprep.subr.mxu0 0.0
    %2247 = vmatpush1.msra.mxu0 0.0
    %2248 = vmatprep.subr.mxu0 0.0
    %2249 = vmatpush1.msra.mxu0 0.0
    %2250 = vmatprep.subr.mxu0 0.0
    %2251 = vmatpush1.msra.mxu0 0.0
    %2252 = vmatprep.subr.mxu0 0.0
    %2253 = vmatpush1.msra.mxu0 0.0
    %2254 = vmatprep.subr.mxu0 0.0
    %2255 = vmatpush1.msra.mxu0 0.0
    %2256 = vmatprep.subr.mxu0 0.0
    %2257 = vmatpush1.msra.mxu0 0.0
    %2258 = vmatprep.subr.mxu0 0.0
    %2259 = vmatpush1.msra.mxu0 0.0
    %2260 = vmatprep.subr.mxu0 0.0
    %2261 = vmatpush1.msra.mxu0 0.0
    %2262 = vmatprep.subr.mxu0 0.0
    %2263 = vmatpush1.msra.mxu0 0.0
    %2264 = vmatprep.subr.mxu0 0.0
    %2265 = vmatpush1.msra.mxu0 0.0
    %2266 = vmatprep.subr.mxu0 0.0
    %2267 = vmatpush1.msra.mxu0 0.0
    %2268 = vmatprep.subr.mxu0 0.0
    %2269 = vmatpush1.msra.mxu0 0.0
    %2270 = vmatprep.subr.mxu0 0.0
    %2271 = vmatpush1.msra.mxu0 0.0
    %2272 = vmatprep.subr.mxu0 0.0
    %2273 = vmatpush1.msra.mxu0 0.0
    %2274 = vmatprep.mubr.f32.mxu0 0.0
    %2275 = vmatmul.mubr.f32.gmra.mrb[0].mxu0 %v2208
    %v2276 = vpop.f32.mrb[0].mxu0
    %v2277 = vadd.f32 0.0, %v2276
    %v2278 = vpop.f32.mrb[0].mxu0
    %2279 = vdwg.mxu0
    %2281 = vrot.lane.b32.xlu0 %v2195, 32
    %v2282 = vpop.permute.xlu0 %2281
    %v2283 = vsel %vm95, %v2282, 0
    %2285 = vmatprep.subr.mxu0 0.0
    %2286 = vmatpush1.msra.mxu0 %v229
    %2287 = vmatprep.subr.mxu0 0.0
    %2288 = vmatpush1.msra.mxu0 %v230
    %2289 = vmatprep.subr.mxu0 0.0
    %2290 = vmatpush1.msra.mxu0 %v231
    %2291 = vmatprep.subr.mxu0 0.0
    %2292 = vmatpush1.msra.mxu0 %v232
    %2293 = vmatprep.subr.mxu0 0.0
    %2294 = vmatpush1.msra.mxu0 0.0
    %2295 = vmatprep.subr.mxu0 0.0
    %2296 = vmatpush1.msra.mxu0 0.0
    %2297 = vmatprep.subr.mxu0 0.0
    %2298 = vmatpush1.msra.mxu0 0.0
    %2299 = vmatprep.subr.mxu0 0.0
    %2300 = vmatpush1.msra.mxu0 0.0
    %2301 = vmatprep.subr.mxu0 0.0
    %2302 = vmatpush1.msra.mxu0 0.0
    %2303 = vmatprep.subr.mxu0 0.0
    %2304 = vmatpush1.msra.mxu0 0.0
    %2305 = vmatprep.subr.mxu0 0.0
    %2306 = vmatpush1.msra.mxu0 0.0
    %2307 = vmatprep.subr.mxu0 0.0
    %2308 = vmatpush1.msra.mxu0 0.0
    %2309 = vmatprep.subr.mxu0 0.0
    %2310 = vmatpush1.msra.mxu0 0.0
    %2311 = vmatprep.subr.mxu0 0.0
    %2312 = vmatpush1.msra.mxu0 0.0
    %2313 = vmatprep.subr.mxu0 0.0
    %2314 = vmatpush1.msra.mxu0 0.0
    %2315 = vmatprep.subr.mxu0 0.0
    %2316 = vmatpush1.msra.mxu0 0.0
    %2317 = vmatprep.subr.mxu0 0.0
    %2318 = vmatpush1.msra.mxu0 0.0
    %2319 = vmatprep.subr.mxu0 0.0
    %2320 = vmatpush1.msra.mxu0 0.0
    %2321 = vmatprep.subr.mxu0 0.0
    %2322 = vmatpush1.msra.mxu0 0.0
    %2323 = vmatprep.subr.mxu0 0.0
    %2324 = vmatpush1.msra.mxu0 0.0
    %2325 = vmatprep.subr.mxu0 0.0
    %2326 = vmatpush1.msra.mxu0 0.0
    %2327 = vmatprep.subr.mxu0 0.0
    %2328 = vmatpush1.msra.mxu0 0.0
    %2329 = vmatprep.subr.mxu0 0.0
    %2330 = vmatpush1.msra.mxu0 0.0
    %2331 = vmatprep.subr.mxu0 0.0
    %2332 = vmatpush1.msra.mxu0 0.0
    %2333 = vmatprep.subr.mxu0 0.0
    %2334 = vmatpush1.msra.mxu0 0.0
    %2335 = vmatprep.subr.mxu0 0.0
    %2336 = vmatpush1.msra.mxu0 0.0
    %2337 = vmatprep.subr.mxu0 0.0
    %2338 = vmatpush1.msra.mxu0 0.0
    %2339 = vmatprep.subr.mxu0 0.0
    %2340 = vmatpush1.msra.mxu0 0.0
    %2341 = vmatprep.subr.mxu0 0.0
    %2342 = vmatpush1.msra.mxu0 0.0
    %2343 = vmatprep.subr.mxu0 0.0
    %2344 = vmatpush1.msra.mxu0 0.0
    %2345 = vmatprep.subr.mxu0 0.0
    %2346 = vmatpush1.msra.mxu0 0.0
    %2347 = vmatprep.subr.mxu0 0.0
    %2348 = vmatpush1.msra.mxu0 0.0
    %2349 = vmatprep.mubr.f32.mxu0 0.0
    %2350 = vmatmul.mubr.f32.gmra.mrb[0].mxu0 %v2283
    %v2351 = vpop.f32.mrb[0].mxu0
    %v2352 = vadd.f32 %v2277, %v2351
    %v2353 = vpop.f32.mrb[0].mxu0
    %2354 = vdwg.mxu0
    %v2355 = vadd.f32 %v2352, %v505
    %v2356 = vxor.u32 %v2355, 2147483648
    %v2357 = vmul.f32 %v2356, 1.442695
    %v2358 = vpow.pop %v2357
    %v2359 = vadd.f32 %v2358, 1.0
    %v2360 = vrcp.pop %v2359
    %v2361 = vmul.f32 1.0, %v2360
    %v2362 = vtanh.pop %v2355
    %v2363 = vmul.f32 %v2361, %v2015
    %2365 = vrot.lane.b32.xlu0 %v2362, 64
    %v2366 = vpop.permute.xlu0 %2365
    %v2368 = vmul.f32 %v2361, %v2366
    %2370 = vrot.lane.b32.xlu0 %v2368, 32
    %v2371 = vpop.permute.xlu0 %2370
    %v2373 = vadd.f32 %v2363, %v2371
    %v2374 = vtanh.pop %v2373
    %2376 = vrot.lane.b32.xlu0 %v2374, 64
    %v2377 = vpop.permute.xlu0 %2376
    %v2379 = vmul.f32 %v2361, %v2377
    %v2380 = vmul.f32 %v2193, %v2379
    %v2381 = vmul.f32 %v2198, %v2012
    %v2382 = vadd.f32 %v2380, %v2381
    %v2383 = vmul.f32 %v2193, %v2373
    %v2384 = vmul.f32 %v2198, %v2015
    %v2385 = vadd.f32 %v2383, %v2384
    %2387 = vrot.lane.b32.xlu0 %v2380, 32
    %v2388 = vpop.permute.xlu0 %2387
    %v2389 = vsel %vm95, %v2388, 0
    %2391 = vmatprep.subr.mxu0 0.0
    %2392 = vmatpush1.msra.mxu0 %v238
    %2393 = vmatprep.subr.mxu0 0.0
    %2394 = vmatpush1.msra.mxu0 %v239
    %2395 = vmatprep.subr.mxu0 0.0
    %2396 = vmatpush1.msra.mxu0 %v240
    %2397 = vmatprep.subr.mxu0 0.0
    %2398 = vmatpush1.msra.mxu0 %v241
    %2399 = vmatprep.subr.mxu0 0.0
    %2400 = vmatpush1.msra.mxu0 0.0
    %2401 = vmatprep.subr.mxu0 0.0
    %2402 = vmatpush1.msra.mxu0 0.0
    %2403 = vmatprep.subr.mxu0 0.0
    %2404 = vmatpush1.msra.mxu0 0.0
    %2405 = vmatprep.subr.mxu0 0.0
    %2406 = vmatpush1.msra.mxu0 0.0
    %2407 = vmatprep.subr.mxu0 0.0
    %2408 = vmatpush1.msra.mxu0 0.0
    %2409 = vmatprep.subr.mxu0 0.0
    %2410 = vmatpush1.msra.mxu0 0.0
    %2411 = vmatprep.subr.mxu0 0.0
    %2412 = vmatpush1.msra.mxu0 0.0
    %2413 = vmatprep.subr.mxu0 0.0
    %2414 = vmatpush1.msra.mxu0 0.0
    %2415 = vmatprep.subr.mxu0 0.0
    %2416 = vmatpush1.msra.mxu0 0.0
    %2417 = vmatprep.subr.mxu0 0.0
    %2418 = vmatpush1.msra.mxu0 0.0
    %2419 = vmatprep.subr.mxu0 0.0
    %2420 = vmatpush1.msra.mxu0 0.0
    %2421 = vmatprep.subr.mxu0 0.0
    %2422 = vmatpush1.msra.mxu0 0.0
    %2423 = vmatprep.subr.mxu0 0.0
    %2424 = vmatpush1.msra.mxu0 0.0
    %2425 = vmatprep.subr.mxu0 0.0
    %2426 = vmatpush1.msra.mxu0 0.0
    %2427 = vmatprep.subr.mxu0 0.0
    %2428 = vmatpush1.msra.mxu0 0.0
    %2429 = vmatprep.subr.mxu0 0.0
    %2430 = vmatpush1.msra.mxu0 0.0
    %2431 = vmatprep.subr.mxu0 0.0
    %2432 = vmatpush1.msra.mxu0 0.0
    %2433 = vmatprep.subr.mxu0 0.0
    %2434 = vmatpush1.msra.mxu0 0.0
    %2435 = vmatprep.subr.mxu0 0.0
    %2436 = vmatpush1.msra.mxu0 0.0
    %2437 = vmatprep.subr.mxu0 0.0
    %2438 = vmatpush1.msra.mxu0 0.0
    %2439 = vmatprep.subr.mxu0 0.0
    %2440 = vmatpush1.msra.mxu0 0.0
    %2441 = vmatprep.subr.mxu0 0.0
    %2442 = vmatpush1.msra.mxu0 0.0
    %2443 = vmatprep.subr.mxu0 0.0
    %2444 = vmatpush1.msra.mxu0 0.0
    %2445 = vmatprep.subr.mxu0 0.0
    %2446 = vmatpush1.msra.mxu0 0.0
    %2447 = vmatprep.subr.mxu0 0.0
    %2448 = vmatpush1.msra.mxu0 0.0
    %2449 = vmatprep.subr.mxu0 0.0
    %2450 = vmatpush1.msra.mxu0 0.0
    %2451 = vmatprep.subr.mxu0 0.0
    %2452 = vmatpush1.msra.mxu0 0.0
    %2453 = vmatprep.subr.mxu0 0.0
    %2454 = vmatpush1.msra.mxu0 0.0
    %2455 = vmatprep.mubr.f32.mxu0 0.0
    %2456 = vmatmul.mubr.f32.gmra.mrb[0].mxu0 %v2389
    %v2457 = vpop.f32.mrb[0].mxu0
    %v2458 = vadd.f32 0.0, %v2457
    %v2459 = vpop.f32.mrb[0].mxu0
    %2460 = vdwg.mxu0
    %2462 = vrot.lane.b32.xlu0 %v2201, 32
    %v2463 = vpop.permute.xlu0 %2462
    %v2464 = vsel %vm95, %v2463, 0
    %2466 = vmatprep.subr.mxu0 0.0
    %2467 = vmatpush1.msra.mxu0 %v225
    %2468 = vmatprep.subr.mxu0 0.0
    %2469 = vmatpush1.msra.mxu0 %v226
    %2470 = vmatprep.subr.mxu0 0.0
    %2471 = vmatpush1.msra.mxu0 %v227
    %2472 = vmatprep.subr.mxu0 0.0
    %2473 = vmatpush1.msra.mxu0 %v228
    %2474 = vmatprep.subr.mxu0 0.0
    %2475 = vmatpush1.msra.mxu0 0.0
    %2476 = vmatprep.subr.mxu0 0.0
    %2477 = vmatpush1.msra.mxu0 0.0
    %2478 = vmatprep.subr.mxu0 0.0
    %2479 = vmatpush1.msra.mxu0 0.0
    %2480 = vmatprep.subr.mxu0 0.0
    %2481 = vmatpush1.msra.mxu0 0.0
    %2482 = vmatprep.subr.mxu0 0.0
    %2483 = vmatpush1.msra.mxu0 0.0
    %2484 = vmatprep.subr.mxu0 0.0
    %2485 = vmatpush1.msra.mxu0 0.0
    %2486 = vmatprep.subr.mxu0 0.0
    %2487 = vmatpush1.msra.mxu0 0.0
    %2488 = vmatprep.subr.mxu0 0.0
    %2489 = vmatpush1.msra.mxu0 0.0
    %2490 = vmatprep.subr.mxu0 0.0
    %2491 = vmatpush1.msra.mxu0 0.0
    %2492 = vmatprep.subr.mxu0 0.0
    %2493 = vmatpush1.msra.mxu0 0.0
    %2494 = vmatprep.subr.mxu0 0.0
    %2495 = vmatpush1.msra.mxu0 0.0
    %2496 = vmatprep.subr.mxu0 0.0
    %2497 = vmatpush1.msra.mxu0 0.0
    %2498 = vmatprep.subr.mxu0 0.0
    %2499 = vmatpush1.msra.mxu0 0.0
    %2500 = vmatprep.subr.mxu0 0.0
    %2501 = vmatpush1.msra.mxu0 0.0
    %2502 = vmatprep.subr.mxu0 0.0
    %2503 = vmatpush1.msra.mxu0 0.0
    %2504 = vmatprep.subr.mxu0 0.0
    %2505 = vmatpush1.msra.mxu0 0.0
    %2506 = vmatprep.subr.mxu0 0.0
    %2507 = vmatpush1.msra.mxu0 0.0
    %2508 = vmatprep.subr.mxu0 0.0
    %2509 = vmatpush1.msra.mxu0 0.0
    %2510 = vmatprep.subr.mxu0 0.0
    %2511 = vmatpush1.msra.mxu0 0.0
    %2512 = vmatprep.subr.mxu0 0.0
    %2513 = vmatpush1.msra.mxu0 0.0
    %2514 = vmatprep.subr.mxu0 0.0
    %2515 = vmatpush1.msra.mxu0 0.0
    %2516 = vmatprep.subr.mxu0 0.0
    %2517 = vmatpush1.msra.mxu0 0.0
    %2518 = vmatprep.subr.mxu0 0.0
    %2519 = vmatpush1.msra.mxu0 0.0
    %2520 = vmatprep.subr.mxu0 0.0
    %2521 = vmatpush1.msra.mxu0 0.0
    %2522 = vmatprep.subr.mxu0 0.0
    %2523 = vmatpush1.msra.mxu0 0.0
    %2524 = vmatprep.subr.mxu0 0.0
    %2525 = vmatpush1.msra.mxu0 0.0
    %2526 = vmatprep.subr.mxu0 0.0
    %2527 = vmatpush1.msra.mxu0 0.0
    %2528 = vmatprep.subr.mxu0 0.0
    %2529 = vmatpush1.msra.mxu0 0.0
    %2530 = vmatprep.mubr.f32.mxu0 0.0
    %2531 = vmatmul.mubr.f32.gmra.mrb[0].mxu0 %v2464
    %v2532 = vpop.f32.mrb[0].mxu0
    %v2533 = vadd.f32 0.0, %v2532
    %v2534 = vpop.f32.mrb[0].mxu0
    %2535 = vdwg.mxu0
    %v2536 = vadd.f32 %v217, %v2533
    %v2537 = vxor.u32 %v2536, 2147483648
    %v2538 = vmul.f32 %v2537, 1.442695
    %v2539 = vpow.pop %v2538
    %v2540 = vadd.f32 %v2539, 1.0
    %v2541 = vrcp.pop %v2540
    %v2542 = vmul.f32 1.0, %v2541
    %v2543 = vtanh.pop %v2536
    %v2544 = vmul.f32 %v2542, %v2204
    %2546 = vrot.lane.b32.xlu0 %v2543, 64
    %v2547 = vpop.permute.xlu0 %2546
    %v2549 = vmul.f32 %v2542, %v2547
    %2551 = vrot.lane.b32.xlu0 %v2549, 32
    %v2552 = vpop.permute.xlu0 %2551
    %v2554 = vadd.f32 %v2544, %v2552
    %v2555 = vtanh.pop %v2554
    %2557 = vrot.lane.b32.xlu0 %v2555, 64
    %v2558 = vpop.permute.xlu0 %2557
    %v2560 = vmul.f32 %v2542, %v2558
    %2561 = vset.pattern.permute.xlu0 6
    %2562 = vperm.xlu0 %2561, %v75
    %v2563 = vpop.permute.xlu0 %2562
    %v2565 = vmul.f32 %v2563, %v2560
    %2566 = vset.pattern.permute.xlu0 6
    %2567 = vperm.xlu0 %2566, %v346
    %v2568 = vpop.permute.xlu0 %2567
    %v2570 = vmul.f32 %v2568, %v2201
    %v2571 = vadd.f32 %v2565, %v2570
    %v2572 = vmul.f32 %v2563, %v2554
    %v2573 = vmul.f32 %v2568, %v2204
    %v2574 = vadd.f32 %v2572, %v2573
    %2576 = vrot.lane.b32.xlu0 %v2382, 32
    %v2577 = vpop.permute.xlu0 %2576
    %v2578 = vsel %vm95, %v2577, 0
    %2580 = vmatprep.subr.mxu0 0.0
    %2581 = vmatpush1.msra.mxu0 %v233
    %2582 = vmatprep.subr.mxu0 0.0
    %2583 = vmatpush1.msra.mxu0 %v234
    %2584 = vmatprep.subr.mxu0 0.0
    %2585 = vmatpush1.msra.mxu0 %v235
    %2586 = vmatprep.subr.mxu0 0.0
    %2587 = vmatpush1.msra.mxu0 %v236
    %2588 = vmatprep.subr.mxu0 0.0
    %2589 = vmatpush1.msra.mxu0 0.0
    %2590 = vmatprep.subr.mxu0 0.0
    %2591 = vmatpush1.msra.mxu0 0.0
    %2592 = vmatprep.subr.mxu0 0.0
    %2593 = vmatpush1.msra.mxu0 0.0
    %2594 = vmatprep.subr.mxu0 0.0
    %2595 = vmatpush1.msra.mxu0 0.0
    %2596 = vmatprep.subr.mxu0 0.0
    %2597 = vmatpush1.msra.mxu0 0.0
    %2598 = vmatprep.subr.mxu0 0.0
    %2599 = vmatpush1.msra.mxu0 0.0
    %2600 = vmatprep.subr.mxu0 0.0
    %2601 = vmatpush1.msra.mxu0 0.0
    %2602 = vmatprep.subr.mxu0 0.0
    %2603 = vmatpush1.msra.mxu0 0.0
    %2604 = vmatprep.subr.mxu0 0.0
    %2605 = vmatpush1.msra.mxu0 0.0
    %2606 = vmatprep.subr.mxu0 0.0
    %2607 = vmatpush1.msra.mxu0 0.0
    %2608 = vmatprep.subr.mxu0 0.0
    %2609 = vmatpush1.msra.mxu0 0.0
    %2610 = vmatprep.subr.mxu0 0.0
    %2611 = vmatpush1.msra.mxu0 0.0
    %2612 = vmatprep.subr.mxu0 0.0
    %2613 = vmatpush1.msra.mxu0 0.0
    %2614 = vmatprep.subr.mxu0 0.0
    %2615 = vmatpush1.msra.mxu0 0.0
    %2616 = vmatprep.subr.mxu0 0.0
    %2617 = vmatpush1.msra.mxu0 0.0
    %2618 = vmatprep.subr.mxu0 0.0
    %2619 = vmatpush1.msra.mxu0 0.0
    %2620 = vmatprep.subr.mxu0 0.0
    %2621 = vmatpush1.msra.mxu0 0.0
    %2622 = vmatprep.subr.mxu0 0.0
    %2623 = vmatpush1.msra.mxu0 0.0
    %2624 = vmatprep.subr.mxu0 0.0
    %2625 = vmatpush1.msra.mxu0 0.0
    %2626 = vmatprep.subr.mxu0 0.0
    %2627 = vmatpush1.msra.mxu0 0.0
    %2628 = vmatprep.subr.mxu0 0.0
    %2629 = vmatpush1.msra.mxu0 0.0
    %2630 = vmatprep.subr.mxu0 0.0
    %2631 = vmatpush1.msra.mxu0 0.0
    %2632 = vmatprep.subr.mxu0 0.0
    %2633 = vmatpush1.msra.mxu0 0.0
    %2634 = vmatprep.subr.mxu0 0.0
    %2635 = vmatpush1.msra.mxu0 0.0
    %2636 = vmatprep.subr.mxu0 0.0
    %2637 = vmatpush1.msra.mxu0 0.0
    %2638 = vmatprep.subr.mxu0 0.0
    %2639 = vmatpush1.msra.mxu0 0.0
    %2640 = vmatprep.subr.mxu0 0.0
    %2641 = vmatpush1.msra.mxu0 0.0
    %2642 = vmatprep.subr.mxu0 0.0
    %2643 = vmatpush1.msra.mxu0 0.0
    %2644 = vmatprep.mubr.f32.mxu0 0.0
    %2645 = vmatmul.mubr.f32.gmra.mrb[0].mxu0 %v2578
    %v2646 = vpop.f32.mrb[0].mxu0
    %v2647 = vadd.f32 0.0, %v2646
    %v2648 = vpop.f32.mrb[0].mxu0
    %2649 = vdwg.mxu0
    %2651 = vrot.lane.b32.xlu0 %v2565, 32
    %v2652 = vpop.permute.xlu0 %2651
    %v2653 = vsel %vm95, %v2652, 0
    %2655 = vmatprep.subr.mxu0 0.0
    %2656 = vmatpush1.msra.mxu0 %v229
    %2657 = vmatprep.subr.mxu0 0.0
    %2658 = vmatpush1.msra.mxu0 %v230
    %2659 = vmatprep.subr.mxu0 0.0
    %2660 = vmatpush1.msra.mxu0 %v231
    %2661 = vmatprep.subr.mxu0 0.0
    %2662 = vmatpush1.msra.mxu0 %v232
    %2663 = vmatprep.subr.mxu0 0.0
    %2664 = vmatpush1.msra.mxu0 0.0
    %2665 = vmatprep.subr.mxu0 0.0
    %2666 = vmatpush1.msra.mxu0 0.0
    %2667 = vmatprep.subr.mxu0 0.0
    %2668 = vmatpush1.msra.mxu0 0.0
    %2669 = vmatprep.subr.mxu0 0.0
    %2670 = vmatpush1.msra.mxu0 0.0
    %2671 = vmatprep.subr.mxu0 0.0
    %2672 = vmatpush1.msra.mxu0 0.0
    %2673 = vmatprep.subr.mxu0 0.0
    %2674 = vmatpush1.msra.mxu0 0.0
    %2675 = vmatprep.subr.mxu0 0.0
    %2676 = vmatpush1.msra.mxu0 0.0
    %2677 = vmatprep.subr.mxu0 0.0
    %2678 = vmatpush1.msra.mxu0 0.0
    %2679 = vmatprep.subr.mxu0 0.0
    %2680 = vmatpush1.msra.mxu0 0.0
    %2681 = vmatprep.subr.mxu0 0.0
    %2682 = vmatpush1.msra.mxu0 0.0
    %2683 = vmatprep.subr.mxu0 0.0
    %2684 = vmatpush1.msra.mxu0 0.0
    %2685 = vmatprep.subr.mxu0 0.0
    %2686 = vmatpush1.msra.mxu0 0.0
    %2687 = vmatprep.subr.mxu0 0.0
    %2688 = vmatpush1.msra.mxu0 0.0
    %2689 = vmatprep.subr.mxu0 0.0
    %2690 = vmatpush1.msra.mxu0 0.0
    %2691 = vmatprep.subr.mxu0 0.0
    %2692 = vmatpush1.msra.mxu0 0.0
    %2693 = vmatprep.subr.mxu0 0.0
    %2694 = vmatpush1.msra.mxu0 0.0
    %2695 = vmatprep.subr.mxu0 0.0
    %2696 = vmatpush1.msra.mxu0 0.0
    %2697 = vmatprep.subr.mxu0 0.0
    %2698 = vmatpush1.msra.mxu0 0.0
    %2699 = vmatprep.subr.mxu0 0.0
    %2700 = vmatpush1.msra.mxu0 0.0
    %2701 = vmatprep.subr.mxu0 0.0
    %2702 = vmatpush1.msra.mxu0 0.0
    %2703 = vmatprep.subr.mxu0 0.0
    %2704 = vmatpush1.msra.mxu0 0.0
    %2705 = vmatprep.subr.mxu0 0.0
    %2706 = vmatpush1.msra.mxu0 0.0
    %2707 = vmatprep.subr.mxu0 0.0
    %2708 = vmatpush1.msra.mxu0 0.0
    %2709 = vmatprep.subr.mxu0 0.0
    %2710 = vmatpush1.msra.mxu0 0.0
    %2711 = vmatprep.subr.mxu0 0.0
    %2712 = vmatpush1.msra.mxu0 0.0
    %2713 = vmatprep.subr.mxu0 0.0
    %2714 = vmatpush1.msra.mxu0 0.0
    %2715 = vmatprep.subr.mxu0 0.0
    %2716 = vmatpush1.msra.mxu0 0.0
    %2717 = vmatprep.subr.mxu0 0.0
    %2718 = vmatpush1.msra.mxu0 0.0
    %2719 = vmatprep.mubr.f32.mxu0 0.0
    %2720 = vmatmul.mubr.f32.gmra.mrb[0].mxu0 %v2653
    %v2721 = vpop.f32.mrb[0].mxu0
    %v2722 = vadd.f32 %v2647, %v2721
    %v2723 = vpop.f32.mrb[0].mxu0
    %2724 = vdwg.mxu0
    %v2725 = vadd.f32 %v2722, %v505
    %v2726 = vxor.u32 %v2725, 2147483648
    %v2727 = vmul.f32 %v2726, 1.442695
    %v2728 = vpow.pop %v2727
    %v2729 = vadd.f32 %v2728, 1.0
    %v2730 = vrcp.pop %v2729
    %v2731 = vmul.f32 1.0, %v2730
    %v2732 = vtanh.pop %v2725
    %v2733 = vmul.f32 %v2731, %v2385
    %2735 = vrot.lane.b32.xlu0 %v2732, 64
    %v2736 = vpop.permute.xlu0 %2735
    %v2738 = vmul.f32 %v2731, %v2736
    %2740 = vrot.lane.b32.xlu0 %v2738, 32
    %v2741 = vpop.permute.xlu0 %2740
    %v2743 = vadd.f32 %v2733, %v2741
    %v2744 = vtanh.pop %v2743
    %2746 = vrot.lane.b32.xlu0 %v2744, 64
    %v2747 = vpop.permute.xlu0 %2746
    %v2749 = vmul.f32 %v2731, %v2747
    %v2750 = vmul.f32 %v2563, %v2749
    %v2751 = vmul.f32 %v2568, %v2382
    %v2752 = vadd.f32 %v2750, %v2751
    %v2753 = vmul.f32 %v2563, %v2743
    %v2754 = vmul.f32 %v2568, %v2385
    %v2755 = vadd.f32 %v2753, %v2754
    %2757 = vrot.lane.b32.xlu0 %v2750, 32
    %v2758 = vpop.permute.xlu0 %2757
    %v2759 = vsel %vm95, %v2758, 0
    %2761 = vmatprep.subr.mxu0 0.0
    %2762 = vmatpush1.msra.mxu0 %v238
    %2763 = vmatprep.subr.mxu0 0.0
    %2764 = vmatpush1.msra.mxu0 %v239
    %2765 = vmatprep.subr.mxu0 0.0
    %2766 = vmatpush1.msra.mxu0 %v240
    %2767 = vmatprep.subr.mxu0 0.0
    %2768 = vmatpush1.msra.mxu0 %v241
    %2769 = vmatprep.subr.mxu0 0.0
    %2770 = vmatpush1.msra.mxu0 0.0
    %2771 = vmatprep.subr.mxu0 0.0
    %2772 = vmatpush1.msra.mxu0 0.0
    %2773 = vmatprep.subr.mxu0 0.0
    %2774 = vmatpush1.msra.mxu0 0.0
    %2775 = vmatprep.subr.mxu0 0.0
    %2776 = vmatpush1.msra.mxu0 0.0
    %2777 = vmatprep.subr.mxu0 0.0
    %2778 = vmatpush1.msra.mxu0 0.0
    %2779 = vmatprep.subr.mxu0 0.0
    %2780 = vmatpush1.msra.mxu0 0.0
    %2781 = vmatprep.subr.mxu0 0.0
    %2782 = vmatpush1.msra.mxu0 0.0
    %2783 = vmatprep.subr.mxu0 0.0
    %2784 = vmatpush1.msra.mxu0 0.0
    %2785 = vmatprep.subr.mxu0 0.0
    %2786 = vmatpush1.msra.mxu0 0.0
    %2787 = vmatprep.subr.mxu0 0.0
    %2788 = vmatpush1.msra.mxu0 0.0
    %2789 = vmatprep.subr.mxu0 0.0
    %2790 = vmatpush1.msra.mxu0 0.0
    %2791 = vmatprep.subr.mxu0 0.0
    %2792 = vmatpush1.msra.mxu0 0.0
    %2793 = vmatprep.subr.mxu0 0.0
    %2794 = vmatpush1.msra.mxu0 0.0
    %2795 = vmatprep.subr.mxu0 0.0
    %2796 = vmatpush1.msra.mxu0 0.0
    %2797 = vmatprep.subr.mxu0 0.0
    %2798 = vmatpush1.msra.mxu0 0.0
    %2799 = vmatprep.subr.mxu0 0.0
    %2800 = vmatpush1.msra.mxu0 0.0
    %2801 = vmatprep.subr.mxu0 0.0
    %2802 = vmatpush1.msra.mxu0 0.0
    %2803 = vmatprep.subr.mxu0 0.0
    %2804 = vmatpush1.msra.mxu0 0.0
    %2805 = vmatprep.subr.mxu0 0.0
    %2806 = vmatpush1.msra.mxu0 0.0
    %2807 = vmatprep.subr.mxu0 0.0
    %2808 = vmatpush1.msra.mxu0 0.0
    %2809 = vmatprep.subr.mxu0 0.0
    %2810 = vmatpush1.msra.mxu0 0.0
    %2811 = vmatprep.subr.mxu0 0.0
    %2812 = vmatpush1.msra.mxu0 0.0
    %2813 = vmatprep.subr.mxu0 0.0
    %2814 = vmatpush1.msra.mxu0 0.0
    %2815 = vmatprep.subr.mxu0 0.0
    %2816 = vmatpush1.msra.mxu0 0.0
    %2817 = vmatprep.subr.mxu0 0.0
    %2818 = vmatpush1.msra.mxu0 0.0
    %2819 = vmatprep.subr.mxu0 0.0
    %2820 = vmatpush1.msra.mxu0 0.0
    %2821 = vmatprep.subr.mxu0 0.0
    %2822 = vmatpush1.msra.mxu0 0.0
    %2823 = vmatprep.subr.mxu0 0.0
    %2824 = vmatpush1.msra.mxu0 0.0
    %2825 = vmatprep.mubr.f32.mxu0 0.0
    %2826 = vmatmul.mubr.f32.gmra.mrb[0].mxu0 %v2759
    %v2827 = vpop.f32.mrb[0].mxu0
    %v2828 = vadd.f32 0.0, %v2827
    %v2829 = vpop.f32.mrb[0].mxu0
    %2830 = vdwg.mxu0
    %2832 = vrot.lane.b32.xlu0 %v2571, 32
    %v2833 = vpop.permute.xlu0 %2832
    %v2834 = vsel %vm95, %v2833, 0
    %2836 = vmatprep.subr.mxu0 0.0
    %2837 = vmatpush1.msra.mxu0 %v225
    %2838 = vmatprep.subr.mxu0 0.0
    %2839 = vmatpush1.msra.mxu0 %v226
    %2840 = vmatprep.subr.mxu0 0.0
    %2841 = vmatpush1.msra.mxu0 %v227
    %2842 = vmatprep.subr.mxu0 0.0
    %2843 = vmatpush1.msra.mxu0 %v228
    %2844 = vmatprep.subr.mxu0 0.0
    %2845 = vmatpush1.msra.mxu0 0.0
    %2846 = vmatprep.subr.mxu0 0.0
    %2847 = vmatpush1.msra.mxu0 0.0
    %2848 = vmatprep.subr.mxu0 0.0
    %2849 = vmatpush1.msra.mxu0 0.0
    %2850 = vmatprep.subr.mxu0 0.0
    %2851 = vmatpush1.msra.mxu0 0.0
    %2852 = vmatprep.subr.mxu0 0.0
    %2853 = vmatpush1.msra.mxu0 0.0
    %2854 = vmatprep.subr.mxu0 0.0
    %2855 = vmatpush1.msra.mxu0 0.0
    %2856 = vmatprep.subr.mxu0 0.0
    %2857 = vmatpush1.msra.mxu0 0.0
    %2858 = vmatprep.subr.mxu0 0.0
    %2859 = vmatpush1.msra.mxu0 0.0
    %2860 = vmatprep.subr.mxu0 0.0
    %2861 = vmatpush1.msra.mxu0 0.0
    %2862 = vmatprep.subr.mxu0 0.0
    %2863 = vmatpush1.msra.mxu0 0.0
    %2864 = vmatprep.subr.mxu0 0.0
    %2865 = vmatpush1.msra.mxu0 0.0
    %2866 = vmatprep.subr.mxu0 0.0
    %2867 = vmatpush1.msra.mxu0 0.0
    %2868 = vmatprep.subr.mxu0 0.0
    %2869 = vmatpush1.msra.mxu0 0.0
    %2870 = vmatprep.subr.mxu0 0.0
    %2871 = vmatpush1.msra.mxu0 0.0
    %2872 = vmatprep.subr.mxu0 0.0
    %2873 = vmatpush1.msra.mxu0 0.0
    %2874 = vmatprep.subr.mxu0 0.0
    %2875 = vmatpush1.msra.mxu0 0.0
    %2876 = vmatprep.subr.mxu0 0.0
    %2877 = vmatpush1.msra.mxu0 0.0
    %2878 = vmatprep.subr.mxu0 0.0
    %2879 = vmatpush1.msra.mxu0 0.0
    %2880 = vmatprep.subr.mxu0 0.0
    %2881 = vmatpush1.msra.mxu0 0.0
    %2882 = vmatprep.subr.mxu0 0.0
    %2883 = vmatpush1.msra.mxu0 0.0
    %2884 = vmatprep.subr.mxu0 0.0
    %2885 = vmatpush1.msra.mxu0 0.0
    %2886 = vmatprep.subr.mxu0 0.0
    %2887 = vmatpush1.msra.mxu0 0.0
    %2888 = vmatprep.subr.mxu0 0.0
    %2889 = vmatpush1.msra.mxu0 0.0
    %2890 = vmatprep.subr.mxu0 0.0
    %2891 = vmatpush1.msra.mxu0 0.0
    %2892 = vmatprep.subr.mxu0 0.0
    %2893 = vmatpush1.msra.mxu0 0.0
    %2894 = vmatprep.subr.mxu0 0.0
    %2895 = vmatpush1.msra.mxu0 0.0
    %2896 = vmatprep.subr.mxu0 0.0
    %2897 = vmatpush1.msra.mxu0 0.0
    %2898 = vmatprep.subr.mxu0 0.0
    %2899 = vmatpush1.msra.mxu0 0.0
    %2900 = vmatprep.mubr.f32.mxu0 0.0
    %2901 = vmatmul.mubr.f32.gmra.mrb[0].mxu0 %v2834
    %v2902 = vpop.f32.mrb[0].mxu0
    %v2903 = vadd.f32 0.0, %v2902
    %v2904 = vpop.f32.mrb[0].mxu0
    %2905 = vdwg.mxu0
    %v2906 = vadd.f32 %v222, %v2903
    %v2907 = vxor.u32 %v2906, 2147483648
    %v2908 = vmul.f32 %v2907, 1.442695
    %v2909 = vpow.pop %v2908
    %v2910 = vadd.f32 %v2909, 1.0
    %v2911 = vrcp.pop %v2910
    %v2912 = vmul.f32 1.0, %v2911
    %v2913 = vtanh.pop %v2906
    %v2914 = vmul.f32 %v2912, %v2574
    %2916 = vrot.lane.b32.xlu0 %v2913, 64
    %v2917 = vpop.permute.xlu0 %2916
    %v2919 = vmul.f32 %v2912, %v2917
    %2921 = vrot.lane.b32.xlu0 %v2919, 32
    %v2922 = vpop.permute.xlu0 %2921
    %v2924 = vadd.f32 %v2914, %v2922
    %v2925 = vtanh.pop %v2924
    %2927 = vrot.lane.b32.xlu0 %v2925, 64
    %v2928 = vpop.permute.xlu0 %2927
    %v2930 = vmul.f32 %v2912, %v2928
    %2931 = vset.pattern.permute.xlu0 7
    %2932 = vperm.xlu0 %2931, %v75
    %v2933 = vpop.permute.xlu0 %2932
    %v2935 = vmul.f32 %v2933, %v2930
    %2936 = vset.pattern.permute.xlu0 7
    %2937 = vperm.xlu0 %2936, %v346
    %v2938 = vpop.permute.xlu0 %2937
    %v2940 = vmul.f32 %v2938, %v2571
    %v2941 = vadd.f32 %v2935, %v2940
    %v2942 = vmul.f32 %v2933, %v2924
    %v2943 = vmul.f32 %v2938, %v2574
    %v2944 = vadd.f32 %v2942, %v2943
    %2946 = vrot.lane.b32.xlu0 %v2752, 32
    %v2947 = vpop.permute.xlu0 %2946
    %v2948 = vsel %vm95, %v2947, 0
    %2950 = vmatprep.subr.mxu0 0.0
    %2951 = vmatpush1.msra.mxu0 %v233
    %2952 = vmatprep.subr.mxu0 0.0
    %2953 = vmatpush1.msra.mxu0 %v234
    %2954 = vmatprep.subr.mxu0 0.0
    %2955 = vmatpush1.msra.mxu0 %v235
    %2956 = vmatprep.subr.mxu0 0.0
    %2957 = vmatpush1.msra.mxu0 %v236
    %2958 = vmatprep.subr.mxu0 0.0
    %2959 = vmatpush1.msra.mxu0 0.0
    %2960 = vmatprep.subr.mxu0 0.0
    %2961 = vmatpush1.msra.mxu0 0.0
    %2962 = vmatprep.subr.mxu0 0.0
    %2963 = vmatpush1.msra.mxu0 0.0
    %2964 = vmatprep.subr.mxu0 0.0
    %2965 = vmatpush1.msra.mxu0 0.0
    %2966 = vmatprep.subr.mxu0 0.0
    %2967 = vmatpush1.msra.mxu0 0.0
    %2968 = vmatprep.subr.mxu0 0.0
    %2969 = vmatpush1.msra.mxu0 0.0
    %2970 = vmatprep.subr.mxu0 0.0
    %2971 = vmatpush1.msra.mxu0 0.0
    %2972 = vmatprep.subr.mxu0 0.0
    %2973 = vmatpush1.msra.mxu0 0.0
    %2974 = vmatprep.subr.mxu0 0.0
    %2975 = vmatpush1.msra.mxu0 0.0
    %2976 = vmatprep.subr.mxu0 0.0
    %2977 = vmatpush1.msra.mxu0 0.0
    %2978 = vmatprep.subr.mxu0 0.0
    %2979 = vmatpush1.msra.mxu0 0.0
    %2980 = vmatprep.subr.mxu0 0.0
    %2981 = vmatpush1.msra.mxu0 0.0
    %2982 = vmatprep.subr.mxu0 0.0
    %2983 = vmatpush1.msra.mxu0 0.0
    %2984 = vmatprep.subr.mxu0 0.0
    %2985 = vmatpush1.msra.mxu0 0.0
    %2986 = vmatprep.subr.mxu0 0.0
    %2987 = vmatpush1.msra.mxu0 0.0
    %2988 = vmatprep.subr.mxu0 0.0
    %2989 = vmatpush1.msra.mxu0 0.0
    %2990 = vmatprep.subr.mxu0 0.0
    %2991 = vmatpush1.msra.mxu0 0.0
    %2992 = vmatprep.subr.mxu0 0.0
    %2993 = vmatpush1.msra.mxu0 0.0
    %2994 = vmatprep.subr.mxu0 0.0
    %2995 = vmatpush1.msra.mxu0 0.0
    %2996 = vmatprep.subr.mxu0 0.0
    %2997 = vmatpush1.msra.mxu0 0.0
    %2998 = vmatprep.subr.mxu0 0.0
    %2999 = vmatpush1.msra.mxu0 0.0
    %3000 = vmatprep.subr.mxu0 0.0
    %3001 = vmatpush1.msra.mxu0 0.0
    %3002 = vmatprep.subr.mxu0 0.0
    %3003 = vmatpush1.msra.mxu0 0.0
    %3004 = vmatprep.subr.mxu0 0.0
    %3005 = vmatpush1.msra.mxu0 0.0
    %3006 = vmatprep.subr.mxu0 0.0
    %3007 = vmatpush1.msra.mxu0 0.0
    %3008 = vmatprep.subr.mxu0 0.0
    %3009 = vmatpush1.msra.mxu0 0.0
    %3010 = vmatprep.subr.mxu0 0.0
    %3011 = vmatpush1.msra.mxu0 0.0
    %3012 = vmatprep.subr.mxu0 0.0
    %3013 = vmatpush1.msra.mxu0 0.0
    %3014 = vmatprep.mubr.f32.mxu0 0.0
    %3015 = vmatmul.mubr.f32.gmra.mrb[0].mxu0 %v2948
    %v3016 = vpop.f32.mrb[0].mxu0
    %v3017 = vadd.f32 0.0, %v3016
    %v3018 = vpop.f32.mrb[0].mxu0
    %3019 = vdwg.mxu0
    %3021 = vrot.lane.b32.xlu0 %v2935, 32
    %v3022 = vpop.permute.xlu0 %3021
    %v3023 = vsel %vm95, %v3022, 0
    %3025 = vmatprep.subr.mxu0 0.0
    %3026 = vmatpush1.msra.mxu0 %v229
    %3027 = vmatprep.subr.mxu0 0.0
    %3028 = vmatpush1.msra.mxu0 %v230
    %3029 = vmatprep.subr.mxu0 0.0
    %3030 = vmatpush1.msra.mxu0 %v231
    %3031 = vmatprep.subr.mxu0 0.0
    %3032 = vmatpush1.msra.mxu0 %v232
    %3033 = vmatprep.subr.mxu0 0.0
    %3034 = vmatpush1.msra.mxu0 0.0
    %3035 = vmatprep.subr.mxu0 0.0
    %3036 = vmatpush1.msra.mxu0 0.0
    %3037 = vmatprep.subr.mxu0 0.0
    %3038 = vmatpush1.msra.mxu0 0.0
    %3039 = vmatprep.subr.mxu0 0.0
    %3040 = vmatpush1.msra.mxu0 0.0
    %3041 = vmatprep.subr.mxu0 0.0
    %3042 = vmatpush1.msra.mxu0 0.0
    %3043 = vmatprep.subr.mxu0 0.0
    %3044 = vmatpush1.msra.mxu0 0.0
    %3045 = vmatprep.subr.mxu0 0.0
    %3046 = vmatpush1.msra.mxu0 0.0
    %3047 = vmatprep.subr.mxu0 0.0
    %3048 = vmatpush1.msra.mxu0 0.0
    %3049 = vmatprep.subr.mxu0 0.0
    %3050 = vmatpush1.msra.mxu0 0.0
    %3051 = vmatprep.subr.mxu0 0.0
    %3052 = vmatpush1.msra.mxu0 0.0
    %3053 = vmatprep.subr.mxu0 0.0
    %3054 = vmatpush1.msra.mxu0 0.0
    %3055 = vmatprep.subr.mxu0 0.0
    %3056 = vmatpush1.msra.mxu0 0.0
    %3057 = vmatprep.subr.mxu0 0.0
    %3058 = vmatpush1.msra.mxu0 0.0
    %3059 = vmatprep.subr.mxu0 0.0
    %3060 = vmatpush1.msra.mxu0 0.0
    %3061 = vmatprep.subr.mxu0 0.0
    %3062 = vmatpush1.msra.mxu0 0.0
    %3063 = vmatprep.subr.mxu0 0.0
    %3064 = vmatpush1.msra.mxu0 0.0
    %3065 = vmatprep.subr.mxu0 0.0
    %3066 = vmatpush1.msra.mxu0 0.0
    %3067 = vmatprep.subr.mxu0 0.0
    %3068 = vmatpush1.msra.mxu0 0.0
    %3069 = vmatprep.subr.mxu0 0.0
    %3070 = vmatpush1.msra.mxu0 0.0
    %3071 = vmatprep.subr.mxu0 0.0
    %3072 = vmatpush1.msra.mxu0 0.0
    %3073 = vmatprep.subr.mxu0 0.0
    %3074 = vmatpush1.msra.mxu0 0.0
    %3075 = vmatprep.subr.mxu0 0.0
    %3076 = vmatpush1.msra.mxu0 0.0
    %3077 = vmatprep.subr.mxu0 0.0
    %3078 = vmatpush1.msra.mxu0 0.0
    %3079 = vmatprep.subr.mxu0 0.0
    %3080 = vmatpush1.msra.mxu0 0.0
    %3081 = vmatprep.subr.mxu0 0.0
    %3082 = vmatpush1.msra.mxu0 0.0
    %3083 = vmatprep.subr.mxu0 0.0
    %3084 = vmatpush1.msra.mxu0 0.0
    %3085 = vmatprep.subr.mxu0 0.0
    %3086 = vmatpush1.msra.mxu0 0.0
    %3087 = vmatprep.subr.mxu0 0.0
    %3088 = vmatpush1.msra.mxu0 0.0
    %3089 = vmatprep.mubr.f32.mxu0 0.0
    %3090 = vmatmul.mubr.f32.gmra.mrb[0].mxu0 %v3023
    %v3091 = vpop.f32.mrb[0].mxu0
    %v3092 = vadd.f32 %v3017, %v3091
    %v3093 = vpop.f32.mrb[0].mxu0
    %3094 = vdwg.mxu0
    %v3095 = vadd.f32 %v3092, %v505
    %v3096 = vxor.u32 %v3095, 2147483648
    %v3097 = vmul.f32 %v3096, 1.442695
    %v3098 = vpow.pop %v3097
    %v3099 = vadd.f32 %v3098, 1.0
    %v3100 = vrcp.pop %v3099
    %v3101 = vmul.f32 1.0, %v3100
    %v3102 = vtanh.pop %v3095
    %v3103 = vmul.f32 %v3101, %v2755
    %3105 = vrot.lane.b32.xlu0 %v3102, 64
    %v3106 = vpop.permute.xlu0 %3105
    %v3108 = vmul.f32 %v3101, %v3106
    %3110 = vrot.lane.b32.xlu0 %v3108, 32
    %v3111 = vpop.permute.xlu0 %3110
    %v3113 = vadd.f32 %v3103, %v3111
    %v3114 = vtanh.pop %v3113
    %3116 = vrot.lane.b32.xlu0 %v3114, 64
    %v3117 = vpop.permute.xlu0 %3116
    %v3119 = vmul.f32 %v3101, %v3117
    %v3120 = vmul.f32 %v2933, %v3119
    %v3121 = vmul.f32 %v2938, %v2752
    %v3122 = vadd.f32 %v3120, %v3121
    %v3123 = vmul.f32 %v2933, %v3113
    %v3124 = vmul.f32 %v2938, %v2755
    %v3125 = vadd.f32 %v3123, %v3124
    %3127 = vrot.lane.b32.xlu0 %v3120, 32
    %v3128 = vpop.permute.xlu0 %3127
    %v3129 = vsel %vm95, %v3128, 0
    %3131 = vmatprep.subr.mxu0 0.0
    %3132 = vmatpush1.msra.mxu0 %v238
    %3133 = vmatprep.subr.mxu0 0.0
    %3134 = vmatpush1.msra.mxu0 %v239
    %3135 = vmatprep.subr.mxu0 0.0
    %3136 = vmatpush1.msra.mxu0 %v240
    %3137 = vmatprep.subr.mxu0 0.0
    %3138 = vmatpush1.msra.mxu0 %v241
    %3139 = vmatprep.subr.mxu0 0.0
    %3140 = vmatpush1.msra.mxu0 0.0
    %3141 = vmatprep.subr.mxu0 0.0
    %3142 = vmatpush1.msra.mxu0 0.0
    %3143 = vmatprep.subr.mxu0 0.0
    %3144 = vmatpush1.msra.mxu0 0.0
    %3145 = vmatprep.subr.mxu0 0.0
    %3146 = vmatpush1.msra.mxu0 0.0
    %3147 = vmatprep.subr.mxu0 0.0
    %3148 = vmatpush1.msra.mxu0 0.0
    %3149 = vmatprep.subr.mxu0 0.0
    %3150 = vmatpush1.msra.mxu0 0.0
    %3151 = vmatprep.subr.mxu0 0.0
    %3152 = vmatpush1.msra.mxu0 0.0
    %3153 = vmatprep.subr.mxu0 0.0
    %3154 = vmatpush1.msra.mxu0 0.0
    %3155 = vmatprep.subr.mxu0 0.0
    %3156 = vmatpush1.msra.mxu0 0.0
    %3157 = vmatprep.subr.mxu0 0.0
    %3158 = vmatpush1.msra.mxu0 0.0
    %3159 = vmatprep.subr.mxu0 0.0
    %3160 = vmatpush1.msra.mxu0 0.0
    %3161 = vmatprep.subr.mxu0 0.0
    %3162 = vmatpush1.msra.mxu0 0.0
    %3163 = vmatprep.subr.mxu0 0.0
    %3164 = vmatpush1.msra.mxu0 0.0
    %3165 = vmatprep.subr.mxu0 0.0
    %3166 = vmatpush1.msra.mxu0 0.0
    %3167 = vmatprep.subr.mxu0 0.0
    %3168 = vmatpush1.msra.mxu0 0.0
    %3169 = vmatprep.subr.mxu0 0.0
    %3170 = vmatpush1.msra.mxu0 0.0
    %3171 = vmatprep.subr.mxu0 0.0
    %3172 = vmatpush1.msra.mxu0 0.0
    %3173 = vmatprep.subr.mxu0 0.0
    %3174 = vmatpush1.msra.mxu0 0.0
    %3175 = vmatprep.subr.mxu0 0.0
    %3176 = vmatpush1.msra.mxu0 0.0
    %3177 = vmatprep.subr.mxu0 0.0
    %3178 = vmatpush1.msra.mxu0 0.0
    %3179 = vmatprep.subr.mxu0 0.0
    %3180 = vmatpush1.msra.mxu0 0.0
    %3181 = vmatprep.subr.mxu0 0.0
    %3182 = vmatpush1.msra.mxu0 0.0
    %3183 = vmatprep.subr.mxu0 0.0
    %3184 = vmatpush1.msra.mxu0 0.0
    %3185 = vmatprep.subr.mxu0 0.0
    %3186 = vmatpush1.msra.mxu0 0.0
    %3187 = vmatprep.subr.mxu0 0.0
    %3188 = vmatpush1.msra.mxu0 0.0
    %3189 = vmatprep.subr.mxu0 0.0
    %3190 = vmatpush1.msra.mxu0 0.0
    %3191 = vmatprep.subr.mxu0 0.0
    %3192 = vmatpush1.msra.mxu0 0.0
    %3193 = vmatprep.subr.mxu0 0.0
    %3194 = vmatpush1.msra.mxu0 0.0
    %3195 = vmatprep.mubr.f32.mxu0 0.0
    %3196 = vmatmul.mubr.f32.gmra.mrb[0].mxu0 %v3129
    %v3197 = vpop.f32.mrb[0].mxu0
    %v3198 = vadd.f32 0.0, %v3197
    %v3199 = vpop.f32.mrb[0].mxu0
    %3200 = vdwg.mxu0
    %v3201 = vld [vmem:[%s1] sm:$0xff]
    %v3202 = vld [vmem:[%s1 + $0x8] sm:$0xff]
    %v3203 = vld [vmem:[%s1 + $0x10] sm:$0xff]
    %v3204 = vld [vmem:[%s1 + $0x18] sm:$0xff]
    %v3205 = vld [vmem:[%s1 + $0x20] sm:$0xff]
    %v3206 = vld [vmem:[%s1 + $0x28] sm:$0xff]
    %v3207 = vld [vmem:[%s1 + $0x30] sm:$0xff]
    %v3208 = vld [vmem:[%s1 + $0x38] sm:$0xff]
    %v3209 = vld [vmem:[%s10] sm:$0xff]
    %v3210 = vld [vmem:[%s10 + $0x8] sm:$0xff]
    %v3211 = vld [vmem:[%s10 + $0x10] sm:$0xff]
    %v3212 = vld [vmem:[%s10 + $0x18] sm:$0xff]
    %v3213 = vld [vmem:[%s13] sm:$0x1]
    %v3215 = vlaneseq
    %v3216 = vshrl.u32 %v3215, 7
    %v3217 = vsub.s32 0, %v3216
    %v3218 = vrot.slane %v3213, %v3217
    %v3221 = vsel %vm95, %v3201, 0
    %v3224 = vsel %vm95, %v3202, 0
    %v3227 = vsel %vm95, %v3203, 0
    %v3230 = vsel %vm95, %v3204, 0
    %v3233 = vsel %vm95, %v3205, 0
    %v3236 = vsel %vm95, %v3206, 0
    %v3239 = vsel %vm95, %v3207, 0
    %v3242 = vsel %vm95, %v3208, 0
    %3244 = vmatprep.subr.mxu0 0.0
    %3245 = vmatpush1.msra.mxu0 %v3209
    %3246 = vmatprep.subr.mxu0 0.0
    %3247 = vmatpush1.msra.mxu0 %v3210
    %3248 = vmatprep.subr.mxu0 0.0
    %3249 = vmatpush1.msra.mxu0 %v3211
    %3250 = vmatprep.subr.mxu0 0.0
    %3251 = vmatpush1.msra.mxu0 %v3212
    %3252 = vmatprep.subr.mxu0 0.0
    %3253 = vmatpush1.msra.mxu0 0.0
    %3254 = vmatprep.subr.mxu0 0.0
    %3255 = vmatpush1.msra.mxu0 0.0
    %3256 = vmatprep.subr.mxu0 0.0
    %3257 = vmatpush1.msra.mxu0 0.0
    %3258 = vmatprep.subr.mxu0 0.0
    %3259 = vmatpush1.msra.mxu0 0.0
    %3260 = vmatprep.subr.mxu0 0.0
    %3261 = vmatpush1.msra.mxu0 0.0
    %3262 = vmatprep.subr.mxu0 0.0
    %3263 = vmatpush1.msra.mxu0 0.0
    %3264 = vmatprep.subr.mxu0 0.0
    %3265 = vmatpush1.msra.mxu0 0.0
    %3266 = vmatprep.subr.mxu0 0.0
    %3267 = vmatpush1.msra.mxu0 0.0
    %3268 = vmatprep.subr.mxu0 0.0
    %3269 = vmatpush1.msra.mxu0 0.0
    %3270 = vmatprep.subr.mxu0 0.0
    %3271 = vmatpush1.msra.mxu0 0.0
    %3272 = vmatprep.subr.mxu0 0.0
    %3273 = vmatpush1.msra.mxu0 0.0
    %3274 = vmatprep.subr.mxu0 0.0
    %3275 = vmatpush1.msra.mxu0 0.0
    %3276 = vmatprep.subr.mxu0 0.0
    %3277 = vmatpush1.msra.mxu0 0.0
    %3278 = vmatprep.subr.mxu0 0.0
    %3279 = vmatpush1.msra.mxu0 0.0
    %3280 = vmatprep.subr.mxu0 0.0
    %3281 = vmatpush1.msra.mxu0 0.0
    %3282 = vmatprep.subr.mxu0 0.0
    %3283 = vmatpush1.msra.mxu0 0.0
    %3284 = vmatprep.subr.mxu0 0.0
    %3285 = vmatpush1.msra.mxu0 0.0
    %3286 = vmatprep.subr.mxu0 0.0
    %3287 = vmatpush1.msra.mxu0 0.0
    %3288 = vmatprep.subr.mxu0 0.0
    %3289 = vmatpush1.msra.mxu0 0.0
    %3290 = vmatprep.subr.mxu0 0.0
    %3291 = vmatpush1.msra.mxu0 0.0
    %3292 = vmatprep.subr.mxu0 0.0
    %3293 = vmatpush1.msra.mxu0 0.0
    %3294 = vmatprep.subr.mxu0 0.0
    %3295 = vmatpush1.msra.mxu0 0.0
    %3296 = vmatprep.subr.mxu0 0.0
    %3297 = vmatpush1.msra.mxu0 0.0
    %3298 = vmatprep.subr.mxu0 0.0
    %3299 = vmatpush1.msra.mxu0 0.0
    %3300 = vmatprep.subr.mxu0 0.0
    %3301 = vmatpush1.msra.mxu0 0.0
    %3302 = vmatprep.subr.mxu0 0.0
    %3303 = vmatpush1.msra.mxu0 0.0
    %3304 = vmatprep.subr.mxu0 0.0
    %3305 = vmatpush1.msra.mxu0 0.0
    %3306 = vmatprep.subr.mxu0 0.0
    %3307 = vmatpush1.msra.mxu0 0.0
    %3308 = vmatprep.mubr.f32.mxu0 0.0
    %3309 = vmatmul.mubr.f32.gmra.mrb[0].mxu0 %v3221
    %v3310 = vpop.f32.mrb[0].mxu0
    %v3311 = vadd.f32 %v3218, %v3310
    %v3312 = vpop.f32.mrb[0].mxu0
    %3313 = vmatprep.mubr.f32.mxu0 0.0
    %3314 = vmatmul.mubr.f32.gmra.mrb[0].mxu0 %v3224
    %v3315 = vpop.f32.mrb[0].mxu0
    %v3316 = vadd.f32 %v3218, %v3315
    %v3317 = vpop.f32.mrb[0].mxu0
    %3318 = vmatprep.mubr.f32.mxu0 0.0
    %3319 = vmatmul.mubr.f32.gmra.mrb[0].mxu0 %v3227
    %v3320 = vpop.f32.mrb[0].mxu0
    %v3321 = vadd.f32 %v3218, %v3320
    %v3322 = vpop.f32.mrb[0].mxu0
    %3323 = vmatprep.mubr.f32.mxu0 0.0
    %3324 = vmatmul.mubr.f32.gmra.mrb[0].mxu0 %v3230
    %v3325 = vpop.f32.mrb[0].mxu0
    %v3326 = vadd.f32 %v3218, %v3325
    %v3327 = vpop.f32.mrb[0].mxu0
    %3328 = vmatprep.mubr.f32.mxu0 0.0
    %3329 = vmatmul.mubr.f32.gmra.mrb[0].mxu0 %v3233
    %v3330 = vpop.f32.mrb[0].mxu0
    %v3331 = vadd.f32 %v3218, %v3330
    %v3332 = vpop.f32.mrb[0].mxu0
    %3333 = vmatprep.mubr.f32.mxu0 0.0
    %3334 = vmatmul.mubr.f32.gmra.mrb[0].mxu0 %v3236
    %v3335 = vpop.f32.mrb[0].mxu0
    %v3336 = vadd.f32 %v3218, %v3335
    %v3337 = vpop.f32.mrb[0].mxu0
    %3338 = vmatprep.mubr.f32.mxu0 0.0
    %3339 = vmatmul.mubr.f32.gmra.mrb[0].mxu0 %v3239
    %v3340 = vpop.f32.mrb[0].mxu0
    %v3341 = vadd.f32 %v3218, %v3340
    %v3342 = vpop.f32.mrb[0].mxu0
    %3343 = vmatprep.mubr.f32.mxu0 0.0
    %3344 = vmatmul.mubr.f32.gmra.mrb[0].mxu0 %v3242
    %v3345 = vpop.f32.mrb[0].mxu0
    %v3346 = vpop.f32.mrb[0].mxu0
    %3347 = vdwg.mxu0
    %v3348 = vld [vmem:[%s11] sm:$0xff]
    %v3349 = vld [vmem:[%s11 + $0x8] sm:$0xff]
    %v3350 = vld [vmem:[%s11 + $0x10] sm:$0xff]
    %v3351 = vld [vmem:[%s11 + $0x18] sm:$0xff]
    %v3352 = vld [vmem:[%s12] sm:$0xff]
    %v3353 = vld [vmem:[%s12 + $0x8] sm:$0xff]
    %v3354 = vld [vmem:[%s12 + $0x10] sm:$0xff]
    %v3355 = vld [vmem:[%s12 + $0x18] sm:$0xff]
    %v3356 = vld [vmem:[%s14] sm:$0xff]
    %v3357 = vld [vmem:[%s14 + $0x8] sm:$0xff]
    %v3358 = vld [vmem:[%s14 + $0x10] sm:$0xff]
    %v3359 = vld [vmem:[%s14 + $0x18] sm:$0xff]
    %v3360 = vld [vmem:[%s15] sm:$0xff]
    %v3361 = vld [vmem:[%s15 + $0x8] sm:$0xff]
    %v3362 = vld [vmem:[%s15 + $0x10] sm:$0xff]
    %v3363 = vld [vmem:[%s15 + $0x18] sm:$0xff]
    %v3364 = vld [vmem:[%s16] sm:$0x1]
    %v3365 = vld [vmem:[%s17] sm:$0xff]
    %v3366 = vld [vmem:[%s17 + $0x8] sm:$0xff]
    %v3367 = vld [vmem:[%s17 + $0x10] sm:$0xff]
    %v3368 = vld [vmem:[%s17 + $0x18] sm:$0xff]
    %v3369 = vld [vmem:[%s18] sm:$0x1]
    %v3370 = vld [vmem:[%s19] sm:$0xff]
    %v3371 = vld [vmem:[%s19 + $0x8] sm:$0xff]
    %v3372 = vld [vmem:[%s19 + $0x10] sm:$0xff]
    %v3373 = vld [vmem:[%s19 + $0x18] sm:$0xff]
    %v3374 = vld [vmem:[%s21] sm:$0x1]
    %v3375 = vld [vmem:[%s22] sm:$0x1]
    %v3376 = vld [vmem:[%s3] sm:$0xff]
    %v3377 = vlaneseq
    %v3378 = vand.u32 %v3377, 127
    %v3380 = vlaneseq
    %v3381 = vshrl.u32 %v3380, 7
    %v3382 = vsub.s32 0, %v3381
    %v3383 = vrot.slane %v3374, %v3382
    %3386 = vrot.lane.b32.xlu0 %v3122, 32
    %v3387 = vpop.permute.xlu0 %3386
    %v3388 = vsel %vm95, %v3387, 0
    %3390 = vmatprep.subr.mxu0 0.0
    %3391 = vmatpush1.msra.mxu0 %v3370
    %3392 = vmatprep.subr.mxu0 0.0
    %3393 = vmatpush1.msra.mxu0 %v3371
    %3394 = vmatprep.subr.mxu0 0.0
    %3395 = vmatpush1.msra.mxu0 %v3372
    %3396 = vmatprep.subr.mxu0 0.0
    %3397 = vmatpush1.msra.mxu0 %v3373
    %3398 = vmatprep.subr.mxu0 0.0
    %3399 = vmatpush1.msra.mxu0 0.0
    %3400 = vmatprep.subr.mxu0 0.0
    %3401 = vmatpush1.msra.mxu0 0.0
    %3402 = vmatprep.subr.mxu0 0.0
    %3403 = vmatpush1.msra.mxu0 0.0
    %3404 = vmatprep.subr.mxu0 0.0
    %3405 = vmatpush1.msra.mxu0 0.0
    %3406 = vmatprep.subr.mxu0 0.0
    %3407 = vmatpush1.msra.mxu0 0.0
    %3408 = vmatprep.subr.mxu0 0.0
    %3409 = vmatpush1.msra.mxu0 0.0
    %3410 = vmatprep.subr.mxu0 0.0
    %3411 = vmatpush1.msra.mxu0 0.0
    %3412 = vmatprep.subr.mxu0 0.0
    %3413 = vmatpush1.msra.mxu0 0.0
    %3414 = vmatprep.subr.mxu0 0.0
    %3415 = vmatpush1.msra.mxu0 0.0
    %3416 = vmatprep.subr.mxu0 0.0
    %3417 = vmatpush1.msra.mxu0 0.0
    %3418 = vmatprep.subr.mxu0 0.0
    %3419 = vmatpush1.msra.mxu0 0.0
    %3420 = vmatprep.subr.mxu0 0.0
    %3421 = vmatpush1.msra.mxu0 0.0
    %3422 = vmatprep.subr.mxu0 0.0
    %3423 = vmatpush1.msra.mxu0 0.0
    %3424 = vmatprep.subr.mxu0 0.0
    %3425 = vmatpush1.msra.mxu0 0.0
    %3426 = vmatprep.subr.mxu0 0.0
    %3427 = vmatpush1.msra.mxu0 0.0
    %3428 = vmatprep.subr.mxu0 0.0
    %3429 = vmatpush1.msra.mxu0 0.0
    %3430 = vmatprep.subr.mxu0 0.0
    %3431 = vmatpush1.msra.mxu0 0.0
    %3432 = vmatprep.subr.mxu0 0.0
    %3433 = vmatpush1.msra.mxu0 0.0
    %3434 = vmatprep.subr.mxu0 0.0
    %3435 = vmatpush1.msra.mxu0 0.0
    %3436 = vmatprep.subr.mxu0 0.0
    %3437 = vmatpush1.msra.mxu0 0.0
    %3438 = vmatprep.subr.mxu0 0.0
    %3439 = vmatpush1.msra.mxu0 0.0
    %3440 = vmatprep.subr.mxu0 0.0
    %3441 = vmatpush1.msra.mxu0 0.0
    %3442 = vmatprep.subr.mxu0 0.0
    %3443 = vmatpush1.msra.mxu0 0.0
    %3444 = vmatprep.subr.mxu0 0.0
    %3445 = vmatpush1.msra.mxu0 0.0
    %3446 = vmatprep.subr.mxu0 0.0
    %3447 = vmatpush1.msra.mxu0 0.0
    %3448 = vmatprep.subr.mxu0 0.0
    %3449 = vmatpush1.msra.mxu0 0.0
    %3450 = vmatprep.subr.mxu0 0.0
    %3451 = vmatpush1.msra.mxu0 0.0
    %3452 = vmatprep.subr.mxu0 0.0
    %3453 = vmatpush1.msra.mxu0 0.0
    %3454 = vmatprep.mubr.f32.mxu0 0.0
    %3455 = vmatmul.mubr.f32.gmra.mrb[0].mxu0 %v3388
    %v3456 = vpop.f32.mrb[0].mxu0
    %v3457 = vadd.f32 %v3383, %v3456
    %v3458 = vpop.f32.mrb[0].mxu0
    %3459 = vdwg.mxu0
    %v3460 = vadd.f32 %v3457, %v608
    %v3461 = vtanh.pop %v3460
    %v3463 = vlaneseq
    %v3464 = vshrl.u32 %v3463, 7
    %v3465 = vsub.s32 0, %v3464
    %v3466 = vrot.slane %v3375, %v3465
    %v3468 = vmul.f32 %v3461, %v3466
    %v3469 = vsel %vm95, %v3468, 0.0
    %3470 = vadd.xlane.f32.xlu0 %v3469
    %v3471 = vpop.xlane.xlu0 %3470
    %v3472 = vadd.f32 %v3457, %v978
    %v3473 = vtanh.pop %v3472
    %v3474 = vmul.f32 %v3473, %v3466
    %v3475 = vsel %vm95, %v3474, 0.0
    %3476 = vadd.xlane.f32.xlu0 %v3475
    %v3477 = vpop.xlane.xlu0 %3476
    %v3478 = vadd.f32 %v3457, %v1348
    %v3479 = vtanh.pop %v3478
    %v3480 = vmul.f32 %v3479, %v3466
    %v3481 = vsel %vm95, %v3480, 0.0
    %3482 = vadd.xlane.f32.xlu0 %v3481
    %v3483 = vpop.xlane.xlu0 %3482
    %v3484 = vadd.f32 %v3457, %v1718
    %v3485 = vtanh.pop %v3484
    %v3486 = vmul.f32 %v3485, %v3466
    %v3487 = vsel %vm95, %v3486, 0.0
    %3488 = vadd.xlane.f32.xlu0 %v3487
    %v3489 = vpop.xlane.xlu0 %3488
    %v3490 = vadd.f32 %v3457, %v2088
    %v3491 = vtanh.pop %v3490
    %v3492 = vmul.f32 %v3491, %v3466
    %v3493 = vsel %vm95, %v3492, 0.0
    %3494 = vadd.xlane.f32.xlu0 %v3493
    %v3495 = vpop.xlane.xlu0 %3494
    %v3496 = vadd.f32 %v3457, %v2458
    %v3497 = vtanh.pop %v3496
    %v3498 = vmul.f32 %v3497, %v3466
    %v3499 = vsel %vm95, %v3498, 0.0
    %3500 = vadd.xlane.f32.xlu0 %v3499
    %v3501 = vpop.xlane.xlu0 %3500
    %v3502 = vadd.f32 %v3457, %v2828
    %v3503 = vtanh.pop %v3502
    %v3504 = vmul.f32 %v3503, %v3466
    %v3505 = vsel %vm95, %v3504, 0.0
    %3506 = vadd.xlane.f32.xlu0 %v3505
    %v3507 = vpop.xlane.xlu0 %3506
    %v3508 = vadd.f32 %v3457, %v3198
    %v3509 = vtanh.pop %v3508
    %v3510 = vmul.f32 %v3509, %v3466
    %v3511 = vsel %vm95, %v3510, 0.0
    %3512 = vadd.xlane.f32.xlu0 %v3511
    %v3513 = vpop.xlane.xlu0 %3512
    %v3514 = vmax.f32 %v3471, %v3477
    %v3515 = vmax.f32 %v3514, %v3483
    %v3516 = vmax.f32 %v3515, %v3489
    %v3517 = vmax.f32 %v3516, %v3495
    %v3518 = vmax.f32 %v3517, %v3501
    %v3519 = vmax.f32 %v3518, %v3507
    %v3520 = vmax.f32 %v3519, %v3513
    %v3521 = vsub.f32 %v3471, %v3520
    %v3522 = vmul.f32 %v3521, 1.442695
    %v3523 = vpow.pop %v3522
    %v3524 = vsub.f32 %v3477, %v3520
    %v3525 = vmul.f32 %v3524, 1.442695
    %v3526 = vpow.pop %v3525
    %v3527 = vsub.f32 %v3483, %v3520
    %v3528 = vmul.f32 %v3527, 1.442695
    %v3529 = vpow.pop %v3528
    %v3530 = vsub.f32 %v3489, %v3520
    %v3531 = vmul.f32 %v3530, 1.442695
    %v3532 = vpow.pop %v3531
    %v3533 = vsub.f32 %v3495, %v3520
    %v3534 = vmul.f32 %v3533, 1.442695
    %v3535 = vpow.pop %v3534
    %v3536 = vsub.f32 %v3501, %v3520
    %v3537 = vmul.f32 %v3536, 1.442695
    %v3538 = vpow.pop %v3537
    %v3539 = vsub.f32 %v3507, %v3520
    %v3540 = vmul.f32 %v3539, 1.442695
    %v3541 = vpow.pop %v3540
    %v3542 = vsub.f32 %v3513, %v3520
    %v3543 = vmul.f32 %v3542, 1.442695
    %v3544 = vpow.pop %v3543
    %v3545 = vadd.f32 %v3523, %v3526
    %v3546 = vadd.f32 %v3545, %v3529
    %v3547 = vadd.f32 %v3546, %v3532
    %v3548 = vadd.f32 %v3547, %v3535
    %v3549 = vadd.f32 %v3548, %v3538
    %v3550 = vadd.f32 %v3549, %v3541
    %v3551 = vadd.f32 %v3550, %v3544
    %v3552 = vmul.f32 %v3523, %v532
    %v3553 = vmul.f32 %v3526, %v900
    %v3554 = vadd.f32 %v3552, %v3553
    %v3555 = vmul.f32 %v3529, %v1270
    %v3556 = vadd.f32 %v3554, %v3555
    %v3557 = vmul.f32 %v3532, %v1640
    %v3558 = vadd.f32 %v3556, %v3557
    %v3559 = vmul.f32 %v3535, %v2010
    %v3560 = vadd.f32 %v3558, %v3559
    %v3561 = vmul.f32 %v3538, %v2380
    %v3562 = vadd.f32 %v3560, %v3561
    %v3563 = vmul.f32 %v3541, %v2750
    %v3564 = vadd.f32 %v3562, %v3563
    %v3565 = vmul.f32 %v3544, %v3120
    %v3566 = vadd.f32 %v3564, %v3565
    %v3567 = vrcp.pop %v3551
    %v3568 = vmul.f32 %v3566, %v3567
    %3570 = vrot.lane.b32.xlu0 %v3568, 32
    %v3571 = vpop.permute.xlu0 %3570
    %v3572 = vsel %vm95, %v3571, 0
    %3574 = vmatprep.subr.mxu0 0.0
    %3575 = vmatpush1.msra.mxu0 %v3348
    %3576 = vmatprep.subr.mxu0 0.0
    %3577 = vmatpush1.msra.mxu0 %v3349
    %3578 = vmatprep.subr.mxu0 0.0
    %3579 = vmatpush1.msra.mxu0 %v3350
    %3580 = vmatprep.subr.mxu0 0.0
    %3581 = vmatpush1.msra.mxu0 %v3351
    %3582 = vmatprep.subr.mxu0 0.0
    %3583 = vmatpush1.msra.mxu0 0.0
    %3584 = vmatprep.subr.mxu0 0.0
    %3585 = vmatpush1.msra.mxu0 0.0
    %3586 = vmatprep.subr.mxu0 0.0
    %3587 = vmatpush1.msra.mxu0 0.0
    %3588 = vmatprep.subr.mxu0 0.0
    %3589 = vmatpush1.msra.mxu0 0.0
    %3590 = vmatprep.subr.mxu0 0.0
    %3591 = vmatpush1.msra.mxu0 0.0
    %3592 = vmatprep.subr.mxu0 0.0
    %3593 = vmatpush1.msra.mxu0 0.0
    %3594 = vmatprep.subr.mxu0 0.0
    %3595 = vmatpush1.msra.mxu0 0.0
    %3596 = vmatprep.subr.mxu0 0.0
    %3597 = vmatpush1.msra.mxu0 0.0
    %3598 = vmatprep.subr.mxu0 0.0
    %3599 = vmatpush1.msra.mxu0 0.0
    %3600 = vmatprep.subr.mxu0 0.0
    %3601 = vmatpush1.msra.mxu0 0.0
    %3602 = vmatprep.subr.mxu0 0.0
    %3603 = vmatpush1.msra.mxu0 0.0
    %3604 = vmatprep.subr.mxu0 0.0
    %3605 = vmatpush1.msra.mxu0 0.0
    %3606 = vmatprep.subr.mxu0 0.0
    %3607 = vmatpush1.msra.mxu0 0.0
    %3608 = vmatprep.subr.mxu0 0.0
    %3609 = vmatpush1.msra.mxu0 0.0
    %3610 = vmatprep.subr.mxu0 0.0
    %3611 = vmatpush1.msra.mxu0 0.0
    %3612 = vmatprep.subr.mxu0 0.0
    %3613 = vmatpush1.msra.mxu0 0.0
    %3614 = vmatprep.subr.mxu0 0.0
    %3615 = vmatpush1.msra.mxu0 0.0
    %3616 = vmatprep.subr.mxu0 0.0
    %3617 = vmatpush1.msra.mxu0 0.0
    %3618 = vmatprep.subr.mxu0 0.0
    %3619 = vmatpush1.msra.mxu0 0.0
    %3620 = vmatprep.subr.mxu0 0.0
    %3621 = vmatpush1.msra.mxu0 0.0
    %3622 = vmatprep.subr.mxu0 0.0
    %3623 = vmatpush1.msra.mxu0 0.0
    %3624 = vmatprep.subr.mxu0 0.0
    %3625 = vmatpush1.msra.mxu0 0.0
    %3626 = vmatprep.subr.mxu0 0.0
    %3627 = vmatpush1.msra.mxu0 0.0
    %3628 = vmatprep.subr.mxu0 0.0
    %3629 = vmatpush1.msra.mxu0 0.0
    %3630 = vmatprep.subr.mxu0 0.0
    %3631 = vmatpush1.msra.mxu0 0.0
    %3632 = vmatprep.subr.mxu0 0.0
    %3633 = vmatpush1.msra.mxu0 0.0
    %3634 = vmatprep.subr.mxu0 0.0
    %3635 = vmatpush1.msra.mxu0 0.0
    %3636 = vmatprep.subr.mxu0 0.0
    %3637 = vmatpush1.msra.mxu0 0.0
    %3638 = vmatprep.mubr.f32.mxu0 0.0
    %3639 = vmatmul.mubr.f32.gmra.mrb[0].mxu0 %v3572
    %v3640 = vpop.f32.mrb[0].mxu0
    %v3641 = vadd.f32 0.0, %v3640
    %v3642 = vpop.f32.mrb[0].mxu0
    %3643 = vdwg.mxu0
    %v3644 = vadd.f32 %v3311, %v3641
    %3646 = vrot.lane.b32.xlu0 %v2941, 32
    %v3647 = vpop.permute.xlu0 %3646
    %v3648 = vsel %vm95, %v3647, 0
    %3650 = vmatprep.subr.mxu0 0.0
    %3651 = vmatpush1.msra.mxu0 %v3352
    %3652 = vmatprep.subr.mxu0 0.0
    %3653 = vmatpush1.msra.mxu0 %v3353
    %3654 = vmatprep.subr.mxu0 0.0
    %3655 = vmatpush1.msra.mxu0 %v3354
    %3656 = vmatprep.subr.mxu0 0.0
    %3657 = vmatpush1.msra.mxu0 %v3355
    %3658 = vmatprep.subr.mxu0 0.0
    %3659 = vmatpush1.msra.mxu0 0.0
    %3660 = vmatprep.subr.mxu0 0.0
    %3661 = vmatpush1.msra.mxu0 0.0
    %3662 = vmatprep.subr.mxu0 0.0
    %3663 = vmatpush1.msra.mxu0 0.0
    %3664 = vmatprep.subr.mxu0 0.0
    %3665 = vmatpush1.msra.mxu0 0.0
    %3666 = vmatprep.subr.mxu0 0.0
    %3667 = vmatpush1.msra.mxu0 0.0
    %3668 = vmatprep.subr.mxu0 0.0
    %3669 = vmatpush1.msra.mxu0 0.0
    %3670 = vmatprep.subr.mxu0 0.0
    %3671 = vmatpush1.msra.mxu0 0.0
    %3672 = vmatprep.subr.mxu0 0.0
    %3673 = vmatpush1.msra.mxu0 0.0
    %3674 = vmatprep.subr.mxu0 0.0
    %3675 = vmatpush1.msra.mxu0 0.0
    %3676 = vmatprep.subr.mxu0 0.0
    %3677 = vmatpush1.msra.mxu0 0.0
    %3678 = vmatprep.subr.mxu0 0.0
    %3679 = vmatpush1.msra.mxu0 0.0
    %3680 = vmatprep.subr.mxu0 0.0
    %3681 = vmatpush1.msra.mxu0 0.0
    %3682 = vmatprep.subr.mxu0 0.0
    %3683 = vmatpush1.msra.mxu0 0.0
    %3684 = vmatprep.subr.mxu0 0.0
    %3685 = vmatpush1.msra.mxu0 0.0
    %3686 = vmatprep.subr.mxu0 0.0
    %3687 = vmatpush1.msra.mxu0 0.0
    %3688 = vmatprep.subr.mxu0 0.0
    %3689 = vmatpush1.msra.mxu0 0.0
    %3690 = vmatprep.subr.mxu0 0.0
    %3691 = vmatpush1.msra.mxu0 0.0
    %3692 = vmatprep.subr.mxu0 0.0
    %3693 = vmatpush1.msra.mxu0 0.0
    %3694 = vmatprep.subr.mxu0 0.0
    %3695 = vmatpush1.msra.mxu0 0.0
    %3696 = vmatprep.subr.mxu0 0.0
    %3697 = vmatpush1.msra.mxu0 0.0
    %3698 = vmatprep.subr.mxu0 0.0
    %3699 = vmatpush1.msra.mxu0 0.0
    %3700 = vmatprep.subr.mxu0 0.0
    %3701 = vmatpush1.msra.mxu0 0.0
    %3702 = vmatprep.subr.mxu0 0.0
    %3703 = vmatpush1.msra.mxu0 0.0
    %3704 = vmatprep.subr.mxu0 0.0
    %3705 = vmatpush1.msra.mxu0 0.0
    %3706 = vmatprep.subr.mxu0 0.0
    %3707 = vmatpush1.msra.mxu0 0.0
    %3708 = vmatprep.subr.mxu0 0.0
    %3709 = vmatpush1.msra.mxu0 0.0
    %3710 = vmatprep.subr.mxu0 0.0
    %3711 = vmatpush1.msra.mxu0 0.0
    %3712 = vmatprep.subr.mxu0 0.0
    %3713 = vmatpush1.msra.mxu0 0.0
    %3714 = vmatprep.mubr.f32.mxu0 0.0
    %3715 = vmatmul.mubr.f32.gmra.mrb[0].mxu0 %v3648
    %v3716 = vpop.f32.mrb[0].mxu0
    %v3717 = vadd.f32 0.0, %v3716
    %v3718 = vpop.f32.mrb[0].mxu0
    %3719 = vdwg.mxu0
    %v3720 = vadd.f32 %v3644, %v3717
    %v3721 = vxor.u32 %v3720, 2147483648
    %v3722 = vmul.f32 %v3721, 1.442695
    %v3723 = vpow.pop %v3722
    %v3724 = vadd.f32 %v3723, 1.0
    %v3725 = vrcp.pop %v3724
    %v3726 = vmul.f32 1.0, %v3725
    %v3727 = vtanh.pop %v3720
    %v3728 = vmul.f32 %v3726, %v2944
    %3730 = vrot.lane.b32.xlu0 %v3727, 64
    %v3731 = vpop.permute.xlu0 %3730
    %v3733 = vmul.f32 %v3726, %v3731
    %3735 = vrot.lane.b32.xlu0 %v3733, 32
    %v3736 = vpop.permute.xlu0 %3735
    %v3738 = vadd.f32 %v3728, %v3736
    %v3739 = vtanh.pop %v3738
    %3741 = vrot.lane.b32.xlu0 %v3739, 64
    %v3742 = vpop.permute.xlu0 %3741
    %v3744 = vmul.f32 %v3726, %v3742
    %3745 = vmatprep.subr.mxu0 0.0
    %3746 = vmatpush1.msra.mxu0 %v3360
    %3747 = vmatprep.subr.mxu0 0.0
    %3748 = vmatpush1.msra.mxu0 %v3361
    %3749 = vmatprep.subr.mxu0 0.0
    %3750 = vmatpush1.msra.mxu0 %v3362
    %3751 = vmatprep.subr.mxu0 0.0
    %3752 = vmatpush1.msra.mxu0 %v3363
    %3753 = vmatprep.subr.mxu0 0.0
    %3754 = vmatpush1.msra.mxu0 0.0
    %3755 = vmatprep.subr.mxu0 0.0
    %3756 = vmatpush1.msra.mxu0 0.0
    %3757 = vmatprep.subr.mxu0 0.0
    %3758 = vmatpush1.msra.mxu0 0.0
    %3759 = vmatprep.subr.mxu0 0.0
    %3760 = vmatpush1.msra.mxu0 0.0
    %3761 = vmatprep.subr.mxu0 0.0
    %3762 = vmatpush1.msra.mxu0 0.0
    %3763 = vmatprep.subr.mxu0 0.0
    %3764 = vmatpush1.msra.mxu0 0.0
    %3765 = vmatprep.subr.mxu0 0.0
    %3766 = vmatpush1.msra.mxu0 0.0
    %3767 = vmatprep.subr.mxu0 0.0
    %3768 = vmatpush1.msra.mxu0 0.0
    %3769 = vmatprep.subr.mxu0 0.0
    %3770 = vmatpush1.msra.mxu0 0.0
    %3771 = vmatprep.subr.mxu0 0.0
    %3772 = vmatpush1.msra.mxu0 0.0
    %3773 = vmatprep.subr.mxu0 0.0
    %3774 = vmatpush1.msra.mxu0 0.0
    %3775 = vmatprep.subr.mxu0 0.0
    %3776 = vmatpush1.msra.mxu0 0.0
    %3777 = vmatprep.subr.mxu0 0.0
    %3778 = vmatpush1.msra.mxu0 0.0
    %3779 = vmatprep.subr.mxu0 0.0
    %3780 = vmatpush1.msra.mxu0 0.0
    %3781 = vmatprep.subr.mxu0 0.0
    %3782 = vmatpush1.msra.mxu0 0.0
    %3783 = vmatprep.subr.mxu0 0.0
    %3784 = vmatpush1.msra.mxu0 0.0
    %3785 = vmatprep.subr.mxu0 0.0
    %3786 = vmatpush1.msra.mxu0 0.0
    %3787 = vmatprep.subr.mxu0 0.0
    %3788 = vmatpush1.msra.mxu0 0.0
    %3789 = vmatprep.subr.mxu0 0.0
    %3790 = vmatpush1.msra.mxu0 0.0
    %3791 = vmatprep.subr.mxu0 0.0
    %3792 = vmatpush1.msra.mxu0 0.0
    %3793 = vmatprep.subr.mxu0 0.0
    %3794 = vmatpush1.msra.mxu0 0.0
    %3795 = vmatprep.subr.mxu0 0.0
    %3796 = vmatpush1.msra.mxu0 0.0
    %3797 = vmatprep.subr.mxu0 0.0
    %3798 = vmatpush1.msra.mxu0 0.0
    %3799 = vmatprep.subr.mxu0 0.0
    %3800 = vmatpush1.msra.mxu0 0.0
    %3801 = vmatprep.subr.mxu0 0.0
    %3802 = vmatpush1.msra.mxu0 0.0
    %3803 = vmatprep.subr.mxu0 0.0
    %3804 = vmatpush1.msra.mxu0 0.0
    %3805 = vmatprep.subr.mxu0 0.0
    %3806 = vmatpush1.msra.mxu0 0.0
    %3807 = vmatprep.subr.mxu0 0.0
    %3808 = vmatpush1.msra.mxu0 0.0
    %3809 = vmatprep.mubr.f32.mxu0 0.0
    %3810 = vmatmul.mubr.f32.gmra.mrb[0].mxu0 %v3388
    %v3811 = vpop.f32.mrb[0].mxu0
    %v3812 = vadd.f32 0.0, %v3811
    %v3813 = vpop.f32.mrb[0].mxu0
    %3814 = vdwg.mxu0
    %3816 = vrot.lane.b32.xlu0 %v3744, 32
    %v3817 = vpop.permute.xlu0 %3816
    %v3818 = vsel %vm95, %v3817, 0
    %3820 = vmatprep.subr.mxu0 0.0
    %3821 = vmatpush1.msra.mxu0 %v3356
    %3822 = vmatprep.subr.mxu0 0.0
    %3823 = vmatpush1.msra.mxu0 %v3357
    %3824 = vmatprep.subr.mxu0 0.0
    %3825 = vmatpush1.msra.mxu0 %v3358
    %3826 = vmatprep.subr.mxu0 0.0
    %3827 = vmatpush1.msra.mxu0 %v3359
    %3828 = vmatprep.subr.mxu0 0.0
    %3829 = vmatpush1.msra.mxu0 0.0
    %3830 = vmatprep.subr.mxu0 0.0
    %3831 = vmatpush1.msra.mxu0 0.0
    %3832 = vmatprep.subr.mxu0 0.0
    %3833 = vmatpush1.msra.mxu0 0.0
    %3834 = vmatprep.subr.mxu0 0.0
    %3835 = vmatpush1.msra.mxu0 0.0
    %3836 = vmatprep.subr.mxu0 0.0
    %3837 = vmatpush1.msra.mxu0 0.0
    %3838 = vmatprep.subr.mxu0 0.0
    %3839 = vmatpush1.msra.mxu0 0.0
    %3840 = vmatprep.subr.mxu0 0.0
    %3841 = vmatpush1.msra.mxu0 0.0
    %3842 = vmatprep.subr.mxu0 0.0
    %3843 = vmatpush1.msra.mxu0 0.0
    %3844 = vmatprep.subr.mxu0 0.0
    %3845 = vmatpush1.msra.mxu0 0.0
    %3846 = vmatprep.subr.mxu0 0.0
    %3847 = vmatpush1.msra.mxu0 0.0
    %3848 = vmatprep.subr.mxu0 0.0
    %3849 = vmatpush1.msra.mxu0 0.0
    %3850 = vmatprep.subr.mxu0 0.0
    %3851 = vmatpush1.msra.mxu0 0.0
    %3852 = vmatprep.subr.mxu0 0.0
    %3853 = vmatpush1.msra.mxu0 0.0
    %3854 = vmatprep.subr.mxu0 0.0
    %3855 = vmatpush1.msra.mxu0 0.0
    %3856 = vmatprep.subr.mxu0 0.0
    %3857 = vmatpush1.msra.mxu0 0.0
    %3858 = vmatprep.subr.mxu0 0.0
    %3859 = vmatpush1.msra.mxu0 0.0
    %3860 = vmatprep.subr.mxu0 0.0
    %3861 = vmatpush1.msra.mxu0 0.0
    %3862 = vmatprep.subr.mxu0 0.0
    %3863 = vmatpush1.msra.mxu0 0.0
    %3864 = vmatprep.subr.mxu0 0.0
    %3865 = vmatpush1.msra.mxu0 0.0
    %3866 = vmatprep.subr.mxu0 0.0
    %3867 = vmatpush1.msra.mxu0 0.0
    %3868 = vmatprep.subr.mxu0 0.0
    %3869 = vmatpush1.msra.mxu0 0.0
    %3870 = vmatprep.subr.mxu0 0.0
    %3871 = vmatpush1.msra.mxu0 0.0
    %3872 = vmatprep.subr.mxu0 0.0
    %3873 = vmatpush1.msra.mxu0 0.0
    %3874 = vmatprep.subr.mxu0 0.0
    %3875 = vmatpush1.msra.mxu0 0.0
    %3876 = vmatprep.subr.mxu0 0.0
    %3877 = vmatpush1.msra.mxu0 0.0
    %3878 = vmatprep.subr.mxu0 0.0
    %3879 = vmatpush1.msra.mxu0 0.0
    %3880 = vmatprep.subr.mxu0 0.0
    %3881 = vmatpush1.msra.mxu0 0.0
    %3882 = vmatprep.subr.mxu0 0.0
    %3883 = vmatpush1.msra.mxu0 0.0
    %3884 = vmatprep.mubr.f32.mxu0 0.0
    %3885 = vmatmul.mubr.f32.gmra.mrb[0].mxu0 %v3818
    %v3886 = vpop.f32.mrb[0].mxu0
    %v3887 = vadd.f32 %v3812, %v3886
    %v3888 = vpop.f32.mrb[0].mxu0
    %3889 = vdwg.mxu0
    %v3891 = vlaneseq
    %v3892 = vshrl.u32 %v3891, 7
    %v3893 = vsub.s32 0, %v3892
    %v3894 = vrot.slane %v3364, %v3893
    %v3896 = vadd.f32 %v3887, %v3894
    %v3897 = vxor.u32 %v3896, 2147483648
    %v3898 = vmul.f32 %v3897, 1.442695
    %v3899 = vpow.pop %v3898
    %v3900 = vadd.f32 %v3899, 1.0
    %v3901 = vrcp.pop %v3900
    %v3902 = vmul.f32 1.0, %v3901
    %v3903 = vtanh.pop %v3896
    %v3904 = vmul.f32 %v3902, %v3125
    %3906 = vrot.lane.b32.xlu0 %v3903, 64
    %v3907 = vpop.permute.xlu0 %3906
    %v3909 = vmul.f32 %v3902, %v3907
    %3911 = vrot.lane.b32.xlu0 %v3909, 32
    %v3912 = vpop.permute.xlu0 %3911
    %v3914 = vadd.f32 %v3904, %v3912
    %v3915 = vtanh.pop %v3914
    %3917 = vrot.lane.b32.xlu0 %v3915, 64
    %v3918 = vpop.permute.xlu0 %3917
    %v3920 = vmul.f32 %v3902, %v3918
    %v3922 = vlaneseq
    %v3923 = vshrl.u32 %v3922, 7
    %v3924 = vsub.s32 0, %v3923
    %v3925 = vrot.slane %v3369, %v3924
    %3928 = vrot.lane.b32.xlu0 %v3920, 32
    %v3929 = vpop.permute.xlu0 %3928
    %v3930 = vsel %vm95, %v3929, 0
    %3932 = vmatprep.subr.mxu0 0.0
    %3933 = vmatpush1.msra.mxu0 %v3365
    %3934 = vmatprep.subr.mxu0 0.0
    %3935 = vmatpush1.msra.mxu0 %v3366
    %3936 = vmatprep.subr.mxu0 0.0
    %3937 = vmatpush1.msra.mxu0 %v3367
    %3938 = vmatprep.subr.mxu0 0.0
    %3939 = vmatpush1.msra.mxu0 %v3368
    %3940 = vmatprep.subr.mxu0 0.0
    %3941 = vmatpush1.msra.mxu0 0.0
    %3942 = vmatprep.subr.mxu0 0.0
    %3943 = vmatpush1.msra.mxu0 0.0
    %3944 = vmatprep.subr.mxu0 0.0
    %3945 = vmatpush1.msra.mxu0 0.0
    %3946 = vmatprep.subr.mxu0 0.0
    %3947 = vmatpush1.msra.mxu0 0.0
    %3948 = vmatprep.subr.mxu0 0.0
    %3949 = vmatpush1.msra.mxu0 0.0
    %3950 = vmatprep.subr.mxu0 0.0
    %3951 = vmatpush1.msra.mxu0 0.0
    %3952 = vmatprep.subr.mxu0 0.0
    %3953 = vmatpush1.msra.mxu0 0.0
    %3954 = vmatprep.subr.mxu0 0.0
    %3955 = vmatpush1.msra.mxu0 0.0
    %3956 = vmatprep.subr.mxu0 0.0
    %3957 = vmatpush1.msra.mxu0 0.0
    %3958 = vmatprep.subr.mxu0 0.0
    %3959 = vmatpush1.msra.mxu0 0.0
    %3960 = vmatprep.subr.mxu0 0.0
    %3961 = vmatpush1.msra.mxu0 0.0
    %3962 = vmatprep.subr.mxu0 0.0
    %3963 = vmatpush1.msra.mxu0 0.0
    %3964 = vmatprep.subr.mxu0 0.0
    %3965 = vmatpush1.msra.mxu0 0.0
    %3966 = vmatprep.subr.mxu0 0.0
    %3967 = vmatpush1.msra.mxu0 0.0
    %3968 = vmatprep.subr.mxu0 0.0
    %3969 = vmatpush1.msra.mxu0 0.0
    %3970 = vmatprep.subr.mxu0 0.0
    %3971 = vmatpush1.msra.mxu0 0.0
    %3972 = vmatprep.subr.mxu0 0.0
    %3973 = vmatpush1.msra.mxu0 0.0
    %3974 = vmatprep.subr.mxu0 0.0
    %3975 = vmatpush1.msra.mxu0 0.0
    %3976 = vmatprep.subr.mxu0 0.0
    %3977 = vmatpush1.msra.mxu0 0.0
    %3978 = vmatprep.subr.mxu0 0.0
    %3979 = vmatpush1.msra.mxu0 0.0
    %3980 = vmatprep.subr.mxu0 0.0
    %3981 = vmatpush1.msra.mxu0 0.0
    %3982 = vmatprep.subr.mxu0 0.0
    %3983 = vmatpush1.msra.mxu0 0.0
    %3984 = vmatprep.subr.mxu0 0.0
    %3985 = vmatpush1.msra.mxu0 0.0
    %3986 = vmatprep.subr.mxu0 0.0
    %3987 = vmatpush1.msra.mxu0 0.0
    %3988 = vmatprep.subr.mxu0 0.0
    %3989 = vmatpush1.msra.mxu0 0.0
    %3990 = vmatprep.subr.mxu0 0.0
    %3991 = vmatpush1.msra.mxu0 0.0
    %3992 = vmatprep.subr.mxu0 0.0
    %3993 = vmatpush1.msra.mxu0 0.0
    %3994 = vmatprep.subr.mxu0 0.0
    %3995 = vmatpush1.msra.mxu0 0.0
    %3996 = vmatprep.mubr.f32.mxu0 0.0
    %3997 = vmatmul.mubr.f32.gmra.mrb[0].mxu0 %v3930
    %v3998 = vpop.f32.mrb[0].mxu0
    %v3999 = vadd.f32 %v3925, %v3998
    %v4000 = vpop.f32.mrb[0].mxu0
    %4001 = vdwg.mxu0
    %vm4002 = vcmp.ne.s32.totalorder %v3376, 0
    %v4003 = vsel %vm4002, 1, 0
    %v4004 = vcvt.s32.f32 %v4003
    %v4005 = vsel %vm95, %v3999, -inf
    %4006 = vmax.xlane.f32.xlu0 %v4005
    %v4007 = vpop.xlane.xlu0 %4006
    %v4008 = vsub.f32 %v3999, %v4007
    %v4009 = vmul.f32 %v4008, 1.442695
    %v4010 = vpow.pop %v4009
    %v4011 = vsel %vm95, %v4010, 0.0
    %4012 = vadd.xlane.f32.xlu0 %v4011
    %v4013 = vpop.xlane.xlu0 %4012
    %v4014 = vlog2.pop %v4013
    %v4015 = vmul.f32 %v4014, 0.6931472
    %v4016 = vadd.f32 %v4015, %v4007
    %4017 = vset.pattern.permute.xlu0 1
    %4018 = vperm.xlu0 %4017, %v3376
    %v4019 = vpop.permute.xlu0 %4018
    %vm4020 = vcmp.eq.s32.totalorder %v3378, %v4019
    %v4021 = vsel %vm4020, %v3999, 0.0
    %v4022 = vsel %vm95, %v4021, 0.0
    %4023 = vadd.xlane.f32.xlu0 %v4022
    %v4024 = vpop.xlane.xlu0 %4023
    %v4025 = vsub.f32 %v4016, %v4024
    %v4026 = vmul.f32 %v4025, %v4004
    %vm4027 = vcmask 15368
    %v4028 = vsel %vm4027, %v4026, 0.0
    %v4029 = vrot.slane %v4028, 4
    %v4030 = vadd.f32 %v4028, %v4029
    %v4031 = vrot.slane %v4030, 2
    %v4032 = vadd.f32 %v4030, %v4031
    %v4033 = vrot.slane %v4032, 1
    %v4034 = vadd.f32 %v4032, %v4033
    %v4035 = vadd.f32 %v4034, 0.0
    %v4036 = vsel %vm4027, %v4004, 0.0
    %v4037 = vrot.slane %v4036, 4
    %v4038 = vadd.f32 %v4036, %v4037
    %v4039 = vrot.slane %v4038, 2
    %v4040 = vadd.f32 %v4038, %v4039
    %v4041 = vrot.slane %v4040, 1
    %v4042 = vadd.f32 %v4040, %v4041
    %v4043 = vadd.f32 %v4042, 0.0
    %4044 = vmatprep.subr.mxu0 0.0
    %4045 = vmatpush1.msra.mxu0 %v3370
    %4046 = vmatprep.subr.mxu0 0.0
    %4047 = vmatpush1.msra.mxu0 %v3371
    %4048 = vmatprep.subr.mxu0 0.0
    %4049 = vmatpush1.msra.mxu0 %v3372
    %4050 = vmatprep.subr.mxu0 0.0
    %4051 = vmatpush1.msra.mxu0 %v3373
    %4052 = vmatprep.subr.mxu0 0.0
    %4053 = vmatpush1.msra.mxu0 0.0
    %4054 = vmatprep.subr.mxu0 0.0
    %4055 = vmatpush1.msra.mxu0 0.0
    %4056 = vmatprep.subr.mxu0 0.0
    %4057 = vmatpush1.msra.mxu0 0.0
    %4058 = vmatprep.subr.mxu0 0.0
    %4059 = vmatpush1.msra.mxu0 0.0
    %4060 = vmatprep.subr.mxu0 0.0
    %4061 = vmatpush1.msra.mxu0 0.0
    %4062 = vmatprep.subr.mxu0 0.0
    %4063 = vmatpush1.msra.mxu0 0.0
    %4064 = vmatprep.subr.mxu0 0.0
    %4065 = vmatpush1.msra.mxu0 0.0
    %4066 = vmatprep.subr.mxu0 0.0
    %4067 = vmatpush1.msra.mxu0 0.0
    %4068 = vmatprep.subr.mxu0 0.0
    %4069 = vmatpush1.msra.mxu0 0.0
    %4070 = vmatprep.subr.mxu0 0.0
    %4071 = vmatpush1.msra.mxu0 0.0
    %4072 = vmatprep.subr.mxu0 0.0
    %4073 = vmatpush1.msra.mxu0 0.0
    %4074 = vmatprep.subr.mxu0 0.0
    %4075 = vmatpush1.msra.mxu0 0.0
    %4076 = vmatprep.subr.mxu0 0.0
    %4077 = vmatpush1.msra.mxu0 0.0
    %4078 = vmatprep.subr.mxu0 0.0
    %4079 = vmatpush1.msra.mxu0 0.0
    %4080 = vmatprep.subr.mxu0 0.0
    %4081 = vmatpush1.msra.mxu0 0.0
    %4082 = vmatprep.subr.mxu0 0.0
    %4083 = vmatpush1.msra.mxu0 0.0
    %4084 = vmatprep.subr.mxu0 0.0
    %4085 = vmatpush1.msra.mxu0 0.0
    %4086 = vmatprep.subr.mxu0 0.0
    %4087 = vmatpush1.msra.mxu0 0.0
    %4088 = vmatprep.subr.mxu0 0.0
    %4089 = vmatpush1.msra.mxu0 0.0
    %4090 = vmatprep.subr.mxu0 0.0
    %4091 = vmatpush1.msra.mxu0 0.0
    %4092 = vmatprep.subr.mxu0 0.0
    %4093 = vmatpush1.msra.mxu0 0.0
    %4094 = vmatprep.subr.mxu0 0.0
    %4095 = vmatpush1.msra.mxu0 0.0
    %4096 = vmatprep.subr.mxu0 0.0
    %4097 = vmatpush1.msra.mxu0 0.0
    %4098 = vmatprep.subr.mxu0 0.0
    %4099 = vmatpush1.msra.mxu0 0.0
    %4100 = vmatprep.subr.mxu0 0.0
    %4101 = vmatpush1.msra.mxu0 0.0
    %4102 = vmatprep.subr.mxu0 0.0
    %4103 = vmatpush1.msra.mxu0 0.0
    %4104 = vmatprep.subr.mxu0 0.0
    %4105 = vmatpush1.msra.mxu0 0.0
    %4106 = vmatprep.subr.mxu0 0.0
    %4107 = vmatpush1.msra.mxu0 0.0
    %4108 = vmatprep.mubr.f32.mxu0 0.0
    %4109 = vmatmul.mubr.f32.gmra.mrb[0].mxu0 %v3930
    %v4110 = vpop.f32.mrb[0].mxu0
    %v4111 = vadd.f32 %v3383, %v4110
    %v4112 = vpop.f32.mrb[0].mxu0
    %4113 = vdwg.mxu0
    %v4114 = vadd.f32 %v4111, %v608
    %v4115 = vtanh.pop %v4114
    %v4116 = vmul.f32 %v4115, %v3466
    %v4117 = vsel %vm95, %v4116, 0.0
    %4118 = vadd.xlane.f32.xlu0 %v4117
    %v4119 = vpop.xlane.xlu0 %4118
    %v4120 = vadd.f32 %v4111, %v978
    %v4121 = vtanh.pop %v4120
    %v4122 = vmul.f32 %v4121, %v3466
    %v4123 = vsel %vm95, %v4122, 0.0
    %4124 = vadd.xlane.f32.xlu0 %v4123
    %v4125 = vpop.xlane.xlu0 %4124
    %v4126 = vadd.f32 %v4111, %v1348
    %v4127 = vtanh.pop %v4126
    %v4128 = vmul.f32 %v4127, %v3466
    %v4129 = vsel %vm95, %v4128, 0.0
    %4130 = vadd.xlane.f32.xlu0 %v4129
    %v4131 = vpop.xlane.xlu0 %4130
    %v4132 = vadd.f32 %v4111, %v1718
    %v4133 = vtanh.pop %v4132
    %v4134 = vmul.f32 %v4133, %v3466
    %v4135 = vsel %vm95, %v4134, 0.0
    %4136 = vadd.xlane.f32.xlu0 %v4135
    %v4137 = vpop.xlane.xlu0 %4136
    %v4138 = vadd.f32 %v4111, %v2088
    %v4139 = vtanh.pop %v4138
    %v4140 = vmul.f32 %v4139, %v3466
    %v4141 = vsel %vm95, %v4140, 0.0
    %4142 = vadd.xlane.f32.xlu0 %v4141
    %v4143 = vpop.xlane.xlu0 %4142
    %v4144 = vadd.f32 %v4111, %v2458
    %v4145 = vtanh.pop %v4144
    %v4146 = vmul.f32 %v4145, %v3466
    %v4147 = vsel %vm95, %v4146, 0.0
    %4148 = vadd.xlane.f32.xlu0 %v4147
    %v4149 = vpop.xlane.xlu0 %4148
    %v4150 = vadd.f32 %v4111, %v2828
    %v4151 = vtanh.pop %v4150
    %v4152 = vmul.f32 %v4151, %v3466
    %v4153 = vsel %vm95, %v4152, 0.0
    %4154 = vadd.xlane.f32.xlu0 %v4153
    %v4155 = vpop.xlane.xlu0 %4154
    %v4156 = vadd.f32 %v4111, %v3198
    %v4157 = vtanh.pop %v4156
    %v4158 = vmul.f32 %v4157, %v3466
    %v4159 = vsel %vm95, %v4158, 0.0
    %4160 = vadd.xlane.f32.xlu0 %v4159
    %v4161 = vpop.xlane.xlu0 %4160
    %v4162 = vmax.f32 %v4119, %v4125
    %v4163 = vmax.f32 %v4162, %v4131
    %v4164 = vmax.f32 %v4163, %v4137
    %v4165 = vmax.f32 %v4164, %v4143
    %v4166 = vmax.f32 %v4165, %v4149
    %v4167 = vmax.f32 %v4166, %v4155
    %v4168 = vmax.f32 %v4167, %v4161
    %v4169 = vsub.f32 %v4119, %v4168
    %v4170 = vmul.f32 %v4169, 1.442695
    %v4171 = vpow.pop %v4170
    %v4172 = vsub.f32 %v4125, %v4168
    %v4173 = vmul.f32 %v4172, 1.442695
    %v4174 = vpow.pop %v4173
    %v4175 = vsub.f32 %v4131, %v4168
    %v4176 = vmul.f32 %v4175, 1.442695
    %v4177 = vpow.pop %v4176
    %v4178 = vsub.f32 %v4137, %v4168
    %v4179 = vmul.f32 %v4178, 1.442695
    %v4180 = vpow.pop %v4179
    %v4181 = vsub.f32 %v4143, %v4168
    %v4182 = vmul.f32 %v4181, 1.442695
    %v4183 = vpow.pop %v4182
    %v4184 = vsub.f32 %v4149, %v4168
    %v4185 = vmul.f32 %v4184, 1.442695
    %v4186 = vpow.pop %v4185
    %v4187 = vsub.f32 %v4155, %v4168
    %v4188 = vmul.f32 %v4187, 1.442695
    %v4189 = vpow.pop %v4188
    %v4190 = vsub.f32 %v4161, %v4168
    %v4191 = vmul.f32 %v4190, 1.442695
    %v4192 = vpow.pop %v4191
    %v4193 = vadd.f32 %v4171, %v4174
    %v4194 = vadd.f32 %v4193, %v4177
    %v4195 = vadd.f32 %v4194, %v4180
    %v4196 = vadd.f32 %v4195, %v4183
    %v4197 = vadd.f32 %v4196, %v4186
    %v4198 = vadd.f32 %v4197, %v4189
    %v4199 = vadd.f32 %v4198, %v4192
    %v4200 = vmul.f32 %v4171, %v532
    %v4201 = vmul.f32 %v4174, %v900
    %v4202 = vadd.f32 %v4200, %v4201
    %v4203 = vmul.f32 %v4177, %v1270
    %v4204 = vadd.f32 %v4202, %v4203
    %v4205 = vmul.f32 %v4180, %v1640
    %v4206 = vadd.f32 %v4204, %v4205
    %v4207 = vmul.f32 %v4183, %v2010
    %v4208 = vadd.f32 %v4206, %v4207
    %v4209 = vmul.f32 %v4186, %v2380
    %v4210 = vadd.f32 %v4208, %v4209
    %v4211 = vmul.f32 %v4189, %v2750
    %v4212 = vadd.f32 %v4210, %v4211
    %v4213 = vmul.f32 %v4192, %v3120
    %v4214 = vadd.f32 %v4212, %v4213
    %v4215 = vrcp.pop %v4199
    %v4216 = vmul.f32 %v4214, %v4215
    %4218 = vrot.lane.b32.xlu0 %v4216, 32
    %v4219 = vpop.permute.xlu0 %4218
    %v4220 = vsel %vm95, %v4219, 0
    %4222 = vmatprep.subr.mxu0 0.0
    %4223 = vmatpush1.msra.mxu0 %v3348
    %4224 = vmatprep.subr.mxu0 0.0
    %4225 = vmatpush1.msra.mxu0 %v3349
    %4226 = vmatprep.subr.mxu0 0.0
    %4227 = vmatpush1.msra.mxu0 %v3350
    %4228 = vmatprep.subr.mxu0 0.0
    %4229 = vmatpush1.msra.mxu0 %v3351
    %4230 = vmatprep.subr.mxu0 0.0
    %4231 = vmatpush1.msra.mxu0 0.0
    %4232 = vmatprep.subr.mxu0 0.0
    %4233 = vmatpush1.msra.mxu0 0.0
    %4234 = vmatprep.subr.mxu0 0.0
    %4235 = vmatpush1.msra.mxu0 0.0
    %4236 = vmatprep.subr.mxu0 0.0
    %4237 = vmatpush1.msra.mxu0 0.0
    %4238 = vmatprep.subr.mxu0 0.0
    %4239 = vmatpush1.msra.mxu0 0.0
    %4240 = vmatprep.subr.mxu0 0.0
    %4241 = vmatpush1.msra.mxu0 0.0
    %4242 = vmatprep.subr.mxu0 0.0
    %4243 = vmatpush1.msra.mxu0 0.0
    %4244 = vmatprep.subr.mxu0 0.0
    %4245 = vmatpush1.msra.mxu0 0.0
    %4246 = vmatprep.subr.mxu0 0.0
    %4247 = vmatpush1.msra.mxu0 0.0
    %4248 = vmatprep.subr.mxu0 0.0
    %4249 = vmatpush1.msra.mxu0 0.0
    %4250 = vmatprep.subr.mxu0 0.0
    %4251 = vmatpush1.msra.mxu0 0.0
    %4252 = vmatprep.subr.mxu0 0.0
    %4253 = vmatpush1.msra.mxu0 0.0
    %4254 = vmatprep.subr.mxu0 0.0
    %4255 = vmatpush1.msra.mxu0 0.0
    %4256 = vmatprep.subr.mxu0 0.0
    %4257 = vmatpush1.msra.mxu0 0.0
    %4258 = vmatprep.subr.mxu0 0.0
    %4259 = vmatpush1.msra.mxu0 0.0
    %4260 = vmatprep.subr.mxu0 0.0
    %4261 = vmatpush1.msra.mxu0 0.0
    %4262 = vmatprep.subr.mxu0 0.0
    %4263 = vmatpush1.msra.mxu0 0.0
    %4264 = vmatprep.subr.mxu0 0.0
    %4265 = vmatpush1.msra.mxu0 0.0
    %4266 = vmatprep.subr.mxu0 0.0
    %4267 = vmatpush1.msra.mxu0 0.0
    %4268 = vmatprep.subr.mxu0 0.0
    %4269 = vmatpush1.msra.mxu0 0.0
    %4270 = vmatprep.subr.mxu0 0.0
    %4271 = vmatpush1.msra.mxu0 0.0
    %4272 = vmatprep.subr.mxu0 0.0
    %4273 = vmatpush1.msra.mxu0 0.0
    %4274 = vmatprep.subr.mxu0 0.0
    %4275 = vmatpush1.msra.mxu0 0.0
    %4276 = vmatprep.subr.mxu0 0.0
    %4277 = vmatpush1.msra.mxu0 0.0
    %4278 = vmatprep.subr.mxu0 0.0
    %4279 = vmatpush1.msra.mxu0 0.0
    %4280 = vmatprep.subr.mxu0 0.0
    %4281 = vmatpush1.msra.mxu0 0.0
    %4282 = vmatprep.subr.mxu0 0.0
    %4283 = vmatpush1.msra.mxu0 0.0
    %4284 = vmatprep.subr.mxu0 0.0
    %4285 = vmatpush1.msra.mxu0 0.0
    %4286 = vmatprep.mubr.f32.mxu0 0.0
    %4287 = vmatmul.mubr.f32.gmra.mrb[0].mxu0 %v4220
    %v4288 = vpop.f32.mrb[0].mxu0
    %v4289 = vadd.f32 0.0, %v4288
    %v4290 = vpop.f32.mrb[0].mxu0
    %4291 = vdwg.mxu0
    %v4292 = vadd.f32 %v3316, %v4289
    %4293 = vmatprep.subr.mxu0 0.0
    %4294 = vmatpush1.msra.mxu0 %v3352
    %4295 = vmatprep.subr.mxu0 0.0
    %4296 = vmatpush1.msra.mxu0 %v3353
    %4297 = vmatprep.subr.mxu0 0.0
    %4298 = vmatpush1.msra.mxu0 %v3354
    %4299 = vmatprep.subr.mxu0 0.0
    %4300 = vmatpush1.msra.mxu0 %v3355
    %4301 = vmatprep.subr.mxu0 0.0
    %4302 = vmatpush1.msra.mxu0 0.0
    %4303 = vmatprep.subr.mxu0 0.0
    %4304 = vmatpush1.msra.mxu0 0.0
    %4305 = vmatprep.subr.mxu0 0.0
    %4306 = vmatpush1.msra.mxu0 0.0
    %4307 = vmatprep.subr.mxu0 0.0
    %4308 = vmatpush1.msra.mxu0 0.0
    %4309 = vmatprep.subr.mxu0 0.0
    %4310 = vmatpush1.msra.mxu0 0.0
    %4311 = vmatprep.subr.mxu0 0.0
    %4312 = vmatpush1.msra.mxu0 0.0
    %4313 = vmatprep.subr.mxu0 0.0
    %4314 = vmatpush1.msra.mxu0 0.0
    %4315 = vmatprep.subr.mxu0 0.0
    %4316 = vmatpush1.msra.mxu0 0.0
    %4317 = vmatprep.subr.mxu0 0.0
    %4318 = vmatpush1.msra.mxu0 0.0
    %4319 = vmatprep.subr.mxu0 0.0
    %4320 = vmatpush1.msra.mxu0 0.0
    %4321 = vmatprep.subr.mxu0 0.0
    %4322 = vmatpush1.msra.mxu0 0.0
    %4323 = vmatprep.subr.mxu0 0.0
    %4324 = vmatpush1.msra.mxu0 0.0
    %4325 = vmatprep.subr.mxu0 0.0
    %4326 = vmatpush1.msra.mxu0 0.0
    %4327 = vmatprep.subr.mxu0 0.0
    %4328 = vmatpush1.msra.mxu0 0.0
    %4329 = vmatprep.subr.mxu0 0.0
    %4330 = vmatpush1.msra.mxu0 0.0
    %4331 = vmatprep.subr.mxu0 0.0
    %4332 = vmatpush1.msra.mxu0 0.0
    %4333 = vmatprep.subr.mxu0 0.0
    %4334 = vmatpush1.msra.mxu0 0.0
    %4335 = vmatprep.subr.mxu0 0.0
    %4336 = vmatpush1.msra.mxu0 0.0
    %4337 = vmatprep.subr.mxu0 0.0
    %4338 = vmatpush1.msra.mxu0 0.0
    %4339 = vmatprep.subr.mxu0 0.0
    %4340 = vmatpush1.msra.mxu0 0.0
    %4341 = vmatprep.subr.mxu0 0.0
    %4342 = vmatpush1.msra.mxu0 0.0
    %4343 = vmatprep.subr.mxu0 0.0
    %4344 = vmatpush1.msra.mxu0 0.0
    %4345 = vmatprep.subr.mxu0 0.0
    %4346 = vmatpush1.msra.mxu0 0.0
    %4347 = vmatprep.subr.mxu0 0.0
    %4348 = vmatpush1.msra.mxu0 0.0
    %4349 = vmatprep.subr.mxu0 0.0
    %4350 = vmatpush1.msra.mxu0 0.0
    %4351 = vmatprep.subr.mxu0 0.0
    %4352 = vmatpush1.msra.mxu0 0.0
    %4353 = vmatprep.subr.mxu0 0.0
    %4354 = vmatpush1.msra.mxu0 0.0
    %4355 = vmatprep.subr.mxu0 0.0
    %4356 = vmatpush1.msra.mxu0 0.0
    %4357 = vmatprep.mubr.f32.mxu0 0.0
    %4358 = vmatmul.mubr.f32.gmra.mrb[0].mxu0 %v3818
    %v4359 = vpop.f32.mrb[0].mxu0
    %v4360 = vadd.f32 0.0, %v4359
    %v4361 = vpop.f32.mrb[0].mxu0
    %4362 = vdwg.mxu0
    %v4363 = vadd.f32 %v4292, %v4360
    %v4364 = vxor.u32 %v4363, 2147483648
    %v4365 = vmul.f32 %v4364, 1.442695
    %v4366 = vpow.pop %v4365
    %v4367 = vadd.f32 %v4366, 1.0
    %v4368 = vrcp.pop %v4367
    %v4369 = vmul.f32 1.0, %v4368
    %v4370 = vtanh.pop %v4363
    %v4371 = vmul.f32 %v4369, %v3738
    %4373 = vrot.lane.b32.xlu0 %v4370, 64
    %v4374 = vpop.permute.xlu0 %4373
    %v4376 = vmul.f32 %v4369, %v4374
    %4378 = vrot.lane.b32.xlu0 %v4376, 32
    %v4379 = vpop.permute.xlu0 %4378
    %v4381 = vadd.f32 %v4371, %v4379
    %v4382 = vtanh.pop %v4381
    %4384 = vrot.lane.b32.xlu0 %v4382, 64
    %v4385 = vpop.permute.xlu0 %4384
    %v4387 = vmul.f32 %v4369, %v4385
    %4388 = vmatprep.subr.mxu0 0.0
    %4389 = vmatpush1.msra.mxu0 %v3360
    %4390 = vmatprep.subr.mxu0 0.0
    %4391 = vmatpush1.msra.mxu0 %v3361
    %4392 = vmatprep.subr.mxu0 0.0
    %4393 = vmatpush1.msra.mxu0 %v3362
    %4394 = vmatprep.subr.mxu0 0.0
    %4395 = vmatpush1.msra.mxu0 %v3363
    %4396 = vmatprep.subr.mxu0 0.0
    %4397 = vmatpush1.msra.mxu0 0.0
    %4398 = vmatprep.subr.mxu0 0.0
    %4399 = vmatpush1.msra.mxu0 0.0
    %4400 = vmatprep.subr.mxu0 0.0
    %4401 = vmatpush1.msra.mxu0 0.0
    %4402 = vmatprep.subr.mxu0 0.0
    %4403 = vmatpush1.msra.mxu0 0.0
    %4404 = vmatprep.subr.mxu0 0.0
    %4405 = vmatpush1.msra.mxu0 0.0
    %4406 = vmatprep.subr.mxu0 0.0
    %4407 = vmatpush1.msra.mxu0 0.0
    %4408 = vmatprep.subr.mxu0 0.0
    %4409 = vmatpush1.msra.mxu0 0.0
    %4410 = vmatprep.subr.mxu0 0.0
    %4411 = vmatpush1.msra.mxu0 0.0
    %4412 = vmatprep.subr.mxu0 0.0
    %4413 = vmatpush1.msra.mxu0 0.0
    %4414 = vmatprep.subr.mxu0 0.0
    %4415 = vmatpush1.msra.mxu0 0.0
    %4416 = vmatprep.subr.mxu0 0.0
    %4417 = vmatpush1.msra.mxu0 0.0
    %4418 = vmatprep.subr.mxu0 0.0
    %4419 = vmatpush1.msra.mxu0 0.0
    %4420 = vmatprep.subr.mxu0 0.0
    %4421 = vmatpush1.msra.mxu0 0.0
    %4422 = vmatprep.subr.mxu0 0.0
    %4423 = vmatpush1.msra.mxu0 0.0
    %4424 = vmatprep.subr.mxu0 0.0
    %4425 = vmatpush1.msra.mxu0 0.0
    %4426 = vmatprep.subr.mxu0 0.0
    %4427 = vmatpush1.msra.mxu0 0.0
    %4428 = vmatprep.subr.mxu0 0.0
    %4429 = vmatpush1.msra.mxu0 0.0
    %4430 = vmatprep.subr.mxu0 0.0
    %4431 = vmatpush1.msra.mxu0 0.0
    %4432 = vmatprep.subr.mxu0 0.0
    %4433 = vmatpush1.msra.mxu0 0.0
    %4434 = vmatprep.subr.mxu0 0.0
    %4435 = vmatpush1.msra.mxu0 0.0
    %4436 = vmatprep.subr.mxu0 0.0
    %4437 = vmatpush1.msra.mxu0 0.0
    %4438 = vmatprep.subr.mxu0 0.0
    %4439 = vmatpush1.msra.mxu0 0.0
    %4440 = vmatprep.subr.mxu0 0.0
    %4441 = vmatpush1.msra.mxu0 0.0
    %4442 = vmatprep.subr.mxu0 0.0
    %4443 = vmatpush1.msra.mxu0 0.0
    %4444 = vmatprep.subr.mxu0 0.0
    %4445 = vmatpush1.msra.mxu0 0.0
    %4446 = vmatprep.subr.mxu0 0.0
    %4447 = vmatpush1.msra.mxu0 0.0
    %4448 = vmatprep.subr.mxu0 0.0
    %4449 = vmatpush1.msra.mxu0 0.0
    %4450 = vmatprep.subr.mxu0 0.0
    %4451 = vmatpush1.msra.mxu0 0.0
    %4452 = vmatprep.mubr.f32.mxu0 0.0
    %4453 = vmatmul.mubr.f32.gmra.mrb[0].mxu0 %v3930
    %v4454 = vpop.f32.mrb[0].mxu0
    %v4455 = vadd.f32 0.0, %v4454
    %v4456 = vpop.f32.mrb[0].mxu0
    %4457 = vdwg.mxu0
    %4459 = vrot.lane.b32.xlu0 %v4387, 32
    %v4460 = vpop.permute.xlu0 %4459
    %v4461 = vsel %vm95, %v4460, 0
    %4463 = vmatprep.subr.mxu0 0.0
    %4464 = vmatpush1.msra.mxu0 %v3356
    %4465 = vmatprep.subr.mxu0 0.0
    %4466 = vmatpush1.msra.mxu0 %v3357
    %4467 = vmatprep.subr.mxu0 0.0
    %4468 = vmatpush1.msra.mxu0 %v3358
    %4469 = vmatprep.subr.mxu0 0.0
    %4470 = vmatpush1.msra.mxu0 %v3359
    %4471 = vmatprep.subr.mxu0 0.0
    %4472 = vmatpush1.msra.mxu0 0.0
    %4473 = vmatprep.subr.mxu0 0.0
    %4474 = vmatpush1.msra.mxu0 0.0
    %4475 = vmatprep.subr.mxu0 0.0
    %4476 = vmatpush1.msra.mxu0 0.0
    %4477 = vmatprep.subr.mxu0 0.0
    %4478 = vmatpush1.msra.mxu0 0.0
    %4479 = vmatprep.subr.mxu0 0.0
    %4480 = vmatpush1.msra.mxu0 0.0
    %4481 = vmatprep.subr.mxu0 0.0
    %4482 = vmatpush1.msra.mxu0 0.0
    %4483 = vmatprep.subr.mxu0 0.0
    %4484 = vmatpush1.msra.mxu0 0.0
    %4485 = vmatprep.subr.mxu0 0.0
    %4486 = vmatpush1.msra.mxu0 0.0
    %4487 = vmatprep.subr.mxu0 0.0
    %4488 = vmatpush1.msra.mxu0 0.0
    %4489 = vmatprep.subr.mxu0 0.0
    %4490 = vmatpush1.msra.mxu0 0.0
    %4491 = vmatprep.subr.mxu0 0.0
    %4492 = vmatpush1.msra.mxu0 0.0
    %4493 = vmatprep.subr.mxu0 0.0
    %4494 = vmatpush1.msra.mxu0 0.0
    %4495 = vmatprep.subr.mxu0 0.0
    %4496 = vmatpush1.msra.mxu0 0.0
    %4497 = vmatprep.subr.mxu0 0.0
    %4498 = vmatpush1.msra.mxu0 0.0
    %4499 = vmatprep.subr.mxu0 0.0
    %4500 = vmatpush1.msra.mxu0 0.0
    %4501 = vmatprep.subr.mxu0 0.0
    %4502 = vmatpush1.msra.mxu0 0.0
    %4503 = vmatprep.subr.mxu0 0.0
    %4504 = vmatpush1.msra.mxu0 0.0
    %4505 = vmatprep.subr.mxu0 0.0
    %4506 = vmatpush1.msra.mxu0 0.0
    %4507 = vmatprep.subr.mxu0 0.0
    %4508 = vmatpush1.msra.mxu0 0.0
    %4509 = vmatprep.subr.mxu0 0.0
    %4510 = vmatpush1.msra.mxu0 0.0
    %4511 = vmatprep.subr.mxu0 0.0
    %4512 = vmatpush1.msra.mxu0 0.0
    %4513 = vmatprep.subr.mxu0 0.0
    %4514 = vmatpush1.msra.mxu0 0.0
    %4515 = vmatprep.subr.mxu0 0.0
    %4516 = vmatpush1.msra.mxu0 0.0
    %4517 = vmatprep.subr.mxu0 0.0
    %4518 = vmatpush1.msra.mxu0 0.0
    %4519 = vmatprep.subr.mxu0 0.0
    %4520 = vmatpush1.msra.mxu0 0.0
    %4521 = vmatprep.subr.mxu0 0.0
    %4522 = vmatpush1.msra.mxu0 0.0
    %4523 = vmatprep.subr.mxu0 0.0
    %4524 = vmatpush1.msra.mxu0 0.0
    %4525 = vmatprep.subr.mxu0 0.0
    %4526 = vmatpush1.msra.mxu0 0.0
    %4527 = vmatprep.mubr.f32.mxu0 0.0
    %4528 = vmatmul.mubr.f32.gmra.mrb[0].mxu0 %v4461
    %v4529 = vpop.f32.mrb[0].mxu0
    %v4530 = vadd.f32 %v4455, %v4529
    %v4531 = vpop.f32.mrb[0].mxu0
    %4532 = vdwg.mxu0
    %v4533 = vadd.f32 %v4530, %v3894
    %v4534 = vxor.u32 %v4533, 2147483648
    %v4535 = vmul.f32 %v4534, 1.442695
    %v4536 = vpow.pop %v4535
    %v4537 = vadd.f32 %v4536, 1.0
    %v4538 = vrcp.pop %v4537
    %v4539 = vmul.f32 1.0, %v4538
    %v4540 = vtanh.pop %v4533
    %v4541 = vmul.f32 %v4539, %v3914
    %4543 = vrot.lane.b32.xlu0 %v4540, 64
    %v4544 = vpop.permute.xlu0 %4543
    %v4546 = vmul.f32 %v4539, %v4544
    %4548 = vrot.lane.b32.xlu0 %v4546, 32
    %v4549 = vpop.permute.xlu0 %4548
    %v4551 = vadd.f32 %v4541, %v4549
    %v4552 = vtanh.pop %v4551
    %4554 = vrot.lane.b32.xlu0 %v4552, 64
    %v4555 = vpop.permute.xlu0 %4554
    %v4557 = vmul.f32 %v4539, %v4555
    %4559 = vrot.lane.b32.xlu0 %v4557, 32
    %v4560 = vpop.permute.xlu0 %4559
    %v4561 = vsel %vm95, %v4560, 0
    %4563 = vmatprep.subr.mxu0 0.0
    %4564 = vmatpush1.msra.mxu0 %v3365
    %4565 = vmatprep.subr.mxu0 0.0
    %4566 = vmatpush1.msra.mxu0 %v3366
    %4567 = vmatprep.subr.mxu0 0.0
    %4568 = vmatpush1.msra.mxu0 %v3367
    %4569 = vmatprep.subr.mxu0 0.0
    %4570 = vmatpush1.msra.mxu0 %v3368
    %4571 = vmatprep.subr.mxu0 0.0
    %4572 = vmatpush1.msra.mxu0 0.0
    %4573 = vmatprep.subr.mxu0 0.0
    %4574 = vmatpush1.msra.mxu0 0.0
    %4575 = vmatprep.subr.mxu0 0.0
    %4576 = vmatpush1.msra.mxu0 0.0
    %4577 = vmatprep.subr.mxu0 0.0
    %4578 = vmatpush1.msra.mxu0 0.0
    %4579 = vmatprep.subr.mxu0 0.0
    %4580 = vmatpush1.msra.mxu0 0.0
    %4581 = vmatprep.subr.mxu0 0.0
    %4582 = vmatpush1.msra.mxu0 0.0
    %4583 = vmatprep.subr.mxu0 0.0
    %4584 = vmatpush1.msra.mxu0 0.0
    %4585 = vmatprep.subr.mxu0 0.0
    %4586 = vmatpush1.msra.mxu0 0.0
    %4587 = vmatprep.subr.mxu0 0.0
    %4588 = vmatpush1.msra.mxu0 0.0
    %4589 = vmatprep.subr.mxu0 0.0
    %4590 = vmatpush1.msra.mxu0 0.0
    %4591 = vmatprep.subr.mxu0 0.0
    %4592 = vmatpush1.msra.mxu0 0.0
    %4593 = vmatprep.subr.mxu0 0.0
    %4594 = vmatpush1.msra.mxu0 0.0
    %4595 = vmatprep.subr.mxu0 0.0
    %4596 = vmatpush1.msra.mxu0 0.0
    %4597 = vmatprep.subr.mxu0 0.0
    %4598 = vmatpush1.msra.mxu0 0.0
    %4599 = vmatprep.subr.mxu0 0.0
    %4600 = vmatpush1.msra.mxu0 0.0
    %4601 = vmatprep.subr.mxu0 0.0
    %4602 = vmatpush1.msra.mxu0 0.0
    %4603 = vmatprep.subr.mxu0 0.0
    %4604 = vmatpush1.msra.mxu0 0.0
    %4605 = vmatprep.subr.mxu0 0.0
    %4606 = vmatpush1.msra.mxu0 0.0
    %4607 = vmatprep.subr.mxu0 0.0
    %4608 = vmatpush1.msra.mxu0 0.0
    %4609 = vmatprep.subr.mxu0 0.0
    %4610 = vmatpush1.msra.mxu0 0.0
    %4611 = vmatprep.subr.mxu0 0.0
    %4612 = vmatpush1.msra.mxu0 0.0
    %4613 = vmatprep.subr.mxu0 0.0
    %4614 = vmatpush1.msra.mxu0 0.0
    %4615 = vmatprep.subr.mxu0 0.0
    %4616 = vmatpush1.msra.mxu0 0.0
    %4617 = vmatprep.subr.mxu0 0.0
    %4618 = vmatpush1.msra.mxu0 0.0
    %4619 = vmatprep.subr.mxu0 0.0
    %4620 = vmatpush1.msra.mxu0 0.0
    %4621 = vmatprep.subr.mxu0 0.0
    %4622 = vmatpush1.msra.mxu0 0.0
    %4623 = vmatprep.subr.mxu0 0.0
    %4624 = vmatpush1.msra.mxu0 0.0
    %4625 = vmatprep.subr.mxu0 0.0
    %4626 = vmatpush1.msra.mxu0 0.0
    %4627 = vmatprep.mubr.f32.mxu0 0.0
    %4628 = vmatmul.mubr.f32.gmra.mrb[0].mxu0 %v4561
    %v4629 = vpop.f32.mrb[0].mxu0
    %v4630 = vadd.f32 %v3925, %v4629
    %v4631 = vpop.f32.mrb[0].mxu0
    %4632 = vdwg.mxu0
    %v4633 = vsel %vm95, %v4630, -inf
    %4634 = vmax.xlane.f32.xlu0 %v4633
    %v4635 = vpop.xlane.xlu0 %4634
    %v4636 = vsub.f32 %v4630, %v4635
    %v4637 = vmul.f32 %v4636, 1.442695
    %v4638 = vpow.pop %v4637
    %v4639 = vsel %vm95, %v4638, 0.0
    %4640 = vadd.xlane.f32.xlu0 %v4639
    %v4641 = vpop.xlane.xlu0 %4640
    %v4642 = vlog2.pop %v4641
    %v4643 = vmul.f32 %v4642, 0.6931472
    %v4644 = vadd.f32 %v4643, %v4635
    %4645 = vset.pattern.permute.xlu0 2
    %4646 = vperm.xlu0 %4645, %v3376
    %v4647 = vpop.permute.xlu0 %4646
    %vm4648 = vcmp.eq.s32.totalorder %v3378, %v4647
    %v4649 = vsel %vm4648, %v4630, 0.0
    %v4650 = vsel %vm95, %v4649, 0.0
    %4651 = vadd.xlane.f32.xlu0 %v4650
    %v4652 = vpop.xlane.xlu0 %4651
    %v4653 = vsub.f32 %v4644, %v4652
    %v4654 = vmul.f32 %v4653, %v4004
    %vm4655 = vcmask 23568
    %v4656 = vsel %vm4655, %v4654, 0.0
    %v4657 = vrot.slane %v4656, 4
    %v4658 = vadd.f32 %v4656, %v4657
    %v4659 = vrot.slane %v4658, 2
    %v4660 = vadd.f32 %v4658, %v4659
    %v4661 = vrot.slane %v4660, 1
    %v4662 = vadd.f32 %v4660, %v4661
    %4664 = vrot.lane.b32.xlu0 %v4662, 127
    %v4665 = vpop.permute.xlu0 %4664
    %v4667 = vadd.f32 %v4035, %v4665
    %v4668 = vsel %vm4655, %v4004, 0.0
    %v4669 = vrot.slane %v4668, 4
    %v4670 = vadd.f32 %v4668, %v4669
    %v4671 = vrot.slane %v4670, 2
    %v4672 = vadd.f32 %v4670, %v4671
    %v4673 = vrot.slane %v4672, 1
    %v4674 = vadd.f32 %v4672, %v4673
    %4676 = vrot.lane.b32.xlu0 %v4674, 127
    %v4677 = vpop.permute.xlu0 %4676
    %v4679 = vadd.f32 %v4043, %v4677
    %4680 = vmatprep.subr.mxu0 0.0
    %4681 = vmatpush1.msra.mxu0 %v3370
    %4682 = vmatprep.subr.mxu0 0.0
    %4683 = vmatpush1.msra.mxu0 %v3371
    %4684 = vmatprep.subr.mxu0 0.0
    %4685 = vmatpush1.msra.mxu0 %v3372
    %4686 = vmatprep.subr.mxu0 0.0
    %4687 = vmatpush1.msra.mxu0 %v3373
    %4688 = vmatprep.subr.mxu0 0.0
    %4689 = vmatpush1.msra.mxu0 0.0
    %4690 = vmatprep.subr.mxu0 0.0
    %4691 = vmatpush1.msra.mxu0 0.0
    %4692 = vmatprep.subr.mxu0 0.0
    %4693 = vmatpush1.msra.mxu0 0.0
    %4694 = vmatprep.subr.mxu0 0.0
    %4695 = vmatpush1.msra.mxu0 0.0
    %4696 = vmatprep.subr.mxu0 0.0
    %4697 = vmatpush1.msra.mxu0 0.0
    %4698 = vmatprep.subr.mxu0 0.0
    %4699 = vmatpush1.msra.mxu0 0.0
    %4700 = vmatprep.subr.mxu0 0.0
    %4701 = vmatpush1.msra.mxu0 0.0
    %4702 = vmatprep.subr.mxu0 0.0
    %4703 = vmatpush1.msra.mxu0 0.0
    %4704 = vmatprep.subr.mxu0 0.0
    %4705 = vmatpush1.msra.mxu0 0.0
    %4706 = vmatprep.subr.mxu0 0.0
    %4707 = vmatpush1.msra.mxu0 0.0
    %4708 = vmatprep.subr.mxu0 0.0
    %4709 = vmatpush1.msra.mxu0 0.0
    %4710 = vmatprep.subr.mxu0 0.0
    %4711 = vmatpush1.msra.mxu0 0.0
    %4712 = vmatprep.subr.mxu0 0.0
    %4713 = vmatpush1.msra.mxu0 0.0
    %4714 = vmatprep.subr.mxu0 0.0
    %4715 = vmatpush1.msra.mxu0 0.0
    %4716 = vmatprep.subr.mxu0 0.0
    %4717 = vmatpush1.msra.mxu0 0.0
    %4718 = vmatprep.subr.mxu0 0.0
    %4719 = vmatpush1.msra.mxu0 0.0
    %4720 = vmatprep.subr.mxu0 0.0
    %4721 = vmatpush1.msra.mxu0 0.0
    %4722 = vmatprep.subr.mxu0 0.0
    %4723 = vmatpush1.msra.mxu0 0.0
    %4724 = vmatprep.subr.mxu0 0.0
    %4725 = vmatpush1.msra.mxu0 0.0
    %4726 = vmatprep.subr.mxu0 0.0
    %4727 = vmatpush1.msra.mxu0 0.0
    %4728 = vmatprep.subr.mxu0 0.0
    %4729 = vmatpush1.msra.mxu0 0.0
    %4730 = vmatprep.subr.mxu0 0.0
    %4731 = vmatpush1.msra.mxu0 0.0
    %4732 = vmatprep.subr.mxu0 0.0
    %4733 = vmatpush1.msra.mxu0 0.0
    %4734 = vmatprep.subr.mxu0 0.0
    %4735 = vmatpush1.msra.mxu0 0.0
    %4736 = vmatprep.subr.mxu0 0.0
    %4737 = vmatpush1.msra.mxu0 0.0
    %4738 = vmatprep.subr.mxu0 0.0
    %4739 = vmatpush1.msra.mxu0 0.0
    %4740 = vmatprep.subr.mxu0 0.0
    %4741 = vmatpush1.msra.mxu0 0.0
    %4742 = vmatprep.subr.mxu0 0.0
    %4743 = vmatpush1.msra.mxu0 0.0
    %4744 = vmatprep.mubr.f32.mxu0 0.0
    %4745 = vmatmul.mubr.f32.gmra.mrb[0].mxu0 %v4561
    %v4746 = vpop.f32.mrb[0].mxu0
    %v4747 = vadd.f32 %v3383, %v4746
    %v4748 = vpop.f32.mrb[0].mxu0
    %4749 = vdwg.mxu0
    %v4750 = vadd.f32 %v4747, %v608
    %v4751 = vtanh.pop %v4750
    %v4752 = vmul.f32 %v4751, %v3466
    %v4753 = vsel %vm95, %v4752, 0.0
    %4754 = vadd.xlane.f32.xlu0 %v4753
    %v4755 = vpop.xlane.xlu0 %4754
    %v4756 = vadd.f32 %v4747, %v978
    %v4757 = vtanh.pop %v4756
    %v4758 = vmul.f32 %v4757, %v3466
    %v4759 = vsel %vm95, %v4758, 0.0
    %4760 = vadd.xlane.f32.xlu0 %v4759
    %v4761 = vpop.xlane.xlu0 %4760
    %v4762 = vadd.f32 %v4747, %v1348
    %v4763 = vtanh.pop %v4762
    %v4764 = vmul.f32 %v4763, %v3466
    %v4765 = vsel %vm95, %v4764, 0.0
    %4766 = vadd.xlane.f32.xlu0 %v4765
    %v4767 = vpop.xlane.xlu0 %4766
    %v4768 = vadd.f32 %v4747, %v1718
    %v4769 = vtanh.pop %v4768
    %v4770 = vmul.f32 %v4769, %v3466
    %v4771 = vsel %vm95, %v4770, 0.0
    %4772 = vadd.xlane.f32.xlu0 %v4771
    %v4773 = vpop.xlane.xlu0 %4772
    %v4774 = vadd.f32 %v4747, %v2088
    %v4775 = vtanh.pop %v4774
    %v4776 = vmul.f32 %v4775, %v3466
    %v4777 = vsel %vm95, %v4776, 0.0
    %4778 = vadd.xlane.f32.xlu0 %v4777
    %v4779 = vpop.xlane.xlu0 %4778
    %v4780 = vadd.f32 %v4747, %v2458
    %v4781 = vtanh.pop %v4780
    %v4782 = vmul.f32 %v4781, %v3466
    %v4783 = vsel %vm95, %v4782, 0.0
    %4784 = vadd.xlane.f32.xlu0 %v4783
    %v4785 = vpop.xlane.xlu0 %4784
    %v4786 = vadd.f32 %v4747, %v2828
    %v4787 = vtanh.pop %v4786
    %v4788 = vmul.f32 %v4787, %v3466
    %v4789 = vsel %vm95, %v4788, 0.0
    %4790 = vadd.xlane.f32.xlu0 %v4789
    %v4791 = vpop.xlane.xlu0 %4790
    %v4792 = vadd.f32 %v4747, %v3198
    %v4793 = vtanh.pop %v4792
    %v4794 = vmul.f32 %v4793, %v3466
    %v4795 = vsel %vm95, %v4794, 0.0
    %4796 = vadd.xlane.f32.xlu0 %v4795
    %v4797 = vpop.xlane.xlu0 %4796
    %v4798 = vmax.f32 %v4755, %v4761
    %v4799 = vmax.f32 %v4798, %v4767
    %v4800 = vmax.f32 %v4799, %v4773
    %v4801 = vmax.f32 %v4800, %v4779
    %v4802 = vmax.f32 %v4801, %v4785
    %v4803 = vmax.f32 %v4802, %v4791
    %v4804 = vmax.f32 %v4803, %v4797
    %v4805 = vsub.f32 %v4755, %v4804
    %v4806 = vmul.f32 %v4805, 1.442695
    %v4807 = vpow.pop %v4806
    %v4808 = vsub.f32 %v4761, %v4804
    %v4809 = vmul.f32 %v4808, 1.442695
    %v4810 = vpow.pop %v4809
    %v4811 = vsub.f32 %v4767, %v4804
    %v4812 = vmul.f32 %v4811, 1.442695
    %v4813 = vpow.pop %v4812
    %v4814 = vsub.f32 %v4773, %v4804
    %v4815 = vmul.f32 %v4814, 1.442695
    %v4816 = vpow.pop %v4815
    %v4817 = vsub.f32 %v4779, %v4804
    %v4818 = vmul.f32 %v4817, 1.442695
    %v4819 = vpow.pop %v4818
    %v4820 = vsub.f32 %v4785, %v4804
    %v4821 = vmul.f32 %v4820, 1.442695
    %v4822 = vpow.pop %v4821
    %v4823 = vsub.f32 %v4791, %v4804
    %v4824 = vmul.f32 %v4823, 1.442695
    %v4825 = vpow.pop %v4824
    %v4826 = vsub.f32 %v4797, %v4804
    %v4827 = vmul.f32 %v4826, 1.442695
    %v4828 = vpow.pop %v4827
    %v4829 = vadd.f32 %v4807, %v4810
    %v4830 = vadd.f32 %v4829, %v4813
    %v4831 = vadd.f32 %v4830, %v4816
    %v4832 = vadd.f32 %v4831, %v4819
    %v4833 = vadd.f32 %v4832, %v4822
    %v4834 = vadd.f32 %v4833, %v4825
    %v4835 = vadd.f32 %v4834, %v4828
    %v4836 = vmul.f32 %v4807, %v532
    %v4837 = vmul.f32 %v4810, %v900
    %v4838 = vadd.f32 %v4836, %v4837
    %v4839 = vmul.f32 %v4813, %v1270
    %v4840 = vadd.f32 %v4838, %v4839
    %v4841 = vmul.f32 %v4816, %v1640
    %v4842 = vadd.f32 %v4840, %v4841
    %v4843 = vmul.f32 %v4819, %v2010
    %v4844 = vadd.f32 %v4842, %v4843
    %v4845 = vmul.f32 %v4822, %v2380
    %v4846 = vadd.f32 %v4844, %v4845
    %v4847 = vmul.f32 %v4825, %v2750
    %v4848 = vadd.f32 %v4846, %v4847
    %v4849 = vmul.f32 %v4828, %v3120
    %v4850 = vadd.f32 %v4848, %v4849
    %v4851 = vrcp.pop %v4835
    %v4852 = vmul.f32 %v4850, %v4851
    %4854 = vrot.lane.b32.xlu0 %v4852, 32
    %v4855 = vpop.permute.xlu0 %4854
    %v4856 = vsel %vm95, %v4855, 0
    %4858 = vmatprep.subr.mxu0 0.0
    %4859 = vmatpush1.msra.mxu0 %v3348
    %4860 = vmatprep.subr.mxu0 0.0
    %4861 = vmatpush1.msra.mxu0 %v3349
    %4862 = vmatprep.subr.mxu0 0.0
    %4863 = vmatpush1.msra.mxu0 %v3350
    %4864 = vmatprep.subr.mxu0 0.0
    %4865 = vmatpush1.msra.mxu0 %v3351
    %4866 = vmatprep.subr.mxu0 0.0
    %4867 = vmatpush1.msra.mxu0 0.0
    %4868 = vmatprep.subr.mxu0 0.0
    %4869 = vmatpush1.msra.mxu0 0.0
    %4870 = vmatprep.subr.mxu0 0.0
    %4871 = vmatpush1.msra.mxu0 0.0
    %4872 = vmatprep.subr.mxu0 0.0
    %4873 = vmatpush1.msra.mxu0 0.0
    %4874 = vmatprep.subr.mxu0 0.0
    %4875 = vmatpush1.msra.mxu0 0.0
    %4876 = vmatprep.subr.mxu0 0.0
    %4877 = vmatpush1.msra.mxu0 0.0
    %4878 = vmatprep.subr.mxu0 0.0
    %4879 = vmatpush1.msra.mxu0 0.0
    %4880 = vmatprep.subr.mxu0 0.0
    %4881 = vmatpush1.msra.mxu0 0.0
    %4882 = vmatprep.subr.mxu0 0.0
    %4883 = vmatpush1.msra.mxu0 0.0
    %4884 = vmatprep.subr.mxu0 0.0
    %4885 = vmatpush1.msra.mxu0 0.0
    %4886 = vmatprep.subr.mxu0 0.0
    %4887 = vmatpush1.msra.mxu0 0.0
    %4888 = vmatprep.subr.mxu0 0.0
    %4889 = vmatpush1.msra.mxu0 0.0
    %4890 = vmatprep.subr.mxu0 0.0
    %4891 = vmatpush1.msra.mxu0 0.0
    %4892 = vmatprep.subr.mxu0 0.0
    %4893 = vmatpush1.msra.mxu0 0.0
    %4894 = vmatprep.subr.mxu0 0.0
    %4895 = vmatpush1.msra.mxu0 0.0
    %4896 = vmatprep.subr.mxu0 0.0
    %4897 = vmatpush1.msra.mxu0 0.0
    %4898 = vmatprep.subr.mxu0 0.0
    %4899 = vmatpush1.msra.mxu0 0.0
    %4900 = vmatprep.subr.mxu0 0.0
    %4901 = vmatpush1.msra.mxu0 0.0
    %4902 = vmatprep.subr.mxu0 0.0
    %4903 = vmatpush1.msra.mxu0 0.0
    %4904 = vmatprep.subr.mxu0 0.0
    %4905 = vmatpush1.msra.mxu0 0.0
    %4906 = vmatprep.subr.mxu0 0.0
    %4907 = vmatpush1.msra.mxu0 0.0
    %4908 = vmatprep.subr.mxu0 0.0
    %4909 = vmatpush1.msra.mxu0 0.0
    %4910 = vmatprep.subr.mxu0 0.0
    %4911 = vmatpush1.msra.mxu0 0.0
    %4912 = vmatprep.subr.mxu0 0.0
    %4913 = vmatpush1.msra.mxu0 0.0
    %4914 = vmatprep.subr.mxu0 0.0
    %4915 = vmatpush1.msra.mxu0 0.0
    %4916 = vmatprep.subr.mxu0 0.0
    %4917 = vmatpush1.msra.mxu0 0.0
    %4918 = vmatprep.subr.mxu0 0.0
    %4919 = vmatpush1.msra.mxu0 0.0
    %4920 = vmatprep.subr.mxu0 0.0
    %4921 = vmatpush1.msra.mxu0 0.0
    %4922 = vmatprep.mubr.f32.mxu0 0.0
    %4923 = vmatmul.mubr.f32.gmra.mrb[0].mxu0 %v4856
    %v4924 = vpop.f32.mrb[0].mxu0
    %v4925 = vadd.f32 0.0, %v4924
    %v4926 = vpop.f32.mrb[0].mxu0
    %4927 = vdwg.mxu0
    %v4928 = vadd.f32 %v3321, %v4925
    %4929 = vmatprep.subr.mxu0 0.0
    %4930 = vmatpush1.msra.mxu0 %v3352
    %4931 = vmatprep.subr.mxu0 0.0
    %4932 = vmatpush1.msra.mxu0 %v3353
    %4933 = vmatprep.subr.mxu0 0.0
    %4934 = vmatpush1.msra.mxu0 %v3354
    %4935 = vmatprep.subr.mxu0 0.0
    %4936 = vmatpush1.msra.mxu0 %v3355
    %4937 = vmatprep.subr.mxu0 0.0
    %4938 = vmatpush1.msra.mxu0 0.0
    %4939 = vmatprep.subr.mxu0 0.0
    %4940 = vmatpush1.msra.mxu0 0.0
    %4941 = vmatprep.subr.mxu0 0.0
    %4942 = vmatpush1.msra.mxu0 0.0
    %4943 = vmatprep.subr.mxu0 0.0
    %4944 = vmatpush1.msra.mxu0 0.0
    %4945 = vmatprep.subr.mxu0 0.0
    %4946 = vmatpush1.msra.mxu0 0.0
    %4947 = vmatprep.subr.mxu0 0.0
    %4948 = vmatpush1.msra.mxu0 0.0
    %4949 = vmatprep.subr.mxu0 0.0
    %4950 = vmatpush1.msra.mxu0 0.0
    %4951 = vmatprep.subr.mxu0 0.0
    %4952 = vmatpush1.msra.mxu0 0.0
    %4953 = vmatprep.subr.mxu0 0.0
    %4954 = vmatpush1.msra.mxu0 0.0
    %4955 = vmatprep.subr.mxu0 0.0
    %4956 = vmatpush1.msra.mxu0 0.0
    %4957 = vmatprep.subr.mxu0 0.0
    %4958 = vmatpush1.msra.mxu0 0.0
    %4959 = vmatprep.subr.mxu0 0.0
    %4960 = vmatpush1.msra.mxu0 0.0
    %4961 = vmatprep.subr.mxu0 0.0
    %4962 = vmatpush1.msra.mxu0 0.0
    %4963 = vmatprep.subr.mxu0 0.0
    %4964 = vmatpush1.msra.mxu0 0.0
    %4965 = vmatprep.subr.mxu0 0.0
    %4966 = vmatpush1.msra.mxu0 0.0
    %4967 = vmatprep.subr.mxu0 0.0
    %4968 = vmatpush1.msra.mxu0 0.0
    %4969 = vmatprep.subr.mxu0 0.0
    %4970 = vmatpush1.msra.mxu0 0.0
    %4971 = vmatprep.subr.mxu0 0.0
    %4972 = vmatpush1.msra.mxu0 0.0
    %4973 = vmatprep.subr.mxu0 0.0
    %4974 = vmatpush1.msra.mxu0 0.0
    %4975 = vmatprep.subr.mxu0 0.0
    %4976 = vmatpush1.msra.mxu0 0.0
    %4977 = vmatprep.subr.mxu0 0.0
    %4978 = vmatpush1.msra.mxu0 0.0
    %4979 = vmatprep.subr.mxu0 0.0
    %4980 = vmatpush1.msra.mxu0 0.0
    %4981 = vmatprep.subr.mxu0 0.0
    %4982 = vmatpush1.msra.mxu0 0.0
    %4983 = vmatprep.subr.mxu0 0.0
    %4984 = vmatpush1.msra.mxu0 0.0
    %4985 = vmatprep.subr.mxu0 0.0
    %4986 = vmatpush1.msra.mxu0 0.0
    %4987 = vmatprep.subr.mxu0 0.0
    %4988 = vmatpush1.msra.mxu0 0.0
    %4989 = vmatprep.subr.mxu0 0.0
    %4990 = vmatpush1.msra.mxu0 0.0
    %4991 = vmatprep.subr.mxu0 0.0
    %4992 = vmatpush1.msra.mxu0 0.0
    %4993 = vmatprep.mubr.f32.mxu0 0.0
    %4994 = vmatmul.mubr.f32.gmra.mrb[0].mxu0 %v4461
    %v4995 = vpop.f32.mrb[0].mxu0
    %v4996 = vadd.f32 0.0, %v4995
    %v4997 = vpop.f32.mrb[0].mxu0
    %4998 = vdwg.mxu0
    %v4999 = vadd.f32 %v4928, %v4996
    %v5000 = vxor.u32 %v4999, 2147483648
    %v5001 = vmul.f32 %v5000, 1.442695
    %v5002 = vpow.pop %v5001
    %v5003 = vadd.f32 %v5002, 1.0
    %v5004 = vrcp.pop %v5003
    %v5005 = vmul.f32 1.0, %v5004
    %v5006 = vtanh.pop %v4999
    %v5007 = vmul.f32 %v5005, %v4381
    %5009 = vrot.lane.b32.xlu0 %v5006, 64
    %v5010 = vpop.permute.xlu0 %5009
    %v5012 = vmul.f32 %v5005, %v5010
    %5014 = vrot.lane.b32.xlu0 %v5012, 32
    %v5015 = vpop.permute.xlu0 %5014
    %v5017 = vadd.f32 %v5007, %v5015
    %v5018 = vtanh.pop %v5017
    %5020 = vrot.lane.b32.xlu0 %v5018, 64
    %v5021 = vpop.permute.xlu0 %5020
    %v5023 = vmul.f32 %v5005, %v5021
    %5024 = vmatprep.subr.mxu0 0.0
    %5025 = vmatpush1.msra.mxu0 %v3360
    %5026 = vmatprep.subr.mxu0 0.0
    %5027 = vmatpush1.msra.mxu0 %v3361
    %5028 = vmatprep.subr.mxu0 0.0
    %5029 = vmatpush1.msra.mxu0 %v3362
    %5030 = vmatprep.subr.mxu0 0.0
    %5031 = vmatpush1.msra.mxu0 %v3363
    %5032 = vmatprep.subr.mxu0 0.0
    %5033 = vmatpush1.msra.mxu0 0.0
    %5034 = vmatprep.subr.mxu0 0.0
    %5035 = vmatpush1.msra.mxu0 0.0
    %5036 = vmatprep.subr.mxu0 0.0
    %5037 = vmatpush1.msra.mxu0 0.0
    %5038 = vmatprep.subr.mxu0 0.0
    %5039 = vmatpush1.msra.mxu0 0.0
    %5040 = vmatprep.subr.mxu0 0.0
    %5041 = vmatpush1.msra.mxu0 0.0
    %5042 = vmatprep.subr.mxu0 0.0
    %5043 = vmatpush1.msra.mxu0 0.0
    %5044 = vmatprep.subr.mxu0 0.0
    %5045 = vmatpush1.msra.mxu0 0.0
    %5046 = vmatprep.subr.mxu0 0.0
    %5047 = vmatpush1.msra.mxu0 0.0
    %5048 = vmatprep.subr.mxu0 0.0
    %5049 = vmatpush1.msra.mxu0 0.0
    %5050 = vmatprep.subr.mxu0 0.0
    %5051 = vmatpush1.msra.mxu0 0.0
    %5052 = vmatprep.subr.mxu0 0.0
    %5053 = vmatpush1.msra.mxu0 0.0
    %5054 = vmatprep.subr.mxu0 0.0
    %5055 = vmatpush1.msra.mxu0 0.0
    %5056 = vmatprep.subr.mxu0 0.0
    %5057 = vmatpush1.msra.mxu0 0.0
    %5058 = vmatprep.subr.mxu0 0.0
    %5059 = vmatpush1.msra.mxu0 0.0
    %5060 = vmatprep.subr.mxu0 0.0
    %5061 = vmatpush1.msra.mxu0 0.0
    %5062 = vmatprep.subr.mxu0 0.0
    %5063 = vmatpush1.msra.mxu0 0.0
    %5064 = vmatprep.subr.mxu0 0.0
    %5065 = vmatpush1.msra.mxu0 0.0
    %5066 = vmatprep.subr.mxu0 0.0
    %5067 = vmatpush1.msra.mxu0 0.0
    %5068 = vmatprep.subr.mxu0 0.0
    %5069 = vmatpush1.msra.mxu0 0.0
    %5070 = vmatprep.subr.mxu0 0.0
    %5071 = vmatpush1.msra.mxu0 0.0
    %5072 = vmatprep.subr.mxu0 0.0
    %5073 = vmatpush1.msra.mxu0 0.0
    %5074 = vmatprep.subr.mxu0 0.0
    %5075 = vmatpush1.msra.mxu0 0.0
    %5076 = vmatprep.subr.mxu0 0.0
    %5077 = vmatpush1.msra.mxu0 0.0
    %5078 = vmatprep.subr.mxu0 0.0
    %5079 = vmatpush1.msra.mxu0 0.0
    %5080 = vmatprep.subr.mxu0 0.0
    %5081 = vmatpush1.msra.mxu0 0.0
    %5082 = vmatprep.subr.mxu0 0.0
    %5083 = vmatpush1.msra.mxu0 0.0
    %5084 = vmatprep.subr.mxu0 0.0
    %5085 = vmatpush1.msra.mxu0 0.0
    %5086 = vmatprep.subr.mxu0 0.0
    %5087 = vmatpush1.msra.mxu0 0.0
    %5088 = vmatprep.mubr.f32.mxu0 0.0
    %5089 = vmatmul.mubr.f32.gmra.mrb[0].mxu0 %v4561
    %v5090 = vpop.f32.mrb[0].mxu0
    %v5091 = vadd.f32 0.0, %v5090
    %v5092 = vpop.f32.mrb[0].mxu0
    %5093 = vdwg.mxu0
    %5095 = vrot.lane.b32.xlu0 %v5023, 32
    %v5096 = vpop.permute.xlu0 %5095
    %v5097 = vsel %vm95, %v5096, 0
    %5099 = vmatprep.subr.mxu0 0.0
    %5100 = vmatpush1.msra.mxu0 %v3356
    %5101 = vmatprep.subr.mxu0 0.0
    %5102 = vmatpush1.msra.mxu0 %v3357
    %5103 = vmatprep.subr.mxu0 0.0
    %5104 = vmatpush1.msra.mxu0 %v3358
    %5105 = vmatprep.subr.mxu0 0.0
    %5106 = vmatpush1.msra.mxu0 %v3359
    %5107 = vmatprep.subr.mxu0 0.0
    %5108 = vmatpush1.msra.mxu0 0.0
    %5109 = vmatprep.subr.mxu0 0.0
    %5110 = vmatpush1.msra.mxu0 0.0
    %5111 = vmatprep.subr.mxu0 0.0
    %5112 = vmatpush1.msra.mxu0 0.0
    %5113 = vmatprep.subr.mxu0 0.0
    %5114 = vmatpush1.msra.mxu0 0.0
    %5115 = vmatprep.subr.mxu0 0.0
    %5116 = vmatpush1.msra.mxu0 0.0
    %5117 = vmatprep.subr.mxu0 0.0
    %5118 = vmatpush1.msra.mxu0 0.0
    %5119 = vmatprep.subr.mxu0 0.0
    %5120 = vmatpush1.msra.mxu0 0.0
    %5121 = vmatprep.subr.mxu0 0.0
    %5122 = vmatpush1.msra.mxu0 0.0
    %5123 = vmatprep.subr.mxu0 0.0
    %5124 = vmatpush1.msra.mxu0 0.0
    %5125 = vmatprep.subr.mxu0 0.0
    %5126 = vmatpush1.msra.mxu0 0.0
    %5127 = vmatprep.subr.mxu0 0.0
    %5128 = vmatpush1.msra.mxu0 0.0
    %5129 = vmatprep.subr.mxu0 0.0
    %5130 = vmatpush1.msra.mxu0 0.0
    %5131 = vmatprep.subr.mxu0 0.0
    %5132 = vmatpush1.msra.mxu0 0.0
    %5133 = vmatprep.subr.mxu0 0.0
    %5134 = vmatpush1.msra.mxu0 0.0
    %5135 = vmatprep.subr.mxu0 0.0
    %5136 = vmatpush1.msra.mxu0 0.0
    %5137 = vmatprep.subr.mxu0 0.0
    %5138 = vmatpush1.msra.mxu0 0.0
    %5139 = vmatprep.subr.mxu0 0.0
    %5140 = vmatpush1.msra.mxu0 0.0
    %5141 = vmatprep.subr.mxu0 0.0
    %5142 = vmatpush1.msra.mxu0 0.0
    %5143 = vmatprep.subr.mxu0 0.0
    %5144 = vmatpush1.msra.mxu0 0.0
    %5145 = vmatprep.subr.mxu0 0.0
    %5146 = vmatpush1.msra.mxu0 0.0
    %5147 = vmatprep.subr.mxu0 0.0
    %5148 = vmatpush1.msra.mxu0 0.0
    %5149 = vmatprep.subr.mxu0 0.0
    %5150 = vmatpush1.msra.mxu0 0.0
    %5151 = vmatprep.subr.mxu0 0.0
    %5152 = vmatpush1.msra.mxu0 0.0
    %5153 = vmatprep.subr.mxu0 0.0
    %5154 = vmatpush1.msra.mxu0 0.0
    %5155 = vmatprep.subr.mxu0 0.0
    %5156 = vmatpush1.msra.mxu0 0.0
    %5157 = vmatprep.subr.mxu0 0.0
    %5158 = vmatpush1.msra.mxu0 0.0
    %5159 = vmatprep.subr.mxu0 0.0
    %5160 = vmatpush1.msra.mxu0 0.0
    %5161 = vmatprep.subr.mxu0 0.0
    %5162 = vmatpush1.msra.mxu0 0.0
    %5163 = vmatprep.mubr.f32.mxu0 0.0
    %5164 = vmatmul.mubr.f32.gmra.mrb[0].mxu0 %v5097
    %v5165 = vpop.f32.mrb[0].mxu0
    %v5166 = vadd.f32 %v5091, %v5165
    %v5167 = vpop.f32.mrb[0].mxu0
    %5168 = vdwg.mxu0
    %v5169 = vadd.f32 %v5166, %v3894
    %v5170 = vxor.u32 %v5169, 2147483648
    %v5171 = vmul.f32 %v5170, 1.442695
    %v5172 = vpow.pop %v5171
    %v5173 = vadd.f32 %v5172, 1.0
    %v5174 = vrcp.pop %v5173
    %v5175 = vmul.f32 1.0, %v5174
    %v5176 = vtanh.pop %v5169
    %v5177 = vmul.f32 %v5175, %v4551
    %5179 = vrot.lane.b32.xlu0 %v5176, 64
    %v5180 = vpop.permute.xlu0 %5179
    %v5182 = vmul.f32 %v5175, %v5180
    %5184 = vrot.lane.b32.xlu0 %v5182, 32
    %v5185 = vpop.permute.xlu0 %5184
    %v5187 = vadd.f32 %v5177, %v5185
    %v5188 = vtanh.pop %v5187
    %5190 = vrot.lane.b32.xlu0 %v5188, 64
    %v5191 = vpop.permute.xlu0 %5190
    %v5193 = vmul.f32 %v5175, %v5191
    %5195 = vrot.lane.b32.xlu0 %v5193, 32
    %v5196 = vpop.permute.xlu0 %5195
    %v5197 = vsel %vm95, %v5196, 0
    %5199 = vmatprep.subr.mxu0 0.0
    %5200 = vmatpush1.msra.mxu0 %v3365
    %5201 = vmatprep.subr.mxu0 0.0
    %5202 = vmatpush1.msra.mxu0 %v3366
    %5203 = vmatprep.subr.mxu0 0.0
    %5204 = vmatpush1.msra.mxu0 %v3367
    %5205 = vmatprep.subr.mxu0 0.0
    %5206 = vmatpush1.msra.mxu0 %v3368
    %5207 = vmatprep.subr.mxu0 0.0
    %5208 = vmatpush1.msra.mxu0 0.0
    %5209 = vmatprep.subr.mxu0 0.0
    %5210 = vmatpush1.msra.mxu0 0.0
    %5211 = vmatprep.subr.mxu0 0.0
    %5212 = vmatpush1.msra.mxu0 0.0
    %5213 = vmatprep.subr.mxu0 0.0
    %5214 = vmatpush1.msra.mxu0 0.0
    %5215 = vmatprep.subr.mxu0 0.0
    %5216 = vmatpush1.msra.mxu0 0.0
    %5217 = vmatprep.subr.mxu0 0.0
    %5218 = vmatpush1.msra.mxu0 0.0
    %5219 = vmatprep.subr.mxu0 0.0
    %5220 = vmatpush1.msra.mxu0 0.0
    %5221 = vmatprep.subr.mxu0 0.0
    %5222 = vmatpush1.msra.mxu0 0.0
    %5223 = vmatprep.subr.mxu0 0.0
    %5224 = vmatpush1.msra.mxu0 0.0
    %5225 = vmatprep.subr.mxu0 0.0
    %5226 = vmatpush1.msra.mxu0 0.0
    %5227 = vmatprep.subr.mxu0 0.0
    %5228 = vmatpush1.msra.mxu0 0.0
    %5229 = vmatprep.subr.mxu0 0.0
    %5230 = vmatpush1.msra.mxu0 0.0
    %5231 = vmatprep.subr.mxu0 0.0
    %5232 = vmatpush1.msra.mxu0 0.0
    %5233 = vmatprep.subr.mxu0 0.0
    %5234 = vmatpush1.msra.mxu0 0.0
    %5235 = vmatprep.subr.mxu0 0.0
    %5236 = vmatpush1.msra.mxu0 0.0
    %5237 = vmatprep.subr.mxu0 0.0
    %5238 = vmatpush1.msra.mxu0 0.0
    %5239 = vmatprep.subr.mxu0 0.0
    %5240 = vmatpush1.msra.mxu0 0.0
    %5241 = vmatprep.subr.mxu0 0.0
    %5242 = vmatpush1.msra.mxu0 0.0
    %5243 = vmatprep.subr.mxu0 0.0
    %5244 = vmatpush1.msra.mxu0 0.0
    %5245 = vmatprep.subr.mxu0 0.0
    %5246 = vmatpush1.msra.mxu0 0.0
    %5247 = vmatprep.subr.mxu0 0.0
    %5248 = vmatpush1.msra.mxu0 0.0
    %5249 = vmatprep.subr.mxu0 0.0
    %5250 = vmatpush1.msra.mxu0 0.0
    %5251 = vmatprep.subr.mxu0 0.0
    %5252 = vmatpush1.msra.mxu0 0.0
    %5253 = vmatprep.subr.mxu0 0.0
    %5254 = vmatpush1.msra.mxu0 0.0
    %5255 = vmatprep.subr.mxu0 0.0
    %5256 = vmatpush1.msra.mxu0 0.0
    %5257 = vmatprep.subr.mxu0 0.0
    %5258 = vmatpush1.msra.mxu0 0.0
    %5259 = vmatprep.subr.mxu0 0.0
    %5260 = vmatpush1.msra.mxu0 0.0
    %5261 = vmatprep.subr.mxu0 0.0
    %5262 = vmatpush1.msra.mxu0 0.0
    %5263 = vmatprep.mubr.f32.mxu0 0.0
    %5264 = vmatmul.mubr.f32.gmra.mrb[0].mxu0 %v5197
    %v5265 = vpop.f32.mrb[0].mxu0
    %v5266 = vadd.f32 %v3925, %v5265
    %v5267 = vpop.f32.mrb[0].mxu0
    %5268 = vdwg.mxu0
    %v5269 = vsel %vm95, %v5266, -inf
    %5270 = vmax.xlane.f32.xlu0 %v5269
    %v5271 = vpop.xlane.xlu0 %5270
    %v5272 = vsub.f32 %v5266, %v5271
    %v5273 = vmul.f32 %v5272, 1.442695
    %v5274 = vpow.pop %v5273
    %v5275 = vsel %vm95, %v5274, 0.0
    %5276 = vadd.xlane.f32.xlu0 %v5275
    %v5277 = vpop.xlane.xlu0 %5276
    %v5278 = vlog2.pop %v5277
    %v5279 = vmul.f32 %v5278, 0.6931472
    %v5280 = vadd.f32 %v5279, %v5271
    %5281 = vset.pattern.permute.xlu0 3
    %5282 = vperm.xlu0 %5281, %v3376
    %v5283 = vpop.permute.xlu0 %5282
    %vm5284 = vcmp.eq.s32.totalorder %v3378, %v5283
    %v5285 = vsel %vm5284, %v5266, 0.0
    %v5286 = vsel %vm95, %v5285, 0.0
    %5287 = vadd.xlane.f32.xlu0 %v5286
    %v5288 = vpop.xlane.xlu0 %5287
    %v5289 = vsub.f32 %v5280, %v5288
    %v5290 = vmul.f32 %v5289, %v4004
    %vm5291 = vcmask 31768
    %v5292 = vsel %vm5291, %v5290, 0.0
    %v5293 = vrot.slane %v5292, 4
    %v5294 = vadd.f32 %v5292, %v5293
    %v5295 = vrot.slane %v5294, 2
    %v5296 = vadd.f32 %v5294, %v5295
    %v5297 = vrot.slane %v5296, 1
    %v5298 = vadd.f32 %v5296, %v5297
    %5300 = vrot.lane.b32.xlu0 %v5298, 126
    %v5301 = vpop.permute.xlu0 %5300
    %v5303 = vadd.f32 %v4667, %v5301
    %v5304 = vsel %vm5291, %v4004, 0.0
    %v5305 = vrot.slane %v5304, 4
    %v5306 = vadd.f32 %v5304, %v5305
    %v5307 = vrot.slane %v5306, 2
    %v5308 = vadd.f32 %v5306, %v5307
    %v5309 = vrot.slane %v5308, 1
    %v5310 = vadd.f32 %v5308, %v5309
    %5312 = vrot.lane.b32.xlu0 %v5310, 126
    %v5313 = vpop.permute.xlu0 %5312
    %v5315 = vadd.f32 %v4679, %v5313
    %5316 = vmatprep.subr.mxu0 0.0
    %5317 = vmatpush1.msra.mxu0 %v3370
    %5318 = vmatprep.subr.mxu0 0.0
    %5319 = vmatpush1.msra.mxu0 %v3371
    %5320 = vmatprep.subr.mxu0 0.0
    %5321 = vmatpush1.msra.mxu0 %v3372
    %5322 = vmatprep.subr.mxu0 0.0
    %5323 = vmatpush1.msra.mxu0 %v3373
    %5324 = vmatprep.subr.mxu0 0.0
    %5325 = vmatpush1.msra.mxu0 0.0
    %5326 = vmatprep.subr.mxu0 0.0
    %5327 = vmatpush1.msra.mxu0 0.0
    %5328 = vmatprep.subr.mxu0 0.0
    %5329 = vmatpush1.msra.mxu0 0.0
    %5330 = vmatprep.subr.mxu0 0.0
    %5331 = vmatpush1.msra.mxu0 0.0
    %5332 = vmatprep.subr.mxu0 0.0
    %5333 = vmatpush1.msra.mxu0 0.0
    %5334 = vmatprep.subr.mxu0 0.0
    %5335 = vmatpush1.msra.mxu0 0.0
    %5336 = vmatprep.subr.mxu0 0.0
    %5337 = vmatpush1.msra.mxu0 0.0
    %5338 = vmatprep.subr.mxu0 0.0
    %5339 = vmatpush1.msra.mxu0 0.0
    %5340 = vmatprep.subr.mxu0 0.0
    %5341 = vmatpush1.msra.mxu0 0.0
    %5342 = vmatprep.subr.mxu0 0.0
    %5343 = vmatpush1.msra.mxu0 0.0
    %5344 = vmatprep.subr.mxu0 0.0
    %5345 = vmatpush1.msra.mxu0 0.0
    %5346 = vmatprep.subr.mxu0 0.0
    %5347 = vmatpush1.msra.mxu0 0.0
    %5348 = vmatprep.subr.mxu0 0.0
    %5349 = vmatpush1.msra.mxu0 0.0
    %5350 = vmatprep.subr.mxu0 0.0
    %5351 = vmatpush1.msra.mxu0 0.0
    %5352 = vmatprep.subr.mxu0 0.0
    %5353 = vmatpush1.msra.mxu0 0.0
    %5354 = vmatprep.subr.mxu0 0.0
    %5355 = vmatpush1.msra.mxu0 0.0
    %5356 = vmatprep.subr.mxu0 0.0
    %5357 = vmatpush1.msra.mxu0 0.0
    %5358 = vmatprep.subr.mxu0 0.0
    %5359 = vmatpush1.msra.mxu0 0.0
    %5360 = vmatprep.subr.mxu0 0.0
    %5361 = vmatpush1.msra.mxu0 0.0
    %5362 = vmatprep.subr.mxu0 0.0
    %5363 = vmatpush1.msra.mxu0 0.0
    %5364 = vmatprep.subr.mxu0 0.0
    %5365 = vmatpush1.msra.mxu0 0.0
    %5366 = vmatprep.subr.mxu0 0.0
    %5367 = vmatpush1.msra.mxu0 0.0
    %5368 = vmatprep.subr.mxu0 0.0
    %5369 = vmatpush1.msra.mxu0 0.0
    %5370 = vmatprep.subr.mxu0 0.0
    %5371 = vmatpush1.msra.mxu0 0.0
    %5372 = vmatprep.subr.mxu0 0.0
    %5373 = vmatpush1.msra.mxu0 0.0
    %5374 = vmatprep.subr.mxu0 0.0
    %5375 = vmatpush1.msra.mxu0 0.0
    %5376 = vmatprep.subr.mxu0 0.0
    %5377 = vmatpush1.msra.mxu0 0.0
    %5378 = vmatprep.subr.mxu0 0.0
    %5379 = vmatpush1.msra.mxu0 0.0
    %5380 = vmatprep.mubr.f32.mxu0 0.0
    %5381 = vmatmul.mubr.f32.gmra.mrb[0].mxu0 %v5197
    %v5382 = vpop.f32.mrb[0].mxu0
    %v5383 = vadd.f32 %v3383, %v5382
    %v5384 = vpop.f32.mrb[0].mxu0
    %5385 = vdwg.mxu0
    %v5386 = vadd.f32 %v5383, %v608
    %v5387 = vtanh.pop %v5386
    %v5388 = vmul.f32 %v5387, %v3466
    %v5389 = vsel %vm95, %v5388, 0.0
    %5390 = vadd.xlane.f32.xlu0 %v5389
    %v5391 = vpop.xlane.xlu0 %5390
    %v5392 = vadd.f32 %v5383, %v978
    %v5393 = vtanh.pop %v5392
    %v5394 = vmul.f32 %v5393, %v3466
    %v5395 = vsel %vm95, %v5394, 0.0
    %5396 = vadd.xlane.f32.xlu0 %v5395
    %v5397 = vpop.xlane.xlu0 %5396
    %v5398 = vadd.f32 %v5383, %v1348
    %v5399 = vtanh.pop %v5398
    %v5400 = vmul.f32 %v5399, %v3466
    %v5401 = vsel %vm95, %v5400, 0.0
    %5402 = vadd.xlane.f32.xlu0 %v5401
    %v5403 = vpop.xlane.xlu0 %5402
    %v5404 = vadd.f32 %v5383, %v1718
    %v5405 = vtanh.pop %v5404
    %v5406 = vmul.f32 %v5405, %v3466
    %v5407 = vsel %vm95, %v5406, 0.0
    %5408 = vadd.xlane.f32.xlu0 %v5407
    %v5409 = vpop.xlane.xlu0 %5408
    %v5410 = vadd.f32 %v5383, %v2088
    %v5411 = vtanh.pop %v5410
    %v5412 = vmul.f32 %v5411, %v3466
    %v5413 = vsel %vm95, %v5412, 0.0
    %5414 = vadd.xlane.f32.xlu0 %v5413
    %v5415 = vpop.xlane.xlu0 %5414
    %v5416 = vadd.f32 %v5383, %v2458
    %v5417 = vtanh.pop %v5416
    %v5418 = vmul.f32 %v5417, %v3466
    %v5419 = vsel %vm95, %v5418, 0.0
    %5420 = vadd.xlane.f32.xlu0 %v5419
    %v5421 = vpop.xlane.xlu0 %5420
    %v5422 = vadd.f32 %v5383, %v2828
    %v5423 = vtanh.pop %v5422
    %v5424 = vmul.f32 %v5423, %v3466
    %v5425 = vsel %vm95, %v5424, 0.0
    %5426 = vadd.xlane.f32.xlu0 %v5425
    %v5427 = vpop.xlane.xlu0 %5426
    %v5428 = vadd.f32 %v5383, %v3198
    %v5429 = vtanh.pop %v5428
    %v5430 = vmul.f32 %v5429, %v3466
    %v5431 = vsel %vm95, %v5430, 0.0
    %5432 = vadd.xlane.f32.xlu0 %v5431
    %v5433 = vpop.xlane.xlu0 %5432
    %v5434 = vmax.f32 %v5391, %v5397
    %v5435 = vmax.f32 %v5434, %v5403
    %v5436 = vmax.f32 %v5435, %v5409
    %v5437 = vmax.f32 %v5436, %v5415
    %v5438 = vmax.f32 %v5437, %v5421
    %v5439 = vmax.f32 %v5438, %v5427
    %v5440 = vmax.f32 %v5439, %v5433
    %v5441 = vsub.f32 %v5391, %v5440
    %v5442 = vmul.f32 %v5441, 1.442695
    %v5443 = vpow.pop %v5442
    %v5444 = vsub.f32 %v5397, %v5440
    %v5445 = vmul.f32 %v5444, 1.442695
    %v5446 = vpow.pop %v5445
    %v5447 = vsub.f32 %v5403, %v5440
    %v5448 = vmul.f32 %v5447, 1.442695
    %v5449 = vpow.pop %v5448
    %v5450 = vsub.f32 %v5409, %v5440
    %v5451 = vmul.f32 %v5450, 1.442695
    %v5452 = vpow.pop %v5451
    %v5453 = vsub.f32 %v5415, %v5440
    %v5454 = vmul.f32 %v5453, 1.442695
    %v5455 = vpow.pop %v5454
    %v5456 = vsub.f32 %v5421, %v5440
    %v5457 = vmul.f32 %v5456, 1.442695
    %v5458 = vpow.pop %v5457
    %v5459 = vsub.f32 %v5427, %v5440
    %v5460 = vmul.f32 %v5459, 1.442695
    %v5461 = vpow.pop %v5460
    %v5462 = vsub.f32 %v5433, %v5440
    %v5463 = vmul.f32 %v5462, 1.442695
    %v5464 = vpow.pop %v5463
    %v5465 = vadd.f32 %v5443, %v5446
    %v5466 = vadd.f32 %v5465, %v5449
    %v5467 = vadd.f32 %v5466, %v5452
    %v5468 = vadd.f32 %v5467, %v5455
    %v5469 = vadd.f32 %v5468, %v5458
    %v5470 = vadd.f32 %v5469, %v5461
    %v5471 = vadd.f32 %v5470, %v5464
    %v5472 = vmul.f32 %v5443, %v532
    %v5473 = vmul.f32 %v5446, %v900
    %v5474 = vadd.f32 %v5472, %v5473
    %v5475 = vmul.f32 %v5449, %v1270
    %v5476 = vadd.f32 %v5474, %v5475
    %v5477 = vmul.f32 %v5452, %v1640
    %v5478 = vadd.f32 %v5476, %v5477
    %v5479 = vmul.f32 %v5455, %v2010
    %v5480 = vadd.f32 %v5478, %v5479
    %v5481 = vmul.f32 %v5458, %v2380
    %v5482 = vadd.f32 %v5480, %v5481
    %v5483 = vmul.f32 %v5461, %v2750
    %v5484 = vadd.f32 %v5482, %v5483
    %v5485 = vmul.f32 %v5464, %v3120
    %v5486 = vadd.f32 %v5484, %v5485
    %v5487 = vrcp.pop %v5471
    %v5488 = vmul.f32 %v5486, %v5487
    %5490 = vrot.lane.b32.xlu0 %v5488, 32
    %v5491 = vpop.permute.xlu0 %5490
    %v5492 = vsel %vm95, %v5491, 0
    %5494 = vmatprep.subr.mxu0 0.0
    %5495 = vmatpush1.msra.mxu0 %v3348
    %5496 = vmatprep.subr.mxu0 0.0
    %5497 = vmatpush1.msra.mxu0 %v3349
    %5498 = vmatprep.subr.mxu0 0.0
    %5499 = vmatpush1.msra.mxu0 %v3350
    %5500 = vmatprep.subr.mxu0 0.0
    %5501 = vmatpush1.msra.mxu0 %v3351
    %5502 = vmatprep.subr.mxu0 0.0
    %5503 = vmatpush1.msra.mxu0 0.0
    %5504 = vmatprep.subr.mxu0 0.0
    %5505 = vmatpush1.msra.mxu0 0.0
    %5506 = vmatprep.subr.mxu0 0.0
    %5507 = vmatpush1.msra.mxu0 0.0
    %5508 = vmatprep.subr.mxu0 0.0
    %5509 = vmatpush1.msra.mxu0 0.0
    %5510 = vmatprep.subr.mxu0 0.0
    %5511 = vmatpush1.msra.mxu0 0.0
    %5512 = vmatprep.subr.mxu0 0.0
    %5513 = vmatpush1.msra.mxu0 0.0
    %5514 = vmatprep.subr.mxu0 0.0
    %5515 = vmatpush1.msra.mxu0 0.0
    %5516 = vmatprep.subr.mxu0 0.0
    %5517 = vmatpush1.msra.mxu0 0.0
    %5518 = vmatprep.subr.mxu0 0.0
    %5519 = vmatpush1.msra.mxu0 0.0
    %5520 = vmatprep.subr.mxu0 0.0
    %5521 = vmatpush1.msra.mxu0 0.0
    %5522 = vmatprep.subr.mxu0 0.0
    %5523 = vmatpush1.msra.mxu0 0.0
    %5524 = vmatprep.subr.mxu0 0.0
    %5525 = vmatpush1.msra.mxu0 0.0
    %5526 = vmatprep.subr.mxu0 0.0
    %5527 = vmatpush1.msra.mxu0 0.0
    %5528 = vmatprep.subr.mxu0 0.0
    %5529 = vmatpush1.msra.mxu0 0.0
    %5530 = vmatprep.subr.mxu0 0.0
    %5531 = vmatpush1.msra.mxu0 0.0
    %5532 = vmatprep.subr.mxu0 0.0
    %5533 = vmatpush1.msra.mxu0 0.0
    %5534 = vmatprep.subr.mxu0 0.0
    %5535 = vmatpush1.msra.mxu0 0.0
    %5536 = vmatprep.subr.mxu0 0.0
    %5537 = vmatpush1.msra.mxu0 0.0
    %5538 = vmatprep.subr.mxu0 0.0
    %5539 = vmatpush1.msra.mxu0 0.0
    %5540 = vmatprep.subr.mxu0 0.0
    %5541 = vmatpush1.msra.mxu0 0.0
    %5542 = vmatprep.subr.mxu0 0.0
    %5543 = vmatpush1.msra.mxu0 0.0
    %5544 = vmatprep.subr.mxu0 0.0
    %5545 = vmatpush1.msra.mxu0 0.0
    %5546 = vmatprep.subr.mxu0 0.0
    %5547 = vmatpush1.msra.mxu0 0.0
    %5548 = vmatprep.subr.mxu0 0.0
    %5549 = vmatpush1.msra.mxu0 0.0
    %5550 = vmatprep.subr.mxu0 0.0
    %5551 = vmatpush1.msra.mxu0 0.0
    %5552 = vmatprep.subr.mxu0 0.0
    %5553 = vmatpush1.msra.mxu0 0.0
    %5554 = vmatprep.subr.mxu0 0.0
    %5555 = vmatpush1.msra.mxu0 0.0
    %5556 = vmatprep.subr.mxu0 0.0
    %5557 = vmatpush1.msra.mxu0 0.0
    %5558 = vmatprep.mubr.f32.mxu0 0.0
    %5559 = vmatmul.mubr.f32.gmra.mrb[0].mxu0 %v5492
    %v5560 = vpop.f32.mrb[0].mxu0
    %v5561 = vadd.f32 0.0, %v5560
    %v5562 = vpop.f32.mrb[0].mxu0
    %5563 = vdwg.mxu0
    %v5564 = vadd.f32 %v3326, %v5561
    %5565 = vmatprep.subr.mxu0 0.0
    %5566 = vmatpush1.msra.mxu0 %v3352
    %5567 = vmatprep.subr.mxu0 0.0
    %5568 = vmatpush1.msra.mxu0 %v3353
    %5569 = vmatprep.subr.mxu0 0.0
    %5570 = vmatpush1.msra.mxu0 %v3354
    %5571 = vmatprep.subr.mxu0 0.0
    %5572 = vmatpush1.msra.mxu0 %v3355
    %5573 = vmatprep.subr.mxu0 0.0
    %5574 = vmatpush1.msra.mxu0 0.0
    %5575 = vmatprep.subr.mxu0 0.0
    %5576 = vmatpush1.msra.mxu0 0.0
    %5577 = vmatprep.subr.mxu0 0.0
    %5578 = vmatpush1.msra.mxu0 0.0
    %5579 = vmatprep.subr.mxu0 0.0
    %5580 = vmatpush1.msra.mxu0 0.0
    %5581 = vmatprep.subr.mxu0 0.0
    %5582 = vmatpush1.msra.mxu0 0.0
    %5583 = vmatprep.subr.mxu0 0.0
    %5584 = vmatpush1.msra.mxu0 0.0
    %5585 = vmatprep.subr.mxu0 0.0
    %5586 = vmatpush1.msra.mxu0 0.0
    %5587 = vmatprep.subr.mxu0 0.0
    %5588 = vmatpush1.msra.mxu0 0.0
    %5589 = vmatprep.subr.mxu0 0.0
    %5590 = vmatpush1.msra.mxu0 0.0
    %5591 = vmatprep.subr.mxu0 0.0
    %5592 = vmatpush1.msra.mxu0 0.0
    %5593 = vmatprep.subr.mxu0 0.0
    %5594 = vmatpush1.msra.mxu0 0.0
    %5595 = vmatprep.subr.mxu0 0.0
    %5596 = vmatpush1.msra.mxu0 0.0
    %5597 = vmatprep.subr.mxu0 0.0
    %5598 = vmatpush1.msra.mxu0 0.0
    %5599 = vmatprep.subr.mxu0 0.0
    %5600 = vmatpush1.msra.mxu0 0.0
    %5601 = vmatprep.subr.mxu0 0.0
    %5602 = vmatpush1.msra.mxu0 0.0
    %5603 = vmatprep.subr.mxu0 0.0
    %5604 = vmatpush1.msra.mxu0 0.0
    %5605 = vmatprep.subr.mxu0 0.0
    %5606 = vmatpush1.msra.mxu0 0.0
    %5607 = vmatprep.subr.mxu0 0.0
    %5608 = vmatpush1.msra.mxu0 0.0
    %5609 = vmatprep.subr.mxu0 0.0
    %5610 = vmatpush1.msra.mxu0 0.0
    %5611 = vmatprep.subr.mxu0 0.0
    %5612 = vmatpush1.msra.mxu0 0.0
    %5613 = vmatprep.subr.mxu0 0.0
    %5614 = vmatpush1.msra.mxu0 0.0
    %5615 = vmatprep.subr.mxu0 0.0
    %5616 = vmatpush1.msra.mxu0 0.0
    %5617 = vmatprep.subr.mxu0 0.0
    %5618 = vmatpush1.msra.mxu0 0.0
    %5619 = vmatprep.subr.mxu0 0.0
    %5620 = vmatpush1.msra.mxu0 0.0
    %5621 = vmatprep.subr.mxu0 0.0
    %5622 = vmatpush1.msra.mxu0 0.0
    %5623 = vmatprep.subr.mxu0 0.0
    %5624 = vmatpush1.msra.mxu0 0.0
    %5625 = vmatprep.subr.mxu0 0.0
    %5626 = vmatpush1.msra.mxu0 0.0
    %5627 = vmatprep.subr.mxu0 0.0
    %5628 = vmatpush1.msra.mxu0 0.0
    %5629 = vmatprep.mubr.f32.mxu0 0.0
    %5630 = vmatmul.mubr.f32.gmra.mrb[0].mxu0 %v5097
    %v5631 = vpop.f32.mrb[0].mxu0
    %v5632 = vadd.f32 0.0, %v5631
    %v5633 = vpop.f32.mrb[0].mxu0
    %5634 = vdwg.mxu0
    %v5635 = vadd.f32 %v5564, %v5632
    %v5636 = vxor.u32 %v5635, 2147483648
    %v5637 = vmul.f32 %v5636, 1.442695
    %v5638 = vpow.pop %v5637
    %v5639 = vadd.f32 %v5638, 1.0
    %v5640 = vrcp.pop %v5639
    %v5641 = vmul.f32 1.0, %v5640
    %v5642 = vtanh.pop %v5635
    %v5643 = vmul.f32 %v5641, %v5017
    %5645 = vrot.lane.b32.xlu0 %v5642, 64
    %v5646 = vpop.permute.xlu0 %5645
    %v5648 = vmul.f32 %v5641, %v5646
    %5650 = vrot.lane.b32.xlu0 %v5648, 32
    %v5651 = vpop.permute.xlu0 %5650
    %v5653 = vadd.f32 %v5643, %v5651
    %v5654 = vtanh.pop %v5653
    %5656 = vrot.lane.b32.xlu0 %v5654, 64
    %v5657 = vpop.permute.xlu0 %5656
    %v5659 = vmul.f32 %v5641, %v5657
    %5660 = vmatprep.subr.mxu0 0.0
    %5661 = vmatpush1.msra.mxu0 %v3360
    %5662 = vmatprep.subr.mxu0 0.0
    %5663 = vmatpush1.msra.mxu0 %v3361
    %5664 = vmatprep.subr.mxu0 0.0
    %5665 = vmatpush1.msra.mxu0 %v3362
    %5666 = vmatprep.subr.mxu0 0.0
    %5667 = vmatpush1.msra.mxu0 %v3363
    %5668 = vmatprep.subr.mxu0 0.0
    %5669 = vmatpush1.msra.mxu0 0.0
    %5670 = vmatprep.subr.mxu0 0.0
    %5671 = vmatpush1.msra.mxu0 0.0
    %5672 = vmatprep.subr.mxu0 0.0
    %5673 = vmatpush1.msra.mxu0 0.0
    %5674 = vmatprep.subr.mxu0 0.0
    %5675 = vmatpush1.msra.mxu0 0.0
    %5676 = vmatprep.subr.mxu0 0.0
    %5677 = vmatpush1.msra.mxu0 0.0
    %5678 = vmatprep.subr.mxu0 0.0
    %5679 = vmatpush1.msra.mxu0 0.0
    %5680 = vmatprep.subr.mxu0 0.0
    %5681 = vmatpush1.msra.mxu0 0.0
    %5682 = vmatprep.subr.mxu0 0.0
    %5683 = vmatpush1.msra.mxu0 0.0
    %5684 = vmatprep.subr.mxu0 0.0
    %5685 = vmatpush1.msra.mxu0 0.0
    %5686 = vmatprep.subr.mxu0 0.0
    %5687 = vmatpush1.msra.mxu0 0.0
    %5688 = vmatprep.subr.mxu0 0.0
    %5689 = vmatpush1.msra.mxu0 0.0
    %5690 = vmatprep.subr.mxu0 0.0
    %5691 = vmatpush1.msra.mxu0 0.0
    %5692 = vmatprep.subr.mxu0 0.0
    %5693 = vmatpush1.msra.mxu0 0.0
    %5694 = vmatprep.subr.mxu0 0.0
    %5695 = vmatpush1.msra.mxu0 0.0
    %5696 = vmatprep.subr.mxu0 0.0
    %5697 = vmatpush1.msra.mxu0 0.0
    %5698 = vmatprep.subr.mxu0 0.0
    %5699 = vmatpush1.msra.mxu0 0.0
    %5700 = vmatprep.subr.mxu0 0.0
    %5701 = vmatpush1.msra.mxu0 0.0
    %5702 = vmatprep.subr.mxu0 0.0
    %5703 = vmatpush1.msra.mxu0 0.0
    %5704 = vmatprep.subr.mxu0 0.0
    %5705 = vmatpush1.msra.mxu0 0.0
    %5706 = vmatprep.subr.mxu0 0.0
    %5707 = vmatpush1.msra.mxu0 0.0
    %5708 = vmatprep.subr.mxu0 0.0
    %5709 = vmatpush1.msra.mxu0 0.0
    %5710 = vmatprep.subr.mxu0 0.0
    %5711 = vmatpush1.msra.mxu0 0.0
    %5712 = vmatprep.subr.mxu0 0.0
    %5713 = vmatpush1.msra.mxu0 0.0
    %5714 = vmatprep.subr.mxu0 0.0
    %5715 = vmatpush1.msra.mxu0 0.0
    %5716 = vmatprep.subr.mxu0 0.0
    %5717 = vmatpush1.msra.mxu0 0.0
    %5718 = vmatprep.subr.mxu0 0.0
    %5719 = vmatpush1.msra.mxu0 0.0
    %5720 = vmatprep.subr.mxu0 0.0
    %5721 = vmatpush1.msra.mxu0 0.0
    %5722 = vmatprep.subr.mxu0 0.0
    %5723 = vmatpush1.msra.mxu0 0.0
    %5724 = vmatprep.mubr.f32.mxu0 0.0
    %5725 = vmatmul.mubr.f32.gmra.mrb[0].mxu0 %v5197
    %v5726 = vpop.f32.mrb[0].mxu0
    %v5727 = vadd.f32 0.0, %v5726
    %v5728 = vpop.f32.mrb[0].mxu0
    %5729 = vdwg.mxu0
    %5731 = vrot.lane.b32.xlu0 %v5659, 32
    %v5732 = vpop.permute.xlu0 %5731
    %v5733 = vsel %vm95, %v5732, 0
    %5735 = vmatprep.subr.mxu0 0.0
    %5736 = vmatpush1.msra.mxu0 %v3356
    %5737 = vmatprep.subr.mxu0 0.0
    %5738 = vmatpush1.msra.mxu0 %v3357
    %5739 = vmatprep.subr.mxu0 0.0
    %5740 = vmatpush1.msra.mxu0 %v3358
    %5741 = vmatprep.subr.mxu0 0.0
    %5742 = vmatpush1.msra.mxu0 %v3359
    %5743 = vmatprep.subr.mxu0 0.0
    %5744 = vmatpush1.msra.mxu0 0.0
    %5745 = vmatprep.subr.mxu0 0.0
    %5746 = vmatpush1.msra.mxu0 0.0
    %5747 = vmatprep.subr.mxu0 0.0
    %5748 = vmatpush1.msra.mxu0 0.0
    %5749 = vmatprep.subr.mxu0 0.0
    %5750 = vmatpush1.msra.mxu0 0.0
    %5751 = vmatprep.subr.mxu0 0.0
    %5752 = vmatpush1.msra.mxu0 0.0
    %5753 = vmatprep.subr.mxu0 0.0
    %5754 = vmatpush1.msra.mxu0 0.0
    %5755 = vmatprep.subr.mxu0 0.0
    %5756 = vmatpush1.msra.mxu0 0.0
    %5757 = vmatprep.subr.mxu0 0.0
    %5758 = vmatpush1.msra.mxu0 0.0
    %5759 = vmatprep.subr.mxu0 0.0
    %5760 = vmatpush1.msra.mxu0 0.0
    %5761 = vmatprep.subr.mxu0 0.0
    %5762 = vmatpush1.msra.mxu0 0.0
    %5763 = vmatprep.subr.mxu0 0.0
    %5764 = vmatpush1.msra.mxu0 0.0
    %5765 = vmatprep.subr.mxu0 0.0
    %5766 = vmatpush1.msra.mxu0 0.0
    %5767 = vmatprep.subr.mxu0 0.0
    %5768 = vmatpush1.msra.mxu0 0.0
    %5769 = vmatprep.subr.mxu0 0.0
    %5770 = vmatpush1.msra.mxu0 0.0
    %5771 = vmatprep.subr.mxu0 0.0
    %5772 = vmatpush1.msra.mxu0 0.0
    %5773 = vmatprep.subr.mxu0 0.0
    %5774 = vmatpush1.msra.mxu0 0.0
    %5775 = vmatprep.subr.mxu0 0.0
    %5776 = vmatpush1.msra.mxu0 0.0
    %5777 = vmatprep.subr.mxu0 0.0
    %5778 = vmatpush1.msra.mxu0 0.0
    %5779 = vmatprep.subr.mxu0 0.0
    %5780 = vmatpush1.msra.mxu0 0.0
    %5781 = vmatprep.subr.mxu0 0.0
    %5782 = vmatpush1.msra.mxu0 0.0
    %5783 = vmatprep.subr.mxu0 0.0
    %5784 = vmatpush1.msra.mxu0 0.0
    %5785 = vmatprep.subr.mxu0 0.0
    %5786 = vmatpush1.msra.mxu0 0.0
    %5787 = vmatprep.subr.mxu0 0.0
    %5788 = vmatpush1.msra.mxu0 0.0
    %5789 = vmatprep.subr.mxu0 0.0
    %5790 = vmatpush1.msra.mxu0 0.0
    %5791 = vmatprep.subr.mxu0 0.0
    %5792 = vmatpush1.msra.mxu0 0.0
    %5793 = vmatprep.subr.mxu0 0.0
    %5794 = vmatpush1.msra.mxu0 0.0
    %5795 = vmatprep.subr.mxu0 0.0
    %5796 = vmatpush1.msra.mxu0 0.0
    %5797 = vmatprep.subr.mxu0 0.0
    %5798 = vmatpush1.msra.mxu0 0.0
    %5799 = vmatprep.mubr.f32.mxu0 0.0
    %5800 = vmatmul.mubr.f32.gmra.mrb[0].mxu0 %v5733
    %v5801 = vpop.f32.mrb[0].mxu0
    %v5802 = vadd.f32 %v5727, %v5801
    %v5803 = vpop.f32.mrb[0].mxu0
    %5804 = vdwg.mxu0
    %v5805 = vadd.f32 %v5802, %v3894
    %v5806 = vxor.u32 %v5805, 2147483648
    %v5807 = vmul.f32 %v5806, 1.442695
    %v5808 = vpow.pop %v5807
    %v5809 = vadd.f32 %v5808, 1.0
    %v5810 = vrcp.pop %v5809
    %v5811 = vmul.f32 1.0, %v5810
    %v5812 = vtanh.pop %v5805
    %v5813 = vmul.f32 %v5811, %v5187
    %5815 = vrot.lane.b32.xlu0 %v5812, 64
    %v5816 = vpop.permute.xlu0 %5815
    %v5818 = vmul.f32 %v5811, %v5816
    %5820 = vrot.lane.b32.xlu0 %v5818, 32
    %v5821 = vpop.permute.xlu0 %5820
    %v5823 = vadd.f32 %v5813, %v5821
    %v5824 = vtanh.pop %v5823
    %5826 = vrot.lane.b32.xlu0 %v5824, 64
    %v5827 = vpop.permute.xlu0 %5826
    %v5829 = vmul.f32 %v5811, %v5827
    %5831 = vrot.lane.b32.xlu0 %v5829, 32
    %v5832 = vpop.permute.xlu0 %5831
    %v5833 = vsel %vm95, %v5832, 0
    %5835 = vmatprep.subr.mxu0 0.0
    %5836 = vmatpush1.msra.mxu0 %v3365
    %5837 = vmatprep.subr.mxu0 0.0
    %5838 = vmatpush1.msra.mxu0 %v3366
    %5839 = vmatprep.subr.mxu0 0.0
    %5840 = vmatpush1.msra.mxu0 %v3367
    %5841 = vmatprep.subr.mxu0 0.0
    %5842 = vmatpush1.msra.mxu0 %v3368
    %5843 = vmatprep.subr.mxu0 0.0
    %5844 = vmatpush1.msra.mxu0 0.0
    %5845 = vmatprep.subr.mxu0 0.0
    %5846 = vmatpush1.msra.mxu0 0.0
    %5847 = vmatprep.subr.mxu0 0.0
    %5848 = vmatpush1.msra.mxu0 0.0
    %5849 = vmatprep.subr.mxu0 0.0
    %5850 = vmatpush1.msra.mxu0 0.0
    %5851 = vmatprep.subr.mxu0 0.0
    %5852 = vmatpush1.msra.mxu0 0.0
    %5853 = vmatprep.subr.mxu0 0.0
    %5854 = vmatpush1.msra.mxu0 0.0
    %5855 = vmatprep.subr.mxu0 0.0
    %5856 = vmatpush1.msra.mxu0 0.0
    %5857 = vmatprep.subr.mxu0 0.0
    %5858 = vmatpush1.msra.mxu0 0.0
    %5859 = vmatprep.subr.mxu0 0.0
    %5860 = vmatpush1.msra.mxu0 0.0
    %5861 = vmatprep.subr.mxu0 0.0
    %5862 = vmatpush1.msra.mxu0 0.0
    %5863 = vmatprep.subr.mxu0 0.0
    %5864 = vmatpush1.msra.mxu0 0.0
    %5865 = vmatprep.subr.mxu0 0.0
    %5866 = vmatpush1.msra.mxu0 0.0
    %5867 = vmatprep.subr.mxu0 0.0
    %5868 = vmatpush1.msra.mxu0 0.0
    %5869 = vmatprep.subr.mxu0 0.0
    %5870 = vmatpush1.msra.mxu0 0.0
    %5871 = vmatprep.subr.mxu0 0.0
    %5872 = vmatpush1.msra.mxu0 0.0
    %5873 = vmatprep.subr.mxu0 0.0
    %5874 = vmatpush1.msra.mxu0 0.0
    %5875 = vmatprep.subr.mxu0 0.0
    %5876 = vmatpush1.msra.mxu0 0.0
    %5877 = vmatprep.subr.mxu0 0.0
    %5878 = vmatpush1.msra.mxu0 0.0
    %5879 = vmatprep.subr.mxu0 0.0
    %5880 = vmatpush1.msra.mxu0 0.0
    %5881 = vmatprep.subr.mxu0 0.0
    %5882 = vmatpush1.msra.mxu0 0.0
    %5883 = vmatprep.subr.mxu0 0.0
    %5884 = vmatpush1.msra.mxu0 0.0
    %5885 = vmatprep.subr.mxu0 0.0
    %5886 = vmatpush1.msra.mxu0 0.0
    %5887 = vmatprep.subr.mxu0 0.0
    %5888 = vmatpush1.msra.mxu0 0.0
    %5889 = vmatprep.subr.mxu0 0.0
    %5890 = vmatpush1.msra.mxu0 0.0
    %5891 = vmatprep.subr.mxu0 0.0
    %5892 = vmatpush1.msra.mxu0 0.0
    %5893 = vmatprep.subr.mxu0 0.0
    %5894 = vmatpush1.msra.mxu0 0.0
    %5895 = vmatprep.subr.mxu0 0.0
    %5896 = vmatpush1.msra.mxu0 0.0
    %5897 = vmatprep.subr.mxu0 0.0
    %5898 = vmatpush1.msra.mxu0 0.0
    %5899 = vmatprep.mubr.f32.mxu0 0.0
    %5900 = vmatmul.mubr.f32.gmra.mrb[0].mxu0 %v5833
    %v5901 = vpop.f32.mrb[0].mxu0
    %v5902 = vadd.f32 %v3925, %v5901
    %v5903 = vpop.f32.mrb[0].mxu0
    %5904 = vdwg.mxu0
    %v5905 = vsel %vm95, %v5902, -inf
    %5906 = vmax.xlane.f32.xlu0 %v5905
    %v5907 = vpop.xlane.xlu0 %5906
    %v5908 = vsub.f32 %v5902, %v5907
    %v5909 = vmul.f32 %v5908, 1.442695
    %v5910 = vpow.pop %v5909
    %v5911 = vsel %vm95, %v5910, 0.0
    %5912 = vadd.xlane.f32.xlu0 %v5911
    %v5913 = vpop.xlane.xlu0 %5912
    %v5914 = vlog2.pop %v5913
    %v5915 = vmul.f32 %v5914, 0.6931472
    %v5916 = vadd.f32 %v5915, %v5907
    %5917 = vset.pattern.permute.xlu0 4
    %5918 = vperm.xlu0 %5917, %v3376
    %v5919 = vpop.permute.xlu0 %5918
    %vm5920 = vcmp.eq.s32.totalorder %v3378, %v5919
    %v5921 = vsel %vm5920, %v5902, 0.0
    %v5922 = vsel %vm95, %v5921, 0.0
    %5923 = vadd.xlane.f32.xlu0 %v5922
    %v5924 = vpop.xlane.xlu0 %5923
    %v5925 = vsub.f32 %v5916, %v5924
    %v5926 = vmul.f32 %v5925, %v4004
    %vm5927 = vcmask 39968
    %v5928 = vsel %vm5927, %v5926, 0.0
    %v5929 = vrot.slane %v5928, 4
    %v5930 = vadd.f32 %v5928, %v5929
    %v5931 = vrot.slane %v5930, 2
    %v5932 = vadd.f32 %v5930, %v5931
    %v5933 = vrot.slane %v5932, 1
    %v5934 = vadd.f32 %v5932, %v5933
    %5936 = vrot.lane.b32.xlu0 %v5934, 125
    %v5937 = vpop.permute.xlu0 %5936
    %v5939 = vadd.f32 %v5303, %v5937
    %v5940 = vsel %vm5927, %v4004, 0.0
    %v5941 = vrot.slane %v5940, 4
    %v5942 = vadd.f32 %v5940, %v5941
    %v5943 = vrot.slane %v5942, 2
    %v5944 = vadd.f32 %v5942, %v5943
    %v5945 = vrot.slane %v5944, 1
    %v5946 = vadd.f32 %v5944, %v5945
    %5948 = vrot.lane.b32.xlu0 %v5946, 125
    %v5949 = vpop.permute.xlu0 %5948
    %v5951 = vadd.f32 %v5315, %v5949
    %5952 = vmatprep.subr.mxu0 0.0
    %5953 = vmatpush1.msra.mxu0 %v3370
    %5954 = vmatprep.subr.mxu0 0.0
    %5955 = vmatpush1.msra.mxu0 %v3371
    %5956 = vmatprep.subr.mxu0 0.0
    %5957 = vmatpush1.msra.mxu0 %v3372
    %5958 = vmatprep.subr.mxu0 0.0
    %5959 = vmatpush1.msra.mxu0 %v3373
    %5960 = vmatprep.subr.mxu0 0.0
    %5961 = vmatpush1.msra.mxu0 0.0
    %5962 = vmatprep.subr.mxu0 0.0
    %5963 = vmatpush1.msra.mxu0 0.0
    %5964 = vmatprep.subr.mxu0 0.0
    %5965 = vmatpush1.msra.mxu0 0.0
    %5966 = vmatprep.subr.mxu0 0.0
    %5967 = vmatpush1.msra.mxu0 0.0
    %5968 = vmatprep.subr.mxu0 0.0
    %5969 = vmatpush1.msra.mxu0 0.0
    %5970 = vmatprep.subr.mxu0 0.0
    %5971 = vmatpush1.msra.mxu0 0.0
    %5972 = vmatprep.subr.mxu0 0.0
    %5973 = vmatpush1.msra.mxu0 0.0
    %5974 = vmatprep.subr.mxu0 0.0
    %5975 = vmatpush1.msra.mxu0 0.0
    %5976 = vmatprep.subr.mxu0 0.0
    %5977 = vmatpush1.msra.mxu0 0.0
    %5978 = vmatprep.subr.mxu0 0.0
    %5979 = vmatpush1.msra.mxu0 0.0
    %5980 = vmatprep.subr.mxu0 0.0
    %5981 = vmatpush1.msra.mxu0 0.0
    %5982 = vmatprep.subr.mxu0 0.0
    %5983 = vmatpush1.msra.mxu0 0.0
    %5984 = vmatprep.subr.mxu0 0.0
    %5985 = vmatpush1.msra.mxu0 0.0
    %5986 = vmatprep.subr.mxu0 0.0
    %5987 = vmatpush1.msra.mxu0 0.0
    %5988 = vmatprep.subr.mxu0 0.0
    %5989 = vmatpush1.msra.mxu0 0.0
    %5990 = vmatprep.subr.mxu0 0.0
    %5991 = vmatpush1.msra.mxu0 0.0
    %5992 = vmatprep.subr.mxu0 0.0
    %5993 = vmatpush1.msra.mxu0 0.0
    %5994 = vmatprep.subr.mxu0 0.0
    %5995 = vmatpush1.msra.mxu0 0.0
    %5996 = vmatprep.subr.mxu0 0.0
    %5997 = vmatpush1.msra.mxu0 0.0
    %5998 = vmatprep.subr.mxu0 0.0
    %5999 = vmatpush1.msra.mxu0 0.0
    %6000 = vmatprep.subr.mxu0 0.0
    %6001 = vmatpush1.msra.mxu0 0.0
    %6002 = vmatprep.subr.mxu0 0.0
    %6003 = vmatpush1.msra.mxu0 0.0
    %6004 = vmatprep.subr.mxu0 0.0
    %6005 = vmatpush1.msra.mxu0 0.0
    %6006 = vmatprep.subr.mxu0 0.0
    %6007 = vmatpush1.msra.mxu0 0.0
    %6008 = vmatprep.subr.mxu0 0.0
    %6009 = vmatpush1.msra.mxu0 0.0
    %6010 = vmatprep.subr.mxu0 0.0
    %6011 = vmatpush1.msra.mxu0 0.0
    %6012 = vmatprep.subr.mxu0 0.0
    %6013 = vmatpush1.msra.mxu0 0.0
    %6014 = vmatprep.subr.mxu0 0.0
    %6015 = vmatpush1.msra.mxu0 0.0
    %6016 = vmatprep.mubr.f32.mxu0 0.0
    %6017 = vmatmul.mubr.f32.gmra.mrb[0].mxu0 %v5833
    %v6018 = vpop.f32.mrb[0].mxu0
    %v6019 = vadd.f32 %v3383, %v6018
    %v6020 = vpop.f32.mrb[0].mxu0
    %6021 = vdwg.mxu0
    %v6022 = vadd.f32 %v6019, %v608
    %v6023 = vtanh.pop %v6022
    %v6024 = vmul.f32 %v6023, %v3466
    %v6025 = vsel %vm95, %v6024, 0.0
    %6026 = vadd.xlane.f32.xlu0 %v6025
    %v6027 = vpop.xlane.xlu0 %6026
    %v6028 = vadd.f32 %v6019, %v978
    %v6029 = vtanh.pop %v6028
    %v6030 = vmul.f32 %v6029, %v3466
    %v6031 = vsel %vm95, %v6030, 0.0
    %6032 = vadd.xlane.f32.xlu0 %v6031
    %v6033 = vpop.xlane.xlu0 %6032
    %v6034 = vadd.f32 %v6019, %v1348
    %v6035 = vtanh.pop %v6034
    %v6036 = vmul.f32 %v6035, %v3466
    %v6037 = vsel %vm95, %v6036, 0.0
    %6038 = vadd.xlane.f32.xlu0 %v6037
    %v6039 = vpop.xlane.xlu0 %6038
    %v6040 = vadd.f32 %v6019, %v1718
    %v6041 = vtanh.pop %v6040
    %v6042 = vmul.f32 %v6041, %v3466
    %v6043 = vsel %vm95, %v6042, 0.0
    %6044 = vadd.xlane.f32.xlu0 %v6043
    %v6045 = vpop.xlane.xlu0 %6044
    %v6046 = vadd.f32 %v6019, %v2088
    %v6047 = vtanh.pop %v6046
    %v6048 = vmul.f32 %v6047, %v3466
    %v6049 = vsel %vm95, %v6048, 0.0
    %6050 = vadd.xlane.f32.xlu0 %v6049
    %v6051 = vpop.xlane.xlu0 %6050
    %v6052 = vadd.f32 %v6019, %v2458
    %v6053 = vtanh.pop %v6052
    %v6054 = vmul.f32 %v6053, %v3466
    %v6055 = vsel %vm95, %v6054, 0.0
    %6056 = vadd.xlane.f32.xlu0 %v6055
    %v6057 = vpop.xlane.xlu0 %6056
    %v6058 = vadd.f32 %v6019, %v2828
    %v6059 = vtanh.pop %v6058
    %v6060 = vmul.f32 %v6059, %v3466
    %v6061 = vsel %vm95, %v6060, 0.0
    %6062 = vadd.xlane.f32.xlu0 %v6061
    %v6063 = vpop.xlane.xlu0 %6062
    %v6064 = vadd.f32 %v6019, %v3198
    %v6065 = vtanh.pop %v6064
    %v6066 = vmul.f32 %v6065, %v3466
    %v6067 = vsel %vm95, %v6066, 0.0
    %6068 = vadd.xlane.f32.xlu0 %v6067
    %v6069 = vpop.xlane.xlu0 %6068
    %v6070 = vmax.f32 %v6027, %v6033
    %v6071 = vmax.f32 %v6070, %v6039
    %v6072 = vmax.f32 %v6071, %v6045
    %v6073 = vmax.f32 %v6072, %v6051
    %v6074 = vmax.f32 %v6073, %v6057
    %v6075 = vmax.f32 %v6074, %v6063
    %v6076 = vmax.f32 %v6075, %v6069
    %v6077 = vsub.f32 %v6027, %v6076
    %v6078 = vmul.f32 %v6077, 1.442695
    %v6079 = vpow.pop %v6078
    %v6080 = vsub.f32 %v6033, %v6076
    %v6081 = vmul.f32 %v6080, 1.442695
    %v6082 = vpow.pop %v6081
    %v6083 = vsub.f32 %v6039, %v6076
    %v6084 = vmul.f32 %v6083, 1.442695
    %v6085 = vpow.pop %v6084
    %v6086 = vsub.f32 %v6045, %v6076
    %v6087 = vmul.f32 %v6086, 1.442695
    %v6088 = vpow.pop %v6087
    %v6089 = vsub.f32 %v6051, %v6076
    %v6090 = vmul.f32 %v6089, 1.442695
    %v6091 = vpow.pop %v6090
    %v6092 = vsub.f32 %v6057, %v6076
    %v6093 = vmul.f32 %v6092, 1.442695
    %v6094 = vpow.pop %v6093
    %v6095 = vsub.f32 %v6063, %v6076
    %v6096 = vmul.f32 %v6095, 1.442695
    %v6097 = vpow.pop %v6096
    %v6098 = vsub.f32 %v6069, %v6076
    %v6099 = vmul.f32 %v6098, 1.442695
    %v6100 = vpow.pop %v6099
    %v6101 = vadd.f32 %v6079, %v6082
    %v6102 = vadd.f32 %v6101, %v6085
    %v6103 = vadd.f32 %v6102, %v6088
    %v6104 = vadd.f32 %v6103, %v6091
    %v6105 = vadd.f32 %v6104, %v6094
    %v6106 = vadd.f32 %v6105, %v6097
    %v6107 = vadd.f32 %v6106, %v6100
    %v6108 = vmul.f32 %v6079, %v532
    %v6109 = vmul.f32 %v6082, %v900
    %v6110 = vadd.f32 %v6108, %v6109
    %v6111 = vmul.f32 %v6085, %v1270
    %v6112 = vadd.f32 %v6110, %v6111
    %v6113 = vmul.f32 %v6088, %v1640
    %v6114 = vadd.f32 %v6112, %v6113
    %v6115 = vmul.f32 %v6091, %v2010
    %v6116 = vadd.f32 %v6114, %v6115
    %v6117 = vmul.f32 %v6094, %v2380
    %v6118 = vadd.f32 %v6116, %v6117
    %v6119 = vmul.f32 %v6097, %v2750
    %v6120 = vadd.f32 %v6118, %v6119
    %v6121 = vmul.f32 %v6100, %v3120
    %v6122 = vadd.f32 %v6120, %v6121
    %v6123 = vrcp.pop %v6107
    %v6124 = vmul.f32 %v6122, %v6123
    %6126 = vrot.lane.b32.xlu0 %v6124, 32
    %v6127 = vpop.permute.xlu0 %6126
    %v6128 = vsel %vm95, %v6127, 0
    %6130 = vmatprep.subr.mxu0 0.0
    %6131 = vmatpush1.msra.mxu0 %v3348
    %6132 = vmatprep.subr.mxu0 0.0
    %6133 = vmatpush1.msra.mxu0 %v3349
    %6134 = vmatprep.subr.mxu0 0.0
    %6135 = vmatpush1.msra.mxu0 %v3350
    %6136 = vmatprep.subr.mxu0 0.0
    %6137 = vmatpush1.msra.mxu0 %v3351
    %6138 = vmatprep.subr.mxu0 0.0
    %6139 = vmatpush1.msra.mxu0 0.0
    %6140 = vmatprep.subr.mxu0 0.0
    %6141 = vmatpush1.msra.mxu0 0.0
    %6142 = vmatprep.subr.mxu0 0.0
    %6143 = vmatpush1.msra.mxu0 0.0
    %6144 = vmatprep.subr.mxu0 0.0
    %6145 = vmatpush1.msra.mxu0 0.0
    %6146 = vmatprep.subr.mxu0 0.0
    %6147 = vmatpush1.msra.mxu0 0.0
    %6148 = vmatprep.subr.mxu0 0.0
    %6149 = vmatpush1.msra.mxu0 0.0
    %6150 = vmatprep.subr.mxu0 0.0
    %6151 = vmatpush1.msra.mxu0 0.0
    %6152 = vmatprep.subr.mxu0 0.0
    %6153 = vmatpush1.msra.mxu0 0.0
    %6154 = vmatprep.subr.mxu0 0.0
    %6155 = vmatpush1.msra.mxu0 0.0
    %6156 = vmatprep.subr.mxu0 0.0
    %6157 = vmatpush1.msra.mxu0 0.0
    %6158 = vmatprep.subr.mxu0 0.0
    %6159 = vmatpush1.msra.mxu0 0.0
    %6160 = vmatprep.subr.mxu0 0.0
    %6161 = vmatpush1.msra.mxu0 0.0
    %6162 = vmatprep.subr.mxu0 0.0
    %6163 = vmatpush1.msra.mxu0 0.0
    %6164 = vmatprep.subr.mxu0 0.0
    %6165 = vmatpush1.msra.mxu0 0.0
    %6166 = vmatprep.subr.mxu0 0.0
    %6167 = vmatpush1.msra.mxu0 0.0
    %6168 = vmatprep.subr.mxu0 0.0
    %6169 = vmatpush1.msra.mxu0 0.0
    %6170 = vmatprep.subr.mxu0 0.0
    %6171 = vmatpush1.msra.mxu0 0.0
    %6172 = vmatprep.subr.mxu0 0.0
    %6173 = vmatpush1.msra.mxu0 0.0
    %6174 = vmatprep.subr.mxu0 0.0
    %6175 = vmatpush1.msra.mxu0 0.0
    %6176 = vmatprep.subr.mxu0 0.0
    %6177 = vmatpush1.msra.mxu0 0.0
    %6178 = vmatprep.subr.mxu0 0.0
    %6179 = vmatpush1.msra.mxu0 0.0
    %6180 = vmatprep.subr.mxu0 0.0
    %6181 = vmatpush1.msra.mxu0 0.0
    %6182 = vmatprep.subr.mxu0 0.0
    %6183 = vmatpush1.msra.mxu0 0.0
    %6184 = vmatprep.subr.mxu0 0.0
    %6185 = vmatpush1.msra.mxu0 0.0
    %6186 = vmatprep.subr.mxu0 0.0
    %6187 = vmatpush1.msra.mxu0 0.0
    %6188 = vmatprep.subr.mxu0 0.0
    %6189 = vmatpush1.msra.mxu0 0.0
    %6190 = vmatprep.subr.mxu0 0.0
    %6191 = vmatpush1.msra.mxu0 0.0
    %6192 = vmatprep.subr.mxu0 0.0
    %6193 = vmatpush1.msra.mxu0 0.0
    %6194 = vmatprep.mubr.f32.mxu0 0.0
    %6195 = vmatmul.mubr.f32.gmra.mrb[0].mxu0 %v6128
    %v6196 = vpop.f32.mrb[0].mxu0
    %v6197 = vadd.f32 0.0, %v6196
    %v6198 = vpop.f32.mrb[0].mxu0
    %6199 = vdwg.mxu0
    %v6200 = vadd.f32 %v3331, %v6197
    %6201 = vmatprep.subr.mxu0 0.0
    %6202 = vmatpush1.msra.mxu0 %v3352
    %6203 = vmatprep.subr.mxu0 0.0
    %6204 = vmatpush1.msra.mxu0 %v3353
    %6205 = vmatprep.subr.mxu0 0.0
    %6206 = vmatpush1.msra.mxu0 %v3354
    %6207 = vmatprep.subr.mxu0 0.0
    %6208 = vmatpush1.msra.mxu0 %v3355
    %6209 = vmatprep.subr.mxu0 0.0
    %6210 = vmatpush1.msra.mxu0 0.0
    %6211 = vmatprep.subr.mxu0 0.0
    %6212 = vmatpush1.msra.mxu0 0.0
    %6213 = vmatprep.subr.mxu0 0.0
    %6214 = vmatpush1.msra.mxu0 0.0
    %6215 = vmatprep.subr.mxu0 0.0
    %6216 = vmatpush1.msra.mxu0 0.0
    %6217 = vmatprep.subr.mxu0 0.0
    %6218 = vmatpush1.msra.mxu0 0.0
    %6219 = vmatprep.subr.mxu0 0.0
    %6220 = vmatpush1.msra.mxu0 0.0
    %6221 = vmatprep.subr.mxu0 0.0
    %6222 = vmatpush1.msra.mxu0 0.0
    %6223 = vmatprep.subr.mxu0 0.0
    %6224 = vmatpush1.msra.mxu0 0.0
    %6225 = vmatprep.subr.mxu0 0.0
    %6226 = vmatpush1.msra.mxu0 0.0
    %6227 = vmatprep.subr.mxu0 0.0
    %6228 = vmatpush1.msra.mxu0 0.0
    %6229 = vmatprep.subr.mxu0 0.0
    %6230 = vmatpush1.msra.mxu0 0.0
    %6231 = vmatprep.subr.mxu0 0.0
    %6232 = vmatpush1.msra.mxu0 0.0
    %6233 = vmatprep.subr.mxu0 0.0
    %6234 = vmatpush1.msra.mxu0 0.0
    %6235 = vmatprep.subr.mxu0 0.0
    %6236 = vmatpush1.msra.mxu0 0.0
    %6237 = vmatprep.subr.mxu0 0.0
    %6238 = vmatpush1.msra.mxu0 0.0
    %6239 = vmatprep.subr.mxu0 0.0
    %6240 = vmatpush1.msra.mxu0 0.0
    %6241 = vmatprep.subr.mxu0 0.0
    %6242 = vmatpush1.msra.mxu0 0.0
    %6243 = vmatprep.subr.mxu0 0.0
    %6244 = vmatpush1.msra.mxu0 0.0
    %6245 = vmatprep.subr.mxu0 0.0
    %6246 = vmatpush1.msra.mxu0 0.0
    %6247 = vmatprep.subr.mxu0 0.0
    %6248 = vmatpush1.msra.mxu0 0.0
    %6249 = vmatprep.subr.mxu0 0.0
    %6250 = vmatpush1.msra.mxu0 0.0
    %6251 = vmatprep.subr.mxu0 0.0
    %6252 = vmatpush1.msra.mxu0 0.0
    %6253 = vmatprep.subr.mxu0 0.0
    %6254 = vmatpush1.msra.mxu0 0.0
    %6255 = vmatprep.subr.mxu0 0.0
    %6256 = vmatpush1.msra.mxu0 0.0
    %6257 = vmatprep.subr.mxu0 0.0
    %6258 = vmatpush1.msra.mxu0 0.0
    %6259 = vmatprep.subr.mxu0 0.0
    %6260 = vmatpush1.msra.mxu0 0.0
    %6261 = vmatprep.subr.mxu0 0.0
    %6262 = vmatpush1.msra.mxu0 0.0
    %6263 = vmatprep.subr.mxu0 0.0
    %6264 = vmatpush1.msra.mxu0 0.0
    %6265 = vmatprep.mubr.f32.mxu0 0.0
    %6266 = vmatmul.mubr.f32.gmra.mrb[0].mxu0 %v5733
    %v6267 = vpop.f32.mrb[0].mxu0
    %v6268 = vadd.f32 0.0, %v6267
    %v6269 = vpop.f32.mrb[0].mxu0
    %6270 = vdwg.mxu0
    %v6271 = vadd.f32 %v6200, %v6268
    %v6272 = vxor.u32 %v6271, 2147483648
    %v6273 = vmul.f32 %v6272, 1.442695
    %v6274 = vpow.pop %v6273
    %v6275 = vadd.f32 %v6274, 1.0
    %v6276 = vrcp.pop %v6275
    %v6277 = vmul.f32 1.0, %v6276
    %v6278 = vtanh.pop %v6271
    %v6279 = vmul.f32 %v6277, %v5653
    %6281 = vrot.lane.b32.xlu0 %v6278, 64
    %v6282 = vpop.permute.xlu0 %6281
    %v6284 = vmul.f32 %v6277, %v6282
    %6286 = vrot.lane.b32.xlu0 %v6284, 32
    %v6287 = vpop.permute.xlu0 %6286
    %v6289 = vadd.f32 %v6279, %v6287
    %v6290 = vtanh.pop %v6289
    %6292 = vrot.lane.b32.xlu0 %v6290, 64
    %v6293 = vpop.permute.xlu0 %6292
    %v6295 = vmul.f32 %v6277, %v6293
    %6296 = vmatprep.subr.mxu0 0.0
    %6297 = vmatpush1.msra.mxu0 %v3360
    %6298 = vmatprep.subr.mxu0 0.0
    %6299 = vmatpush1.msra.mxu0 %v3361
    %6300 = vmatprep.subr.mxu0 0.0
    %6301 = vmatpush1.msra.mxu0 %v3362
    %6302 = vmatprep.subr.mxu0 0.0
    %6303 = vmatpush1.msra.mxu0 %v3363
    %6304 = vmatprep.subr.mxu0 0.0
    %6305 = vmatpush1.msra.mxu0 0.0
    %6306 = vmatprep.subr.mxu0 0.0
    %6307 = vmatpush1.msra.mxu0 0.0
    %6308 = vmatprep.subr.mxu0 0.0
    %6309 = vmatpush1.msra.mxu0 0.0
    %6310 = vmatprep.subr.mxu0 0.0
    %6311 = vmatpush1.msra.mxu0 0.0
    %6312 = vmatprep.subr.mxu0 0.0
    %6313 = vmatpush1.msra.mxu0 0.0
    %6314 = vmatprep.subr.mxu0 0.0
    %6315 = vmatpush1.msra.mxu0 0.0
    %6316 = vmatprep.subr.mxu0 0.0
    %6317 = vmatpush1.msra.mxu0 0.0
    %6318 = vmatprep.subr.mxu0 0.0
    %6319 = vmatpush1.msra.mxu0 0.0
    %6320 = vmatprep.subr.mxu0 0.0
    %6321 = vmatpush1.msra.mxu0 0.0
    %6322 = vmatprep.subr.mxu0 0.0
    %6323 = vmatpush1.msra.mxu0 0.0
    %6324 = vmatprep.subr.mxu0 0.0
    %6325 = vmatpush1.msra.mxu0 0.0
    %6326 = vmatprep.subr.mxu0 0.0
    %6327 = vmatpush1.msra.mxu0 0.0
    %6328 = vmatprep.subr.mxu0 0.0
    %6329 = vmatpush1.msra.mxu0 0.0
    %6330 = vmatprep.subr.mxu0 0.0
    %6331 = vmatpush1.msra.mxu0 0.0
    %6332 = vmatprep.subr.mxu0 0.0
    %6333 = vmatpush1.msra.mxu0 0.0
    %6334 = vmatprep.subr.mxu0 0.0
    %6335 = vmatpush1.msra.mxu0 0.0
    %6336 = vmatprep.subr.mxu0 0.0
    %6337 = vmatpush1.msra.mxu0 0.0
    %6338 = vmatprep.subr.mxu0 0.0
    %6339 = vmatpush1.msra.mxu0 0.0
    %6340 = vmatprep.subr.mxu0 0.0
    %6341 = vmatpush1.msra.mxu0 0.0
    %6342 = vmatprep.subr.mxu0 0.0
    %6343 = vmatpush1.msra.mxu0 0.0
    %6344 = vmatprep.subr.mxu0 0.0
    %6345 = vmatpush1.msra.mxu0 0.0
    %6346 = vmatprep.subr.mxu0 0.0
    %6347 = vmatpush1.msra.mxu0 0.0
    %6348 = vmatprep.subr.mxu0 0.0
    %6349 = vmatpush1.msra.mxu0 0.0
    %6350 = vmatprep.subr.mxu0 0.0
    %6351 = vmatpush1.msra.mxu0 0.0
    %6352 = vmatprep.subr.mxu0 0.0
    %6353 = vmatpush1.msra.mxu0 0.0
    %6354 = vmatprep.subr.mxu0 0.0
    %6355 = vmatpush1.msra.mxu0 0.0
    %6356 = vmatprep.subr.mxu0 0.0
    %6357 = vmatpush1.msra.mxu0 0.0
    %6358 = vmatprep.subr.mxu0 0.0
    %6359 = vmatpush1.msra.mxu0 0.0
    %6360 = vmatprep.mubr.f32.mxu0 0.0
    %6361 = vmatmul.mubr.f32.gmra.mrb[0].mxu0 %v5833
    %v6362 = vpop.f32.mrb[0].mxu0
    %v6363 = vadd.f32 0.0, %v6362
    %v6364 = vpop.f32.mrb[0].mxu0
    %6365 = vdwg.mxu0
    %6367 = vrot.lane.b32.xlu0 %v6295, 32
    %v6368 = vpop.permute.xlu0 %6367
    %v6369 = vsel %vm95, %v6368, 0
    %6371 = vmatprep.subr.mxu0 0.0
    %6372 = vmatpush1.msra.mxu0 %v3356
    %6373 = vmatprep.subr.mxu0 0.0
    %6374 = vmatpush1.msra.mxu0 %v3357
    %6375 = vmatprep.subr.mxu0 0.0
    %6376 = vmatpush1.msra.mxu0 %v3358
    %6377 = vmatprep.subr.mxu0 0.0
    %6378 = vmatpush1.msra.mxu0 %v3359
    %6379 = vmatprep.subr.mxu0 0.0
    %6380 = vmatpush1.msra.mxu0 0.0
    %6381 = vmatprep.subr.mxu0 0.0
    %6382 = vmatpush1.msra.mxu0 0.0
    %6383 = vmatprep.subr.mxu0 0.0
    %6384 = vmatpush1.msra.mxu0 0.0
    %6385 = vmatprep.subr.mxu0 0.0
    %6386 = vmatpush1.msra.mxu0 0.0
    %6387 = vmatprep.subr.mxu0 0.0
    %6388 = vmatpush1.msra.mxu0 0.0
    %6389 = vmatprep.subr.mxu0 0.0
    %6390 = vmatpush1.msra.mxu0 0.0
    %6391 = vmatprep.subr.mxu0 0.0
    %6392 = vmatpush1.msra.mxu0 0.0
    %6393 = vmatprep.subr.mxu0 0.0
    %6394 = vmatpush1.msra.mxu0 0.0
    %6395 = vmatprep.subr.mxu0 0.0
    %6396 = vmatpush1.msra.mxu0 0.0
    %6397 = vmatprep.subr.mxu0 0.0
    %6398 = vmatpush1.msra.mxu0 0.0
    %6399 = vmatprep.subr.mxu0 0.0
    %6400 = vmatpush1.msra.mxu0 0.0
    %6401 = vmatprep.subr.mxu0 0.0
    %6402 = vmatpush1.msra.mxu0 0.0
    %6403 = vmatprep.subr.mxu0 0.0
    %6404 = vmatpush1.msra.mxu0 0.0
    %6405 = vmatprep.subr.mxu0 0.0
    %6406 = vmatpush1.msra.mxu0 0.0
    %6407 = vmatprep.subr.mxu0 0.0
    %6408 = vmatpush1.msra.mxu0 0.0
    %6409 = vmatprep.subr.mxu0 0.0
    %6410 = vmatpush1.msra.mxu0 0.0
    %6411 = vmatprep.subr.mxu0 0.0
    %6412 = vmatpush1.msra.mxu0 0.0
    %6413 = vmatprep.subr.mxu0 0.0
    %6414 = vmatpush1.msra.mxu0 0.0
    %6415 = vmatprep.subr.mxu0 0.0
    %6416 = vmatpush1.msra.mxu0 0.0
    %6417 = vmatprep.subr.mxu0 0.0
    %6418 = vmatpush1.msra.mxu0 0.0
    %6419 = vmatprep.subr.mxu0 0.0
    %6420 = vmatpush1.msra.mxu0 0.0
    %6421 = vmatprep.subr.mxu0 0.0
    %6422 = vmatpush1.msra.mxu0 0.0
    %6423 = vmatprep.subr.mxu0 0.0
    %6424 = vmatpush1.msra.mxu0 0.0
    %6425 = vmatprep.subr.mxu0 0.0
    %6426 = vmatpush1.msra.mxu0 0.0
    %6427 = vmatprep.subr.mxu0 0.0
    %6428 = vmatpush1.msra.mxu0 0.0
    %6429 = vmatprep.subr.mxu0 0.0
    %6430 = vmatpush1.msra.mxu0 0.0
    %6431 = vmatprep.subr.mxu0 0.0
    %6432 = vmatpush1.msra.mxu0 0.0
    %6433 = vmatprep.subr.mxu0 0.0
    %6434 = vmatpush1.msra.mxu0 0.0
    %6435 = vmatprep.mubr.f32.mxu0 0.0
    %6436 = vmatmul.mubr.f32.gmra.mrb[0].mxu0 %v6369
    %v6437 = vpop.f32.mrb[0].mxu0
    %v6438 = vadd.f32 %v6363, %v6437
    %v6439 = vpop.f32.mrb[0].mxu0
    %6440 = vdwg.mxu0
    %v6441 = vadd.f32 %v6438, %v3894
    %v6442 = vxor.u32 %v6441, 2147483648
    %v6443 = vmul.f32 %v6442, 1.442695
    %v6444 = vpow.pop %v6443
    %v6445 = vadd.f32 %v6444, 1.0
    %v6446 = vrcp.pop %v6445
    %v6447 = vmul.f32 1.0, %v6446
    %v6448 = vtanh.pop %v6441
    %v6449 = vmul.f32 %v6447, %v5823
    %6451 = vrot.lane.b32.xlu0 %v6448, 64
    %v6452 = vpop.permute.xlu0 %6451
    %v6454 = vmul.f32 %v6447, %v6452
    %6456 = vrot.lane.b32.xlu0 %v6454, 32
    %v6457 = vpop.permute.xlu0 %6456
    %v6459 = vadd.f32 %v6449, %v6457
    %v6460 = vtanh.pop %v6459
    %6462 = vrot.lane.b32.xlu0 %v6460, 64
    %v6463 = vpop.permute.xlu0 %6462
    %v6465 = vmul.f32 %v6447, %v6463
    %6467 = vrot.lane.b32.xlu0 %v6465, 32
    %v6468 = vpop.permute.xlu0 %6467
    %v6469 = vsel %vm95, %v6468, 0
    %6471 = vmatprep.subr.mxu0 0.0
    %6472 = vmatpush1.msra.mxu0 %v3365
    %6473 = vmatprep.subr.mxu0 0.0
    %6474 = vmatpush1.msra.mxu0 %v3366
    %6475 = vmatprep.subr.mxu0 0.0
    %6476 = vmatpush1.msra.mxu0 %v3367
    %6477 = vmatprep.subr.mxu0 0.0
    %6478 = vmatpush1.msra.mxu0 %v3368
    %6479 = vmatprep.subr.mxu0 0.0
    %6480 = vmatpush1.msra.mxu0 0.0
    %6481 = vmatprep.subr.mxu0 0.0
    %6482 = vmatpush1.msra.mxu0 0.0
    %6483 = vmatprep.subr.mxu0 0.0
    %6484 = vmatpush1.msra.mxu0 0.0
    %6485 = vmatprep.subr.mxu0 0.0
    %6486 = vmatpush1.msra.mxu0 0.0
    %6487 = vmatprep.subr.mxu0 0.0
    %6488 = vmatpush1.msra.mxu0 0.0
    %6489 = vmatprep.subr.mxu0 0.0
    %6490 = vmatpush1.msra.mxu0 0.0
    %6491 = vmatprep.subr.mxu0 0.0
    %6492 = vmatpush1.msra.mxu0 0.0
    %6493 = vmatprep.subr.mxu0 0.0
    %6494 = vmatpush1.msra.mxu0 0.0
    %6495 = vmatprep.subr.mxu0 0.0
    %6496 = vmatpush1.msra.mxu0 0.0
    %6497 = vmatprep.subr.mxu0 0.0
    %6498 = vmatpush1.msra.mxu0 0.0
    %6499 = vmatprep.subr.mxu0 0.0
    %6500 = vmatpush1.msra.mxu0 0.0
    %6501 = vmatprep.subr.mxu0 0.0
    %6502 = vmatpush1.msra.mxu0 0.0
    %6503 = vmatprep.subr.mxu0 0.0
    %6504 = vmatpush1.msra.mxu0 0.0
    %6505 = vmatprep.subr.mxu0 0.0
    %6506 = vmatpush1.msra.mxu0 0.0
    %6507 = vmatprep.subr.mxu0 0.0
    %6508 = vmatpush1.msra.mxu0 0.0
    %6509 = vmatprep.subr.mxu0 0.0
    %6510 = vmatpush1.msra.mxu0 0.0
    %6511 = vmatprep.subr.mxu0 0.0
    %6512 = vmatpush1.msra.mxu0 0.0
    %6513 = vmatprep.subr.mxu0 0.0
    %6514 = vmatpush1.msra.mxu0 0.0
    %6515 = vmatprep.subr.mxu0 0.0
    %6516 = vmatpush1.msra.mxu0 0.0
    %6517 = vmatprep.subr.mxu0 0.0
    %6518 = vmatpush1.msra.mxu0 0.0
    %6519 = vmatprep.subr.mxu0 0.0
    %6520 = vmatpush1.msra.mxu0 0.0
    %6521 = vmatprep.subr.mxu0 0.0
    %6522 = vmatpush1.msra.mxu0 0.0
    %6523 = vmatprep.subr.mxu0 0.0
    %6524 = vmatpush1.msra.mxu0 0.0
    %6525 = vmatprep.subr.mxu0 0.0
    %6526 = vmatpush1.msra.mxu0 0.0
    %6527 = vmatprep.subr.mxu0 0.0
    %6528 = vmatpush1.msra.mxu0 0.0
    %6529 = vmatprep.subr.mxu0 0.0
    %6530 = vmatpush1.msra.mxu0 0.0
    %6531 = vmatprep.subr.mxu0 0.0
    %6532 = vmatpush1.msra.mxu0 0.0
    %6533 = vmatprep.subr.mxu0 0.0
    %6534 = vmatpush1.msra.mxu0 0.0
    %6535 = vmatprep.mubr.f32.mxu0 0.0
    %6536 = vmatmul.mubr.f32.gmra.mrb[0].mxu0 %v6469
    %v6537 = vpop.f32.mrb[0].mxu0
    %v6538 = vadd.f32 %v3925, %v6537
    %v6539 = vpop.f32.mrb[0].mxu0
    %6540 = vdwg.mxu0
    %v6541 = vsel %vm95, %v6538, -inf
    %6542 = vmax.xlane.f32.xlu0 %v6541
    %v6543 = vpop.xlane.xlu0 %6542
    %v6544 = vsub.f32 %v6538, %v6543
    %v6545 = vmul.f32 %v6544, 1.442695
    %v6546 = vpow.pop %v6545
    %v6547 = vsel %vm95, %v6546, 0.0
    %6548 = vadd.xlane.f32.xlu0 %v6547
    %v6549 = vpop.xlane.xlu0 %6548
    %v6550 = vlog2.pop %v6549
    %v6551 = vmul.f32 %v6550, 0.6931472
    %v6552 = vadd.f32 %v6551, %v6543
    %6553 = vset.pattern.permute.xlu0 5
    %6554 = vperm.xlu0 %6553, %v3376
    %v6555 = vpop.permute.xlu0 %6554
    %vm6556 = vcmp.eq.s32.totalorder %v3378, %v6555
    %v6557 = vsel %vm6556, %v6538, 0.0
    %v6558 = vsel %vm95, %v6557, 0.0
    %6559 = vadd.xlane.f32.xlu0 %v6558
    %v6560 = vpop.xlane.xlu0 %6559
    %v6561 = vsub.f32 %v6552, %v6560
    %v6562 = vmul.f32 %v6561, %v4004
    %vm6563 = vcmask 48168
    %v6564 = vsel %vm6563, %v6562, 0.0
    %v6565 = vrot.slane %v6564, 4
    %v6566 = vadd.f32 %v6564, %v6565
    %v6567 = vrot.slane %v6566, 2
    %v6568 = vadd.f32 %v6566, %v6567
    %v6569 = vrot.slane %v6568, 1
    %v6570 = vadd.f32 %v6568, %v6569
    %6572 = vrot.lane.b32.xlu0 %v6570, 124
    %v6573 = vpop.permute.xlu0 %6572
    %v6575 = vadd.f32 %v5939, %v6573
    %v6576 = vsel %vm6563, %v4004, 0.0
    %v6577 = vrot.slane %v6576, 4
    %v6578 = vadd.f32 %v6576, %v6577
    %v6579 = vrot.slane %v6578, 2
    %v6580 = vadd.f32 %v6578, %v6579
    %v6581 = vrot.slane %v6580, 1
    %v6582 = vadd.f32 %v6580, %v6581
    %6584 = vrot.lane.b32.xlu0 %v6582, 124
    %v6585 = vpop.permute.xlu0 %6584
    %v6587 = vadd.f32 %v5951, %v6585
    %6588 = vmatprep.subr.mxu0 0.0
    %6589 = vmatpush1.msra.mxu0 %v3370
    %6590 = vmatprep.subr.mxu0 0.0
    %6591 = vmatpush1.msra.mxu0 %v3371
    %6592 = vmatprep.subr.mxu0 0.0
    %6593 = vmatpush1.msra.mxu0 %v3372
    %6594 = vmatprep.subr.mxu0 0.0
    %6595 = vmatpush1.msra.mxu0 %v3373
    %6596 = vmatprep.subr.mxu0 0.0
    %6597 = vmatpush1.msra.mxu0 0.0
    %6598 = vmatprep.subr.mxu0 0.0
    %6599 = vmatpush1.msra.mxu0 0.0
    %6600 = vmatprep.subr.mxu0 0.0
    %6601 = vmatpush1.msra.mxu0 0.0
    %6602 = vmatprep.subr.mxu0 0.0
    %6603 = vmatpush1.msra.mxu0 0.0
    %6604 = vmatprep.subr.mxu0 0.0
    %6605 = vmatpush1.msra.mxu0 0.0
    %6606 = vmatprep.subr.mxu0 0.0
    %6607 = vmatpush1.msra.mxu0 0.0
    %6608 = vmatprep.subr.mxu0 0.0
    %6609 = vmatpush1.msra.mxu0 0.0
    %6610 = vmatprep.subr.mxu0 0.0
    %6611 = vmatpush1.msra.mxu0 0.0
    %6612 = vmatprep.subr.mxu0 0.0
    %6613 = vmatpush1.msra.mxu0 0.0
    %6614 = vmatprep.subr.mxu0 0.0
    %6615 = vmatpush1.msra.mxu0 0.0
    %6616 = vmatprep.subr.mxu0 0.0
    %6617 = vmatpush1.msra.mxu0 0.0
    %6618 = vmatprep.subr.mxu0 0.0
    %6619 = vmatpush1.msra.mxu0 0.0
    %6620 = vmatprep.subr.mxu0 0.0
    %6621 = vmatpush1.msra.mxu0 0.0
    %6622 = vmatprep.subr.mxu0 0.0
    %6623 = vmatpush1.msra.mxu0 0.0
    %6624 = vmatprep.subr.mxu0 0.0
    %6625 = vmatpush1.msra.mxu0 0.0
    %6626 = vmatprep.subr.mxu0 0.0
    %6627 = vmatpush1.msra.mxu0 0.0
    %6628 = vmatprep.subr.mxu0 0.0
    %6629 = vmatpush1.msra.mxu0 0.0
    %6630 = vmatprep.subr.mxu0 0.0
    %6631 = vmatpush1.msra.mxu0 0.0
    %6632 = vmatprep.subr.mxu0 0.0
    %6633 = vmatpush1.msra.mxu0 0.0
    %6634 = vmatprep.subr.mxu0 0.0
    %6635 = vmatpush1.msra.mxu0 0.0
    %6636 = vmatprep.subr.mxu0 0.0
    %6637 = vmatpush1.msra.mxu0 0.0
    %6638 = vmatprep.subr.mxu0 0.0
    %6639 = vmatpush1.msra.mxu0 0.0
    %6640 = vmatprep.subr.mxu0 0.0
    %6641 = vmatpush1.msra.mxu0 0.0
    %6642 = vmatprep.subr.mxu0 0.0
    %6643 = vmatpush1.msra.mxu0 0.0
    %6644 = vmatprep.subr.mxu0 0.0
    %6645 = vmatpush1.msra.mxu0 0.0
    %6646 = vmatprep.subr.mxu0 0.0
    %6647 = vmatpush1.msra.mxu0 0.0
    %6648 = vmatprep.subr.mxu0 0.0
    %6649 = vmatpush1.msra.mxu0 0.0
    %6650 = vmatprep.subr.mxu0 0.0
    %6651 = vmatpush1.msra.mxu0 0.0
    %6652 = vmatprep.mubr.f32.mxu0 0.0
    %6653 = vmatmul.mubr.f32.gmra.mrb[0].mxu0 %v6469
    %v6654 = vpop.f32.mrb[0].mxu0
    %v6655 = vadd.f32 %v3383, %v6654
    %v6656 = vpop.f32.mrb[0].mxu0
    %6657 = vdwg.mxu0
    %v6658 = vadd.f32 %v6655, %v608
    %v6659 = vtanh.pop %v6658
    %v6660 = vmul.f32 %v6659, %v3466
    %v6661 = vsel %vm95, %v6660, 0.0
    %6662 = vadd.xlane.f32.xlu0 %v6661
    %v6663 = vpop.xlane.xlu0 %6662
    %v6664 = vadd.f32 %v6655, %v978
    %v6665 = vtanh.pop %v6664
    %v6666 = vmul.f32 %v6665, %v3466
    %v6667 = vsel %vm95, %v6666, 0.0
    %6668 = vadd.xlane.f32.xlu0 %v6667
    %v6669 = vpop.xlane.xlu0 %6668
    %v6670 = vadd.f32 %v6655, %v1348
    %v6671 = vtanh.pop %v6670
    %v6672 = vmul.f32 %v6671, %v3466
    %v6673 = vsel %vm95, %v6672, 0.0
    %6674 = vadd.xlane.f32.xlu0 %v6673
    %v6675 = vpop.xlane.xlu0 %6674
    %v6676 = vadd.f32 %v6655, %v1718
    %v6677 = vtanh.pop %v6676
    %v6678 = vmul.f32 %v6677, %v3466
    %v6679 = vsel %vm95, %v6678, 0.0
    %6680 = vadd.xlane.f32.xlu0 %v6679
    %v6681 = vpop.xlane.xlu0 %6680
    %v6682 = vadd.f32 %v6655, %v2088
    %v6683 = vtanh.pop %v6682
    %v6684 = vmul.f32 %v6683, %v3466
    %v6685 = vsel %vm95, %v6684, 0.0
    %6686 = vadd.xlane.f32.xlu0 %v6685
    %v6687 = vpop.xlane.xlu0 %6686
    %v6688 = vadd.f32 %v6655, %v2458
    %v6689 = vtanh.pop %v6688
    %v6690 = vmul.f32 %v6689, %v3466
    %v6691 = vsel %vm95, %v6690, 0.0
    %6692 = vadd.xlane.f32.xlu0 %v6691
    %v6693 = vpop.xlane.xlu0 %6692
    %v6694 = vadd.f32 %v6655, %v2828
    %v6695 = vtanh.pop %v6694
    %v6696 = vmul.f32 %v6695, %v3466
    %v6697 = vsel %vm95, %v6696, 0.0
    %6698 = vadd.xlane.f32.xlu0 %v6697
    %v6699 = vpop.xlane.xlu0 %6698
    %v6700 = vadd.f32 %v6655, %v3198
    %v6701 = vtanh.pop %v6700
    %v6702 = vmul.f32 %v6701, %v3466
    %v6703 = vsel %vm95, %v6702, 0.0
    %6704 = vadd.xlane.f32.xlu0 %v6703
    %v6705 = vpop.xlane.xlu0 %6704
    %v6706 = vmax.f32 %v6663, %v6669
    %v6707 = vmax.f32 %v6706, %v6675
    %v6708 = vmax.f32 %v6707, %v6681
    %v6709 = vmax.f32 %v6708, %v6687
    %v6710 = vmax.f32 %v6709, %v6693
    %v6711 = vmax.f32 %v6710, %v6699
    %v6712 = vmax.f32 %v6711, %v6705
    %v6713 = vsub.f32 %v6663, %v6712
    %v6714 = vmul.f32 %v6713, 1.442695
    %v6715 = vpow.pop %v6714
    %v6716 = vsub.f32 %v6669, %v6712
    %v6717 = vmul.f32 %v6716, 1.442695
    %v6718 = vpow.pop %v6717
    %v6719 = vsub.f32 %v6675, %v6712
    %v6720 = vmul.f32 %v6719, 1.442695
    %v6721 = vpow.pop %v6720
    %v6722 = vsub.f32 %v6681, %v6712
    %v6723 = vmul.f32 %v6722, 1.442695
    %v6724 = vpow.pop %v6723
    %v6725 = vsub.f32 %v6687, %v6712
    %v6726 = vmul.f32 %v6725, 1.442695
    %v6727 = vpow.pop %v6726
    %v6728 = vsub.f32 %v6693, %v6712
    %v6729 = vmul.f32 %v6728, 1.442695
    %v6730 = vpow.pop %v6729
    %v6731 = vsub.f32 %v6699, %v6712
    %v6732 = vmul.f32 %v6731, 1.442695
    %v6733 = vpow.pop %v6732
    %v6734 = vsub.f32 %v6705, %v6712
    %v6735 = vmul.f32 %v6734, 1.442695
    %v6736 = vpow.pop %v6735
    %v6737 = vadd.f32 %v6715, %v6718
    %v6738 = vadd.f32 %v6737, %v6721
    %v6739 = vadd.f32 %v6738, %v6724
    %v6740 = vadd.f32 %v6739, %v6727
    %v6741 = vadd.f32 %v6740, %v6730
    %v6742 = vadd.f32 %v6741, %v6733
    %v6743 = vadd.f32 %v6742, %v6736
    %v6744 = vmul.f32 %v6715, %v532
    %v6745 = vmul.f32 %v6718, %v900
    %v6746 = vadd.f32 %v6744, %v6745
    %v6747 = vmul.f32 %v6721, %v1270
    %v6748 = vadd.f32 %v6746, %v6747
    %v6749 = vmul.f32 %v6724, %v1640
    %v6750 = vadd.f32 %v6748, %v6749
    %v6751 = vmul.f32 %v6727, %v2010
    %v6752 = vadd.f32 %v6750, %v6751
    %v6753 = vmul.f32 %v6730, %v2380
    %v6754 = vadd.f32 %v6752, %v6753
    %v6755 = vmul.f32 %v6733, %v2750
    %v6756 = vadd.f32 %v6754, %v6755
    %v6757 = vmul.f32 %v6736, %v3120
    %v6758 = vadd.f32 %v6756, %v6757
    %v6759 = vrcp.pop %v6743
    %v6760 = vmul.f32 %v6758, %v6759
    %6762 = vrot.lane.b32.xlu0 %v6760, 32
    %v6763 = vpop.permute.xlu0 %6762
    %v6764 = vsel %vm95, %v6763, 0
    %6766 = vmatprep.subr.mxu0 0.0
    %6767 = vmatpush1.msra.mxu0 %v3348
    %6768 = vmatprep.subr.mxu0 0.0
    %6769 = vmatpush1.msra.mxu0 %v3349
    %6770 = vmatprep.subr.mxu0 0.0
    %6771 = vmatpush1.msra.mxu0 %v3350
    %6772 = vmatprep.subr.mxu0 0.0
    %6773 = vmatpush1.msra.mxu0 %v3351
    %6774 = vmatprep.subr.mxu0 0.0
    %6775 = vmatpush1.msra.mxu0 0.0
    %6776 = vmatprep.subr.mxu0 0.0
    %6777 = vmatpush1.msra.mxu0 0.0
    %6778 = vmatprep.subr.mxu0 0.0
    %6779 = vmatpush1.msra.mxu0 0.0
    %6780 = vmatprep.subr.mxu0 0.0
    %6781 = vmatpush1.msra.mxu0 0.0
    %6782 = vmatprep.subr.mxu0 0.0
    %6783 = vmatpush1.msra.mxu0 0.0
    %6784 = vmatprep.subr.mxu0 0.0
    %6785 = vmatpush1.msra.mxu0 0.0
    %6786 = vmatprep.subr.mxu0 0.0
    %6787 = vmatpush1.msra.mxu0 0.0
    %6788 = vmatprep.subr.mxu0 0.0
    %6789 = vmatpush1.msra.mxu0 0.0
    %6790 = vmatprep.subr.mxu0 0.0
    %6791 = vmatpush1.msra.mxu0 0.0
    %6792 = vmatprep.subr.mxu0 0.0
    %6793 = vmatpush1.msra.mxu0 0.0
    %6794 = vmatprep.subr.mxu0 0.0
    %6795 = vmatpush1.msra.mxu0 0.0
    %6796 = vmatprep.subr.mxu0 0.0
    %6797 = vmatpush1.msra.mxu0 0.0
    %6798 = vmatprep.subr.mxu0 0.0
    %6799 = vmatpush1.msra.mxu0 0.0
    %6800 = vmatprep.subr.mxu0 0.0
    %6801 = vmatpush1.msra.mxu0 0.0
    %6802 = vmatprep.subr.mxu0 0.0
    %6803 = vmatpush1.msra.mxu0 0.0
    %6804 = vmatprep.subr.mxu0 0.0
    %6805 = vmatpush1.msra.mxu0 0.0
    %6806 = vmatprep.subr.mxu0 0.0
    %6807 = vmatpush1.msra.mxu0 0.0
    %6808 = vmatprep.subr.mxu0 0.0
    %6809 = vmatpush1.msra.mxu0 0.0
    %6810 = vmatprep.subr.mxu0 0.0
    %6811 = vmatpush1.msra.mxu0 0.0
    %6812 = vmatprep.subr.mxu0 0.0
    %6813 = vmatpush1.msra.mxu0 0.0
    %6814 = vmatprep.subr.mxu0 0.0
    %6815 = vmatpush1.msra.mxu0 0.0
    %6816 = vmatprep.subr.mxu0 0.0
    %6817 = vmatpush1.msra.mxu0 0.0
    %6818 = vmatprep.subr.mxu0 0.0
    %6819 = vmatpush1.msra.mxu0 0.0
    %6820 = vmatprep.subr.mxu0 0.0
    %6821 = vmatpush1.msra.mxu0 0.0
    %6822 = vmatprep.subr.mxu0 0.0
    %6823 = vmatpush1.msra.mxu0 0.0
    %6824 = vmatprep.subr.mxu0 0.0
    %6825 = vmatpush1.msra.mxu0 0.0
    %6826 = vmatprep.subr.mxu0 0.0
    %6827 = vmatpush1.msra.mxu0 0.0
    %6828 = vmatprep.subr.mxu0 0.0
    %6829 = vmatpush1.msra.mxu0 0.0
    %6830 = vmatprep.mubr.f32.mxu0 0.0
    %6831 = vmatmul.mubr.f32.gmra.mrb[0].mxu0 %v6764
    %v6832 = vpop.f32.mrb[0].mxu0
    %v6833 = vadd.f32 0.0, %v6832
    %v6834 = vpop.f32.mrb[0].mxu0
    %6835 = vdwg.mxu0
    %v6836 = vadd.f32 %v3336, %v6833
    %6837 = vmatprep.subr.mxu0 0.0
    %6838 = vmatpush1.msra.mxu0 %v3352
    %6839 = vmatprep.subr.mxu0 0.0
    %6840 = vmatpush1.msra.mxu0 %v3353
    %6841 = vmatprep.subr.mxu0 0.0
    %6842 = vmatpush1.msra.mxu0 %v3354
    %6843 = vmatprep.subr.mxu0 0.0
    %6844 = vmatpush1.msra.mxu0 %v3355
    %6845 = vmatprep.subr.mxu0 0.0
    %6846 = vmatpush1.msra.mxu0 0.0
    %6847 = vmatprep.subr.mxu0 0.0
    %6848 = vmatpush1.msra.mxu0 0.0
    %6849 = vmatprep.subr.mxu0 0.0
    %6850 = vmatpush1.msra.mxu0 0.0
    %6851 = vmatprep.subr.mxu0 0.0
    %6852 = vmatpush1.msra.mxu0 0.0
    %6853 = vmatprep.subr.mxu0 0.0
    %6854 = vmatpush1.msra.mxu0 0.0
    %6855 = vmatprep.subr.mxu0 0.0
    %6856 = vmatpush1.msra.mxu0 0.0
    %6857 = vmatprep.subr.mxu0 0.0
    %6858 = vmatpush1.msra.mxu0 0.0
    %6859 = vmatprep.subr.mxu0 0.0
    %6860 = vmatpush1.msra.mxu0 0.0
    %6861 = vmatprep.subr.mxu0 0.0
    %6862 = vmatpush1.msra.mxu0 0.0
    %6863 = vmatprep.subr.mxu0 0.0
    %6864 = vmatpush1.msra.mxu0 0.0
    %6865 = vmatprep.subr.mxu0 0.0
    %6866 = vmatpush1.msra.mxu0 0.0
    %6867 = vmatprep.subr.mxu0 0.0
    %6868 = vmatpush1.msra.mxu0 0.0
    %6869 = vmatprep.subr.mxu0 0.0
    %6870 = vmatpush1.msra.mxu0 0.0
    %6871 = vmatprep.subr.mxu0 0.0
    %6872 = vmatpush1.msra.mxu0 0.0
    %6873 = vmatprep.subr.mxu0 0.0
    %6874 = vmatpush1.msra.mxu0 0.0
    %6875 = vmatprep.subr.mxu0 0.0
    %6876 = vmatpush1.msra.mxu0 0.0
    %6877 = vmatprep.subr.mxu0 0.0
    %6878 = vmatpush1.msra.mxu0 0.0
    %6879 = vmatprep.subr.mxu0 0.0
    %6880 = vmatpush1.msra.mxu0 0.0
    %6881 = vmatprep.subr.mxu0 0.0
    %6882 = vmatpush1.msra.mxu0 0.0
    %6883 = vmatprep.subr.mxu0 0.0
    %6884 = vmatpush1.msra.mxu0 0.0
    %6885 = vmatprep.subr.mxu0 0.0
    %6886 = vmatpush1.msra.mxu0 0.0
    %6887 = vmatprep.subr.mxu0 0.0
    %6888 = vmatpush1.msra.mxu0 0.0
    %6889 = vmatprep.subr.mxu0 0.0
    %6890 = vmatpush1.msra.mxu0 0.0
    %6891 = vmatprep.subr.mxu0 0.0
    %6892 = vmatpush1.msra.mxu0 0.0
    %6893 = vmatprep.subr.mxu0 0.0
    %6894 = vmatpush1.msra.mxu0 0.0
    %6895 = vmatprep.subr.mxu0 0.0
    %6896 = vmatpush1.msra.mxu0 0.0
    %6897 = vmatprep.subr.mxu0 0.0
    %6898 = vmatpush1.msra.mxu0 0.0
    %6899 = vmatprep.subr.mxu0 0.0
    %6900 = vmatpush1.msra.mxu0 0.0
    %6901 = vmatprep.mubr.f32.mxu0 0.0
    %6902 = vmatmul.mubr.f32.gmra.mrb[0].mxu0 %v6369
    %v6903 = vpop.f32.mrb[0].mxu0
    %v6904 = vadd.f32 0.0, %v6903
    %v6905 = vpop.f32.mrb[0].mxu0
    %6906 = vdwg.mxu0
    %v6907 = vadd.f32 %v6836, %v6904
    %v6908 = vxor.u32 %v6907, 2147483648
    %v6909 = vmul.f32 %v6908, 1.442695
    %v6910 = vpow.pop %v6909
    %v6911 = vadd.f32 %v6910, 1.0
    %v6912 = vrcp.pop %v6911
    %v6913 = vmul.f32 1.0, %v6912
    %v6914 = vtanh.pop %v6907
    %v6915 = vmul.f32 %v6913, %v6289
    %6917 = vrot.lane.b32.xlu0 %v6914, 64
    %v6918 = vpop.permute.xlu0 %6917
    %v6920 = vmul.f32 %v6913, %v6918
    %6922 = vrot.lane.b32.xlu0 %v6920, 32
    %v6923 = vpop.permute.xlu0 %6922
    %v6925 = vadd.f32 %v6915, %v6923
    %v6926 = vtanh.pop %v6925
    %6928 = vrot.lane.b32.xlu0 %v6926, 64
    %v6929 = vpop.permute.xlu0 %6928
    %v6931 = vmul.f32 %v6913, %v6929
    %6932 = vmatprep.subr.mxu0 0.0
    %6933 = vmatpush1.msra.mxu0 %v3360
    %6934 = vmatprep.subr.mxu0 0.0
    %6935 = vmatpush1.msra.mxu0 %v3361
    %6936 = vmatprep.subr.mxu0 0.0
    %6937 = vmatpush1.msra.mxu0 %v3362
    %6938 = vmatprep.subr.mxu0 0.0
    %6939 = vmatpush1.msra.mxu0 %v3363
    %6940 = vmatprep.subr.mxu0 0.0
    %6941 = vmatpush1.msra.mxu0 0.0
    %6942 = vmatprep.subr.mxu0 0.0
    %6943 = vmatpush1.msra.mxu0 0.0
    %6944 = vmatprep.subr.mxu0 0.0
    %6945 = vmatpush1.msra.mxu0 0.0
    %6946 = vmatprep.subr.mxu0 0.0
    %6947 = vmatpush1.msra.mxu0 0.0
    %6948 = vmatprep.subr.mxu0 0.0
    %6949 = vmatpush1.msra.mxu0 0.0
    %6950 = vmatprep.subr.mxu0 0.0
    %6951 = vmatpush1.msra.mxu0 0.0
    %6952 = vmatprep.subr.mxu0 0.0
    %6953 = vmatpush1.msra.mxu0 0.0
    %6954 = vmatprep.subr.mxu0 0.0
    %6955 = vmatpush1.msra.mxu0 0.0
    %6956 = vmatprep.subr.mxu0 0.0
    %6957 = vmatpush1.msra.mxu0 0.0
    %6958 = vmatprep.subr.mxu0 0.0
    %6959 = vmatpush1.msra.mxu0 0.0
    %6960 = vmatprep.subr.mxu0 0.0
    %6961 = vmatpush1.msra.mxu0 0.0
    %6962 = vmatprep.subr.mxu0 0.0
    %6963 = vmatpush1.msra.mxu0 0.0
    %6964 = vmatprep.subr.mxu0 0.0
    %6965 = vmatpush1.msra.mxu0 0.0
    %6966 = vmatprep.subr.mxu0 0.0
    %6967 = vmatpush1.msra.mxu0 0.0
    %6968 = vmatprep.subr.mxu0 0.0
    %6969 = vmatpush1.msra.mxu0 0.0
    %6970 = vmatprep.subr.mxu0 0.0
    %6971 = vmatpush1.msra.mxu0 0.0
    %6972 = vmatprep.subr.mxu0 0.0
    %6973 = vmatpush1.msra.mxu0 0.0
    %6974 = vmatprep.subr.mxu0 0.0
    %6975 = vmatpush1.msra.mxu0 0.0
    %6976 = vmatprep.subr.mxu0 0.0
    %6977 = vmatpush1.msra.mxu0 0.0
    %6978 = vmatprep.subr.mxu0 0.0
    %6979 = vmatpush1.msra.mxu0 0.0
    %6980 = vmatprep.subr.mxu0 0.0
    %6981 = vmatpush1.msra.mxu0 0.0
    %6982 = vmatprep.subr.mxu0 0.0
    %6983 = vmatpush1.msra.mxu0 0.0
    %6984 = vmatprep.subr.mxu0 0.0
    %6985 = vmatpush1.msra.mxu0 0.0
    %6986 = vmatprep.subr.mxu0 0.0
    %6987 = vmatpush1.msra.mxu0 0.0
    %6988 = vmatprep.subr.mxu0 0.0
    %6989 = vmatpush1.msra.mxu0 0.0
    %6990 = vmatprep.subr.mxu0 0.0
    %6991 = vmatpush1.msra.mxu0 0.0
    %6992 = vmatprep.subr.mxu0 0.0
    %6993 = vmatpush1.msra.mxu0 0.0
    %6994 = vmatprep.subr.mxu0 0.0
    %6995 = vmatpush1.msra.mxu0 0.0
    %6996 = vmatprep.mubr.f32.mxu0 0.0
    %6997 = vmatmul.mubr.f32.gmra.mrb[0].mxu0 %v6469
    %v6998 = vpop.f32.mrb[0].mxu0
    %v6999 = vadd.f32 0.0, %v6998
    %v7000 = vpop.f32.mrb[0].mxu0
    %7001 = vdwg.mxu0
    %7003 = vrot.lane.b32.xlu0 %v6931, 32
    %v7004 = vpop.permute.xlu0 %7003
    %v7005 = vsel %vm95, %v7004, 0
    %7007 = vmatprep.subr.mxu0 0.0
    %7008 = vmatpush1.msra.mxu0 %v3356
    %7009 = vmatprep.subr.mxu0 0.0
    %7010 = vmatpush1.msra.mxu0 %v3357
    %7011 = vmatprep.subr.mxu0 0.0
    %7012 = vmatpush1.msra.mxu0 %v3358
    %7013 = vmatprep.subr.mxu0 0.0
    %7014 = vmatpush1.msra.mxu0 %v3359
    %7015 = vmatprep.subr.mxu0 0.0
    %7016 = vmatpush1.msra.mxu0 0.0
    %7017 = vmatprep.subr.mxu0 0.0
    %7018 = vmatpush1.msra.mxu0 0.0
    %7019 = vmatprep.subr.mxu0 0.0
    %7020 = vmatpush1.msra.mxu0 0.0
    %7021 = vmatprep.subr.mxu0 0.0
    %7022 = vmatpush1.msra.mxu0 0.0
    %7023 = vmatprep.subr.mxu0 0.0
    %7024 = vmatpush1.msra.mxu0 0.0
    %7025 = vmatprep.subr.mxu0 0.0
    %7026 = vmatpush1.msra.mxu0 0.0
    %7027 = vmatprep.subr.mxu0 0.0
    %7028 = vmatpush1.msra.mxu0 0.0
    %7029 = vmatprep.subr.mxu0 0.0
    %7030 = vmatpush1.msra.mxu0 0.0
    %7031 = vmatprep.subr.mxu0 0.0
    %7032 = vmatpush1.msra.mxu0 0.0
    %7033 = vmatprep.subr.mxu0 0.0
    %7034 = vmatpush1.msra.mxu0 0.0
    %7035 = vmatprep.subr.mxu0 0.0
    %7036 = vmatpush1.msra.mxu0 0.0
    %7037 = vmatprep.subr.mxu0 0.0
    %7038 = vmatpush1.msra.mxu0 0.0
    %7039 = vmatprep.subr.mxu0 0.0
    %7040 = vmatpush1.msra.mxu0 0.0
    %7041 = vmatprep.subr.mxu0 0.0
    %7042 = vmatpush1.msra.mxu0 0.0
    %7043 = vmatprep.subr.mxu0 0.0
    %7044 = vmatpush1.msra.mxu0 0.0
    %7045 = vmatprep.subr.mxu0 0.0
    %7046 = vmatpush1.msra.mxu0 0.0
    %7047 = vmatprep.subr.mxu0 0.0
    %7048 = vmatpush1.msra.mxu0 0.0
    %7049 = vmatprep.subr.mxu0 0.0
    %7050 = vmatpush1.msra.mxu0 0.0
    %7051 = vmatprep.subr.mxu0 0.0
    %7052 = vmatpush1.msra.mxu0 0.0
    %7053 = vmatprep.subr.mxu0 0.0
    %7054 = vmatpush1.msra.mxu0 0.0
    %7055 = vmatprep.subr.mxu0 0.0
    %7056 = vmatpush1.msra.mxu0 0.0
    %7057 = vmatprep.subr.mxu0 0.0
    %7058 = vmatpush1.msra.mxu0 0.0
    %7059 = vmatprep.subr.mxu0 0.0
    %7060 = vmatpush1.msra.mxu0 0.0
    %7061 = vmatprep.subr.mxu0 0.0
    %7062 = vmatpush1.msra.mxu0 0.0
    %7063 = vmatprep.subr.mxu0 0.0
    %7064 = vmatpush1.msra.mxu0 0.0
    %7065 = vmatprep.subr.mxu0 0.0
    %7066 = vmatpush1.msra.mxu0 0.0
    %7067 = vmatprep.subr.mxu0 0.0
    %7068 = vmatpush1.msra.mxu0 0.0
    %7069 = vmatprep.subr.mxu0 0.0
    %7070 = vmatpush1.msra.mxu0 0.0
    %7071 = vmatprep.mubr.f32.mxu0 0.0
    %7072 = vmatmul.mubr.f32.gmra.mrb[0].mxu0 %v7005
    %v7073 = vpop.f32.mrb[0].mxu0
    %v7074 = vadd.f32 %v6999, %v7073
    %v7075 = vpop.f32.mrb[0].mxu0
    %7076 = vdwg.mxu0
    %v7077 = vadd.f32 %v7074, %v3894
    %v7078 = vxor.u32 %v7077, 2147483648
    %v7079 = vmul.f32 %v7078, 1.442695
    %v7080 = vpow.pop %v7079
    %v7081 = vadd.f32 %v7080, 1.0
    %v7082 = vrcp.pop %v7081
    %v7083 = vmul.f32 1.0, %v7082
    %v7084 = vtanh.pop %v7077
    %v7085 = vmul.f32 %v7083, %v6459
    %7087 = vrot.lane.b32.xlu0 %v7084, 64
    %v7088 = vpop.permute.xlu0 %7087
    %v7090 = vmul.f32 %v7083, %v7088
    %7092 = vrot.lane.b32.xlu0 %v7090, 32
    %v7093 = vpop.permute.xlu0 %7092
    %v7095 = vadd.f32 %v7085, %v7093
    %v7096 = vtanh.pop %v7095
    %7098 = vrot.lane.b32.xlu0 %v7096, 64
    %v7099 = vpop.permute.xlu0 %7098
    %v7101 = vmul.f32 %v7083, %v7099
    %7103 = vrot.lane.b32.xlu0 %v7101, 32
    %v7104 = vpop.permute.xlu0 %7103
    %v7105 = vsel %vm95, %v7104, 0
    %7107 = vmatprep.subr.mxu0 0.0
    %7108 = vmatpush1.msra.mxu0 %v3365
    %7109 = vmatprep.subr.mxu0 0.0
    %7110 = vmatpush1.msra.mxu0 %v3366
    %7111 = vmatprep.subr.mxu0 0.0
    %7112 = vmatpush1.msra.mxu0 %v3367
    %7113 = vmatprep.subr.mxu0 0.0
    %7114 = vmatpush1.msra.mxu0 %v3368
    %7115 = vmatprep.subr.mxu0 0.0
    %7116 = vmatpush1.msra.mxu0 0.0
    %7117 = vmatprep.subr.mxu0 0.0
    %7118 = vmatpush1.msra.mxu0 0.0
    %7119 = vmatprep.subr.mxu0 0.0
    %7120 = vmatpush1.msra.mxu0 0.0
    %7121 = vmatprep.subr.mxu0 0.0
    %7122 = vmatpush1.msra.mxu0 0.0
    %7123 = vmatprep.subr.mxu0 0.0
    %7124 = vmatpush1.msra.mxu0 0.0
    %7125 = vmatprep.subr.mxu0 0.0
    %7126 = vmatpush1.msra.mxu0 0.0
    %7127 = vmatprep.subr.mxu0 0.0
    %7128 = vmatpush1.msra.mxu0 0.0
    %7129 = vmatprep.subr.mxu0 0.0
    %7130 = vmatpush1.msra.mxu0 0.0
    %7131 = vmatprep.subr.mxu0 0.0
    %7132 = vmatpush1.msra.mxu0 0.0
    %7133 = vmatprep.subr.mxu0 0.0
    %7134 = vmatpush1.msra.mxu0 0.0
    %7135 = vmatprep.subr.mxu0 0.0
    %7136 = vmatpush1.msra.mxu0 0.0
    %7137 = vmatprep.subr.mxu0 0.0
    %7138 = vmatpush1.msra.mxu0 0.0
    %7139 = vmatprep.subr.mxu0 0.0
    %7140 = vmatpush1.msra.mxu0 0.0
    %7141 = vmatprep.subr.mxu0 0.0
    %7142 = vmatpush1.msra.mxu0 0.0
    %7143 = vmatprep.subr.mxu0 0.0
    %7144 = vmatpush1.msra.mxu0 0.0
    %7145 = vmatprep.subr.mxu0 0.0
    %7146 = vmatpush1.msra.mxu0 0.0
    %7147 = vmatprep.subr.mxu0 0.0
    %7148 = vmatpush1.msra.mxu0 0.0
    %7149 = vmatprep.subr.mxu0 0.0
    %7150 = vmatpush1.msra.mxu0 0.0
    %7151 = vmatprep.subr.mxu0 0.0
    %7152 = vmatpush1.msra.mxu0 0.0
    %7153 = vmatprep.subr.mxu0 0.0
    %7154 = vmatpush1.msra.mxu0 0.0
    %7155 = vmatprep.subr.mxu0 0.0
    %7156 = vmatpush1.msra.mxu0 0.0
    %7157 = vmatprep.subr.mxu0 0.0
    %7158 = vmatpush1.msra.mxu0 0.0
    %7159 = vmatprep.subr.mxu0 0.0
    %7160 = vmatpush1.msra.mxu0 0.0
    %7161 = vmatprep.subr.mxu0 0.0
    %7162 = vmatpush1.msra.mxu0 0.0
    %7163 = vmatprep.subr.mxu0 0.0
    %7164 = vmatpush1.msra.mxu0 0.0
    %7165 = vmatprep.subr.mxu0 0.0
    %7166 = vmatpush1.msra.mxu0 0.0
    %7167 = vmatprep.subr.mxu0 0.0
    %7168 = vmatpush1.msra.mxu0 0.0
    %7169 = vmatprep.subr.mxu0 0.0
    %7170 = vmatpush1.msra.mxu0 0.0
    %7171 = vmatprep.mubr.f32.mxu0 0.0
    %7172 = vmatmul.mubr.f32.gmra.mrb[0].mxu0 %v7105
    %v7173 = vpop.f32.mrb[0].mxu0
    %v7174 = vadd.f32 %v3925, %v7173
    %v7175 = vpop.f32.mrb[0].mxu0
    %7176 = vdwg.mxu0
    %v7177 = vsel %vm95, %v7174, -inf
    %7178 = vmax.xlane.f32.xlu0 %v7177
    %v7179 = vpop.xlane.xlu0 %7178
    %v7180 = vsub.f32 %v7174, %v7179
    %v7181 = vmul.f32 %v7180, 1.442695
    %v7182 = vpow.pop %v7181
    %v7183 = vsel %vm95, %v7182, 0.0
    %7184 = vadd.xlane.f32.xlu0 %v7183
    %v7185 = vpop.xlane.xlu0 %7184
    %v7186 = vlog2.pop %v7185
    %v7187 = vmul.f32 %v7186, 0.6931472
    %v7188 = vadd.f32 %v7187, %v7179
    %7189 = vset.pattern.permute.xlu0 6
    %7190 = vperm.xlu0 %7189, %v3376
    %v7191 = vpop.permute.xlu0 %7190
    %vm7192 = vcmp.eq.s32.totalorder %v3378, %v7191
    %v7193 = vsel %vm7192, %v7174, 0.0
    %v7194 = vsel %vm95, %v7193, 0.0
    %7195 = vadd.xlane.f32.xlu0 %v7194
    %v7196 = vpop.xlane.xlu0 %7195
    %v7197 = vsub.f32 %v7188, %v7196
    %v7198 = vmul.f32 %v7197, %v4004
    %vm7199 = vcmask 56368
    %v7200 = vsel %vm7199, %v7198, 0.0
    %v7201 = vrot.slane %v7200, 4
    %v7202 = vadd.f32 %v7200, %v7201
    %v7203 = vrot.slane %v7202, 2
    %v7204 = vadd.f32 %v7202, %v7203
    %v7205 = vrot.slane %v7204, 1
    %v7206 = vadd.f32 %v7204, %v7205
    %7208 = vrot.lane.b32.xlu0 %v7206, 123
    %v7209 = vpop.permute.xlu0 %7208
    %v7211 = vadd.f32 %v6575, %v7209
    %v7212 = vsel %vm7199, %v4004, 0.0
    %v7213 = vrot.slane %v7212, 4
    %v7214 = vadd.f32 %v7212, %v7213
    %v7215 = vrot.slane %v7214, 2
    %v7216 = vadd.f32 %v7214, %v7215
    %v7217 = vrot.slane %v7216, 1
    %v7218 = vadd.f32 %v7216, %v7217
    %7220 = vrot.lane.b32.xlu0 %v7218, 123
    %v7221 = vpop.permute.xlu0 %7220
    %v7223 = vadd.f32 %v6587, %v7221
    %7224 = vmatprep.subr.mxu0 0.0
    %7225 = vmatpush1.msra.mxu0 %v3370
    %7226 = vmatprep.subr.mxu0 0.0
    %7227 = vmatpush1.msra.mxu0 %v3371
    %7228 = vmatprep.subr.mxu0 0.0
    %7229 = vmatpush1.msra.mxu0 %v3372
    %7230 = vmatprep.subr.mxu0 0.0
    %7231 = vmatpush1.msra.mxu0 %v3373
    %7232 = vmatprep.subr.mxu0 0.0
    %7233 = vmatpush1.msra.mxu0 0.0
    %7234 = vmatprep.subr.mxu0 0.0
    %7235 = vmatpush1.msra.mxu0 0.0
    %7236 = vmatprep.subr.mxu0 0.0
    %7237 = vmatpush1.msra.mxu0 0.0
    %7238 = vmatprep.subr.mxu0 0.0
    %7239 = vmatpush1.msra.mxu0 0.0
    %7240 = vmatprep.subr.mxu0 0.0
    %7241 = vmatpush1.msra.mxu0 0.0
    %7242 = vmatprep.subr.mxu0 0.0
    %7243 = vmatpush1.msra.mxu0 0.0
    %7244 = vmatprep.subr.mxu0 0.0
    %7245 = vmatpush1.msra.mxu0 0.0
    %7246 = vmatprep.subr.mxu0 0.0
    %7247 = vmatpush1.msra.mxu0 0.0
    %7248 = vmatprep.subr.mxu0 0.0
    %7249 = vmatpush1.msra.mxu0 0.0
    %7250 = vmatprep.subr.mxu0 0.0
    %7251 = vmatpush1.msra.mxu0 0.0
    %7252 = vmatprep.subr.mxu0 0.0
    %7253 = vmatpush1.msra.mxu0 0.0
    %7254 = vmatprep.subr.mxu0 0.0
    %7255 = vmatpush1.msra.mxu0 0.0
    %7256 = vmatprep.subr.mxu0 0.0
    %7257 = vmatpush1.msra.mxu0 0.0
    %7258 = vmatprep.subr.mxu0 0.0
    %7259 = vmatpush1.msra.mxu0 0.0
    %7260 = vmatprep.subr.mxu0 0.0
    %7261 = vmatpush1.msra.mxu0 0.0
    %7262 = vmatprep.subr.mxu0 0.0
    %7263 = vmatpush1.msra.mxu0 0.0
    %7264 = vmatprep.subr.mxu0 0.0
    %7265 = vmatpush1.msra.mxu0 0.0
    %7266 = vmatprep.subr.mxu0 0.0
    %7267 = vmatpush1.msra.mxu0 0.0
    %7268 = vmatprep.subr.mxu0 0.0
    %7269 = vmatpush1.msra.mxu0 0.0
    %7270 = vmatprep.subr.mxu0 0.0
    %7271 = vmatpush1.msra.mxu0 0.0
    %7272 = vmatprep.subr.mxu0 0.0
    %7273 = vmatpush1.msra.mxu0 0.0
    %7274 = vmatprep.subr.mxu0 0.0
    %7275 = vmatpush1.msra.mxu0 0.0
    %7276 = vmatprep.subr.mxu0 0.0
    %7277 = vmatpush1.msra.mxu0 0.0
    %7278 = vmatprep.subr.mxu0 0.0
    %7279 = vmatpush1.msra.mxu0 0.0
    %7280 = vmatprep.subr.mxu0 0.0
    %7281 = vmatpush1.msra.mxu0 0.0
    %7282 = vmatprep.subr.mxu0 0.0
    %7283 = vmatpush1.msra.mxu0 0.0
    %7284 = vmatprep.subr.mxu0 0.0
    %7285 = vmatpush1.msra.mxu0 0.0
    %7286 = vmatprep.subr.mxu0 0.0
    %7287 = vmatpush1.msra.mxu0 0.0
    %7288 = vmatprep.mubr.f32.mxu0 0.0
    %7289 = vmatmul.mubr.f32.gmra.mrb[0].mxu0 %v7105
    %v7290 = vpop.f32.mrb[0].mxu0
    %v7291 = vadd.f32 %v3383, %v7290
    %v7292 = vpop.f32.mrb[0].mxu0
    %7293 = vdwg.mxu0
    %v7294 = vadd.f32 %v7291, %v608
    %v7295 = vtanh.pop %v7294
    %v7296 = vmul.f32 %v7295, %v3466
    %v7297 = vsel %vm95, %v7296, 0.0
    %7298 = vadd.xlane.f32.xlu0 %v7297
    %v7299 = vpop.xlane.xlu0 %7298
    %v7300 = vadd.f32 %v7291, %v978
    %v7301 = vtanh.pop %v7300
    %v7302 = vmul.f32 %v7301, %v3466
    %v7303 = vsel %vm95, %v7302, 0.0
    %7304 = vadd.xlane.f32.xlu0 %v7303
    %v7305 = vpop.xlane.xlu0 %7304
    %v7306 = vadd.f32 %v7291, %v1348
    %v7307 = vtanh.pop %v7306
    %v7308 = vmul.f32 %v7307, %v3466
    %v7309 = vsel %vm95, %v7308, 0.0
    %7310 = vadd.xlane.f32.xlu0 %v7309
    %v7311 = vpop.xlane.xlu0 %7310
    %v7312 = vadd.f32 %v7291, %v1718
    %v7313 = vtanh.pop %v7312
    %v7314 = vmul.f32 %v7313, %v3466
    %v7315 = vsel %vm95, %v7314, 0.0
    %7316 = vadd.xlane.f32.xlu0 %v7315
    %v7317 = vpop.xlane.xlu0 %7316
    %v7318 = vadd.f32 %v7291, %v2088
    %v7319 = vtanh.pop %v7318
    %v7320 = vmul.f32 %v7319, %v3466
    %v7321 = vsel %vm95, %v7320, 0.0
    %7322 = vadd.xlane.f32.xlu0 %v7321
    %v7323 = vpop.xlane.xlu0 %7322
    %v7324 = vadd.f32 %v7291, %v2458
    %v7325 = vtanh.pop %v7324
    %v7326 = vmul.f32 %v7325, %v3466
    %v7327 = vsel %vm95, %v7326, 0.0
    %7328 = vadd.xlane.f32.xlu0 %v7327
    %v7329 = vpop.xlane.xlu0 %7328
    %v7330 = vadd.f32 %v7291, %v2828
    %v7331 = vtanh.pop %v7330
    %v7332 = vmul.f32 %v7331, %v3466
    %v7333 = vsel %vm95, %v7332, 0.0
    %7334 = vadd.xlane.f32.xlu0 %v7333
    %v7335 = vpop.xlane.xlu0 %7334
    %v7336 = vadd.f32 %v7291, %v3198
    %v7337 = vtanh.pop %v7336
    %v7338 = vmul.f32 %v7337, %v3466
    %v7339 = vsel %vm95, %v7338, 0.0
    %7340 = vadd.xlane.f32.xlu0 %v7339
    %v7341 = vpop.xlane.xlu0 %7340
    %v7342 = vmax.f32 %v7299, %v7305
    %v7343 = vmax.f32 %v7342, %v7311
    %v7344 = vmax.f32 %v7343, %v7317
    %v7345 = vmax.f32 %v7344, %v7323
    %v7346 = vmax.f32 %v7345, %v7329
    %v7347 = vmax.f32 %v7346, %v7335
    %v7348 = vmax.f32 %v7347, %v7341
    %v7349 = vsub.f32 %v7299, %v7348
    %v7350 = vmul.f32 %v7349, 1.442695
    %v7351 = vpow.pop %v7350
    %v7352 = vsub.f32 %v7305, %v7348
    %v7353 = vmul.f32 %v7352, 1.442695
    %v7354 = vpow.pop %v7353
    %v7355 = vsub.f32 %v7311, %v7348
    %v7356 = vmul.f32 %v7355, 1.442695
    %v7357 = vpow.pop %v7356
    %v7358 = vsub.f32 %v7317, %v7348
    %v7359 = vmul.f32 %v7358, 1.442695
    %v7360 = vpow.pop %v7359
    %v7361 = vsub.f32 %v7323, %v7348
    %v7362 = vmul.f32 %v7361, 1.442695
    %v7363 = vpow.pop %v7362
    %v7364 = vsub.f32 %v7329, %v7348
    %v7365 = vmul.f32 %v7364, 1.442695
    %v7366 = vpow.pop %v7365
    %v7367 = vsub.f32 %v7335, %v7348
    %v7368 = vmul.f32 %v7367, 1.442695
    %v7369 = vpow.pop %v7368
    %v7370 = vsub.f32 %v7341, %v7348
    %v7371 = vmul.f32 %v7370, 1.442695
    %v7372 = vpow.pop %v7371
    %v7373 = vadd.f32 %v7351, %v7354
    %v7374 = vadd.f32 %v7373, %v7357
    %v7375 = vadd.f32 %v7374, %v7360
    %v7376 = vadd.f32 %v7375, %v7363
    %v7377 = vadd.f32 %v7376, %v7366
    %v7378 = vadd.f32 %v7377, %v7369
    %v7379 = vadd.f32 %v7378, %v7372
    %v7380 = vmul.f32 %v7351, %v532
    %v7381 = vmul.f32 %v7354, %v900
    %v7382 = vadd.f32 %v7380, %v7381
    %v7383 = vmul.f32 %v7357, %v1270
    %v7384 = vadd.f32 %v7382, %v7383
    %v7385 = vmul.f32 %v7360, %v1640
    %v7386 = vadd.f32 %v7384, %v7385
    %v7387 = vmul.f32 %v7363, %v2010
    %v7388 = vadd.f32 %v7386, %v7387
    %v7389 = vmul.f32 %v7366, %v2380
    %v7390 = vadd.f32 %v7388, %v7389
    %v7391 = vmul.f32 %v7369, %v2750
    %v7392 = vadd.f32 %v7390, %v7391
    %v7393 = vmul.f32 %v7372, %v3120
    %v7394 = vadd.f32 %v7392, %v7393
    %v7395 = vrcp.pop %v7379
    %v7396 = vmul.f32 %v7394, %v7395
    %7398 = vrot.lane.b32.xlu0 %v7396, 32
    %v7399 = vpop.permute.xlu0 %7398
    %v7400 = vsel %vm95, %v7399, 0
    %7402 = vmatprep.subr.mxu0 0.0
    %7403 = vmatpush1.msra.mxu0 %v3348
    %7404 = vmatprep.subr.mxu0 0.0
    %7405 = vmatpush1.msra.mxu0 %v3349
    %7406 = vmatprep.subr.mxu0 0.0
    %7407 = vmatpush1.msra.mxu0 %v3350
    %7408 = vmatprep.subr.mxu0 0.0
    %7409 = vmatpush1.msra.mxu0 %v3351
    %7410 = vmatprep.subr.mxu0 0.0
    %7411 = vmatpush1.msra.mxu0 0.0
    %7412 = vmatprep.subr.mxu0 0.0
    %7413 = vmatpush1.msra.mxu0 0.0
    %7414 = vmatprep.subr.mxu0 0.0
    %7415 = vmatpush1.msra.mxu0 0.0
    %7416 = vmatprep.subr.mxu0 0.0
    %7417 = vmatpush1.msra.mxu0 0.0
    %7418 = vmatprep.subr.mxu0 0.0
    %7419 = vmatpush1.msra.mxu0 0.0
    %7420 = vmatprep.subr.mxu0 0.0
    %7421 = vmatpush1.msra.mxu0 0.0
    %7422 = vmatprep.subr.mxu0 0.0
    %7423 = vmatpush1.msra.mxu0 0.0
    %7424 = vmatprep.subr.mxu0 0.0
    %7425 = vmatpush1.msra.mxu0 0.0
    %7426 = vmatprep.subr.mxu0 0.0
    %7427 = vmatpush1.msra.mxu0 0.0
    %7428 = vmatprep.subr.mxu0 0.0
    %7429 = vmatpush1.msra.mxu0 0.0
    %7430 = vmatprep.subr.mxu0 0.0
    %7431 = vmatpush1.msra.mxu0 0.0
    %7432 = vmatprep.subr.mxu0 0.0
    %7433 = vmatpush1.msra.mxu0 0.0
    %7434 = vmatprep.subr.mxu0 0.0
    %7435 = vmatpush1.msra.mxu0 0.0
    %7436 = vmatprep.subr.mxu0 0.0
    %7437 = vmatpush1.msra.mxu0 0.0
    %7438 = vmatprep.subr.mxu0 0.0
    %7439 = vmatpush1.msra.mxu0 0.0
    %7440 = vmatprep.subr.mxu0 0.0
    %7441 = vmatpush1.msra.mxu0 0.0
    %7442 = vmatprep.subr.mxu0 0.0
    %7443 = vmatpush1.msra.mxu0 0.0
    %7444 = vmatprep.subr.mxu0 0.0
    %7445 = vmatpush1.msra.mxu0 0.0
    %7446 = vmatprep.subr.mxu0 0.0
    %7447 = vmatpush1.msra.mxu0 0.0
    %7448 = vmatprep.subr.mxu0 0.0
    %7449 = vmatpush1.msra.mxu0 0.0
    %7450 = vmatprep.subr.mxu0 0.0
    %7451 = vmatpush1.msra.mxu0 0.0
    %7452 = vmatprep.subr.mxu0 0.0
    %7453 = vmatpush1.msra.mxu0 0.0
    %7454 = vmatprep.subr.mxu0 0.0
    %7455 = vmatpush1.msra.mxu0 0.0
    %7456 = vmatprep.subr.mxu0 0.0
    %7457 = vmatpush1.msra.mxu0 0.0
    %7458 = vmatprep.subr.mxu0 0.0
    %7459 = vmatpush1.msra.mxu0 0.0
    %7460 = vmatprep.subr.mxu0 0.0
    %7461 = vmatpush1.msra.mxu0 0.0
    %7462 = vmatprep.subr.mxu0 0.0
    %7463 = vmatpush1.msra.mxu0 0.0
    %7464 = vmatprep.subr.mxu0 0.0
    %7465 = vmatpush1.msra.mxu0 0.0
    %7466 = vmatprep.mubr.f32.mxu0 0.0
    %7467 = vmatmul.mubr.f32.gmra.mrb[0].mxu0 %v7400
    %v7468 = vpop.f32.mrb[0].mxu0
    %v7469 = vadd.f32 0.0, %v7468
    %v7470 = vpop.f32.mrb[0].mxu0
    %7471 = vdwg.mxu0
    %v7472 = vadd.f32 %v3341, %v7469
    %7473 = vmatprep.subr.mxu0 0.0
    %7474 = vmatpush1.msra.mxu0 %v3352
    %7475 = vmatprep.subr.mxu0 0.0
    %7476 = vmatpush1.msra.mxu0 %v3353
    %7477 = vmatprep.subr.mxu0 0.0
    %7478 = vmatpush1.msra.mxu0 %v3354
    %7479 = vmatprep.subr.mxu0 0.0
    %7480 = vmatpush1.msra.mxu0 %v3355
    %7481 = vmatprep.subr.mxu0 0.0
    %7482 = vmatpush1.msra.mxu0 0.0
    %7483 = vmatprep.subr.mxu0 0.0
    %7484 = vmatpush1.msra.mxu0 0.0
    %7485 = vmatprep.subr.mxu0 0.0
    %7486 = vmatpush1.msra.mxu0 0.0
    %7487 = vmatprep.subr.mxu0 0.0
    %7488 = vmatpush1.msra.mxu0 0.0
    %7489 = vmatprep.subr.mxu0 0.0
    %7490 = vmatpush1.msra.mxu0 0.0
    %7491 = vmatprep.subr.mxu0 0.0
    %7492 = vmatpush1.msra.mxu0 0.0
    %7493 = vmatprep.subr.mxu0 0.0
    %7494 = vmatpush1.msra.mxu0 0.0
    %7495 = vmatprep.subr.mxu0 0.0
    %7496 = vmatpush1.msra.mxu0 0.0
    %7497 = vmatprep.subr.mxu0 0.0
    %7498 = vmatpush1.msra.mxu0 0.0
    %7499 = vmatprep.subr.mxu0 0.0
    %7500 = vmatpush1.msra.mxu0 0.0
    %7501 = vmatprep.subr.mxu0 0.0
    %7502 = vmatpush1.msra.mxu0 0.0
    %7503 = vmatprep.subr.mxu0 0.0
    %7504 = vmatpush1.msra.mxu0 0.0
    %7505 = vmatprep.subr.mxu0 0.0
    %7506 = vmatpush1.msra.mxu0 0.0
    %7507 = vmatprep.subr.mxu0 0.0
    %7508 = vmatpush1.msra.mxu0 0.0
    %7509 = vmatprep.subr.mxu0 0.0
    %7510 = vmatpush1.msra.mxu0 0.0
    %7511 = vmatprep.subr.mxu0 0.0
    %7512 = vmatpush1.msra.mxu0 0.0
    %7513 = vmatprep.subr.mxu0 0.0
    %7514 = vmatpush1.msra.mxu0 0.0
    %7515 = vmatprep.subr.mxu0 0.0
    %7516 = vmatpush1.msra.mxu0 0.0
    %7517 = vmatprep.subr.mxu0 0.0
    %7518 = vmatpush1.msra.mxu0 0.0
    %7519 = vmatprep.subr.mxu0 0.0
    %7520 = vmatpush1.msra.mxu0 0.0
    %7521 = vmatprep.subr.mxu0 0.0
    %7522 = vmatpush1.msra.mxu0 0.0
    %7523 = vmatprep.subr.mxu0 0.0
    %7524 = vmatpush1.msra.mxu0 0.0
    %7525 = vmatprep.subr.mxu0 0.0
    %7526 = vmatpush1.msra.mxu0 0.0
    %7527 = vmatprep.subr.mxu0 0.0
    %7528 = vmatpush1.msra.mxu0 0.0
    %7529 = vmatprep.subr.mxu0 0.0
    %7530 = vmatpush1.msra.mxu0 0.0
    %7531 = vmatprep.subr.mxu0 0.0
    %7532 = vmatpush1.msra.mxu0 0.0
    %7533 = vmatprep.subr.mxu0 0.0
    %7534 = vmatpush1.msra.mxu0 0.0
    %7535 = vmatprep.subr.mxu0 0.0
    %7536 = vmatpush1.msra.mxu0 0.0
    %7537 = vmatprep.mubr.f32.mxu0 0.0
    %7538 = vmatmul.mubr.f32.gmra.mrb[0].mxu0 %v7005
    %v7539 = vpop.f32.mrb[0].mxu0
    %v7540 = vadd.f32 0.0, %v7539
    %v7541 = vpop.f32.mrb[0].mxu0
    %7542 = vdwg.mxu0
    %v7543 = vadd.f32 %v7472, %v7540
    %v7544 = vxor.u32 %v7543, 2147483648
    %v7545 = vmul.f32 %v7544, 1.442695
    %v7546 = vpow.pop %v7545
    %v7547 = vadd.f32 %v7546, 1.0
    %v7548 = vrcp.pop %v7547
    %v7549 = vmul.f32 1.0, %v7548
    %v7550 = vtanh.pop %v7543
    %v7551 = vmul.f32 %v7549, %v6925
    %7553 = vrot.lane.b32.xlu0 %v7550, 64
    %v7554 = vpop.permute.xlu0 %7553
    %v7556 = vmul.f32 %v7549, %v7554
    %7558 = vrot.lane.b32.xlu0 %v7556, 32
    %v7559 = vpop.permute.xlu0 %7558
    %v7561 = vadd.f32 %v7551, %v7559
    %v7562 = vtanh.pop %v7561
    %7564 = vrot.lane.b32.xlu0 %v7562, 64
    %v7565 = vpop.permute.xlu0 %7564
    %v7567 = vmul.f32 %v7549, %v7565
    %7568 = vmatprep.subr.mxu0 0.0
    %7569 = vmatpush1.msra.mxu0 %v3360
    %7570 = vmatprep.subr.mxu0 0.0
    %7571 = vmatpush1.msra.mxu0 %v3361
    %7572 = vmatprep.subr.mxu0 0.0
    %7573 = vmatpush1.msra.mxu0 %v3362
    %7574 = vmatprep.subr.mxu0 0.0
    %7575 = vmatpush1.msra.mxu0 %v3363
    %7576 = vmatprep.subr.mxu0 0.0
    %7577 = vmatpush1.msra.mxu0 0.0
    %7578 = vmatprep.subr.mxu0 0.0
    %7579 = vmatpush1.msra.mxu0 0.0
    %7580 = vmatprep.subr.mxu0 0.0
    %7581 = vmatpush1.msra.mxu0 0.0
    %7582 = vmatprep.subr.mxu0 0.0
    %7583 = vmatpush1.msra.mxu0 0.0
    %7584 = vmatprep.subr.mxu0 0.0
    %7585 = vmatpush1.msra.mxu0 0.0
    %7586 = vmatprep.subr.mxu0 0.0
    %7587 = vmatpush1.msra.mxu0 0.0
    %7588 = vmatprep.subr.mxu0 0.0
    %7589 = vmatpush1.msra.mxu0 0.0
    %7590 = vmatprep.subr.mxu0 0.0
    %7591 = vmatpush1.msra.mxu0 0.0
    %7592 = vmatprep.subr.mxu0 0.0
    %7593 = vmatpush1.msra.mxu0 0.0
    %7594 = vmatprep.subr.mxu0 0.0
    %7595 = vmatpush1.msra.mxu0 0.0
    %7596 = vmatprep.subr.mxu0 0.0
    %7597 = vmatpush1.msra.mxu0 0.0
    %7598 = vmatprep.subr.mxu0 0.0
    %7599 = vmatpush1.msra.mxu0 0.0
    %7600 = vmatprep.subr.mxu0 0.0
    %7601 = vmatpush1.msra.mxu0 0.0
    %7602 = vmatprep.subr.mxu0 0.0
    %7603 = vmatpush1.msra.mxu0 0.0
    %7604 = vmatprep.subr.mxu0 0.0
    %7605 = vmatpush1.msra.mxu0 0.0
    %7606 = vmatprep.subr.mxu0 0.0
    %7607 = vmatpush1.msra.mxu0 0.0
    %7608 = vmatprep.subr.mxu0 0.0
    %7609 = vmatpush1.msra.mxu0 0.0
    %7610 = vmatprep.subr.mxu0 0.0
    %7611 = vmatpush1.msra.mxu0 0.0
    %7612 = vmatprep.subr.mxu0 0.0
    %7613 = vmatpush1.msra.mxu0 0.0
    %7614 = vmatprep.subr.mxu0 0.0
    %7615 = vmatpush1.msra.mxu0 0.0
    %7616 = vmatprep.subr.mxu0 0.0
    %7617 = vmatpush1.msra.mxu0 0.0
    %7618 = vmatprep.subr.mxu0 0.0
    %7619 = vmatpush1.msra.mxu0 0.0
    %7620 = vmatprep.subr.mxu0 0.0
    %7621 = vmatpush1.msra.mxu0 0.0
    %7622 = vmatprep.subr.mxu0 0.0
    %7623 = vmatpush1.msra.mxu0 0.0
    %7624 = vmatprep.subr.mxu0 0.0
    %7625 = vmatpush1.msra.mxu0 0.0
    %7626 = vmatprep.subr.mxu0 0.0
    %7627 = vmatpush1.msra.mxu0 0.0
    %7628 = vmatprep.subr.mxu0 0.0
    %7629 = vmatpush1.msra.mxu0 0.0
    %7630 = vmatprep.subr.mxu0 0.0
    %7631 = vmatpush1.msra.mxu0 0.0
    %7632 = vmatprep.mubr.f32.mxu0 0.0
    %7633 = vmatmul.mubr.f32.gmra.mrb[0].mxu0 %v7105
    %v7634 = vpop.f32.mrb[0].mxu0
    %v7635 = vadd.f32 0.0, %v7634
    %v7636 = vpop.f32.mrb[0].mxu0
    %7637 = vdwg.mxu0
    %7639 = vrot.lane.b32.xlu0 %v7567, 32
    %v7640 = vpop.permute.xlu0 %7639
    %v7641 = vsel %vm95, %v7640, 0
    %7643 = vmatprep.subr.mxu0 0.0
    %7644 = vmatpush1.msra.mxu0 %v3356
    %7645 = vmatprep.subr.mxu0 0.0
    %7646 = vmatpush1.msra.mxu0 %v3357
    %7647 = vmatprep.subr.mxu0 0.0
    %7648 = vmatpush1.msra.mxu0 %v3358
    %7649 = vmatprep.subr.mxu0 0.0
    %7650 = vmatpush1.msra.mxu0 %v3359
    %7651 = vmatprep.subr.mxu0 0.0
    %7652 = vmatpush1.msra.mxu0 0.0
    %7653 = vmatprep.subr.mxu0 0.0
    %7654 = vmatpush1.msra.mxu0 0.0
    %7655 = vmatprep.subr.mxu0 0.0
    %7656 = vmatpush1.msra.mxu0 0.0
    %7657 = vmatprep.subr.mxu0 0.0
    %7658 = vmatpush1.msra.mxu0 0.0
    %7659 = vmatprep.subr.mxu0 0.0
    %7660 = vmatpush1.msra.mxu0 0.0
    %7661 = vmatprep.subr.mxu0 0.0
    %7662 = vmatpush1.msra.mxu0 0.0
    %7663 = vmatprep.subr.mxu0 0.0
    %7664 = vmatpush1.msra.mxu0 0.0
    %7665 = vmatprep.subr.mxu0 0.0
    %7666 = vmatpush1.msra.mxu0 0.0
    %7667 = vmatprep.subr.mxu0 0.0
    %7668 = vmatpush1.msra.mxu0 0.0
    %7669 = vmatprep.subr.mxu0 0.0
    %7670 = vmatpush1.msra.mxu0 0.0
    %7671 = vmatprep.subr.mxu0 0.0
    %7672 = vmatpush1.msra.mxu0 0.0
    %7673 = vmatprep.subr.mxu0 0.0
    %7674 = vmatpush1.msra.mxu0 0.0
    %7675 = vmatprep.subr.mxu0 0.0
    %7676 = vmatpush1.msra.mxu0 0.0
    %7677 = vmatprep.subr.mxu0 0.0
    %7678 = vmatpush1.msra.mxu0 0.0
    %7679 = vmatprep.subr.mxu0 0.0
    %7680 = vmatpush1.msra.mxu0 0.0
    %7681 = vmatprep.subr.mxu0 0.0
    %7682 = vmatpush1.msra.mxu0 0.0
    %7683 = vmatprep.subr.mxu0 0.0
    %7684 = vmatpush1.msra.mxu0 0.0
    %7685 = vmatprep.subr.mxu0 0.0
    %7686 = vmatpush1.msra.mxu0 0.0
    %7687 = vmatprep.subr.mxu0 0.0
    %7688 = vmatpush1.msra.mxu0 0.0
    %7689 = vmatprep.subr.mxu0 0.0
    %7690 = vmatpush1.msra.mxu0 0.0
    %7691 = vmatprep.subr.mxu0 0.0
    %7692 = vmatpush1.msra.mxu0 0.0
    %7693 = vmatprep.subr.mxu0 0.0
    %7694 = vmatpush1.msra.mxu0 0.0
    %7695 = vmatprep.subr.mxu0 0.0
    %7696 = vmatpush1.msra.mxu0 0.0
    %7697 = vmatprep.subr.mxu0 0.0
    %7698 = vmatpush1.msra.mxu0 0.0
    %7699 = vmatprep.subr.mxu0 0.0
    %7700 = vmatpush1.msra.mxu0 0.0
    %7701 = vmatprep.subr.mxu0 0.0
    %7702 = vmatpush1.msra.mxu0 0.0
    %7703 = vmatprep.subr.mxu0 0.0
    %7704 = vmatpush1.msra.mxu0 0.0
    %7705 = vmatprep.subr.mxu0 0.0
    %7706 = vmatpush1.msra.mxu0 0.0
    %7707 = vmatprep.mubr.f32.mxu0 0.0
    %7708 = vmatmul.mubr.f32.gmra.mrb[0].mxu0 %v7641
    %v7709 = vpop.f32.mrb[0].mxu0
    %v7710 = vadd.f32 %v7635, %v7709
    %v7711 = vpop.f32.mrb[0].mxu0
    %7712 = vdwg.mxu0
    %v7713 = vadd.f32 %v7710, %v3894
    %v7714 = vxor.u32 %v7713, 2147483648
    %v7715 = vmul.f32 %v7714, 1.442695
    %v7716 = vpow.pop %v7715
    %v7717 = vadd.f32 %v7716, 1.0
    %v7718 = vrcp.pop %v7717
    %v7719 = vmul.f32 1.0, %v7718
    %v7720 = vtanh.pop %v7713
    %v7721 = vmul.f32 %v7719, %v7095
    %7723 = vrot.lane.b32.xlu0 %v7720, 64
    %v7724 = vpop.permute.xlu0 %7723
    %v7726 = vmul.f32 %v7719, %v7724
    %7728 = vrot.lane.b32.xlu0 %v7726, 32
    %v7729 = vpop.permute.xlu0 %7728
    %v7731 = vadd.f32 %v7721, %v7729
    %v7732 = vtanh.pop %v7731
    %7734 = vrot.lane.b32.xlu0 %v7732, 64
    %v7735 = vpop.permute.xlu0 %7734
    %v7737 = vmul.f32 %v7719, %v7735
    %7739 = vrot.lane.b32.xlu0 %v7737, 32
    %v7740 = vpop.permute.xlu0 %7739
    %v7741 = vsel %vm95, %v7740, 0
    %7743 = vmatprep.subr.mxu0 0.0
    %7744 = vmatpush1.msra.mxu0 %v3365
    %7745 = vmatprep.subr.mxu0 0.0
    %7746 = vmatpush1.msra.mxu0 %v3366
    %7747 = vmatprep.subr.mxu0 0.0
    %7748 = vmatpush1.msra.mxu0 %v3367
    %7749 = vmatprep.subr.mxu0 0.0
    %7750 = vmatpush1.msra.mxu0 %v3368
    %7751 = vmatprep.subr.mxu0 0.0
    %7752 = vmatpush1.msra.mxu0 0.0
    %7753 = vmatprep.subr.mxu0 0.0
    %7754 = vmatpush1.msra.mxu0 0.0
    %7755 = vmatprep.subr.mxu0 0.0
    %7756 = vmatpush1.msra.mxu0 0.0
    %7757 = vmatprep.subr.mxu0 0.0
    %7758 = vmatpush1.msra.mxu0 0.0
    %7759 = vmatprep.subr.mxu0 0.0
    %7760 = vmatpush1.msra.mxu0 0.0
    %7761 = vmatprep.subr.mxu0 0.0
    %7762 = vmatpush1.msra.mxu0 0.0
    %7763 = vmatprep.subr.mxu0 0.0
    %7764 = vmatpush1.msra.mxu0 0.0
    %7765 = vmatprep.subr.mxu0 0.0
    %7766 = vmatpush1.msra.mxu0 0.0
    %7767 = vmatprep.subr.mxu0 0.0
    %7768 = vmatpush1.msra.mxu0 0.0
    %7769 = vmatprep.subr.mxu0 0.0
    %7770 = vmatpush1.msra.mxu0 0.0
    %7771 = vmatprep.subr.mxu0 0.0
    %7772 = vmatpush1.msra.mxu0 0.0
    %7773 = vmatprep.subr.mxu0 0.0
    %7774 = vmatpush1.msra.mxu0 0.0
    %7775 = vmatprep.subr.mxu0 0.0
    %7776 = vmatpush1.msra.mxu0 0.0
    %7777 = vmatprep.subr.mxu0 0.0
    %7778 = vmatpush1.msra.mxu0 0.0
    %7779 = vmatprep.subr.mxu0 0.0
    %7780 = vmatpush1.msra.mxu0 0.0
    %7781 = vmatprep.subr.mxu0 0.0
    %7782 = vmatpush1.msra.mxu0 0.0
    %7783 = vmatprep.subr.mxu0 0.0
    %7784 = vmatpush1.msra.mxu0 0.0
    %7785 = vmatprep.subr.mxu0 0.0
    %7786 = vmatpush1.msra.mxu0 0.0
    %7787 = vmatprep.subr.mxu0 0.0
    %7788 = vmatpush1.msra.mxu0 0.0
    %7789 = vmatprep.subr.mxu0 0.0
    %7790 = vmatpush1.msra.mxu0 0.0
    %7791 = vmatprep.subr.mxu0 0.0
    %7792 = vmatpush1.msra.mxu0 0.0
    %7793 = vmatprep.subr.mxu0 0.0
    %7794 = vmatpush1.msra.mxu0 0.0
    %7795 = vmatprep.subr.mxu0 0.0
    %7796 = vmatpush1.msra.mxu0 0.0
    %7797 = vmatprep.subr.mxu0 0.0
    %7798 = vmatpush1.msra.mxu0 0.0
    %7799 = vmatprep.subr.mxu0 0.0
    %7800 = vmatpush1.msra.mxu0 0.0
    %7801 = vmatprep.subr.mxu0 0.0
    %7802 = vmatpush1.msra.mxu0 0.0
    %7803 = vmatprep.subr.mxu0 0.0
    %7804 = vmatpush1.msra.mxu0 0.0
    %7805 = vmatprep.subr.mxu0 0.0
    %7806 = vmatpush1.msra.mxu0 0.0
    %7807 = vmatprep.mubr.f32.mxu0 0.0
    %7808 = vmatmul.mubr.f32.gmra.mrb[0].mxu0 %v7741
    %v7809 = vpop.f32.mrb[0].mxu0
    %v7810 = vadd.f32 %v3925, %v7809
    %v7811 = vpop.f32.mrb[0].mxu0
    %7812 = vdwg.mxu0
    %v7813 = vsel %vm95, %v7810, -inf
    %7814 = vmax.xlane.f32.xlu0 %v7813
    %v7815 = vpop.xlane.xlu0 %7814
    %v7816 = vsub.f32 %v7810, %v7815
    %v7817 = vmul.f32 %v7816, 1.442695
    %v7818 = vpow.pop %v7817
    %v7819 = vsel %vm95, %v7818, 0.0
    %7820 = vadd.xlane.f32.xlu0 %v7819
    %v7821 = vpop.xlane.xlu0 %7820
    %v7822 = vlog2.pop %v7821
    %v7823 = vmul.f32 %v7822, 0.6931472
    %v7824 = vadd.f32 %v7823, %v7815
    %7825 = vset.pattern.permute.xlu0 7
    %7826 = vperm.xlu0 %7825, %v3376
    %v7827 = vpop.permute.xlu0 %7826
    %vm7828 = vcmp.eq.s32.totalorder %v3378, %v7827
    %v7829 = vsel %vm7828, %v7810, 0.0
    %v7830 = vsel %vm95, %v7829, 0.0
    %7831 = vadd.xlane.f32.xlu0 %v7830
    %v7832 = vpop.xlane.xlu0 %7831
    %v7833 = vsub.f32 %v7824, %v7832
    %v7834 = vmul.f32 %v7833, %v4004
    %vm7835 = vcmask 64568
    %v7836 = vsel %vm7835, %v7834, 0.0
    %v7837 = vrot.slane %v7836, 4
    %v7838 = vadd.f32 %v7836, %v7837
    %v7839 = vrot.slane %v7838, 2
    %v7840 = vadd.f32 %v7838, %v7839
    %v7841 = vrot.slane %v7840, 1
    %v7842 = vadd.f32 %v7840, %v7841
    %7844 = vrot.lane.b32.xlu0 %v7842, 122
    %v7845 = vpop.permute.xlu0 %7844
    %v7847 = vadd.f32 %v7211, %v7845
    %v7848 = vsel %vm7835, %v4004, 0.0
    %v7849 = vrot.slane %v7848, 4
    %v7850 = vadd.f32 %v7848, %v7849
    %v7851 = vrot.slane %v7850, 2
    %v7852 = vadd.f32 %v7850, %v7851
    %v7853 = vrot.slane %v7852, 1
    %v7854 = vadd.f32 %v7852, %v7853
    %7856 = vrot.lane.b32.xlu0 %v7854, 122
    %v7857 = vpop.permute.xlu0 %7856
    %v7859 = vadd.f32 %v7223, %v7857
    %v7860 = vrcp.pop %v7859
    %v7861 = vmul.f32 %v7847, %v7860
    %7863 = vrot.lane.b32.xlu0 %v7861, 127
    %v7864 = vpop.permute.xlu0 %7863
    %vm7866 = vcmask 0
    %7867 = vst.msk [vmem:[#allocation2] sm:$0x1] %vm7866, %v7864
    // Predicated region
    $region94: #{_lambda_.1} parent=1 // pred_check
      _
    $region95: #{_lambda_.1} parent=1 // pred_check_branch
      %7869 = sbr.rel (0) target = $region97
    $region96: #{_lambda_.1} parent=1 // pred_region
      %s7871 = ssub.s32 16, 16
      %7872 = vsyncadd [#allocation3], %s7871
      %s7874 = sshll.u32 [#allocation2], 4
      %s7875 = int_to_ptr.vmem [resolvable:$true] %s7874
      %7877 = dma.vmem_to_hbm [thread:$0]  %s7875, 16, %s23, [#allocation3]
    $region97: #{_lambda_.1} parent=1 // pred_fallthru
      _
    // Predicated region
    $region98: #{_lambda_.1} parent=1 // pred_check
      _
    $region99: #{_lambda_.1} parent=1 // pred_check_branch
      %7879 = sbr.rel (0) target = $region101
    $region100: #{_lambda_.1} parent=1 // pred_region
      %7880 = dma.done [#allocation3], 16
    $region101: #{_lambda_.1} parent=1 // pred_fallthru
      _
    %7881 = vsyncpa [#allocation3], 1

</llo_original>
